<compile_context>
chip_gen: v6e
topology: v6e:2x2x1
jax: 0.10.0
libtpu: 0.0.40
codegen_flags: <defaults>
</compile_context>

<pallas_src>
import functools

import jax
import jax.numpy as jnp
from jax.experimental import pallas as pl
from jax.experimental.pallas import tpu as pltpu


def _gap_kernel(x_ref, o_ref, *, inv_s, s_total, ts, n_spatial_tiles):
    """Global average pool over the spatial (lane) axis.

    Grid: (channel tiles [parallel], spatial tiles [arbitrary / reduction]).
    x_ref: (N, TC, TS) block of the native (N, C, S) feature map.
    o_ref: (N, TC) f32 output block, resident across the spatial axis and used
           directly as the accumulator.
    """
    x = x_ref[...].astype(jnp.float32)                      # (N, TC, TS)

    if n_spatial_tiles == 1:
        # Whole spatial extent in one tile: single-pass mean, no accumulation.
        o_ref[...] = jnp.sum(x, axis=-1) * inv_s
        return

    si = pl.program_id(1)

    @pl.when(si == 0)
    def _():
        o_ref[...] = jnp.zeros_like(o_ref)

    if s_total % ts != 0:
        # Last spatial tile is partial: mask out-of-range lanes (contents of
        # the padded block region are undefined).  For full tiles the mask is
        # all-true; the compare+select is VPU filler on a mem-bound kernel.
        col = jax.lax.broadcasted_iota(jnp.int32, x.shape, dimension=2)
        x = jnp.where(si * ts + col < s_total, x, 0.0)

    o_ref[...] += jnp.sum(x, axis=-1)                       # lane-axis reduce

    @pl.when(si == n_spatial_tiles - 1)
    def _():
        o_ref[...] = o_ref[...] * inv_s                     # sum -> mean


def _pick_tiles(n, c, s_total, itemsize, vmem_block_bytes):
    # Channel tile (second-to-last block dim): a multiple of 16 (safe sublane
    # packing for both f32 and bf16) that divides C.
    tc = c
    for cand in (512, 256, 128, 64, 32, 16):
        if c % cand == 0:
            tc = cand
            break
    row_bytes = n * tc * itemsize
    if s_total * row_bytes <= vmem_block_bytes:
        ts = s_total                       # single spatial step, no masking
    else:
        ts = max(128, (vmem_block_bytes // (row_bytes * 128)) * 128)
        ts = min(ts, s_total)              # ts == s_total ⇒ full-dim block
    return tc, ts


def med3d_global_avg_pool(feats_ncdhw, *, vmem_block_bytes=4 * 1024 * 1024):
    """AdaptiveAvgPool3d(1) + Flatten(1) on an NCDHW feature map -> (N, C) f32."""
    n, c, d, h, w = feats_ncdhw.shape
    s_total = d * h * w

    # Free view: merge the contiguous spatial dims.  Channels stay on the
    # sublane axis, spatial lands on the lane axis -> no HBM transpose pass.
    x = feats_ncdhw.reshape(n, c, s_total)

    itemsize = jnp.dtype(feats_ncdhw.dtype).itemsize
    tc, ts = _pick_tiles(n, c, s_total, itemsize, vmem_block_bytes)
    n_spatial_tiles = pl.cdiv(s_total, ts)
    grid = (c // tc, n_spatial_tiles)

    cost = pl.CostEstimate(
        flops=int(n) * int(c) * int(s_total),
        transcendentals=0,
        bytes_accessed=int(n) * int(c) * int(s_total) * int(itemsize)
        + int(n) * int(c) * 4,
    )

    pooled = pl.pallas_call(
        functools.partial(_gap_kernel, inv_s=1.0 / s_total, s_total=s_total,
                          ts=ts, n_spatial_tiles=n_spatial_tiles),
        out_shape=jax.ShapeDtypeStruct((n, c), jnp.float32),
        grid_spec=pltpu.PrefetchScalarGridSpec(
            num_scalar_prefetch=0,
            grid=grid,
            in_specs=[pl.BlockSpec((n, tc, ts), lambda ci, si: (0, ci, si))],
            out_specs=pl.BlockSpec((n, tc), lambda ci, si: (0, ci)),
        ),
        compiler_params=pltpu.CompilerParams(
            dimension_semantics=("parallel", "arbitrary")),
        cost_estimate=cost,
    )(x)
    return pooled


def med3d_enc_head(feats_ncdhw, weight, bias, **kw):
    """AdaptiveAvgPool3d(1) -> Flatten(1) -> Linear(C, num_classes).

    feats_ncdhw: (N, 2048, D, H, W)          -- backbone output, NCDHW
    weight:      (num_classes, 2048) float32 -- nn.Linear.weight
    bias:        (num_classes,)      float32 -- nn.Linear.bias
    returns:     (N, num_classes)    float32
    """
    assert feats_ncdhw.shape[1] == weight.shape[1]
    pooled = med3d_global_avg_pool(feats_ncdhw, **kw)       # (N, C) f32
    # Tiny (N x C) @ (C x num_classes) matmul: MXU-starved (a handful of rows),
    # so leave it to XLA instead of holding resident weights in kernel VMEM.
    return pooled @ weight.T.astype(jnp.float32) + bias.astype(jnp.float32)[None, :]


if __name__ == "__main__":
    key = jax.random.PRNGKey(0)
    k_feat, k_w, k_b, k_feat2 = jax.random.split(key, 4)

    # Med3D backbone trunk output: 2048 channels (fixed by Linear(2048, .)).
    N, C, D, H, W = 2, 2048, 4, 4, 4
    NUM_CLASSES = 5

    feats = jax.random.normal(k_feat, (N, C, D, H, W), dtype=jnp.float32)
    weight = jax.random.normal(k_w, (NUM_CLASSES, C), dtype=jnp.float32) * 0.02
    bias = jax.random.normal(k_b, (NUM_CLASSES,), dtype=jnp.float32) * 0.01

    out = jax.block_until_ready(med3d_enc_head(feats, weight, bias))

    # Pure-JAX reference of AdaptiveAvgPool3d(1) + Flatten + Linear.
    ref = jnp.mean(feats, axis=(2, 3, 4)) @ weight.T + bias
    assert out.shape == (N, NUM_CLASSES)
    assert jnp.allclose(out, ref, atol=1e-4, rtol=1e-4), (out, ref)

    # Also exercise the multi-tile reduction path with a ragged spatial size
    # (S = 320 -> 3 spatial tiles of 128, last one partial and masked).
    D2, H2, W2 = 8, 8, 5
    feats2 = jax.random.normal(k_feat2, (N, C, D2, H2, W2), dtype=jnp.float32)
    out2 = jax.block_until_ready(
        med3d_enc_head(feats2, weight, bias, vmem_block_bytes=512 * 1024))
    ref2 = jnp.mean(feats2, axis=(2, 3, 4)) @ weight.T + bias
    assert jnp.allclose(out2, ref2, atol=1e-4, rtol=1e-4), (out2, ref2)

    print("KERNEL_OK")
</pallas_src>

<mosaic_0001>
module attributes {stable_mosaic.version = 11 : i64} {
  func.func @_gap_kernel(%arg0: i32, %arg1: i32, %arg2: memref<2x512x64xf32, #tpu.memory_space<vmem>>, %arg3: memref<2x512xf32, #tpu.memory_space<vmem>>) attributes {dimension_semantics = [#tpu.dimension_semantics<parallel>, #tpu.dimension_semantics<arbitrary>], iteration_bounds = array<i64: 4, 1>, scalar_prefetch = 0 : i64, scratch_operands = 0 : i64, tpu.core_type = #tpu.core_type<tc>, window_params = [{transform_indices = @transform_0, window_bounds = array<i64: 2, 512, 64>}, {transform_indices = @transform_1, window_bounds = array<i64: 2, 512>}]} {
    %c0 = arith.constant 0 : index
    %c0_0 = arith.constant 0 : index
    %c0_1 = arith.constant 0 : index
    %0 = vector.load %arg2[%c0, %c0_0, %c0_1] : memref<2x512x64xf32, #tpu.memory_space<vmem>>, vector<2x512x64xf32>
    %cst = arith.constant dense<0.000000e+00> : vector<2x512xf32>
    %1 = vector.multi_reduction <add>, %0, %cst [2] : vector<2x512x64xf32> to vector<2x512xf32>
    %cst_2 = arith.constant 1.562500e-02 : f32
    %2 = vector.broadcast %cst_2 : f32 to vector<2x512xf32>
    %3 = arith.mulf %1, %2 : vector<2x512xf32>
    %c0_3 = arith.constant 0 : index
    %c0_4 = arith.constant 0 : index
    %4 = vector.load %arg3[%c0_3, %c0_4] : memref<2x512xf32, #tpu.memory_space<vmem>>, vector<2x512xf32>
    tpu.vector_store %arg3[%c0_3, %c0_4], %3 {strides = array<i32>} : memref<2x512xf32, #tpu.memory_space<vmem>>, vector<2x512xf32>,
    return
  }
  func.func @transform_0(%arg0: i32, %arg1: i32) -> (i32, i32, i32) {
    %c0_i32 = arith.constant 0 : i32
    %c0_i32_0 = arith.constant 0 : i32
    return %c0_i32, %arg0, %arg1 : i32, i32, i32
  }
  func.func @transform_1(%arg0: i32, %arg1: i32) -> (i32, i32) {
    %c0_i32 = arith.constant 0 : i32
    %c0_i32_0 = arith.constant 0 : i32
    return %c0_i32, %arg0 : i32, i32
  }
}

</mosaic_0001>

<llo_original>
// kernel: tpu_custom_call.1
$region0: #{tpu_custom_call.1}
  #allocation0 [shape = 'u32[]', space=smem, size = 0x4, offset = 0x4, fixed_abs, tag = 'smem constant byte address 0x4 - core index']
  #allocation1 [shape = 'u32[144,128]{1,0:T(1,128)}', space=vmem, size = 0x12000, scoped, tag = 'internal scratch']
  %s0 = inlined_call_operand.vmem [shape: f32[2,2048,64], index: 0, kind: input, shape index: {}]
  %s1 = inlined_call_operand.hbm [shape: f32[2,2048], index: 1, kind: output, shape index: {}]
  %s2 = sld [smem:[#allocation0]]
  $region75: #{tpu_custom_call.1} parent=0
    _
  %s4 = ssub.s32 1, %s2
  %s5 = scalar_select 0, %s4, %s2
  $region1: #{tpu_custom_call.1} parent=0
    #allocation2 [shape = 'u8[1048576]{0}', space=vmem, size = 0x100000, scoped, tag = 'input window, operand 0']
    #allocation3 [shape = 'u8[8192]{0}', space=vmem, size = 0x2000, scoped, tag = 'output window, operand 0']
    #allocation4 [shape = 's32[2]{0}', space=sflag, size = 0x8, scoped, tag = 'scoped memory for tpu_custom_call.1']
    %6 = vsyncpa [#allocation4], 0
    %s7 = scalar_lea.sflag [#allocation4], 1
    %8 = vsyncpa %s7, 0
    loop: start=0, step=1, limit=6
    $region2: #{tpu_custom_call.1} parent=1 // loop_pre_header
      _
    $region3: #{tpu_custom_call.1} parent=1 // loop_header
      %s10 = sphi 0, %s14
      %p11 = scmp.ge.s32.totalorder %s10, 6
      %s17 = sphi 0, %s29
      %s18 = sphi 0, %s25
      %s19 = sphi 0, %s17
      %s20 = sphi 0, %s18
      %s21 = sphi 0, %s19
      %s22 = sphi 0, %s20
      %s34 = sphi 0, %s36
      %s37 = sphi 0, %s34
      %s38 = sphi 0, %s37
      %s54 = sphi 0, %s38
      %s60 = sphi 0, %s62
      %s63 = sphi 0, %s60
      %s64 = sphi 0, %s63
      %s80 = sphi 0, %s64
    $region4: #{tpu_custom_call.1} parent=1 // loop_header_branch
      %13 = sbr.rel (%p11) target = $region8
    $region5: #{tpu_custom_call.1} parent=1 // loop_body
      %s15 = ssub.s32 %s10, 1
      %s16 = ssub.s32 %s10, 2
      %s23 = sadd.s32 1, %s18
      %p24 = scmp.ge.s32.totalorder %s23, 1
      %s25 = scalar_select %p24, 0, %s23
      %s26 = sadd.s32 1, %s17
      %s27 = scalar_select %p24, %s26, %s17
      %p28 = scmp.ge.s32.totalorder %s27, 4
      %s29 = scalar_select %p28, 0, %s27
      %s30 = ssub.s32 %s17, %s29
      %s31 = ssub.s32 %s18, %s25
      %s32 = sor.u32 %s30, %s31
      %p33 = scmp.eq.s32.totalorder %s32, 0
      %s35 = sadd.s32 %s34, 1
      %s36 = scalar_select %p33, %s34, %s35
      %p39 = pneg %p33
      %p40 = scmp.eq.s32.totalorder %s10, 3
      %p41 = por %p39, %p40
      %p42 = scmp.ne.s32.totalorder %s34, %s37
      %p43 = scmp.eq.s32.totalorder %s10, 0
      %p44 = por %p42, %p43
      %p45 = scmp.ne.s32.totalorder %s34, %s37
      %p46 = scmp.eq.s32.totalorder %s15, 3
      %p47 = por %p45, %p46
      %p48 = scmp.ne.s32.totalorder %s37, %s38
      %p49 = scmp.eq.s32.totalorder %s15, 0
      %p50 = por %p48, %p49
      %p51 = scmp.ne.s32.totalorder %s37, %s38
      %p52 = scmp.eq.s32.totalorder %s16, 3
      %p53 = por %p51, %p52
      %p55 = scmp.ne.s32.totalorder %s38, %s54
      %p56 = scmp.eq.s32.totalorder %s16, 0
      %p57 = por %p55, %p56
      %s58 = ssub.s32 %s17, %s29
      %p59 = scmp.eq.s32.totalorder %s58, 0
      %s61 = sadd.s32 %s60, 1
      %s62 = scalar_select %p59, %s60, %s61
      %p65 = pneg %p59
      %p66 = scmp.eq.s32.totalorder %s10, 3
      %p67 = por %p65, %p66
      %p68 = scmp.ne.s32.totalorder %s60, %s63
      %p69 = scmp.eq.s32.totalorder %s10, 0
      %p70 = por %p68, %p69
      %p71 = scmp.ne.s32.totalorder %s60, %s63
      %p72 = scmp.eq.s32.totalorder %s15, 3
      %p73 = por %p71, %p72
      %p74 = scmp.ne.s32.totalorder %s63, %s64
      %p75 = scmp.eq.s32.totalorder %s15, 0
      %p76 = por %p74, %p75
      %p77 = scmp.ne.s32.totalorder %s63, %s64
      %p78 = scmp.eq.s32.totalorder %s16, 3
      %p79 = por %p77, %p78
      %p81 = scmp.ne.s32.totalorder %s64, %s80
      %p82 = scmp.eq.s32.totalorder %s16, 0
      %p83 = por %p81, %p82
      %p84 = scmp.le.s32.totalorder 1, %s10
      %p85 = scmp.lt.s32.totalorder %s10, 5
      %p86 = pnand %p84, %p85
      %p87 = pneg %p86
      // Predicated region
      $region9: #{tpu_custom_call.1} parent=5 // pred_check
        _
      $region10: #{tpu_custom_call.1} parent=5 // pred_check_branch
        %89 = sbr.rel (%p86) target = $region12
      $region11: #{tpu_custom_call.1} parent=5 // pred_region
        %s90 = ssub.s32 %s10, 1
      $region12: #{tpu_custom_call.1} parent=5 // pred_fallthru
        _
      %p91 = scmp.lt.s32.totalorder %s10, 4
      // Predicated region
      $region13: #{tpu_custom_call.1} parent=5 // pred_check
        %p92 = pneg %p91
      $region14: #{tpu_custom_call.1} parent=5 // pred_check_branch
        %94 = sbr.rel (%p92) target = $region16
      $region15: #{tpu_custom_call.1} parent=5 // pred_region
        // Predicated region
        $region17: #{tpu_custom_call.1} parent=15 // pred_check
          %p95 = pneg %p44
        $region18: #{tpu_custom_call.1} parent=15 // pred_check_branch
          %97 = sbr.rel (%p95) target = $region20
        $region19: #{tpu_custom_call.1} parent=15 // pred_region
          %s98 = sand.u32 %s34, 1
          %s99 = sand.u32 %s34, 1
          %s100 = smul.addr %s99, 1024
          %s101 = scalar_lea.vmem [#allocation2], %s100
          %s102 = smul.u32 64, %s17
          %s103 = sadd.s32 %s18, %s102
          %s104 = smul.addr %s103, 8
          %s105 = scalar_lea.vmem %s0, %s104
          // Predicated region
          $region21: #{tpu_custom_call.1} parent=19 // pred_check
            _
          $region22: #{tpu_custom_call.1} parent=19 // pred_check_branch
            %107 = sbr.rel (0) target = $region24
          $region23: #{tpu_custom_call.1} parent=19 // pred_region
            // Predicated region
            $region25: #{tpu_custom_call.1} parent=23 // pred_check
              _
            $region26: #{tpu_custom_call.1} parent=23 // pred_check_branch
              %109 = sbr.rel (0) target = $region28
            $region27: #{tpu_custom_call.1} parent=23 // pred_region
              // Predicated region
              $region40: #{tpu_custom_call.1} parent=27 // pred_check
                _
              $region41: #{tpu_custom_call.1} parent=27 // pred_check_branch
                %379 = sbr.rel (0) target = $region43
              $region42: #{tpu_custom_call.1} parent=27 // pred_region
                loop: start=0, step=1, limit=1
                $region44: #{tpu_custom_call.1} parent=42 // loop_pre_header
                  _
                $region45: #{tpu_custom_call.1} parent=42 // loop_header
                  %s381 = sphi 0, %s385
                  %p382 = scmp.ge.s32.totalorder %s381, 1
                  %s386 = sphi %s105, %s105
                  %s387 = sphi %s101, %s101
                $region46: #{tpu_custom_call.1} parent=42 // loop_header_branch
                  %384 = sbr.rel (%p382) target = $region50
                $region47: #{tpu_custom_call.1} parent=42 // loop_body
                  %v388 = vld [vmem:[%s386] sm:$0xff]
                  %389 = vst [vmem:[%s387] sm:$0xff] %v388
                  %v390 = vld [vmem:[%s386 + $0x8] sm:$0xff]
                  %391 = vst [vmem:[%s387 + $0x8] sm:$0xff] %v390
                  %v392 = vld [vmem:[%s386 + $0x10] sm:$0xff]
                  %393 = vst [vmem:[%s387 + $0x10] sm:$0xff] %v392
                  %v394 = vld [vmem:[%s386 + $0x18] sm:$0xff]
                  %395 = vst [vmem:[%s387 + $0x18] sm:$0xff] %v394
                  %v396 = vld [vmem:[%s386 + $0x20] sm:$0xff]
                  %397 = vst [vmem:[%s387 + $0x20] sm:$0xff] %v396
                  %v398 = vld [vmem:[%s386 + $0x28] sm:$0xff]
                  %399 = vst [vmem:[%s387 + $0x28] sm:$0xff] %v398
                  %v400 = vld [vmem:[%s386 + $0x30] sm:$0xff]
                  %401 = vst [vmem:[%s387 + $0x30] sm:$0xff] %v400
                  %v402 = vld [vmem:[%s386 + $0x38] sm:$0xff]
                  %403 = vst [vmem:[%s387 + $0x38] sm:$0xff] %v402
                  %v404 = vld [vmem:[%s386 + $0x40] sm:$0xff]
                  %405 = vst [vmem:[%s387 + $0x40] sm:$0xff] %v404
                  %v406 = vld [vmem:[%s386 + $0x48] sm:$0xff]
                  %407 = vst [vmem:[%s387 + $0x48] sm:$0xff] %v406
                  %v408 = vld [vmem:[%s386 + $0x50] sm:$0xff]
                  %409 = vst [vmem:[%s387 + $0x50] sm:$0xff] %v408
                  %v410 = vld [vmem:[%s386 + $0x58] sm:$0xff]
                  %411 = vst [vmem:[%s387 + $0x58] sm:$0xff] %v410
                  %v412 = vld [vmem:[%s386 + $0x60] sm:$0xff]
                  %413 = vst [vmem:[%s387 + $0x60] sm:$0xff] %v412
                  %v414 = vld [vmem:[%s386 + $0x68] sm:$0xff]
                  %415 = vst [vmem:[%s387 + $0x68] sm:$0xff] %v414
                  %v416 = vld [vmem:[%s386 + $0x70] sm:$0xff]
                  %417 = vst [vmem:[%s387 + $0x70] sm:$0xff] %v416
                  %v418 = vld [vmem:[%s386 + $0x78] sm:$0xff]
                  %419 = vst [vmem:[%s387 + $0x78] sm:$0xff] %v418
                  %v420 = vld [vmem:[%s386 + $0x80] sm:$0xff]
                  %421 = vst [vmem:[%s387 + $0x80] sm:$0xff] %v420
                  %v422 = vld [vmem:[%s386 + $0x88] sm:$0xff]
                  %423 = vst [vmem:[%s387 + $0x88] sm:$0xff] %v422
                  %v424 = vld [vmem:[%s386 + $0x90] sm:$0xff]
                  %425 = vst [vmem:[%s387 + $0x90] sm:$0xff] %v424
                  %v426 = vld [vmem:[%s386 + $0x98] sm:$0xff]
                  %427 = vst [vmem:[%s387 + $0x98] sm:$0xff] %v426
                  %v428 = vld [vmem:[%s386 + $0xa0] sm:$0xff]
                  %429 = vst [vmem:[%s387 + $0xa0] sm:$0xff] %v428
                  %v430 = vld [vmem:[%s386 + $0xa8] sm:$0xff]
                  %431 = vst [vmem:[%s387 + $0xa8] sm:$0xff] %v430
                  %v432 = vld [vmem:[%s386 + $0xb0] sm:$0xff]
                  %433 = vst [vmem:[%s387 + $0xb0] sm:$0xff] %v432
                  %v434 = vld [vmem:[%s386 + $0xb8] sm:$0xff]
                  %435 = vst [vmem:[%s387 + $0xb8] sm:$0xff] %v434
                  %v436 = vld [vmem:[%s386 + $0xc0] sm:$0xff]
                  %437 = vst [vmem:[%s387 + $0xc0] sm:$0xff] %v436
                  %v438 = vld [vmem:[%s386 + $0xc8] sm:$0xff]
                  %439 = vst [vmem:[%s387 + $0xc8] sm:$0xff] %v438
                  %v440 = vld [vmem:[%s386 + $0xd0] sm:$0xff]
                  %441 = vst [vmem:[%s387 + $0xd0] sm:$0xff] %v440
                  %v442 = vld [vmem:[%s386 + $0xd8] sm:$0xff]
                  %443 = vst [vmem:[%s387 + $0xd8] sm:$0xff] %v442
                  %v444 = vld [vmem:[%s386 + $0xe0] sm:$0xff]
                  %445 = vst [vmem:[%s387 + $0xe0] sm:$0xff] %v444
                  %v446 = vld [vmem:[%s386 + $0xe8] sm:$0xff]
                  %447 = vst [vmem:[%s387 + $0xe8] sm:$0xff] %v446
                  %v448 = vld [vmem:[%s386 + $0xf0] sm:$0xff]
                  %449 = vst [vmem:[%s387 + $0xf0] sm:$0xff] %v448
                  %v450 = vld [vmem:[%s386 + $0xf8] sm:$0xff]
                  %451 = vst [vmem:[%s387 + $0xf8] sm:$0xff] %v450
                  %v452 = vld [vmem:[%s386 + $0x100] sm:$0xff]
                  %453 = vst [vmem:[%s387 + $0x100] sm:$0xff] %v452
                  %v454 = vld [vmem:[%s386 + $0x108] sm:$0xff]
                  %455 = vst [vmem:[%s387 + $0x108] sm:$0xff] %v454
                  %v456 = vld [vmem:[%s386 + $0x110] sm:$0xff]
                  %457 = vst [vmem:[%s387 + $0x110] sm:$0xff] %v456
                  %v458 = vld [vmem:[%s386 + $0x118] sm:$0xff]
                  %459 = vst [vmem:[%s387 + $0x118] sm:$0xff] %v458
                  %v460 = vld [vmem:[%s386 + $0x120] sm:$0xff]
                  %461 = vst [vmem:[%s387 + $0x120] sm:$0xff] %v460
                  %v462 = vld [vmem:[%s386 + $0x128] sm:$0xff]
                  %463 = vst [vmem:[%s387 + $0x128] sm:$0xff] %v462
                  %v464 = vld [vmem:[%s386 + $0x130] sm:$0xff]
                  %465 = vst [vmem:[%s387 + $0x130] sm:$0xff] %v464
                  %v466 = vld [vmem:[%s386 + $0x138] sm:$0xff]
                  %467 = vst [vmem:[%s387 + $0x138] sm:$0xff] %v466
                  %v468 = vld [vmem:[%s386 + $0x140] sm:$0xff]
                  %469 = vst [vmem:[%s387 + $0x140] sm:$0xff] %v468
                  %v470 = vld [vmem:[%s386 + $0x148] sm:$0xff]
                  %471 = vst [vmem:[%s387 + $0x148] sm:$0xff] %v470
                  %v472 = vld [vmem:[%s386 + $0x150] sm:$0xff]
                  %473 = vst [vmem:[%s387 + $0x150] sm:$0xff] %v472
                  %v474 = vld [vmem:[%s386 + $0x158] sm:$0xff]
                  %475 = vst [vmem:[%s387 + $0x158] sm:$0xff] %v474
                  %v476 = vld [vmem:[%s386 + $0x160] sm:$0xff]
                  %477 = vst [vmem:[%s387 + $0x160] sm:$0xff] %v476
                  %v478 = vld [vmem:[%s386 + $0x168] sm:$0xff]
                  %479 = vst [vmem:[%s387 + $0x168] sm:$0xff] %v478
                  %v480 = vld [vmem:[%s386 + $0x170] sm:$0xff]
                  %481 = vst [vmem:[%s387 + $0x170] sm:$0xff] %v480
                  %v482 = vld [vmem:[%s386 + $0x178] sm:$0xff]
                  %483 = vst [vmem:[%s387 + $0x178] sm:$0xff] %v482
                  %v484 = vld [vmem:[%s386 + $0x180] sm:$0xff]
                  %485 = vst [vmem:[%s387 + $0x180] sm:$0xff] %v484
                  %v486 = vld [vmem:[%s386 + $0x188] sm:$0xff]
                  %487 = vst [vmem:[%s387 + $0x188] sm:$0xff] %v486
                  %v488 = vld [vmem:[%s386 + $0x190] sm:$0xff]
                  %489 = vst [vmem:[%s387 + $0x190] sm:$0xff] %v488
                  %v490 = vld [vmem:[%s386 + $0x198] sm:$0xff]
                  %491 = vst [vmem:[%s387 + $0x198] sm:$0xff] %v490
                  %v492 = vld [vmem:[%s386 + $0x1a0] sm:$0xff]
                  %493 = vst [vmem:[%s387 + $0x1a0] sm:$0xff] %v492
                  %v494 = vld [vmem:[%s386 + $0x1a8] sm:$0xff]
                  %495 = vst [vmem:[%s387 + $0x1a8] sm:$0xff] %v494
                  %v496 = vld [vmem:[%s386 + $0x1b0] sm:$0xff]
                  %497 = vst [vmem:[%s387 + $0x1b0] sm:$0xff] %v496
                  %v498 = vld [vmem:[%s386 + $0x1b8] sm:$0xff]
                  %499 = vst [vmem:[%s387 + $0x1b8] sm:$0xff] %v498
                  %v500 = vld [vmem:[%s386 + $0x1c0] sm:$0xff]
                  %501 = vst [vmem:[%s387 + $0x1c0] sm:$0xff] %v500
                  %v502 = vld [vmem:[%s386 + $0x1c8] sm:$0xff]
                  %503 = vst [vmem:[%s387 + $0x1c8] sm:$0xff] %v502
                  %v504 = vld [vmem:[%s386 + $0x1d0] sm:$0xff]
                  %505 = vst [vmem:[%s387 + $0x1d0] sm:$0xff] %v504
                  %v506 = vld [vmem:[%s386 + $0x1d8] sm:$0xff]
                  %507 = vst [vmem:[%s387 + $0x1d8] sm:$0xff] %v506
                  %v508 = vld [vmem:[%s386 + $0x1e0] sm:$0xff]
                  %509 = vst [vmem:[%s387 + $0x1e0] sm:$0xff] %v508
                  %v510 = vld [vmem:[%s386 + $0x1e8] sm:$0xff]
                  %511 = vst [vmem:[%s387 + $0x1e8] sm:$0xff] %v510
                  %v512 = vld [vmem:[%s386 + $0x1f0] sm:$0xff]
                  %513 = vst [vmem:[%s387 + $0x1f0] sm:$0xff] %v512
                  %v514 = vld [vmem:[%s386 + $0x1f8] sm:$0xff]
                  %515 = vst [vmem:[%s387 + $0x1f8] sm:$0xff] %v514
                  %v516 = vld [vmem:[%s386 + $0x800] sm:$0xff]
                  %517 = vst [vmem:[%s387 + $0x200] sm:$0xff] %v516
                  %v518 = vld [vmem:[%s386 + $0x808] sm:$0xff]
                  %519 = vst [vmem:[%s387 + $0x208] sm:$0xff] %v518
                  %v520 = vld [vmem:[%s386 + $0x810] sm:$0xff]
                  %521 = vst [vmem:[%s387 + $0x210] sm:$0xff] %v520
                  %v522 = vld [vmem:[%s386 + $0x818] sm:$0xff]
                  %523 = vst [vmem:[%s387 + $0x218] sm:$0xff] %v522
                  %v524 = vld [vmem:[%s386 + $0x820] sm:$0xff]
                  %525 = vst [vmem:[%s387 + $0x220] sm:$0xff] %v524
                  %v526 = vld [vmem:[%s386 + $0x828] sm:$0xff]
                  %527 = vst [vmem:[%s387 + $0x228] sm:$0xff] %v526
                  %v528 = vld [vmem:[%s386 + $0x830] sm:$0xff]
                  %529 = vst [vmem:[%s387 + $0x230] sm:$0xff] %v528
                  %v530 = vld [vmem:[%s386 + $0x838] sm:$0xff]
                  %531 = vst [vmem:[%s387 + $0x238] sm:$0xff] %v530
                  %v532 = vld [vmem:[%s386 + $0x840] sm:$0xff]
                  %533 = vst [vmem:[%s387 + $0x240] sm:$0xff] %v532
                  %v534 = vld [vmem:[%s386 + $0x848] sm:$0xff]
                  %535 = vst [vmem:[%s387 + $0x248] sm:$0xff] %v534
                  %v536 = vld [vmem:[%s386 + $0x850] sm:$0xff]
                  %537 = vst [vmem:[%s387 + $0x250] sm:$0xff] %v536
                  %v538 = vld [vmem:[%s386 + $0x858] sm:$0xff]
                  %539 = vst [vmem:[%s387 + $0x258] sm:$0xff] %v538
                  %v540 = vld [vmem:[%s386 + $0x860] sm:$0xff]
                  %541 = vst [vmem:[%s387 + $0x260] sm:$0xff] %v540
                  %v542 = vld [vmem:[%s386 + $0x868] sm:$0xff]
                  %543 = vst [vmem:[%s387 + $0x268] sm:$0xff] %v542
                  %v544 = vld [vmem:[%s386 + $0x870] sm:$0xff]
                  %545 = vst [vmem:[%s387 + $0x270] sm:$0xff] %v544
                  %v546 = vld [vmem:[%s386 + $0x878] sm:$0xff]
                  %547 = vst [vmem:[%s387 + $0x278] sm:$0xff] %v546
                  %v548 = vld [vmem:[%s386 + $0x880] sm:$0xff]
                  %549 = vst [vmem:[%s387 + $0x280] sm:$0xff] %v548
                  %v550 = vld [vmem:[%s386 + $0x888] sm:$0xff]
                  %551 = vst [vmem:[%s387 + $0x288] sm:$0xff] %v550
                  %v552 = vld [vmem:[%s386 + $0x890] sm:$0xff]
                  %553 = vst [vmem:[%s387 + $0x290] sm:$0xff] %v552
                  %v554 = vld [vmem:[%s386 + $0x898] sm:$0xff]
                  %555 = vst [vmem:[%s387 + $0x298] sm:$0xff] %v554
                  %v556 = vld [vmem:[%s386 + $0x8a0] sm:$0xff]
                  %557 = vst [vmem:[%s387 + $0x2a0] sm:$0xff] %v556
                  %v558 = vld [vmem:[%s386 + $0x8a8] sm:$0xff]
                  %559 = vst [vmem:[%s387 + $0x2a8] sm:$0xff] %v558
                  %v560 = vld [vmem:[%s386 + $0x8b0] sm:$0xff]
                  %561 = vst [vmem:[%s387 + $0x2b0] sm:$0xff] %v560
                  %v562 = vld [vmem:[%s386 + $0x8b8] sm:$0xff]
                  %563 = vst [vmem:[%s387 + $0x2b8] sm:$0xff] %v562
                  %v564 = vld [vmem:[%s386 + $0x8c0] sm:$0xff]
                  %565 = vst [vmem:[%s387 + $0x2c0] sm:$0xff] %v564
                  %v566 = vld [vmem:[%s386 + $0x8c8] sm:$0xff]
                  %567 = vst [vmem:[%s387 + $0x2c8] sm:$0xff] %v566
                  %v568 = vld [vmem:[%s386 + $0x8d0] sm:$0xff]
                  %569 = vst [vmem:[%s387 + $0x2d0] sm:$0xff] %v568
                  %v570 = vld [vmem:[%s386 + $0x8d8] sm:$0xff]
                  %571 = vst [vmem:[%s387 + $0x2d8] sm:$0xff] %v570
                  %v572 = vld [vmem:[%s386 + $0x8e0] sm:$0xff]
                  %573 = vst [vmem:[%s387 + $0x2e0] sm:$0xff] %v572
                  %v574 = vld [vmem:[%s386 + $0x8e8] sm:$0xff]
                  %575 = vst [vmem:[%s387 + $0x2e8] sm:$0xff] %v574
                  %v576 = vld [vmem:[%s386 + $0x8f0] sm:$0xff]
                  %577 = vst [vmem:[%s387 + $0x2f0] sm:$0xff] %v576
                  %v578 = vld [vmem:[%s386 + $0x8f8] sm:$0xff]
                  %579 = vst [vmem:[%s387 + $0x2f8] sm:$0xff] %v578
                  %v580 = vld [vmem:[%s386 + $0x900] sm:$0xff]
                  %581 = vst [vmem:[%s387 + $0x300] sm:$0xff] %v580
                  %v582 = vld [vmem:[%s386 + $0x908] sm:$0xff]
                  %583 = vst [vmem:[%s387 + $0x308] sm:$0xff] %v582
                  %v584 = vld [vmem:[%s386 + $0x910] sm:$0xff]
                  %585 = vst [vmem:[%s387 + $0x310] sm:$0xff] %v584
                  %v586 = vld [vmem:[%s386 + $0x918] sm:$0xff]
                  %587 = vst [vmem:[%s387 + $0x318] sm:$0xff] %v586
                  %v588 = vld [vmem:[%s386 + $0x920] sm:$0xff]
                  %589 = vst [vmem:[%s387 + $0x320] sm:$0xff] %v588
                  %v590 = vld [vmem:[%s386 + $0x928] sm:$0xff]
                  %591 = vst [vmem:[%s387 + $0x328] sm:$0xff] %v590
                  %v592 = vld [vmem:[%s386 + $0x930] sm:$0xff]
                  %593 = vst [vmem:[%s387 + $0x330] sm:$0xff] %v592
                  %v594 = vld [vmem:[%s386 + $0x938] sm:$0xff]
                  %595 = vst [vmem:[%s387 + $0x338] sm:$0xff] %v594
                  %v596 = vld [vmem:[%s386 + $0x940] sm:$0xff]
                  %597 = vst [vmem:[%s387 + $0x340] sm:$0xff] %v596
                  %v598 = vld [vmem:[%s386 + $0x948] sm:$0xff]
                  %599 = vst [vmem:[%s387 + $0x348] sm:$0xff] %v598
                  %v600 = vld [vmem:[%s386 + $0x950] sm:$0xff]
                  %601 = vst [vmem:[%s387 + $0x350] sm:$0xff] %v600
                  %v602 = vld [vmem:[%s386 + $0x958] sm:$0xff]
                  %603 = vst [vmem:[%s387 + $0x358] sm:$0xff] %v602
                  %v604 = vld [vmem:[%s386 + $0x960] sm:$0xff]
                  %605 = vst [vmem:[%s387 + $0x360] sm:$0xff] %v604
                  %v606 = vld [vmem:[%s386 + $0x968] sm:$0xff]
                  %607 = vst [vmem:[%s387 + $0x368] sm:$0xff] %v606
                  %v608 = vld [vmem:[%s386 + $0x970] sm:$0xff]
                  %609 = vst [vmem:[%s387 + $0x370] sm:$0xff] %v608
                  %v610 = vld [vmem:[%s386 + $0x978] sm:$0xff]
                  %611 = vst [vmem:[%s387 + $0x378] sm:$0xff] %v610
                  %v612 = vld [vmem:[%s386 + $0x980] sm:$0xff]
                  %613 = vst [vmem:[%s387 + $0x380] sm:$0xff] %v612
                  %v614 = vld [vmem:[%s386 + $0x988] sm:$0xff]
                  %615 = vst [vmem:[%s387 + $0x388] sm:$0xff] %v614
                  %v616 = vld [vmem:[%s386 + $0x990] sm:$0xff]
                  %617 = vst [vmem:[%s387 + $0x390] sm:$0xff] %v616
                  %v618 = vld [vmem:[%s386 + $0x998] sm:$0xff]
                  %619 = vst [vmem:[%s387 + $0x398] sm:$0xff] %v618
                  %v620 = vld [vmem:[%s386 + $0x9a0] sm:$0xff]
                  %621 = vst [vmem:[%s387 + $0x3a0] sm:$0xff] %v620
                  %v622 = vld [vmem:[%s386 + $0x9a8] sm:$0xff]
                  %623 = vst [vmem:[%s387 + $0x3a8] sm:$0xff] %v622
                  %v624 = vld [vmem:[%s386 + $0x9b0] sm:$0xff]
                  %625 = vst [vmem:[%s387 + $0x3b0] sm:$0xff] %v624
                  %v626 = vld [vmem:[%s386 + $0x9b8] sm:$0xff]
                  %627 = vst [vmem:[%s387 + $0x3b8] sm:$0xff] %v626
                  %v628 = vld [vmem:[%s386 + $0x9c0] sm:$0xff]
                  %629 = vst [vmem:[%s387 + $0x3c0] sm:$0xff] %v628
                  %v630 = vld [vmem:[%s386 + $0x9c8] sm:$0xff]
                  %631 = vst [vmem:[%s387 + $0x3c8] sm:$0xff] %v630
                  %v632 = vld [vmem:[%s386 + $0x9d0] sm:$0xff]
                  %633 = vst [vmem:[%s387 + $0x3d0] sm:$0xff] %v632
                  %v634 = vld [vmem:[%s386 + $0x9d8] sm:$0xff]
                  %635 = vst [vmem:[%s387 + $0x3d8] sm:$0xff] %v634
                  %v636 = vld [vmem:[%s386 + $0x9e0] sm:$0xff]
                  %637 = vst [vmem:[%s387 + $0x3e0] sm:$0xff] %v636
                  %v638 = vld [vmem:[%s386 + $0x9e8] sm:$0xff]
                  %639 = vst [vmem:[%s387 + $0x3e8] sm:$0xff] %v638
                  %v640 = vld [vmem:[%s386 + $0x9f0] sm:$0xff]
                  %641 = vst [vmem:[%s387 + $0x3f0] sm:$0xff] %v640
                  %v642 = vld [vmem:[%s386 + $0x9f8] sm:$0xff]
                  %643 = vst [vmem:[%s387 + $0x3f8] sm:$0xff] %v642
                $region48: #{tpu_custom_call.1} parent=42 // loop_footer
                  %s385 = sadd.s32 1, %s381
                $region49: #{tpu_custom_call.1} parent=42 // loop_footer_branch
                  %380 = sbr.rel target = $region45
                $region50: #{tpu_custom_call.1} parent=42 // loop_exit
                  _
              $region43: #{tpu_custom_call.1} parent=27 // pred_fallthru
                _
              // Predicated region
              $region51: #{tpu_custom_call.1} parent=27 // pred_check
                _
              $region52: #{tpu_custom_call.1} parent=27 // pred_check_branch
                %645 = sbr.rel target = $region54
              $region53: #{tpu_custom_call.1} parent=27 // pred_region
                _
              $region54: #{tpu_custom_call.1} parent=27 // pred_fallthru
                _
            $region28: #{tpu_custom_call.1} parent=23 // pred_fallthru
              _
            // Predicated region
            $region29: #{tpu_custom_call.1} parent=23 // pred_check
              _
            $region30: #{tpu_custom_call.1} parent=23 // pred_check_branch
              %111 = sbr.rel target = $region32
            $region31: #{tpu_custom_call.1} parent=23 // pred_region
              %s113 = ssub.s32 256, 1
              loop: start=0, step=1, limit=1
              $region33: #{tpu_custom_call.1} parent=31 // loop_pre_header
                _
              $region34: #{tpu_custom_call.1} parent=31 // loop_header
                %s115 = sphi 0, %s119
                %p116 = scmp.ge.s32.totalorder %s115, 1
                %s120 = sphi %s105, %s105
                %s121 = sphi %s101, %s101
              $region35: #{tpu_custom_call.1} parent=31 // loop_header_branch
                %118 = sbr.rel (%p116) target = $region39
              $region36: #{tpu_custom_call.1} parent=31 // loop_body
                %v122 = vld [vmem:[%s120] sm:%s113]
                %123 = vst [vmem:[%s121] sm:%s113] %v122
                %v124 = vld [vmem:[%s120 + $0x8] sm:%s113]
                %125 = vst [vmem:[%s121 + $0x8] sm:%s113] %v124
                %v126 = vld [vmem:[%s120 + $0x10] sm:%s113]
                %127 = vst [vmem:[%s121 + $0x10] sm:%s113] %v126
                %v128 = vld [vmem:[%s120 + $0x18] sm:%s113]
                %129 = vst [vmem:[%s121 + $0x18] sm:%s113] %v128
                %v130 = vld [vmem:[%s120 + $0x20] sm:%s113]
                %131 = vst [vmem:[%s121 + $0x20] sm:%s113] %v130
                %v132 = vld [vmem:[%s120 + $0x28] sm:%s113]
                %133 = vst [vmem:[%s121 + $0x28] sm:%s113] %v132
                %v134 = vld [vmem:[%s120 + $0x30] sm:%s113]
                %135 = vst [vmem:[%s121 + $0x30] sm:%s113] %v134
                %v136 = vld [vmem:[%s120 + $0x38] sm:%s113]
                %137 = vst [vmem:[%s121 + $0x38] sm:%s113] %v136
                %v138 = vld [vmem:[%s120 + $0x40] sm:%s113]
                %139 = vst [vmem:[%s121 + $0x40] sm:%s113] %v138
                %v140 = vld [vmem:[%s120 + $0x48] sm:%s113]
                %141 = vst [vmem:[%s121 + $0x48] sm:%s113] %v140
                %v142 = vld [vmem:[%s120 + $0x50] sm:%s113]
                %143 = vst [vmem:[%s121 + $0x50] sm:%s113] %v142
                %v144 = vld [vmem:[%s120 + $0x58] sm:%s113]
                %145 = vst [vmem:[%s121 + $0x58] sm:%s113] %v144
                %v146 = vld [vmem:[%s120 + $0x60] sm:%s113]
                %147 = vst [vmem:[%s121 + $0x60] sm:%s113] %v146
                %v148 = vld [vmem:[%s120 + $0x68] sm:%s113]
                %149 = vst [vmem:[%s121 + $0x68] sm:%s113] %v148
                %v150 = vld [vmem:[%s120 + $0x70] sm:%s113]
                %151 = vst [vmem:[%s121 + $0x70] sm:%s113] %v150
                %v152 = vld [vmem:[%s120 + $0x78] sm:%s113]
                %153 = vst [vmem:[%s121 + $0x78] sm:%s113] %v152
                %v154 = vld [vmem:[%s120 + $0x80] sm:%s113]
                %155 = vst [vmem:[%s121 + $0x80] sm:%s113] %v154
                %v156 = vld [vmem:[%s120 + $0x88] sm:%s113]
                %157 = vst [vmem:[%s121 + $0x88] sm:%s113] %v156
                %v158 = vld [vmem:[%s120 + $0x90] sm:%s113]
                %159 = vst [vmem:[%s121 + $0x90] sm:%s113] %v158
                %v160 = vld [vmem:[%s120 + $0x98] sm:%s113]
                %161 = vst [vmem:[%s121 + $0x98] sm:%s113] %v160
                %v162 = vld [vmem:[%s120 + $0xa0] sm:%s113]
                %163 = vst [vmem:[%s121 + $0xa0] sm:%s113] %v162
                %v164 = vld [vmem:[%s120 + $0xa8] sm:%s113]
                %165 = vst [vmem:[%s121 + $0xa8] sm:%s113] %v164
                %v166 = vld [vmem:[%s120 + $0xb0] sm:%s113]
                %167 = vst [vmem:[%s121 + $0xb0] sm:%s113] %v166
                %v168 = vld [vmem:[%s120 + $0xb8] sm:%s113]
                %169 = vst [vmem:[%s121 + $0xb8] sm:%s113] %v168
                %v170 = vld [vmem:[%s120 + $0xc0] sm:%s113]
                %171 = vst [vmem:[%s121 + $0xc0] sm:%s113] %v170
                %v172 = vld [vmem:[%s120 + $0xc8] sm:%s113]
                %173 = vst [vmem:[%s121 + $0xc8] sm:%s113] %v172
                %v174 = vld [vmem:[%s120 + $0xd0] sm:%s113]
                %175 = vst [vmem:[%s121 + $0xd0] sm:%s113] %v174
                %v176 = vld [vmem:[%s120 + $0xd8] sm:%s113]
                %177 = vst [vmem:[%s121 + $0xd8] sm:%s113] %v176
                %v178 = vld [vmem:[%s120 + $0xe0] sm:%s113]
                %179 = vst [vmem:[%s121 + $0xe0] sm:%s113] %v178
                %v180 = vld [vmem:[%s120 + $0xe8] sm:%s113]
                %181 = vst [vmem:[%s121 + $0xe8] sm:%s113] %v180
                %v182 = vld [vmem:[%s120 + $0xf0] sm:%s113]
                %183 = vst [vmem:[%s121 + $0xf0] sm:%s113] %v182
                %v184 = vld [vmem:[%s120 + $0xf8] sm:%s113]
                %185 = vst [vmem:[%s121 + $0xf8] sm:%s113] %v184
                %v186 = vld [vmem:[%s120 + $0x100] sm:%s113]
                %187 = vst [vmem:[%s121 + $0x100] sm:%s113] %v186
                %v188 = vld [vmem:[%s120 + $0x108] sm:%s113]
                %189 = vst [vmem:[%s121 + $0x108] sm:%s113] %v188
                %v190 = vld [vmem:[%s120 + $0x110] sm:%s113]
                %191 = vst [vmem:[%s121 + $0x110] sm:%s113] %v190
                %v192 = vld [vmem:[%s120 + $0x118] sm:%s113]
                %193 = vst [vmem:[%s121 + $0x118] sm:%s113] %v192
                %v194 = vld [vmem:[%s120 + $0x120] sm:%s113]
                %195 = vst [vmem:[%s121 + $0x120] sm:%s113] %v194
                %v196 = vld [vmem:[%s120 + $0x128] sm:%s113]
                %197 = vst [vmem:[%s121 + $0x128] sm:%s113] %v196
                %v198 = vld [vmem:[%s120 + $0x130] sm:%s113]
                %199 = vst [vmem:[%s121 + $0x130] sm:%s113] %v198
                %v200 = vld [vmem:[%s120 + $0x138] sm:%s113]
                %201 = vst [vmem:[%s121 + $0x138] sm:%s113] %v200
                %v202 = vld [vmem:[%s120 + $0x140] sm:%s113]
                %203 = vst [vmem:[%s121 + $0x140] sm:%s113] %v202
                %v204 = vld [vmem:[%s120 + $0x148] sm:%s113]
                %205 = vst [vmem:[%s121 + $0x148] sm:%s113] %v204
                %v206 = vld [vmem:[%s120 + $0x150] sm:%s113]
                %207 = vst [vmem:[%s121 + $0x150] sm:%s113] %v206
                %v208 = vld [vmem:[%s120 + $0x158] sm:%s113]
                %209 = vst [vmem:[%s121 + $0x158] sm:%s113] %v208
                %v210 = vld [vmem:[%s120 + $0x160] sm:%s113]
                %211 = vst [vmem:[%s121 + $0x160] sm:%s113] %v210
                %v212 = vld [vmem:[%s120 + $0x168] sm:%s113]
                %213 = vst [vmem:[%s121 + $0x168] sm:%s113] %v212
                %v214 = vld [vmem:[%s120 + $0x170] sm:%s113]
                %215 = vst [vmem:[%s121 + $0x170] sm:%s113] %v214
                %v216 = vld [vmem:[%s120 + $0x178] sm:%s113]
                %217 = vst [vmem:[%s121 + $0x178] sm:%s113] %v216
                %v218 = vld [vmem:[%s120 + $0x180] sm:%s113]
                %219 = vst [vmem:[%s121 + $0x180] sm:%s113] %v218
                %v220 = vld [vmem:[%s120 + $0x188] sm:%s113]
                %221 = vst [vmem:[%s121 + $0x188] sm:%s113] %v220
                %v222 = vld [vmem:[%s120 + $0x190] sm:%s113]
                %223 = vst [vmem:[%s121 + $0x190] sm:%s113] %v222
                %v224 = vld [vmem:[%s120 + $0x198] sm:%s113]
                %225 = vst [vmem:[%s121 + $0x198] sm:%s113] %v224
                %v226 = vld [vmem:[%s120 + $0x1a0] sm:%s113]
                %227 = vst [vmem:[%s121 + $0x1a0] sm:%s113] %v226
                %v228 = vld [vmem:[%s120 + $0x1a8] sm:%s113]
                %229 = vst [vmem:[%s121 + $0x1a8] sm:%s113] %v228
                %v230 = vld [vmem:[%s120 + $0x1b0] sm:%s113]
                %231 = vst [vmem:[%s121 + $0x1b0] sm:%s113] %v230
                %v232 = vld [vmem:[%s120 + $0x1b8] sm:%s113]
                %233 = vst [vmem:[%s121 + $0x1b8] sm:%s113] %v232
                %v234 = vld [vmem:[%s120 + $0x1c0] sm:%s113]
                %235 = vst [vmem:[%s121 + $0x1c0] sm:%s113] %v234
                %v236 = vld [vmem:[%s120 + $0x1c8] sm:%s113]
                %237 = vst [vmem:[%s121 + $0x1c8] sm:%s113] %v236
                %v238 = vld [vmem:[%s120 + $0x1d0] sm:%s113]
                %239 = vst [vmem:[%s121 + $0x1d0] sm:%s113] %v238
                %v240 = vld [vmem:[%s120 + $0x1d8] sm:%s113]
                %241 = vst [vmem:[%s121 + $0x1d8] sm:%s113] %v240
                %v242 = vld [vmem:[%s120 + $0x1e0] sm:%s113]
                %243 = vst [vmem:[%s121 + $0x1e0] sm:%s113] %v242
                %v244 = vld [vmem:[%s120 + $0x1e8] sm:%s113]
                %245 = vst [vmem:[%s121 + $0x1e8] sm:%s113] %v244
                %v246 = vld [vmem:[%s120 + $0x1f0] sm:%s113]
                %247 = vst [vmem:[%s121 + $0x1f0] sm:%s113] %v246
                %v248 = vld [vmem:[%s120 + $0x1f8] sm:%s113]
                %249 = vst [vmem:[%s121 + $0x1f8] sm:%s113] %v248
                %v250 = vld [vmem:[%s120 + $0x800] sm:%s113]
                %251 = vst [vmem:[%s121 + $0x200] sm:%s113] %v250
                %v252 = vld [vmem:[%s120 + $0x808] sm:%s113]
                %253 = vst [vmem:[%s121 + $0x208] sm:%s113] %v252
                %v254 = vld [vmem:[%s120 + $0x810] sm:%s113]
                %255 = vst [vmem:[%s121 + $0x210] sm:%s113] %v254
                %v256 = vld [vmem:[%s120 + $0x818] sm:%s113]
                %257 = vst [vmem:[%s121 + $0x218] sm:%s113] %v256
                %v258 = vld [vmem:[%s120 + $0x820] sm:%s113]
                %259 = vst [vmem:[%s121 + $0x220] sm:%s113] %v258
                %v260 = vld [vmem:[%s120 + $0x828] sm:%s113]
                %261 = vst [vmem:[%s121 + $0x228] sm:%s113] %v260
                %v262 = vld [vmem:[%s120 + $0x830] sm:%s113]
                %263 = vst [vmem:[%s121 + $0x230] sm:%s113] %v262
                %v264 = vld [vmem:[%s120 + $0x838] sm:%s113]
                %265 = vst [vmem:[%s121 + $0x238] sm:%s113] %v264
                %v266 = vld [vmem:[%s120 + $0x840] sm:%s113]
                %267 = vst [vmem:[%s121 + $0x240] sm:%s113] %v266
                %v268 = vld [vmem:[%s120 + $0x848] sm:%s113]
                %269 = vst [vmem:[%s121 + $0x248] sm:%s113] %v268
                %v270 = vld [vmem:[%s120 + $0x850] sm:%s113]
                %271 = vst [vmem:[%s121 + $0x250] sm:%s113] %v270
                %v272 = vld [vmem:[%s120 + $0x858] sm:%s113]
                %273 = vst [vmem:[%s121 + $0x258] sm:%s113] %v272
                %v274 = vld [vmem:[%s120 + $0x860] sm:%s113]
                %275 = vst [vmem:[%s121 + $0x260] sm:%s113] %v274
                %v276 = vld [vmem:[%s120 + $0x868] sm:%s113]
                %277 = vst [vmem:[%s121 + $0x268] sm:%s113] %v276
                %v278 = vld [vmem:[%s120 + $0x870] sm:%s113]
                %279 = vst [vmem:[%s121 + $0x270] sm:%s113] %v278
                %v280 = vld [vmem:[%s120 + $0x878] sm:%s113]
                %281 = vst [vmem:[%s121 + $0x278] sm:%s113] %v280
                %v282 = vld [vmem:[%s120 + $0x880] sm:%s113]
                %283 = vst [vmem:[%s121 + $0x280] sm:%s113] %v282
                %v284 = vld [vmem:[%s120 + $0x888] sm:%s113]
                %285 = vst [vmem:[%s121 + $0x288] sm:%s113] %v284
                %v286 = vld [vmem:[%s120 + $0x890] sm:%s113]
                %287 = vst [vmem:[%s121 + $0x290] sm:%s113] %v286
                %v288 = vld [vmem:[%s120 + $0x898] sm:%s113]
                %289 = vst [vmem:[%s121 + $0x298] sm:%s113] %v288
                %v290 = vld [vmem:[%s120 + $0x8a0] sm:%s113]
                %291 = vst [vmem:[%s121 + $0x2a0] sm:%s113] %v290
                %v292 = vld [vmem:[%s120 + $0x8a8] sm:%s113]
                %293 = vst [vmem:[%s121 + $0x2a8] sm:%s113] %v292
                %v294 = vld [vmem:[%s120 + $0x8b0] sm:%s113]
                %295 = vst [vmem:[%s121 + $0x2b0] sm:%s113] %v294
                %v296 = vld [vmem:[%s120 + $0x8b8] sm:%s113]
                %297 = vst [vmem:[%s121 + $0x2b8] sm:%s113] %v296
                %v298 = vld [vmem:[%s120 + $0x8c0] sm:%s113]
                %299 = vst [vmem:[%s121 + $0x2c0] sm:%s113] %v298
                %v300 = vld [vmem:[%s120 + $0x8c8] sm:%s113]
                %301 = vst [vmem:[%s121 + $0x2c8] sm:%s113] %v300
                %v302 = vld [vmem:[%s120 + $0x8d0] sm:%s113]
                %303 = vst [vmem:[%s121 + $0x2d0] sm:%s113] %v302
                %v304 = vld [vmem:[%s120 + $0x8d8] sm:%s113]
                %305 = vst [vmem:[%s121 + $0x2d8] sm:%s113] %v304
                %v306 = vld [vmem:[%s120 + $0x8e0] sm:%s113]
                %307 = vst [vmem:[%s121 + $0x2e0] sm:%s113] %v306
                %v308 = vld [vmem:[%s120 + $0x8e8] sm:%s113]
                %309 = vst [vmem:[%s121 + $0x2e8] sm:%s113] %v308
                %v310 = vld [vmem:[%s120 + $0x8f0] sm:%s113]
                %311 = vst [vmem:[%s121 + $0x2f0] sm:%s113] %v310
                %v312 = vld [vmem:[%s120 + $0x8f8] sm:%s113]
                %313 = vst [vmem:[%s121 + $0x2f8] sm:%s113] %v312
                %v314 = vld [vmem:[%s120 + $0x900] sm:%s113]
                %315 = vst [vmem:[%s121 + $0x300] sm:%s113] %v314
                %v316 = vld [vmem:[%s120 + $0x908] sm:%s113]
                %317 = vst [vmem:[%s121 + $0x308] sm:%s113] %v316
                %v318 = vld [vmem:[%s120 + $0x910] sm:%s113]
                %319 = vst [vmem:[%s121 + $0x310] sm:%s113] %v318
                %v320 = vld [vmem:[%s120 + $0x918] sm:%s113]
                %321 = vst [vmem:[%s121 + $0x318] sm:%s113] %v320
                %v322 = vld [vmem:[%s120 + $0x920] sm:%s113]
                %323 = vst [vmem:[%s121 + $0x320] sm:%s113] %v322
                %v324 = vld [vmem:[%s120 + $0x928] sm:%s113]
                %325 = vst [vmem:[%s121 + $0x328] sm:%s113] %v324
                %v326 = vld [vmem:[%s120 + $0x930] sm:%s113]
                %327 = vst [vmem:[%s121 + $0x330] sm:%s113] %v326
                %v328 = vld [vmem:[%s120 + $0x938] sm:%s113]
                %329 = vst [vmem:[%s121 + $0x338] sm:%s113] %v328
                %v330 = vld [vmem:[%s120 + $0x940] sm:%s113]
                %331 = vst [vmem:[%s121 + $0x340] sm:%s113] %v330
                %v332 = vld [vmem:[%s120 + $0x948] sm:%s113]
                %333 = vst [vmem:[%s121 + $0x348] sm:%s113] %v332
                %v334 = vld [vmem:[%s120 + $0x950] sm:%s113]
                %335 = vst [vmem:[%s121 + $0x350] sm:%s113] %v334
                %v336 = vld [vmem:[%s120 + $0x958] sm:%s113]
                %337 = vst [vmem:[%s121 + $0x358] sm:%s113] %v336
                %v338 = vld [vmem:[%s120 + $0x960] sm:%s113]
                %339 = vst [vmem:[%s121 + $0x360] sm:%s113] %v338
                %v340 = vld [vmem:[%s120 + $0x968] sm:%s113]
                %341 = vst [vmem:[%s121 + $0x368] sm:%s113] %v340
                %v342 = vld [vmem:[%s120 + $0x970] sm:%s113]
                %343 = vst [vmem:[%s121 + $0x370] sm:%s113] %v342
                %v344 = vld [vmem:[%s120 + $0x978] sm:%s113]
                %345 = vst [vmem:[%s121 + $0x378] sm:%s113] %v344
                %v346 = vld [vmem:[%s120 + $0x980] sm:%s113]
                %347 = vst [vmem:[%s121 + $0x380] sm:%s113] %v346
                %v348 = vld [vmem:[%s120 + $0x988] sm:%s113]
                %349 = vst [vmem:[%s121 + $0x388] sm:%s113] %v348
                %v350 = vld [vmem:[%s120 + $0x990] sm:%s113]
                %351 = vst [vmem:[%s121 + $0x390] sm:%s113] %v350
                %v352 = vld [vmem:[%s120 + $0x998] sm:%s113]
                %353 = vst [vmem:[%s121 + $0x398] sm:%s113] %v352
                %v354 = vld [vmem:[%s120 + $0x9a0] sm:%s113]
                %355 = vst [vmem:[%s121 + $0x3a0] sm:%s113] %v354
                %v356 = vld [vmem:[%s120 + $0x9a8] sm:%s113]
                %357 = vst [vmem:[%s121 + $0x3a8] sm:%s113] %v356
                %v358 = vld [vmem:[%s120 + $0x9b0] sm:%s113]
                %359 = vst [vmem:[%s121 + $0x3b0] sm:%s113] %v358
                %v360 = vld [vmem:[%s120 + $0x9b8] sm:%s113]
                %361 = vst [vmem:[%s121 + $0x3b8] sm:%s113] %v360
                %v362 = vld [vmem:[%s120 + $0x9c0] sm:%s113]
                %363 = vst [vmem:[%s121 + $0x3c0] sm:%s113] %v362
                %v364 = vld [vmem:[%s120 + $0x9c8] sm:%s113]
                %365 = vst [vmem:[%s121 + $0x3c8] sm:%s113] %v364
                %v366 = vld [vmem:[%s120 + $0x9d0] sm:%s113]
                %367 = vst [vmem:[%s121 + $0x3d0] sm:%s113] %v366
                %v368 = vld [vmem:[%s120 + $0x9d8] sm:%s113]
                %369 = vst [vmem:[%s121 + $0x3d8] sm:%s113] %v368
                %v370 = vld [vmem:[%s120 + $0x9e0] sm:%s113]
                %371 = vst [vmem:[%s121 + $0x3e0] sm:%s113] %v370
                %v372 = vld [vmem:[%s120 + $0x9e8] sm:%s113]
                %373 = vst [vmem:[%s121 + $0x3e8] sm:%s113] %v372
                %v374 = vld [vmem:[%s120 + $0x9f0] sm:%s113]
                %375 = vst [vmem:[%s121 + $0x3f0] sm:%s113] %v374
                %v376 = vld [vmem:[%s120 + $0x9f8] sm:%s113]
                %377 = vst [vmem:[%s121 + $0x3f8] sm:%s113] %v376
              $region37: #{tpu_custom_call.1} parent=31 // loop_footer
                %s119 = sadd.s32 1, %s115
              $region38: #{tpu_custom_call.1} parent=31 // loop_footer_branch
                %114 = sbr.rel target = $region34
              $region39: #{tpu_custom_call.1} parent=31 // loop_exit
                _
            $region32: #{tpu_custom_call.1} parent=23 // pred_fallthru
              _
          $region24: #{tpu_custom_call.1} parent=19 // pred_fallthru
            _
          %646 = vnop
        $region20: #{tpu_custom_call.1} parent=15 // pred_fallthru
          _
      $region16: #{tpu_custom_call.1} parent=5 // pred_fallthru
        _
      %p647 = scmp.le.s32.totalorder 1, %s10
      %p648 = scmp.lt.s32.totalorder %s10, 5
      %p649 = pnand %p647, %p648
      %p650 = pneg %p649
      // Predicated region
      $region55: #{tpu_custom_call.1} parent=5 // pred_check
        _
      $region56: #{tpu_custom_call.1} parent=5 // pred_check_branch
        %652 = sbr.rel (%p649) target = $region58
      $region57: #{tpu_custom_call.1} parent=5 // pred_region
        %s653 = ssub.s32 %s10, 1
        %s654 = sand.u32 %s37, 1
        %s655 = sand.u32 %s37, 1
        %s656 = smul.addr %s655, 1024
        %s657 = scalar_lea.vmem [#allocation2], %s656
        // Predicated region
        $region59: #{tpu_custom_call.1} parent=57 // pred_check
          %p658 = pneg %p50
        $region60: #{tpu_custom_call.1} parent=57 // pred_check_branch
          %660 = sbr.rel (%p658) target = $region62
        $region61: #{tpu_custom_call.1} parent=57 // pred_region
          _
        $region62: #{tpu_custom_call.1} parent=57 // pred_fallthru
          _
        %s661 = sand.u32 %s37, 1
        %s662 = sand.u32 %s37, 1
        %s663 = smul.addr %s662, 1024
        %s664 = scalar_lea.vmem [#allocation2], %s663
        %p665 = pneg %p50
        %p666 = pneg %p47
        %p667 = pneg %p76
        %p668 = pneg %p73
        %s669 = sand.u32 %s63, 1
        %s670 = scalar_lea.sflag [#allocation4], %s669
        %s671 = sand.u32 %s63, 1
        %s672 = smul.addr %s671, 8
        %s673 = scalar_lea.vmem [#allocation3], %s672
        %s674 = smul.u32 64, %s19
        %s675 = smul.u32 4, %s19
        %v676 = vld [vmem:[%s657] sm:$0xff]
        %v677 = vld [vmem:[%s657 + $0x8] sm:$0xff]
        %v678 = vld [vmem:[%s657 + $0x10] sm:$0xff]
        %v679 = vld [vmem:[%s657 + $0x18] sm:$0xff]
        %v680 = vld [vmem:[%s657 + $0x20] sm:$0xff]
        %v681 = vld [vmem:[%s657 + $0x28] sm:$0xff]
        %v682 = vld [vmem:[%s657 + $0x30] sm:$0xff]
        %v683 = vld [vmem:[%s657 + $0x38] sm:$0xff]
        %v684 = vld [vmem:[%s657 + $0x40] sm:$0xff]
        %v685 = vld [vmem:[%s657 + $0x48] sm:$0xff]
        %v686 = vld [vmem:[%s657 + $0x50] sm:$0xff]
        %v687 = vld [vmem:[%s657 + $0x58] sm:$0xff]
        %v688 = vld [vmem:[%s657 + $0x60] sm:$0xff]
        %v689 = vld [vmem:[%s657 + $0x68] sm:$0xff]
        %v690 = vld [vmem:[%s657 + $0x70] sm:$0xff]
        %v691 = vld [vmem:[%s657 + $0x78] sm:$0xff]
        %v692 = vld [vmem:[%s657 + $0x80] sm:$0xff]
        %v693 = vld [vmem:[%s657 + $0x88] sm:$0xff]
        %v694 = vld [vmem:[%s657 + $0x90] sm:$0xff]
        %v695 = vld [vmem:[%s657 + $0x98] sm:$0xff]
        %v696 = vld [vmem:[%s657 + $0xa0] sm:$0xff]
        %v697 = vld [vmem:[%s657 + $0xa8] sm:$0xff]
        %v698 = vld [vmem:[%s657 + $0xb0] sm:$0xff]
        %v699 = vld [vmem:[%s657 + $0xb8] sm:$0xff]
        %v700 = vld [vmem:[%s657 + $0xc0] sm:$0xff]
        %v701 = vld [vmem:[%s657 + $0xc8] sm:$0xff]
        %v702 = vld [vmem:[%s657 + $0xd0] sm:$0xff]
        %v703 = vld [vmem:[%s657 + $0xd8] sm:$0xff]
        %v704 = vld [vmem:[%s657 + $0xe0] sm:$0xff]
        %v705 = vld [vmem:[%s657 + $0xe8] sm:$0xff]
        %v706 = vld [vmem:[%s657 + $0xf0] sm:$0xff]
        %v707 = vld [vmem:[%s657 + $0xf8] sm:$0xff]
        %v708 = vld [vmem:[%s657 + $0x100] sm:$0xff]
        %v709 = vld [vmem:[%s657 + $0x108] sm:$0xff]
        %v710 = vld [vmem:[%s657 + $0x110] sm:$0xff]
        %v711 = vld [vmem:[%s657 + $0x118] sm:$0xff]
        %v712 = vld [vmem:[%s657 + $0x120] sm:$0xff]
        %v713 = vld [vmem:[%s657 + $0x128] sm:$0xff]
        %v714 = vld [vmem:[%s657 + $0x130] sm:$0xff]
        %v715 = vld [vmem:[%s657 + $0x138] sm:$0xff]
        %v716 = vld [vmem:[%s657 + $0x140] sm:$0xff]
        %v717 = vld [vmem:[%s657 + $0x148] sm:$0xff]
        %v718 = vld [vmem:[%s657 + $0x150] sm:$0xff]
        %v719 = vld [vmem:[%s657 + $0x158] sm:$0xff]
        %v720 = vld [vmem:[%s657 + $0x160] sm:$0xff]
        %v721 = vld [vmem:[%s657 + $0x168] sm:$0xff]
        %v722 = vld [vmem:[%s657 + $0x170] sm:$0xff]
        %v723 = vld [vmem:[%s657 + $0x178] sm:$0xff]
        %v724 = vld [vmem:[%s657 + $0x180] sm:$0xff]
        %v725 = vld [vmem:[%s657 + $0x188] sm:$0xff]
        %v726 = vld [vmem:[%s657 + $0x190] sm:$0xff]
        %v727 = vld [vmem:[%s657 + $0x198] sm:$0xff]
        %v728 = vld [vmem:[%s657 + $0x1a0] sm:$0xff]
        %v729 = vld [vmem:[%s657 + $0x1a8] sm:$0xff]
        %v730 = vld [vmem:[%s657 + $0x1b0] sm:$0xff]
        %v731 = vld [vmem:[%s657 + $0x1b8] sm:$0xff]
        %v732 = vld [vmem:[%s657 + $0x1c0] sm:$0xff]
        %v733 = vld [vmem:[%s657 + $0x1c8] sm:$0xff]
        %v734 = vld [vmem:[%s657 + $0x1d0] sm:$0xff]
        %v735 = vld [vmem:[%s657 + $0x1d8] sm:$0xff]
        %v736 = vld [vmem:[%s657 + $0x1e0] sm:$0xff]
        %v737 = vld [vmem:[%s657 + $0x1e8] sm:$0xff]
        %v738 = vld [vmem:[%s657 + $0x1f0] sm:$0xff]
        %v739 = vld [vmem:[%s657 + $0x1f8] sm:$0xff]
        %v740 = vld [vmem:[%s657 + $0x200] sm:$0xff]
        %v741 = vld [vmem:[%s657 + $0x208] sm:$0xff]
        %v742 = vld [vmem:[%s657 + $0x210] sm:$0xff]
        %v743 = vld [vmem:[%s657 + $0x218] sm:$0xff]
        %v744 = vld [vmem:[%s657 + $0x220] sm:$0xff]
        %v745 = vld [vmem:[%s657 + $0x228] sm:$0xff]
        %v746 = vld [vmem:[%s657 + $0x230] sm:$0xff]
        %v747 = vld [vmem:[%s657 + $0x238] sm:$0xff]
        %v748 = vld [vmem:[%s657 + $0x240] sm:$0xff]
        %v749 = vld [vmem:[%s657 + $0x248] sm:$0xff]
        %v750 = vld [vmem:[%s657 + $0x250] sm:$0xff]
        %v751 = vld [vmem:[%s657 + $0x258] sm:$0xff]
        %v752 = vld [vmem:[%s657 + $0x260] sm:$0xff]
        %v753 = vld [vmem:[%s657 + $0x268] sm:$0xff]
        %v754 = vld [vmem:[%s657 + $0x270] sm:$0xff]
        %v755 = vld [vmem:[%s657 + $0x278] sm:$0xff]
        %v756 = vld [vmem:[%s657 + $0x280] sm:$0xff]
        %v757 = vld [vmem:[%s657 + $0x288] sm:$0xff]
        %v758 = vld [vmem:[%s657 + $0x290] sm:$0xff]
        %v759 = vld [vmem:[%s657 + $0x298] sm:$0xff]
        %v760 = vld [vmem:[%s657 + $0x2a0] sm:$0xff]
        %v761 = vld [vmem:[%s657 + $0x2a8] sm:$0xff]
        %v762 = vld [vmem:[%s657 + $0x2b0] sm:$0xff]
        %v763 = vld [vmem:[%s657 + $0x2b8] sm:$0xff]
        %v764 = vld [vmem:[%s657 + $0x2c0] sm:$0xff]
        %v765 = vld [vmem:[%s657 + $0x2c8] sm:$0xff]
        %v766 = vld [vmem:[%s657 + $0x2d0] sm:$0xff]
        %v767 = vld [vmem:[%s657 + $0x2d8] sm:$0xff]
        %v768 = vld [vmem:[%s657 + $0x2e0] sm:$0xff]
        %v769 = vld [vmem:[%s657 + $0x2e8] sm:$0xff]
        %v770 = vld [vmem:[%s657 + $0x2f0] sm:$0xff]
        %v771 = vld [vmem:[%s657 + $0x2f8] sm:$0xff]
        %v772 = vld [vmem:[%s657 + $0x300] sm:$0xff]
        %v773 = vld [vmem:[%s657 + $0x308] sm:$0xff]
        %v774 = vld [vmem:[%s657 + $0x310] sm:$0xff]
        %v775 = vld [vmem:[%s657 + $0x318] sm:$0xff]
        %v776 = vld [vmem:[%s657 + $0x320] sm:$0xff]
        %v777 = vld [vmem:[%s657 + $0x328] sm:$0xff]
        %v778 = vld [vmem:[%s657 + $0x330] sm:$0xff]
        %v779 = vld [vmem:[%s657 + $0x338] sm:$0xff]
        %v780 = vld [vmem:[%s657 + $0x340] sm:$0xff]
        %v781 = vld [vmem:[%s657 + $0x348] sm:$0xff]
        %v782 = vld [vmem:[%s657 + $0x350] sm:$0xff]
        %v783 = vld [vmem:[%s657 + $0x358] sm:$0xff]
        %v784 = vld [vmem:[%s657 + $0x360] sm:$0xff]
        %v785 = vld [vmem:[%s657 + $0x368] sm:$0xff]
        %v786 = vld [vmem:[%s657 + $0x370] sm:$0xff]
        %v787 = vld [vmem:[%s657 + $0x378] sm:$0xff]
        %v788 = vld [vmem:[%s657 + $0x380] sm:$0xff]
        %v789 = vld [vmem:[%s657 + $0x388] sm:$0xff]
        %v790 = vld [vmem:[%s657 + $0x390] sm:$0xff]
        %v791 = vld [vmem:[%s657 + $0x398] sm:$0xff]
        %v792 = vld [vmem:[%s657 + $0x3a0] sm:$0xff]
        %v793 = vld [vmem:[%s657 + $0x3a8] sm:$0xff]
        %v794 = vld [vmem:[%s657 + $0x3b0] sm:$0xff]
        %v795 = vld [vmem:[%s657 + $0x3b8] sm:$0xff]
        %v796 = vld [vmem:[%s657 + $0x3c0] sm:$0xff]
        %v797 = vld [vmem:[%s657 + $0x3c8] sm:$0xff]
        %v798 = vld [vmem:[%s657 + $0x3d0] sm:$0xff]
        %v799 = vld [vmem:[%s657 + $0x3d8] sm:$0xff]
        %v800 = vld [vmem:[%s657 + $0x3e0] sm:$0xff]
        %v801 = vld [vmem:[%s657 + $0x3e8] sm:$0xff]
        %v802 = vld [vmem:[%s657 + $0x3f0] sm:$0xff]
        %v803 = vld [vmem:[%s657 + $0x3f8] sm:$0xff]
        %vm804 = vcmask 523264
        %v805 = vsel %vm804, %v676, 0.0
        %806 = vadd.xlane.f32.xlu0 %v805
        %v807 = vpop.xlane.xlu0 %806
        %v808 = vsel %vm804, %v677, 0.0
        %809 = vadd.xlane.f32.xlu0 %v808
        %v810 = vpop.xlane.xlu0 %809
        %v811 = vsel %vm804, %v678, 0.0
        %812 = vadd.xlane.f32.xlu0 %v811
        %v813 = vpop.xlane.xlu0 %812
        %v814 = vsel %vm804, %v679, 0.0
        %815 = vadd.xlane.f32.xlu0 %v814
        %v816 = vpop.xlane.xlu0 %815
        %v817 = vsel %vm804, %v680, 0.0
        %818 = vadd.xlane.f32.xlu0 %v817
        %v819 = vpop.xlane.xlu0 %818
        %v820 = vsel %vm804, %v681, 0.0
        %821 = vadd.xlane.f32.xlu0 %v820
        %v822 = vpop.xlane.xlu0 %821
        %v823 = vsel %vm804, %v682, 0.0
        %824 = vadd.xlane.f32.xlu0 %v823
        %v825 = vpop.xlane.xlu0 %824
        %v826 = vsel %vm804, %v683, 0.0
        %827 = vadd.xlane.f32.xlu0 %v826
        %v828 = vpop.xlane.xlu0 %827
        %v829 = vsel %vm804, %v684, 0.0
        %830 = vadd.xlane.f32.xlu0 %v829
        %v831 = vpop.xlane.xlu0 %830
        %v832 = vsel %vm804, %v685, 0.0
        %833 = vadd.xlane.f32.xlu0 %v832
        %v834 = vpop.xlane.xlu0 %833
        %v835 = vsel %vm804, %v686, 0.0
        %836 = vadd.xlane.f32.xlu0 %v835
        %v837 = vpop.xlane.xlu0 %836
        %v838 = vsel %vm804, %v687, 0.0
        %839 = vadd.xlane.f32.xlu0 %v838
        %v840 = vpop.xlane.xlu0 %839
        %v841 = vsel %vm804, %v688, 0.0
        %842 = vadd.xlane.f32.xlu0 %v841
        %v843 = vpop.xlane.xlu0 %842
        %v844 = vsel %vm804, %v689, 0.0
        %845 = vadd.xlane.f32.xlu0 %v844
        %v846 = vpop.xlane.xlu0 %845
        %v847 = vsel %vm804, %v690, 0.0
        %848 = vadd.xlane.f32.xlu0 %v847
        %v849 = vpop.xlane.xlu0 %848
        %v850 = vsel %vm804, %v691, 0.0
        %851 = vadd.xlane.f32.xlu0 %v850
        %v852 = vpop.xlane.xlu0 %851
        %v853 = vsel %vm804, %v692, 0.0
        %854 = vadd.xlane.f32.xlu0 %v853
        %v855 = vpop.xlane.xlu0 %854
        %v856 = vsel %vm804, %v693, 0.0
        %857 = vadd.xlane.f32.xlu0 %v856
        %v858 = vpop.xlane.xlu0 %857
        %v859 = vsel %vm804, %v694, 0.0
        %860 = vadd.xlane.f32.xlu0 %v859
        %v861 = vpop.xlane.xlu0 %860
        %v862 = vsel %vm804, %v695, 0.0
        %863 = vadd.xlane.f32.xlu0 %v862
        %v864 = vpop.xlane.xlu0 %863
        %v865 = vsel %vm804, %v696, 0.0
        %866 = vadd.xlane.f32.xlu0 %v865
        %v867 = vpop.xlane.xlu0 %866
        %v868 = vsel %vm804, %v697, 0.0
        %869 = vadd.xlane.f32.xlu0 %v868
        %v870 = vpop.xlane.xlu0 %869
        %v871 = vsel %vm804, %v698, 0.0
        %872 = vadd.xlane.f32.xlu0 %v871
        %v873 = vpop.xlane.xlu0 %872
        %v874 = vsel %vm804, %v699, 0.0
        %875 = vadd.xlane.f32.xlu0 %v874
        %v876 = vpop.xlane.xlu0 %875
        %v877 = vsel %vm804, %v700, 0.0
        %878 = vadd.xlane.f32.xlu0 %v877
        %v879 = vpop.xlane.xlu0 %878
        %v880 = vsel %vm804, %v701, 0.0
        %881 = vadd.xlane.f32.xlu0 %v880
        %v882 = vpop.xlane.xlu0 %881
        %v883 = vsel %vm804, %v702, 0.0
        %884 = vadd.xlane.f32.xlu0 %v883
        %v885 = vpop.xlane.xlu0 %884
        %v886 = vsel %vm804, %v703, 0.0
        %887 = vadd.xlane.f32.xlu0 %v886
        %v888 = vpop.xlane.xlu0 %887
        %v889 = vsel %vm804, %v704, 0.0
        %890 = vadd.xlane.f32.xlu0 %v889
        %v891 = vpop.xlane.xlu0 %890
        %v892 = vsel %vm804, %v705, 0.0
        %893 = vadd.xlane.f32.xlu0 %v892
        %v894 = vpop.xlane.xlu0 %893
        %v895 = vsel %vm804, %v706, 0.0
        %896 = vadd.xlane.f32.xlu0 %v895
        %v897 = vpop.xlane.xlu0 %896
        %v898 = vsel %vm804, %v707, 0.0
        %899 = vadd.xlane.f32.xlu0 %v898
        %v900 = vpop.xlane.xlu0 %899
        %v901 = vsel %vm804, %v708, 0.0
        %902 = vadd.xlane.f32.xlu0 %v901
        %v903 = vpop.xlane.xlu0 %902
        %v904 = vsel %vm804, %v709, 0.0
        %905 = vadd.xlane.f32.xlu0 %v904
        %v906 = vpop.xlane.xlu0 %905
        %v907 = vsel %vm804, %v710, 0.0
        %908 = vadd.xlane.f32.xlu0 %v907
        %v909 = vpop.xlane.xlu0 %908
        %v910 = vsel %vm804, %v711, 0.0
        %911 = vadd.xlane.f32.xlu0 %v910
        %v912 = vpop.xlane.xlu0 %911
        %v913 = vsel %vm804, %v712, 0.0
        %914 = vadd.xlane.f32.xlu0 %v913
        %v915 = vpop.xlane.xlu0 %914
        %v916 = vsel %vm804, %v713, 0.0
        %917 = vadd.xlane.f32.xlu0 %v916
        %v918 = vpop.xlane.xlu0 %917
        %v919 = vsel %vm804, %v714, 0.0
        %920 = vadd.xlane.f32.xlu0 %v919
        %v921 = vpop.xlane.xlu0 %920
        %v922 = vsel %vm804, %v715, 0.0
        %923 = vadd.xlane.f32.xlu0 %v922
        %v924 = vpop.xlane.xlu0 %923
        %v925 = vsel %vm804, %v716, 0.0
        %926 = vadd.xlane.f32.xlu0 %v925
        %v927 = vpop.xlane.xlu0 %926
        %v928 = vsel %vm804, %v717, 0.0
        %929 = vadd.xlane.f32.xlu0 %v928
        %v930 = vpop.xlane.xlu0 %929
        %v931 = vsel %vm804, %v718, 0.0
        %932 = vadd.xlane.f32.xlu0 %v931
        %v933 = vpop.xlane.xlu0 %932
        %v934 = vsel %vm804, %v719, 0.0
        %935 = vadd.xlane.f32.xlu0 %v934
        %v936 = vpop.xlane.xlu0 %935
        %v937 = vsel %vm804, %v720, 0.0
        %938 = vadd.xlane.f32.xlu0 %v937
        %v939 = vpop.xlane.xlu0 %938
        %v940 = vsel %vm804, %v721, 0.0
        %941 = vadd.xlane.f32.xlu0 %v940
        %v942 = vpop.xlane.xlu0 %941
        %v943 = vsel %vm804, %v722, 0.0
        %944 = vadd.xlane.f32.xlu0 %v943
        %v945 = vpop.xlane.xlu0 %944
        %v946 = vsel %vm804, %v723, 0.0
        %947 = vadd.xlane.f32.xlu0 %v946
        %v948 = vpop.xlane.xlu0 %947
        %v949 = vsel %vm804, %v724, 0.0
        %950 = vadd.xlane.f32.xlu0 %v949
        %v951 = vpop.xlane.xlu0 %950
        %v952 = vsel %vm804, %v725, 0.0
        %953 = vadd.xlane.f32.xlu0 %v952
        %v954 = vpop.xlane.xlu0 %953
        %v955 = vsel %vm804, %v726, 0.0
        %956 = vadd.xlane.f32.xlu0 %v955
        %v957 = vpop.xlane.xlu0 %956
        %v958 = vsel %vm804, %v727, 0.0
        %959 = vadd.xlane.f32.xlu0 %v958
        %v960 = vpop.xlane.xlu0 %959
        %v961 = vsel %vm804, %v728, 0.0
        %962 = vadd.xlane.f32.xlu0 %v961
        %v963 = vpop.xlane.xlu0 %962
        %v964 = vsel %vm804, %v729, 0.0
        %965 = vadd.xlane.f32.xlu0 %v964
        %v966 = vpop.xlane.xlu0 %965
        %v967 = vsel %vm804, %v730, 0.0
        %968 = vadd.xlane.f32.xlu0 %v967
        %v969 = vpop.xlane.xlu0 %968
        %v970 = vsel %vm804, %v731, 0.0
        %971 = vadd.xlane.f32.xlu0 %v970
        %v972 = vpop.xlane.xlu0 %971
        %v973 = vsel %vm804, %v732, 0.0
        %974 = vadd.xlane.f32.xlu0 %v973
        %v975 = vpop.xlane.xlu0 %974
        %v976 = vsel %vm804, %v733, 0.0
        %977 = vadd.xlane.f32.xlu0 %v976
        %v978 = vpop.xlane.xlu0 %977
        %v979 = vsel %vm804, %v734, 0.0
        %980 = vadd.xlane.f32.xlu0 %v979
        %v981 = vpop.xlane.xlu0 %980
        %v982 = vsel %vm804, %v735, 0.0
        %983 = vadd.xlane.f32.xlu0 %v982
        %v984 = vpop.xlane.xlu0 %983
        %v985 = vsel %vm804, %v736, 0.0
        %986 = vadd.xlane.f32.xlu0 %v985
        %v987 = vpop.xlane.xlu0 %986
        %v988 = vsel %vm804, %v737, 0.0
        %989 = vadd.xlane.f32.xlu0 %v988
        %v990 = vpop.xlane.xlu0 %989
        %v991 = vsel %vm804, %v738, 0.0
        %992 = vadd.xlane.f32.xlu0 %v991
        %v993 = vpop.xlane.xlu0 %992
        %v994 = vsel %vm804, %v739, 0.0
        %995 = vadd.xlane.f32.xlu0 %v994
        %v996 = vpop.xlane.xlu0 %995
        %v997 = vsel %vm804, %v740, 0.0
        %998 = vadd.xlane.f32.xlu0 %v997
        %v999 = vpop.xlane.xlu0 %998
        %v1000 = vsel %vm804, %v741, 0.0
        %1001 = vadd.xlane.f32.xlu0 %v1000
        %v1002 = vpop.xlane.xlu0 %1001
        %v1003 = vsel %vm804, %v742, 0.0
        %1004 = vadd.xlane.f32.xlu0 %v1003
        %v1005 = vpop.xlane.xlu0 %1004
        %v1006 = vsel %vm804, %v743, 0.0
        %1007 = vadd.xlane.f32.xlu0 %v1006
        %v1008 = vpop.xlane.xlu0 %1007
        %v1009 = vsel %vm804, %v744, 0.0
        %1010 = vadd.xlane.f32.xlu0 %v1009
        %v1011 = vpop.xlane.xlu0 %1010
        %v1012 = vsel %vm804, %v745, 0.0
        %1013 = vadd.xlane.f32.xlu0 %v1012
        %v1014 = vpop.xlane.xlu0 %1013
        %v1015 = vsel %vm804, %v746, 0.0
        %1016 = vadd.xlane.f32.xlu0 %v1015
        %v1017 = vpop.xlane.xlu0 %1016
        %v1018 = vsel %vm804, %v747, 0.0
        %1019 = vadd.xlane.f32.xlu0 %v1018
        %v1020 = vpop.xlane.xlu0 %1019
        %v1021 = vsel %vm804, %v748, 0.0
        %1022 = vadd.xlane.f32.xlu0 %v1021
        %v1023 = vpop.xlane.xlu0 %1022
        %v1024 = vsel %vm804, %v749, 0.0
        %1025 = vadd.xlane.f32.xlu0 %v1024
        %v1026 = vpop.xlane.xlu0 %1025
        %v1027 = vsel %vm804, %v750, 0.0
        %1028 = vadd.xlane.f32.xlu0 %v1027
        %v1029 = vpop.xlane.xlu0 %1028
        %v1030 = vsel %vm804, %v751, 0.0
        %1031 = vadd.xlane.f32.xlu0 %v1030
        %v1032 = vpop.xlane.xlu0 %1031
        %v1033 = vsel %vm804, %v752, 0.0
        %1034 = vadd.xlane.f32.xlu0 %v1033
        %v1035 = vpop.xlane.xlu0 %1034
        %v1036 = vsel %vm804, %v753, 0.0
        %1037 = vadd.xlane.f32.xlu0 %v1036
        %v1038 = vpop.xlane.xlu0 %1037
        %v1039 = vsel %vm804, %v754, 0.0
        %1040 = vadd.xlane.f32.xlu0 %v1039
        %v1041 = vpop.xlane.xlu0 %1040
        %v1042 = vsel %vm804, %v755, 0.0
        %1043 = vadd.xlane.f32.xlu0 %v1042
        %v1044 = vpop.xlane.xlu0 %1043
        %v1045 = vsel %vm804, %v756, 0.0
        %1046 = vadd.xlane.f32.xlu0 %v1045
        %v1047 = vpop.xlane.xlu0 %1046
        %v1048 = vsel %vm804, %v757, 0.0
        %1049 = vadd.xlane.f32.xlu0 %v1048
        %v1050 = vpop.xlane.xlu0 %1049
        %v1051 = vsel %vm804, %v758, 0.0
        %1052 = vadd.xlane.f32.xlu0 %v1051
        %v1053 = vpop.xlane.xlu0 %1052
        %v1054 = vsel %vm804, %v759, 0.0
        %1055 = vadd.xlane.f32.xlu0 %v1054
        %v1056 = vpop.xlane.xlu0 %1055
        %v1057 = vsel %vm804, %v760, 0.0
        %1058 = vadd.xlane.f32.xlu0 %v1057
        %v1059 = vpop.xlane.xlu0 %1058
        %v1060 = vsel %vm804, %v761, 0.0
        %1061 = vadd.xlane.f32.xlu0 %v1060
        %v1062 = vpop.xlane.xlu0 %1061
        %v1063 = vsel %vm804, %v762, 0.0
        %1064 = vadd.xlane.f32.xlu0 %v1063
        %v1065 = vpop.xlane.xlu0 %1064
        %v1066 = vsel %vm804, %v763, 0.0
        %1067 = vadd.xlane.f32.xlu0 %v1066
        %v1068 = vpop.xlane.xlu0 %1067
        %v1069 = vsel %vm804, %v764, 0.0
        %1070 = vadd.xlane.f32.xlu0 %v1069
        %v1071 = vpop.xlane.xlu0 %1070
        %v1072 = vsel %vm804, %v765, 0.0
        %1073 = vadd.xlane.f32.xlu0 %v1072
        %v1074 = vpop.xlane.xlu0 %1073
        %v1075 = vsel %vm804, %v766, 0.0
        %1076 = vadd.xlane.f32.xlu0 %v1075
        %v1077 = vpop.xlane.xlu0 %1076
        %v1078 = vsel %vm804, %v767, 0.0
        %1079 = vadd.xlane.f32.xlu0 %v1078
        %v1080 = vpop.xlane.xlu0 %1079
        %v1081 = vsel %vm804, %v768, 0.0
        %1082 = vadd.xlane.f32.xlu0 %v1081
        %v1083 = vpop.xlane.xlu0 %1082
        %v1084 = vsel %vm804, %v769, 0.0
        %1085 = vadd.xlane.f32.xlu0 %v1084
        %v1086 = vpop.xlane.xlu0 %1085
        %v1087 = vsel %vm804, %v770, 0.0
        %1088 = vadd.xlane.f32.xlu0 %v1087
        %v1089 = vpop.xlane.xlu0 %1088
        %v1090 = vsel %vm804, %v771, 0.0
        %1091 = vadd.xlane.f32.xlu0 %v1090
        %v1092 = vpop.xlane.xlu0 %1091
        %v1093 = vsel %vm804, %v772, 0.0
        %1094 = vadd.xlane.f32.xlu0 %v1093
        %v1095 = vpop.xlane.xlu0 %1094
        %v1096 = vsel %vm804, %v773, 0.0
        %1097 = vadd.xlane.f32.xlu0 %v1096
        %v1098 = vpop.xlane.xlu0 %1097
        %v1099 = vsel %vm804, %v774, 0.0
        %1100 = vadd.xlane.f32.xlu0 %v1099
        %v1101 = vpop.xlane.xlu0 %1100
        %v1102 = vsel %vm804, %v775, 0.0
        %1103 = vadd.xlane.f32.xlu0 %v1102
        %v1104 = vpop.xlane.xlu0 %1103
        %v1105 = vsel %vm804, %v776, 0.0
        %1106 = vadd.xlane.f32.xlu0 %v1105
        %v1107 = vpop.xlane.xlu0 %1106
        %v1108 = vsel %vm804, %v777, 0.0
        %1109 = vadd.xlane.f32.xlu0 %v1108
        %v1110 = vpop.xlane.xlu0 %1109
        %v1111 = vsel %vm804, %v778, 0.0
        %1112 = vadd.xlane.f32.xlu0 %v1111
        %v1113 = vpop.xlane.xlu0 %1112
        %v1114 = vsel %vm804, %v779, 0.0
        %1115 = vadd.xlane.f32.xlu0 %v1114
        %v1116 = vpop.xlane.xlu0 %1115
        %v1117 = vsel %vm804, %v780, 0.0
        %1118 = vadd.xlane.f32.xlu0 %v1117
        %v1119 = vpop.xlane.xlu0 %1118
        %v1120 = vsel %vm804, %v781, 0.0
        %1121 = vadd.xlane.f32.xlu0 %v1120
        %v1122 = vpop.xlane.xlu0 %1121
        %v1123 = vsel %vm804, %v782, 0.0
        %1124 = vadd.xlane.f32.xlu0 %v1123
        %v1125 = vpop.xlane.xlu0 %1124
        %v1126 = vsel %vm804, %v783, 0.0
        %1127 = vadd.xlane.f32.xlu0 %v1126
        %v1128 = vpop.xlane.xlu0 %1127
        %v1129 = vsel %vm804, %v784, 0.0
        %1130 = vadd.xlane.f32.xlu0 %v1129
        %v1131 = vpop.xlane.xlu0 %1130
        %v1132 = vsel %vm804, %v785, 0.0
        %1133 = vadd.xlane.f32.xlu0 %v1132
        %v1134 = vpop.xlane.xlu0 %1133
        %v1135 = vsel %vm804, %v786, 0.0
        %1136 = vadd.xlane.f32.xlu0 %v1135
        %v1137 = vpop.xlane.xlu0 %1136
        %v1138 = vsel %vm804, %v787, 0.0
        %1139 = vadd.xlane.f32.xlu0 %v1138
        %v1140 = vpop.xlane.xlu0 %1139
        %v1141 = vsel %vm804, %v788, 0.0
        %1142 = vadd.xlane.f32.xlu0 %v1141
        %v1143 = vpop.xlane.xlu0 %1142
        %v1144 = vsel %vm804, %v789, 0.0
        %1145 = vadd.xlane.f32.xlu0 %v1144
        %v1146 = vpop.xlane.xlu0 %1145
        %v1147 = vsel %vm804, %v790, 0.0
        %1148 = vadd.xlane.f32.xlu0 %v1147
        %v1149 = vpop.xlane.xlu0 %1148
        %v1150 = vsel %vm804, %v791, 0.0
        %1151 = vadd.xlane.f32.xlu0 %v1150
        %v1152 = vpop.xlane.xlu0 %1151
        %v1153 = vsel %vm804, %v792, 0.0
        %1154 = vadd.xlane.f32.xlu0 %v1153
        %v1155 = vpop.xlane.xlu0 %1154
        %v1156 = vsel %vm804, %v793, 0.0
        %1157 = vadd.xlane.f32.xlu0 %v1156
        %v1158 = vpop.xlane.xlu0 %1157
        %v1159 = vsel %vm804, %v794, 0.0
        %1160 = vadd.xlane.f32.xlu0 %v1159
        %v1161 = vpop.xlane.xlu0 %1160
        %v1162 = vsel %vm804, %v795, 0.0
        %1163 = vadd.xlane.f32.xlu0 %v1162
        %v1164 = vpop.xlane.xlu0 %1163
        %v1165 = vsel %vm804, %v796, 0.0
        %1166 = vadd.xlane.f32.xlu0 %v1165
        %v1167 = vpop.xlane.xlu0 %1166
        %v1168 = vsel %vm804, %v797, 0.0
        %1169 = vadd.xlane.f32.xlu0 %v1168
        %v1170 = vpop.xlane.xlu0 %1169
        %v1171 = vsel %vm804, %v798, 0.0
        %1172 = vadd.xlane.f32.xlu0 %v1171
        %v1173 = vpop.xlane.xlu0 %1172
        %v1174 = vsel %vm804, %v799, 0.0
        %1175 = vadd.xlane.f32.xlu0 %v1174
        %v1176 = vpop.xlane.xlu0 %1175
        %v1177 = vsel %vm804, %v800, 0.0
        %1178 = vadd.xlane.f32.xlu0 %v1177
        %v1179 = vpop.xlane.xlu0 %1178
        %v1180 = vsel %vm804, %v801, 0.0
        %1181 = vadd.xlane.f32.xlu0 %v1180
        %v1182 = vpop.xlane.xlu0 %1181
        %v1183 = vsel %vm804, %v802, 0.0
        %1184 = vadd.xlane.f32.xlu0 %v1183
        %v1185 = vpop.xlane.xlu0 %1184
        %v1186 = vsel %vm804, %v803, 0.0
        %1187 = vadd.xlane.f32.xlu0 %v1186
        %v1188 = vpop.xlane.xlu0 %1187
        %v1189 = vmul.f32 %v807, 0.015625
        %v1190 = vmul.f32 %v810, 0.015625
        %v1191 = vmul.f32 %v813, 0.015625
        %v1192 = vmul.f32 %v816, 0.015625
        %v1193 = vmul.f32 %v819, 0.015625
        %v1194 = vmul.f32 %v822, 0.015625
        %v1195 = vmul.f32 %v825, 0.015625
        %v1196 = vmul.f32 %v828, 0.015625
        %v1197 = vmul.f32 %v831, 0.015625
        %v1198 = vmul.f32 %v834, 0.015625
        %v1199 = vmul.f32 %v837, 0.015625
        %v1200 = vmul.f32 %v840, 0.015625
        %v1201 = vmul.f32 %v843, 0.015625
        %v1202 = vmul.f32 %v846, 0.015625
        %v1203 = vmul.f32 %v849, 0.015625
        %v1204 = vmul.f32 %v852, 0.015625
        %v1205 = vmul.f32 %v855, 0.015625
        %v1206 = vmul.f32 %v858, 0.015625
        %v1207 = vmul.f32 %v861, 0.015625
        %v1208 = vmul.f32 %v864, 0.015625
        %v1209 = vmul.f32 %v867, 0.015625
        %v1210 = vmul.f32 %v870, 0.015625
        %v1211 = vmul.f32 %v873, 0.015625
        %v1212 = vmul.f32 %v876, 0.015625
        %v1213 = vmul.f32 %v879, 0.015625
        %v1214 = vmul.f32 %v882, 0.015625
        %v1215 = vmul.f32 %v885, 0.015625
        %v1216 = vmul.f32 %v888, 0.015625
        %v1217 = vmul.f32 %v891, 0.015625
        %v1218 = vmul.f32 %v894, 0.015625
        %v1219 = vmul.f32 %v897, 0.015625
        %v1220 = vmul.f32 %v900, 0.015625
        %v1221 = vmul.f32 %v903, 0.015625
        %v1222 = vmul.f32 %v906, 0.015625
        %v1223 = vmul.f32 %v909, 0.015625
        %v1224 = vmul.f32 %v912, 0.015625
        %v1225 = vmul.f32 %v915, 0.015625
        %v1226 = vmul.f32 %v918, 0.015625
        %v1227 = vmul.f32 %v921, 0.015625
        %v1228 = vmul.f32 %v924, 0.015625
        %v1229 = vmul.f32 %v927, 0.015625
        %v1230 = vmul.f32 %v930, 0.015625
        %v1231 = vmul.f32 %v933, 0.015625
        %v1232 = vmul.f32 %v936, 0.015625
        %v1233 = vmul.f32 %v939, 0.015625
        %v1234 = vmul.f32 %v942, 0.015625
        %v1235 = vmul.f32 %v945, 0.015625
        %v1236 = vmul.f32 %v948, 0.015625
        %v1237 = vmul.f32 %v951, 0.015625
        %v1238 = vmul.f32 %v954, 0.015625
        %v1239 = vmul.f32 %v957, 0.015625
        %v1240 = vmul.f32 %v960, 0.015625
        %v1241 = vmul.f32 %v963, 0.015625
        %v1242 = vmul.f32 %v966, 0.015625
        %v1243 = vmul.f32 %v969, 0.015625
        %v1244 = vmul.f32 %v972, 0.015625
        %v1245 = vmul.f32 %v975, 0.015625
        %v1246 = vmul.f32 %v978, 0.015625
        %v1247 = vmul.f32 %v981, 0.015625
        %v1248 = vmul.f32 %v984, 0.015625
        %v1249 = vmul.f32 %v987, 0.015625
        %v1250 = vmul.f32 %v990, 0.015625
        %v1251 = vmul.f32 %v993, 0.015625
        %v1252 = vmul.f32 %v996, 0.015625
        %v1253 = vmul.f32 %v999, 0.015625
        %v1254 = vmul.f32 %v1002, 0.015625
        %v1255 = vmul.f32 %v1005, 0.015625
        %v1256 = vmul.f32 %v1008, 0.015625
        %v1257 = vmul.f32 %v1011, 0.015625
        %v1258 = vmul.f32 %v1014, 0.015625
        %v1259 = vmul.f32 %v1017, 0.015625
        %v1260 = vmul.f32 %v1020, 0.015625
        %v1261 = vmul.f32 %v1023, 0.015625
        %v1262 = vmul.f32 %v1026, 0.015625
        %v1263 = vmul.f32 %v1029, 0.015625
        %v1264 = vmul.f32 %v1032, 0.015625
        %v1265 = vmul.f32 %v1035, 0.015625
        %v1266 = vmul.f32 %v1038, 0.015625
        %v1267 = vmul.f32 %v1041, 0.015625
        %v1268 = vmul.f32 %v1044, 0.015625
        %v1269 = vmul.f32 %v1047, 0.015625
        %v1270 = vmul.f32 %v1050, 0.015625
        %v1271 = vmul.f32 %v1053, 0.015625
        %v1272 = vmul.f32 %v1056, 0.015625
        %v1273 = vmul.f32 %v1059, 0.015625
        %v1274 = vmul.f32 %v1062, 0.015625
        %v1275 = vmul.f32 %v1065, 0.015625
        %v1276 = vmul.f32 %v1068, 0.015625
        %v1277 = vmul.f32 %v1071, 0.015625
        %v1278 = vmul.f32 %v1074, 0.015625
        %v1279 = vmul.f32 %v1077, 0.015625
        %v1280 = vmul.f32 %v1080, 0.015625
        %v1281 = vmul.f32 %v1083, 0.015625
        %v1282 = vmul.f32 %v1086, 0.015625
        %v1283 = vmul.f32 %v1089, 0.015625
        %v1284 = vmul.f32 %v1092, 0.015625
        %v1285 = vmul.f32 %v1095, 0.015625
        %v1286 = vmul.f32 %v1098, 0.015625
        %v1287 = vmul.f32 %v1101, 0.015625
        %v1288 = vmul.f32 %v1104, 0.015625
        %v1289 = vmul.f32 %v1107, 0.015625
        %v1290 = vmul.f32 %v1110, 0.015625
        %v1291 = vmul.f32 %v1113, 0.015625
        %v1292 = vmul.f32 %v1116, 0.015625
        %v1293 = vmul.f32 %v1119, 0.015625
        %v1294 = vmul.f32 %v1122, 0.015625
        %v1295 = vmul.f32 %v1125, 0.015625
        %v1296 = vmul.f32 %v1128, 0.015625
        %v1297 = vmul.f32 %v1131, 0.015625
        %v1298 = vmul.f32 %v1134, 0.015625
        %v1299 = vmul.f32 %v1137, 0.015625
        %v1300 = vmul.f32 %v1140, 0.015625
        %v1301 = vmul.f32 %v1143, 0.015625
        %v1302 = vmul.f32 %v1146, 0.015625
        %v1303 = vmul.f32 %v1149, 0.015625
        %v1304 = vmul.f32 %v1152, 0.015625
        %v1305 = vmul.f32 %v1155, 0.015625
        %v1306 = vmul.f32 %v1158, 0.015625
        %v1307 = vmul.f32 %v1161, 0.015625
        %v1308 = vmul.f32 %v1164, 0.015625
        %v1309 = vmul.f32 %v1167, 0.015625
        %v1310 = vmul.f32 %v1170, 0.015625
        %v1311 = vmul.f32 %v1173, 0.015625
        %v1312 = vmul.f32 %v1176, 0.015625
        %v1313 = vmul.f32 %v1179, 0.015625
        %v1314 = vmul.f32 %v1182, 0.015625
        %v1315 = vmul.f32 %v1185, 0.015625
        %v1316 = vmul.f32 %v1188, 0.015625
        %v1446 = vunpack.c.l.s4 269488144
        %v1447 = vunpack.c.0.s8 %v1446
        %v1448 = vlaneseq
        %v1449 = vshrl.u32 %v1448, 7
        %v1450 = vsub.s32 %v1447, %v1449
        %v1451 = vrot.slane %v1189, %v1450
        %v1453 = vunpack.c.l.s4 842150450
        %v1454 = vunpack.c.0.s8 %v1453
        %v1455 = vlaneseq
        %v1456 = vshrl.u32 %v1455, 7
        %v1457 = vsub.s32 %v1454, %v1456
        %v1458 = vrot.slane %v1189, %v1457
        %v1460 = vunpack.c.l.s4 1414812756
        %v1461 = vunpack.c.0.s8 %v1460
        %v1462 = vlaneseq
        %v1463 = vshrl.u32 %v1462, 7
        %v1464 = vsub.s32 %v1461, %v1463
        %v1465 = vrot.slane %v1189, %v1464
        %v1467 = vunpack.c.l.s4 1987475062
        %v1468 = vunpack.c.0.s8 %v1467
        %v1469 = vlaneseq
        %v1470 = vshrl.u32 %v1469, 7
        %v1471 = vsub.s32 %v1468, %v1470
        %v1472 = vrot.slane %v1189, %v1471
        %v1474 = vunpack.c.l.s4 269488144
        %v1475 = vunpack.c.0.s8 %v1474
        %v1476 = vlaneseq
        %v1477 = vshrl.u32 %v1476, 7
        %v1478 = vsub.s32 %v1475, %v1477
        %v1479 = vrot.slane %v1190, %v1478
        %v1481 = vunpack.c.l.s4 842150450
        %v1482 = vunpack.c.0.s8 %v1481
        %v1483 = vlaneseq
        %v1484 = vshrl.u32 %v1483, 7
        %v1485 = vsub.s32 %v1482, %v1484
        %v1486 = vrot.slane %v1190, %v1485
        %v1488 = vunpack.c.l.s4 1414812756
        %v1489 = vunpack.c.0.s8 %v1488
        %v1490 = vlaneseq
        %v1491 = vshrl.u32 %v1490, 7
        %v1492 = vsub.s32 %v1489, %v1491
        %v1493 = vrot.slane %v1190, %v1492
        %v1495 = vunpack.c.l.s4 1987475062
        %v1496 = vunpack.c.0.s8 %v1495
        %v1497 = vlaneseq
        %v1498 = vshrl.u32 %v1497, 7
        %v1499 = vsub.s32 %v1496, %v1498
        %v1500 = vrot.slane %v1190, %v1499
        %v1502 = vunpack.c.l.s4 269488144
        %v1503 = vunpack.c.0.s8 %v1502
        %v1504 = vlaneseq
        %v1505 = vshrl.u32 %v1504, 7
        %v1506 = vsub.s32 %v1503, %v1505
        %v1507 = vrot.slane %v1191, %v1506
        %v1509 = vunpack.c.l.s4 842150450
        %v1510 = vunpack.c.0.s8 %v1509
        %v1511 = vlaneseq
        %v1512 = vshrl.u32 %v1511, 7
        %v1513 = vsub.s32 %v1510, %v1512
        %v1514 = vrot.slane %v1191, %v1513
        %v1516 = vunpack.c.l.s4 1414812756
        %v1517 = vunpack.c.0.s8 %v1516
        %v1518 = vlaneseq
        %v1519 = vshrl.u32 %v1518, 7
        %v1520 = vsub.s32 %v1517, %v1519
        %v1521 = vrot.slane %v1191, %v1520
        %v1523 = vunpack.c.l.s4 1987475062
        %v1524 = vunpack.c.0.s8 %v1523
        %v1525 = vlaneseq
        %v1526 = vshrl.u32 %v1525, 7
        %v1527 = vsub.s32 %v1524, %v1526
        %v1528 = vrot.slane %v1191, %v1527
        %v1530 = vunpack.c.l.s4 269488144
        %v1531 = vunpack.c.0.s8 %v1530
        %v1532 = vlaneseq
        %v1533 = vshrl.u32 %v1532, 7
        %v1534 = vsub.s32 %v1531, %v1533
        %v1535 = vrot.slane %v1192, %v1534
        %v1537 = vunpack.c.l.s4 842150450
        %v1538 = vunpack.c.0.s8 %v1537
        %v1539 = vlaneseq
        %v1540 = vshrl.u32 %v1539, 7
        %v1541 = vsub.s32 %v1538, %v1540
        %v1542 = vrot.slane %v1192, %v1541
        %v1544 = vunpack.c.l.s4 1414812756
        %v1545 = vunpack.c.0.s8 %v1544
        %v1546 = vlaneseq
        %v1547 = vshrl.u32 %v1546, 7
        %v1548 = vsub.s32 %v1545, %v1547
        %v1549 = vrot.slane %v1192, %v1548
        %v1551 = vunpack.c.l.s4 1987475062
        %v1552 = vunpack.c.0.s8 %v1551
        %v1553 = vlaneseq
        %v1554 = vshrl.u32 %v1553, 7
        %v1555 = vsub.s32 %v1552, %v1554
        %v1556 = vrot.slane %v1192, %v1555
        %v1558 = vunpack.c.l.s4 269488144
        %v1559 = vunpack.c.0.s8 %v1558
        %v1560 = vlaneseq
        %v1561 = vshrl.u32 %v1560, 7
        %v1562 = vsub.s32 %v1559, %v1561
        %v1563 = vrot.slane %v1193, %v1562
        %v1565 = vunpack.c.l.s4 842150450
        %v1566 = vunpack.c.0.s8 %v1565
        %v1567 = vlaneseq
        %v1568 = vshrl.u32 %v1567, 7
        %v1569 = vsub.s32 %v1566, %v1568
        %v1570 = vrot.slane %v1193, %v1569
        %v1572 = vunpack.c.l.s4 1414812756
        %v1573 = vunpack.c.0.s8 %v1572
        %v1574 = vlaneseq
        %v1575 = vshrl.u32 %v1574, 7
        %v1576 = vsub.s32 %v1573, %v1575
        %v1577 = vrot.slane %v1193, %v1576
        %v1579 = vunpack.c.l.s4 1987475062
        %v1580 = vunpack.c.0.s8 %v1579
        %v1581 = vlaneseq
        %v1582 = vshrl.u32 %v1581, 7
        %v1583 = vsub.s32 %v1580, %v1582
        %v1584 = vrot.slane %v1193, %v1583
        %v1586 = vunpack.c.l.s4 269488144
        %v1587 = vunpack.c.0.s8 %v1586
        %v1588 = vlaneseq
        %v1589 = vshrl.u32 %v1588, 7
        %v1590 = vsub.s32 %v1587, %v1589
        %v1591 = vrot.slane %v1194, %v1590
        %v1593 = vunpack.c.l.s4 842150450
        %v1594 = vunpack.c.0.s8 %v1593
        %v1595 = vlaneseq
        %v1596 = vshrl.u32 %v1595, 7
        %v1597 = vsub.s32 %v1594, %v1596
        %v1598 = vrot.slane %v1194, %v1597
        %v1600 = vunpack.c.l.s4 1414812756
        %v1601 = vunpack.c.0.s8 %v1600
        %v1602 = vlaneseq
        %v1603 = vshrl.u32 %v1602, 7
        %v1604 = vsub.s32 %v1601, %v1603
        %v1605 = vrot.slane %v1194, %v1604
        %v1607 = vunpack.c.l.s4 1987475062
        %v1608 = vunpack.c.0.s8 %v1607
        %v1609 = vlaneseq
        %v1610 = vshrl.u32 %v1609, 7
        %v1611 = vsub.s32 %v1608, %v1610
        %v1612 = vrot.slane %v1194, %v1611
        %v1614 = vunpack.c.l.s4 269488144
        %v1615 = vunpack.c.0.s8 %v1614
        %v1616 = vlaneseq
        %v1617 = vshrl.u32 %v1616, 7
        %v1618 = vsub.s32 %v1615, %v1617
        %v1619 = vrot.slane %v1195, %v1618
        %v1621 = vunpack.c.l.s4 842150450
        %v1622 = vunpack.c.0.s8 %v1621
        %v1623 = vlaneseq
        %v1624 = vshrl.u32 %v1623, 7
        %v1625 = vsub.s32 %v1622, %v1624
        %v1626 = vrot.slane %v1195, %v1625
        %v1628 = vunpack.c.l.s4 1414812756
        %v1629 = vunpack.c.0.s8 %v1628
        %v1630 = vlaneseq
        %v1631 = vshrl.u32 %v1630, 7
        %v1632 = vsub.s32 %v1629, %v1631
        %v1633 = vrot.slane %v1195, %v1632
        %v1635 = vunpack.c.l.s4 1987475062
        %v1636 = vunpack.c.0.s8 %v1635
        %v1637 = vlaneseq
        %v1638 = vshrl.u32 %v1637, 7
        %v1639 = vsub.s32 %v1636, %v1638
        %v1640 = vrot.slane %v1195, %v1639
        %v1642 = vunpack.c.l.s4 269488144
        %v1643 = vunpack.c.0.s8 %v1642
        %v1644 = vlaneseq
        %v1645 = vshrl.u32 %v1644, 7
        %v1646 = vsub.s32 %v1643, %v1645
        %v1647 = vrot.slane %v1196, %v1646
        %v1649 = vunpack.c.l.s4 842150450
        %v1650 = vunpack.c.0.s8 %v1649
        %v1651 = vlaneseq
        %v1652 = vshrl.u32 %v1651, 7
        %v1653 = vsub.s32 %v1650, %v1652
        %v1654 = vrot.slane %v1196, %v1653
        %v1656 = vunpack.c.l.s4 1414812756
        %v1657 = vunpack.c.0.s8 %v1656
        %v1658 = vlaneseq
        %v1659 = vshrl.u32 %v1658, 7
        %v1660 = vsub.s32 %v1657, %v1659
        %v1661 = vrot.slane %v1196, %v1660
        %v1663 = vunpack.c.l.s4 1987475062
        %v1664 = vunpack.c.0.s8 %v1663
        %v1665 = vlaneseq
        %v1666 = vshrl.u32 %v1665, 7
        %v1667 = vsub.s32 %v1664, %v1666
        %v1668 = vrot.slane %v1196, %v1667
        %v1670 = vunpack.c.l.s4 269488144
        %v1671 = vunpack.c.0.s8 %v1670
        %v1672 = vlaneseq
        %v1673 = vshrl.u32 %v1672, 7
        %v1674 = vsub.s32 %v1671, %v1673
        %v1675 = vrot.slane %v1197, %v1674
        %v1677 = vunpack.c.l.s4 842150450
        %v1678 = vunpack.c.0.s8 %v1677
        %v1679 = vlaneseq
        %v1680 = vshrl.u32 %v1679, 7
        %v1681 = vsub.s32 %v1678, %v1680
        %v1682 = vrot.slane %v1197, %v1681
        %v1684 = vunpack.c.l.s4 1414812756
        %v1685 = vunpack.c.0.s8 %v1684
        %v1686 = vlaneseq
        %v1687 = vshrl.u32 %v1686, 7
        %v1688 = vsub.s32 %v1685, %v1687
        %v1689 = vrot.slane %v1197, %v1688
        %v1691 = vunpack.c.l.s4 1987475062
        %v1692 = vunpack.c.0.s8 %v1691
        %v1693 = vlaneseq
        %v1694 = vshrl.u32 %v1693, 7
        %v1695 = vsub.s32 %v1692, %v1694
        %v1696 = vrot.slane %v1197, %v1695
        %v1698 = vunpack.c.l.s4 269488144
        %v1699 = vunpack.c.0.s8 %v1698
        %v1700 = vlaneseq
        %v1701 = vshrl.u32 %v1700, 7
        %v1702 = vsub.s32 %v1699, %v1701
        %v1703 = vrot.slane %v1198, %v1702
        %v1705 = vunpack.c.l.s4 842150450
        %v1706 = vunpack.c.0.s8 %v1705
        %v1707 = vlaneseq
        %v1708 = vshrl.u32 %v1707, 7
        %v1709 = vsub.s32 %v1706, %v1708
        %v1710 = vrot.slane %v1198, %v1709
        %v1712 = vunpack.c.l.s4 1414812756
        %v1713 = vunpack.c.0.s8 %v1712
        %v1714 = vlaneseq
        %v1715 = vshrl.u32 %v1714, 7
        %v1716 = vsub.s32 %v1713, %v1715
        %v1717 = vrot.slane %v1198, %v1716
        %v1719 = vunpack.c.l.s4 1987475062
        %v1720 = vunpack.c.0.s8 %v1719
        %v1721 = vlaneseq
        %v1722 = vshrl.u32 %v1721, 7
        %v1723 = vsub.s32 %v1720, %v1722
        %v1724 = vrot.slane %v1198, %v1723
        %v1726 = vunpack.c.l.s4 269488144
        %v1727 = vunpack.c.0.s8 %v1726
        %v1728 = vlaneseq
        %v1729 = vshrl.u32 %v1728, 7
        %v1730 = vsub.s32 %v1727, %v1729
        %v1731 = vrot.slane %v1199, %v1730
        %v1733 = vunpack.c.l.s4 842150450
        %v1734 = vunpack.c.0.s8 %v1733
        %v1735 = vlaneseq
        %v1736 = vshrl.u32 %v1735, 7
        %v1737 = vsub.s32 %v1734, %v1736
        %v1738 = vrot.slane %v1199, %v1737
        %v1740 = vunpack.c.l.s4 1414812756
        %v1741 = vunpack.c.0.s8 %v1740
        %v1742 = vlaneseq
        %v1743 = vshrl.u32 %v1742, 7
        %v1744 = vsub.s32 %v1741, %v1743
        %v1745 = vrot.slane %v1199, %v1744
        %v1747 = vunpack.c.l.s4 1987475062
        %v1748 = vunpack.c.0.s8 %v1747
        %v1749 = vlaneseq
        %v1750 = vshrl.u32 %v1749, 7
        %v1751 = vsub.s32 %v1748, %v1750
        %v1752 = vrot.slane %v1199, %v1751
        %v1754 = vunpack.c.l.s4 269488144
        %v1755 = vunpack.c.0.s8 %v1754
        %v1756 = vlaneseq
        %v1757 = vshrl.u32 %v1756, 7
        %v1758 = vsub.s32 %v1755, %v1757
        %v1759 = vrot.slane %v1200, %v1758
        %v1761 = vunpack.c.l.s4 842150450
        %v1762 = vunpack.c.0.s8 %v1761
        %v1763 = vlaneseq
        %v1764 = vshrl.u32 %v1763, 7
        %v1765 = vsub.s32 %v1762, %v1764
        %v1766 = vrot.slane %v1200, %v1765
        %v1768 = vunpack.c.l.s4 1414812756
        %v1769 = vunpack.c.0.s8 %v1768
        %v1770 = vlaneseq
        %v1771 = vshrl.u32 %v1770, 7
        %v1772 = vsub.s32 %v1769, %v1771
        %v1773 = vrot.slane %v1200, %v1772
        %v1775 = vunpack.c.l.s4 1987475062
        %v1776 = vunpack.c.0.s8 %v1775
        %v1777 = vlaneseq
        %v1778 = vshrl.u32 %v1777, 7
        %v1779 = vsub.s32 %v1776, %v1778
        %v1780 = vrot.slane %v1200, %v1779
        %v1782 = vunpack.c.l.s4 269488144
        %v1783 = vunpack.c.0.s8 %v1782
        %v1784 = vlaneseq
        %v1785 = vshrl.u32 %v1784, 7
        %v1786 = vsub.s32 %v1783, %v1785
        %v1787 = vrot.slane %v1201, %v1786
        %v1789 = vunpack.c.l.s4 842150450
        %v1790 = vunpack.c.0.s8 %v1789
        %v1791 = vlaneseq
        %v1792 = vshrl.u32 %v1791, 7
        %v1793 = vsub.s32 %v1790, %v1792
        %v1794 = vrot.slane %v1201, %v1793
        %v1796 = vunpack.c.l.s4 1414812756
        %v1797 = vunpack.c.0.s8 %v1796
        %v1798 = vlaneseq
        %v1799 = vshrl.u32 %v1798, 7
        %v1800 = vsub.s32 %v1797, %v1799
        %v1801 = vrot.slane %v1201, %v1800
        %v1803 = vunpack.c.l.s4 1987475062
        %v1804 = vunpack.c.0.s8 %v1803
        %v1805 = vlaneseq
        %v1806 = vshrl.u32 %v1805, 7
        %v1807 = vsub.s32 %v1804, %v1806
        %v1808 = vrot.slane %v1201, %v1807
        %v1810 = vunpack.c.l.s4 269488144
        %v1811 = vunpack.c.0.s8 %v1810
        %v1812 = vlaneseq
        %v1813 = vshrl.u32 %v1812, 7
        %v1814 = vsub.s32 %v1811, %v1813
        %v1815 = vrot.slane %v1202, %v1814
        %v1817 = vunpack.c.l.s4 842150450
        %v1818 = vunpack.c.0.s8 %v1817
        %v1819 = vlaneseq
        %v1820 = vshrl.u32 %v1819, 7
        %v1821 = vsub.s32 %v1818, %v1820
        %v1822 = vrot.slane %v1202, %v1821
        %v1824 = vunpack.c.l.s4 1414812756
        %v1825 = vunpack.c.0.s8 %v1824
        %v1826 = vlaneseq
        %v1827 = vshrl.u32 %v1826, 7
        %v1828 = vsub.s32 %v1825, %v1827
        %v1829 = vrot.slane %v1202, %v1828
        %v1831 = vunpack.c.l.s4 1987475062
        %v1832 = vunpack.c.0.s8 %v1831
        %v1833 = vlaneseq
        %v1834 = vshrl.u32 %v1833, 7
        %v1835 = vsub.s32 %v1832, %v1834
        %v1836 = vrot.slane %v1202, %v1835
        %v1838 = vunpack.c.l.s4 269488144
        %v1839 = vunpack.c.0.s8 %v1838
        %v1840 = vlaneseq
        %v1841 = vshrl.u32 %v1840, 7
        %v1842 = vsub.s32 %v1839, %v1841
        %v1843 = vrot.slane %v1203, %v1842
        %v1845 = vunpack.c.l.s4 842150450
        %v1846 = vunpack.c.0.s8 %v1845
        %v1847 = vlaneseq
        %v1848 = vshrl.u32 %v1847, 7
        %v1849 = vsub.s32 %v1846, %v1848
        %v1850 = vrot.slane %v1203, %v1849
        %v1852 = vunpack.c.l.s4 1414812756
        %v1853 = vunpack.c.0.s8 %v1852
        %v1854 = vlaneseq
        %v1855 = vshrl.u32 %v1854, 7
        %v1856 = vsub.s32 %v1853, %v1855
        %v1857 = vrot.slane %v1203, %v1856
        %v1859 = vunpack.c.l.s4 1987475062
        %v1860 = vunpack.c.0.s8 %v1859
        %v1861 = vlaneseq
        %v1862 = vshrl.u32 %v1861, 7
        %v1863 = vsub.s32 %v1860, %v1862
        %v1864 = vrot.slane %v1203, %v1863
        %v1866 = vunpack.c.l.s4 269488144
        %v1867 = vunpack.c.0.s8 %v1866
        %v1868 = vlaneseq
        %v1869 = vshrl.u32 %v1868, 7
        %v1870 = vsub.s32 %v1867, %v1869
        %v1871 = vrot.slane %v1204, %v1870
        %v1873 = vunpack.c.l.s4 842150450
        %v1874 = vunpack.c.0.s8 %v1873
        %v1875 = vlaneseq
        %v1876 = vshrl.u32 %v1875, 7
        %v1877 = vsub.s32 %v1874, %v1876
        %v1878 = vrot.slane %v1204, %v1877
        %v1880 = vunpack.c.l.s4 1414812756
        %v1881 = vunpack.c.0.s8 %v1880
        %v1882 = vlaneseq
        %v1883 = vshrl.u32 %v1882, 7
        %v1884 = vsub.s32 %v1881, %v1883
        %v1885 = vrot.slane %v1204, %v1884
        %v1887 = vunpack.c.l.s4 1987475062
        %v1888 = vunpack.c.0.s8 %v1887
        %v1889 = vlaneseq
        %v1890 = vshrl.u32 %v1889, 7
        %v1891 = vsub.s32 %v1888, %v1890
        %v1892 = vrot.slane %v1204, %v1891
        %v1894 = vunpack.c.l.s4 269488144
        %v1895 = vunpack.c.0.s8 %v1894
        %v1896 = vlaneseq
        %v1897 = vshrl.u32 %v1896, 7
        %v1898 = vsub.s32 %v1895, %v1897
        %v1899 = vrot.slane %v1205, %v1898
        %v1901 = vunpack.c.l.s4 842150450
        %v1902 = vunpack.c.0.s8 %v1901
        %v1903 = vlaneseq
        %v1904 = vshrl.u32 %v1903, 7
        %v1905 = vsub.s32 %v1902, %v1904
        %v1906 = vrot.slane %v1205, %v1905
        %v1908 = vunpack.c.l.s4 1414812756
        %v1909 = vunpack.c.0.s8 %v1908
        %v1910 = vlaneseq
        %v1911 = vshrl.u32 %v1910, 7
        %v1912 = vsub.s32 %v1909, %v1911
        %v1913 = vrot.slane %v1205, %v1912
        %v1915 = vunpack.c.l.s4 1987475062
        %v1916 = vunpack.c.0.s8 %v1915
        %v1917 = vlaneseq
        %v1918 = vshrl.u32 %v1917, 7
        %v1919 = vsub.s32 %v1916, %v1918
        %v1920 = vrot.slane %v1205, %v1919
        %v1922 = vunpack.c.l.s4 269488144
        %v1923 = vunpack.c.0.s8 %v1922
        %v1924 = vlaneseq
        %v1925 = vshrl.u32 %v1924, 7
        %v1926 = vsub.s32 %v1923, %v1925
        %v1927 = vrot.slane %v1206, %v1926
        %v1929 = vunpack.c.l.s4 842150450
        %v1930 = vunpack.c.0.s8 %v1929
        %v1931 = vlaneseq
        %v1932 = vshrl.u32 %v1931, 7
        %v1933 = vsub.s32 %v1930, %v1932
        %v1934 = vrot.slane %v1206, %v1933
        %v1936 = vunpack.c.l.s4 1414812756
        %v1937 = vunpack.c.0.s8 %v1936
        %v1938 = vlaneseq
        %v1939 = vshrl.u32 %v1938, 7
        %v1940 = vsub.s32 %v1937, %v1939
        %v1941 = vrot.slane %v1206, %v1940
        %v1943 = vunpack.c.l.s4 1987475062
        %v1944 = vunpack.c.0.s8 %v1943
        %v1945 = vlaneseq
        %v1946 = vshrl.u32 %v1945, 7
        %v1947 = vsub.s32 %v1944, %v1946
        %v1948 = vrot.slane %v1206, %v1947
        %v1950 = vunpack.c.l.s4 269488144
        %v1951 = vunpack.c.0.s8 %v1950
        %v1952 = vlaneseq
        %v1953 = vshrl.u32 %v1952, 7
        %v1954 = vsub.s32 %v1951, %v1953
        %v1955 = vrot.slane %v1207, %v1954
        %v1957 = vunpack.c.l.s4 842150450
        %v1958 = vunpack.c.0.s8 %v1957
        %v1959 = vlaneseq
        %v1960 = vshrl.u32 %v1959, 7
        %v1961 = vsub.s32 %v1958, %v1960
        %v1962 = vrot.slane %v1207, %v1961
        %v1964 = vunpack.c.l.s4 1414812756
        %v1965 = vunpack.c.0.s8 %v1964
        %v1966 = vlaneseq
        %v1967 = vshrl.u32 %v1966, 7
        %v1968 = vsub.s32 %v1965, %v1967
        %v1969 = vrot.slane %v1207, %v1968
        %v1971 = vunpack.c.l.s4 1987475062
        %v1972 = vunpack.c.0.s8 %v1971
        %v1973 = vlaneseq
        %v1974 = vshrl.u32 %v1973, 7
        %v1975 = vsub.s32 %v1972, %v1974
        %v1976 = vrot.slane %v1207, %v1975
        %v1978 = vunpack.c.l.s4 269488144
        %v1979 = vunpack.c.0.s8 %v1978
        %v1980 = vlaneseq
        %v1981 = vshrl.u32 %v1980, 7
        %v1982 = vsub.s32 %v1979, %v1981
        %v1983 = vrot.slane %v1208, %v1982
        %v1985 = vunpack.c.l.s4 842150450
        %v1986 = vunpack.c.0.s8 %v1985
        %v1987 = vlaneseq
        %v1988 = vshrl.u32 %v1987, 7
        %v1989 = vsub.s32 %v1986, %v1988
        %v1990 = vrot.slane %v1208, %v1989
        %v1992 = vunpack.c.l.s4 1414812756
        %v1993 = vunpack.c.0.s8 %v1992
        %v1994 = vlaneseq
        %v1995 = vshrl.u32 %v1994, 7
        %v1996 = vsub.s32 %v1993, %v1995
        %v1997 = vrot.slane %v1208, %v1996
        %v1999 = vunpack.c.l.s4 1987475062
        %v2000 = vunpack.c.0.s8 %v1999
        %v2001 = vlaneseq
        %v2002 = vshrl.u32 %v2001, 7
        %v2003 = vsub.s32 %v2000, %v2002
        %v2004 = vrot.slane %v1208, %v2003
        %v2006 = vunpack.c.l.s4 269488144
        %v2007 = vunpack.c.0.s8 %v2006
        %v2008 = vlaneseq
        %v2009 = vshrl.u32 %v2008, 7
        %v2010 = vsub.s32 %v2007, %v2009
        %v2011 = vrot.slane %v1209, %v2010
        %v2013 = vunpack.c.l.s4 842150450
        %v2014 = vunpack.c.0.s8 %v2013
        %v2015 = vlaneseq
        %v2016 = vshrl.u32 %v2015, 7
        %v2017 = vsub.s32 %v2014, %v2016
        %v2018 = vrot.slane %v1209, %v2017
        %v2020 = vunpack.c.l.s4 1414812756
        %v2021 = vunpack.c.0.s8 %v2020
        %v2022 = vlaneseq
        %v2023 = vshrl.u32 %v2022, 7
        %v2024 = vsub.s32 %v2021, %v2023
        %v2025 = vrot.slane %v1209, %v2024
        %v2027 = vunpack.c.l.s4 1987475062
        %v2028 = vunpack.c.0.s8 %v2027
        %v2029 = vlaneseq
        %v2030 = vshrl.u32 %v2029, 7
        %v2031 = vsub.s32 %v2028, %v2030
        %v2032 = vrot.slane %v1209, %v2031
        %v2034 = vunpack.c.l.s4 269488144
        %v2035 = vunpack.c.0.s8 %v2034
        %v2036 = vlaneseq
        %v2037 = vshrl.u32 %v2036, 7
        %v2038 = vsub.s32 %v2035, %v2037
        %v2039 = vrot.slane %v1210, %v2038
        %v2041 = vunpack.c.l.s4 842150450
        %v2042 = vunpack.c.0.s8 %v2041
        %v2043 = vlaneseq
        %v2044 = vshrl.u32 %v2043, 7
        %v2045 = vsub.s32 %v2042, %v2044
        %v2046 = vrot.slane %v1210, %v2045
        %v2048 = vunpack.c.l.s4 1414812756
        %v2049 = vunpack.c.0.s8 %v2048
        %v2050 = vlaneseq
        %v2051 = vshrl.u32 %v2050, 7
        %v2052 = vsub.s32 %v2049, %v2051
        %v2053 = vrot.slane %v1210, %v2052
        %v2055 = vunpack.c.l.s4 1987475062
        %v2056 = vunpack.c.0.s8 %v2055
        %v2057 = vlaneseq
        %v2058 = vshrl.u32 %v2057, 7
        %v2059 = vsub.s32 %v2056, %v2058
        %v2060 = vrot.slane %v1210, %v2059
        %v2062 = vunpack.c.l.s4 269488144
        %v2063 = vunpack.c.0.s8 %v2062
        %v2064 = vlaneseq
        %v2065 = vshrl.u32 %v2064, 7
        %v2066 = vsub.s32 %v2063, %v2065
        %v2067 = vrot.slane %v1211, %v2066
        %v2069 = vunpack.c.l.s4 842150450
        %v2070 = vunpack.c.0.s8 %v2069
        %v2071 = vlaneseq
        %v2072 = vshrl.u32 %v2071, 7
        %v2073 = vsub.s32 %v2070, %v2072
        %v2074 = vrot.slane %v1211, %v2073
        %v2076 = vunpack.c.l.s4 1414812756
        %v2077 = vunpack.c.0.s8 %v2076
        %v2078 = vlaneseq
        %v2079 = vshrl.u32 %v2078, 7
        %v2080 = vsub.s32 %v2077, %v2079
        %v2081 = vrot.slane %v1211, %v2080
        %v2083 = vunpack.c.l.s4 1987475062
        %v2084 = vunpack.c.0.s8 %v2083
        %v2085 = vlaneseq
        %v2086 = vshrl.u32 %v2085, 7
        %v2087 = vsub.s32 %v2084, %v2086
        %v2088 = vrot.slane %v1211, %v2087
        %v2090 = vunpack.c.l.s4 269488144
        %v2091 = vunpack.c.0.s8 %v2090
        %v2092 = vlaneseq
        %v2093 = vshrl.u32 %v2092, 7
        %v2094 = vsub.s32 %v2091, %v2093
        %v2095 = vrot.slane %v1212, %v2094
        %v2097 = vunpack.c.l.s4 842150450
        %v2098 = vunpack.c.0.s8 %v2097
        %v2099 = vlaneseq
        %v2100 = vshrl.u32 %v2099, 7
        %v2101 = vsub.s32 %v2098, %v2100
        %v2102 = vrot.slane %v1212, %v2101
        %v2104 = vunpack.c.l.s4 1414812756
        %v2105 = vunpack.c.0.s8 %v2104
        %v2106 = vlaneseq
        %v2107 = vshrl.u32 %v2106, 7
        %v2108 = vsub.s32 %v2105, %v2107
        %v2109 = vrot.slane %v1212, %v2108
        %v2111 = vunpack.c.l.s4 1987475062
        %v2112 = vunpack.c.0.s8 %v2111
        %v2113 = vlaneseq
        %v2114 = vshrl.u32 %v2113, 7
        %v2115 = vsub.s32 %v2112, %v2114
        %v2116 = vrot.slane %v1212, %v2115
        %v2118 = vunpack.c.l.s4 269488144
        %v2119 = vunpack.c.0.s8 %v2118
        %v2120 = vlaneseq
        %v2121 = vshrl.u32 %v2120, 7
        %v2122 = vsub.s32 %v2119, %v2121
        %v2123 = vrot.slane %v1213, %v2122
        %v2125 = vunpack.c.l.s4 842150450
        %v2126 = vunpack.c.0.s8 %v2125
        %v2127 = vlaneseq
        %v2128 = vshrl.u32 %v2127, 7
        %v2129 = vsub.s32 %v2126, %v2128
        %v2130 = vrot.slane %v1213, %v2129
        %v2132 = vunpack.c.l.s4 1414812756
        %v2133 = vunpack.c.0.s8 %v2132
        %v2134 = vlaneseq
        %v2135 = vshrl.u32 %v2134, 7
        %v2136 = vsub.s32 %v2133, %v2135
        %v2137 = vrot.slane %v1213, %v2136
        %v2139 = vunpack.c.l.s4 1987475062
        %v2140 = vunpack.c.0.s8 %v2139
        %v2141 = vlaneseq
        %v2142 = vshrl.u32 %v2141, 7
        %v2143 = vsub.s32 %v2140, %v2142
        %v2144 = vrot.slane %v1213, %v2143
        %v2146 = vunpack.c.l.s4 269488144
        %v2147 = vunpack.c.0.s8 %v2146
        %v2148 = vlaneseq
        %v2149 = vshrl.u32 %v2148, 7
        %v2150 = vsub.s32 %v2147, %v2149
        %v2151 = vrot.slane %v1214, %v2150
        %v2153 = vunpack.c.l.s4 842150450
        %v2154 = vunpack.c.0.s8 %v2153
        %v2155 = vlaneseq
        %v2156 = vshrl.u32 %v2155, 7
        %v2157 = vsub.s32 %v2154, %v2156
        %v2158 = vrot.slane %v1214, %v2157
        %v2160 = vunpack.c.l.s4 1414812756
        %v2161 = vunpack.c.0.s8 %v2160
        %v2162 = vlaneseq
        %v2163 = vshrl.u32 %v2162, 7
        %v2164 = vsub.s32 %v2161, %v2163
        %v2165 = vrot.slane %v1214, %v2164
        %v2167 = vunpack.c.l.s4 1987475062
        %v2168 = vunpack.c.0.s8 %v2167
        %v2169 = vlaneseq
        %v2170 = vshrl.u32 %v2169, 7
        %v2171 = vsub.s32 %v2168, %v2170
        %v2172 = vrot.slane %v1214, %v2171
        %v2174 = vunpack.c.l.s4 269488144
        %v2175 = vunpack.c.0.s8 %v2174
        %v2176 = vlaneseq
        %v2177 = vshrl.u32 %v2176, 7
        %v2178 = vsub.s32 %v2175, %v2177
        %v2179 = vrot.slane %v1215, %v2178
        %v2181 = vunpack.c.l.s4 842150450
        %v2182 = vunpack.c.0.s8 %v2181
        %v2183 = vlaneseq
        %v2184 = vshrl.u32 %v2183, 7
        %v2185 = vsub.s32 %v2182, %v2184
        %v2186 = vrot.slane %v1215, %v2185
        %v2188 = vunpack.c.l.s4 1414812756
        %v2189 = vunpack.c.0.s8 %v2188
        %v2190 = vlaneseq
        %v2191 = vshrl.u32 %v2190, 7
        %v2192 = vsub.s32 %v2189, %v2191
        %v2193 = vrot.slane %v1215, %v2192
        %v2195 = vunpack.c.l.s4 1987475062
        %v2196 = vunpack.c.0.s8 %v2195
        %v2197 = vlaneseq
        %v2198 = vshrl.u32 %v2197, 7
        %v2199 = vsub.s32 %v2196, %v2198
        %v2200 = vrot.slane %v1215, %v2199
        %v2202 = vunpack.c.l.s4 269488144
        %v2203 = vunpack.c.0.s8 %v2202
        %v2204 = vlaneseq
        %v2205 = vshrl.u32 %v2204, 7
        %v2206 = vsub.s32 %v2203, %v2205
        %v2207 = vrot.slane %v1216, %v2206
        %v2209 = vunpack.c.l.s4 842150450
        %v2210 = vunpack.c.0.s8 %v2209
        %v2211 = vlaneseq
        %v2212 = vshrl.u32 %v2211, 7
        %v2213 = vsub.s32 %v2210, %v2212
        %v2214 = vrot.slane %v1216, %v2213
        %v2216 = vunpack.c.l.s4 1414812756
        %v2217 = vunpack.c.0.s8 %v2216
        %v2218 = vlaneseq
        %v2219 = vshrl.u32 %v2218, 7
        %v2220 = vsub.s32 %v2217, %v2219
        %v2221 = vrot.slane %v1216, %v2220
        %v2223 = vunpack.c.l.s4 1987475062
        %v2224 = vunpack.c.0.s8 %v2223
        %v2225 = vlaneseq
        %v2226 = vshrl.u32 %v2225, 7
        %v2227 = vsub.s32 %v2224, %v2226
        %v2228 = vrot.slane %v1216, %v2227
        %v2230 = vunpack.c.l.s4 269488144
        %v2231 = vunpack.c.0.s8 %v2230
        %v2232 = vlaneseq
        %v2233 = vshrl.u32 %v2232, 7
        %v2234 = vsub.s32 %v2231, %v2233
        %v2235 = vrot.slane %v1217, %v2234
        %v2237 = vunpack.c.l.s4 842150450
        %v2238 = vunpack.c.0.s8 %v2237
        %v2239 = vlaneseq
        %v2240 = vshrl.u32 %v2239, 7
        %v2241 = vsub.s32 %v2238, %v2240
        %v2242 = vrot.slane %v1217, %v2241
        %v2244 = vunpack.c.l.s4 1414812756
        %v2245 = vunpack.c.0.s8 %v2244
        %v2246 = vlaneseq
        %v2247 = vshrl.u32 %v2246, 7
        %v2248 = vsub.s32 %v2245, %v2247
        %v2249 = vrot.slane %v1217, %v2248
        %v2251 = vunpack.c.l.s4 1987475062
        %v2252 = vunpack.c.0.s8 %v2251
        %v2253 = vlaneseq
        %v2254 = vshrl.u32 %v2253, 7
        %v2255 = vsub.s32 %v2252, %v2254
        %v2256 = vrot.slane %v1217, %v2255
        %v2258 = vunpack.c.l.s4 269488144
        %v2259 = vunpack.c.0.s8 %v2258
        %v2260 = vlaneseq
        %v2261 = vshrl.u32 %v2260, 7
        %v2262 = vsub.s32 %v2259, %v2261
        %v2263 = vrot.slane %v1218, %v2262
        %v2265 = vunpack.c.l.s4 842150450
        %v2266 = vunpack.c.0.s8 %v2265
        %v2267 = vlaneseq
        %v2268 = vshrl.u32 %v2267, 7
        %v2269 = vsub.s32 %v2266, %v2268
        %v2270 = vrot.slane %v1218, %v2269
        %v2272 = vunpack.c.l.s4 1414812756
        %v2273 = vunpack.c.0.s8 %v2272
        %v2274 = vlaneseq
        %v2275 = vshrl.u32 %v2274, 7
        %v2276 = vsub.s32 %v2273, %v2275
        %v2277 = vrot.slane %v1218, %v2276
        %v2279 = vunpack.c.l.s4 1987475062
        %v2280 = vunpack.c.0.s8 %v2279
        %v2281 = vlaneseq
        %v2282 = vshrl.u32 %v2281, 7
        %v2283 = vsub.s32 %v2280, %v2282
        %v2284 = vrot.slane %v1218, %v2283
        %v2286 = vunpack.c.l.s4 269488144
        %v2287 = vunpack.c.0.s8 %v2286
        %v2288 = vlaneseq
        %v2289 = vshrl.u32 %v2288, 7
        %v2290 = vsub.s32 %v2287, %v2289
        %v2291 = vrot.slane %v1219, %v2290
        %v2293 = vunpack.c.l.s4 842150450
        %v2294 = vunpack.c.0.s8 %v2293
        %v2295 = vlaneseq
        %v2296 = vshrl.u32 %v2295, 7
        %v2297 = vsub.s32 %v2294, %v2296
        %v2298 = vrot.slane %v1219, %v2297
        %v2300 = vunpack.c.l.s4 1414812756
        %v2301 = vunpack.c.0.s8 %v2300
        %v2302 = vlaneseq
        %v2303 = vshrl.u32 %v2302, 7
        %v2304 = vsub.s32 %v2301, %v2303
        %v2305 = vrot.slane %v1219, %v2304
        %v2307 = vunpack.c.l.s4 1987475062
        %v2308 = vunpack.c.0.s8 %v2307
        %v2309 = vlaneseq
        %v2310 = vshrl.u32 %v2309, 7
        %v2311 = vsub.s32 %v2308, %v2310
        %v2312 = vrot.slane %v1219, %v2311
        %v2314 = vunpack.c.l.s4 269488144
        %v2315 = vunpack.c.0.s8 %v2314
        %v2316 = vlaneseq
        %v2317 = vshrl.u32 %v2316, 7
        %v2318 = vsub.s32 %v2315, %v2317
        %v2319 = vrot.slane %v1220, %v2318
        %v2321 = vunpack.c.l.s4 842150450
        %v2322 = vunpack.c.0.s8 %v2321
        %v2323 = vlaneseq
        %v2324 = vshrl.u32 %v2323, 7
        %v2325 = vsub.s32 %v2322, %v2324
        %v2326 = vrot.slane %v1220, %v2325
        %v2328 = vunpack.c.l.s4 1414812756
        %v2329 = vunpack.c.0.s8 %v2328
        %v2330 = vlaneseq
        %v2331 = vshrl.u32 %v2330, 7
        %v2332 = vsub.s32 %v2329, %v2331
        %v2333 = vrot.slane %v1220, %v2332
        %v2335 = vunpack.c.l.s4 1987475062
        %v2336 = vunpack.c.0.s8 %v2335
        %v2337 = vlaneseq
        %v2338 = vshrl.u32 %v2337, 7
        %v2339 = vsub.s32 %v2336, %v2338
        %v2340 = vrot.slane %v1220, %v2339
        %v2342 = vunpack.c.l.s4 269488144
        %v2343 = vunpack.c.0.s8 %v2342
        %v2344 = vlaneseq
        %v2345 = vshrl.u32 %v2344, 7
        %v2346 = vsub.s32 %v2343, %v2345
        %v2347 = vrot.slane %v1221, %v2346
        %v2349 = vunpack.c.l.s4 842150450
        %v2350 = vunpack.c.0.s8 %v2349
        %v2351 = vlaneseq
        %v2352 = vshrl.u32 %v2351, 7
        %v2353 = vsub.s32 %v2350, %v2352
        %v2354 = vrot.slane %v1221, %v2353
        %v2356 = vunpack.c.l.s4 1414812756
        %v2357 = vunpack.c.0.s8 %v2356
        %v2358 = vlaneseq
        %v2359 = vshrl.u32 %v2358, 7
        %v2360 = vsub.s32 %v2357, %v2359
        %v2361 = vrot.slane %v1221, %v2360
        %v2363 = vunpack.c.l.s4 1987475062
        %v2364 = vunpack.c.0.s8 %v2363
        %v2365 = vlaneseq
        %v2366 = vshrl.u32 %v2365, 7
        %v2367 = vsub.s32 %v2364, %v2366
        %v2368 = vrot.slane %v1221, %v2367
        %v2370 = vunpack.c.l.s4 269488144
        %v2371 = vunpack.c.0.s8 %v2370
        %v2372 = vlaneseq
        %v2373 = vshrl.u32 %v2372, 7
        %v2374 = vsub.s32 %v2371, %v2373
        %v2375 = vrot.slane %v1222, %v2374
        %v2377 = vunpack.c.l.s4 842150450
        %v2378 = vunpack.c.0.s8 %v2377
        %v2379 = vlaneseq
        %v2380 = vshrl.u32 %v2379, 7
        %v2381 = vsub.s32 %v2378, %v2380
        %v2382 = vrot.slane %v1222, %v2381
        %v2384 = vunpack.c.l.s4 1414812756
        %v2385 = vunpack.c.0.s8 %v2384
        %v2386 = vlaneseq
        %v2387 = vshrl.u32 %v2386, 7
        %v2388 = vsub.s32 %v2385, %v2387
        %v2389 = vrot.slane %v1222, %v2388
        %v2391 = vunpack.c.l.s4 1987475062
        %v2392 = vunpack.c.0.s8 %v2391
        %v2393 = vlaneseq
        %v2394 = vshrl.u32 %v2393, 7
        %v2395 = vsub.s32 %v2392, %v2394
        %v2396 = vrot.slane %v1222, %v2395
        %v2398 = vunpack.c.l.s4 269488144
        %v2399 = vunpack.c.0.s8 %v2398
        %v2400 = vlaneseq
        %v2401 = vshrl.u32 %v2400, 7
        %v2402 = vsub.s32 %v2399, %v2401
        %v2403 = vrot.slane %v1223, %v2402
        %v2405 = vunpack.c.l.s4 842150450
        %v2406 = vunpack.c.0.s8 %v2405
        %v2407 = vlaneseq
        %v2408 = vshrl.u32 %v2407, 7
        %v2409 = vsub.s32 %v2406, %v2408
        %v2410 = vrot.slane %v1223, %v2409
        %v2412 = vunpack.c.l.s4 1414812756
        %v2413 = vunpack.c.0.s8 %v2412
        %v2414 = vlaneseq
        %v2415 = vshrl.u32 %v2414, 7
        %v2416 = vsub.s32 %v2413, %v2415
        %v2417 = vrot.slane %v1223, %v2416
        %v2419 = vunpack.c.l.s4 1987475062
        %v2420 = vunpack.c.0.s8 %v2419
        %v2421 = vlaneseq
        %v2422 = vshrl.u32 %v2421, 7
        %v2423 = vsub.s32 %v2420, %v2422
        %v2424 = vrot.slane %v1223, %v2423
        %v2426 = vunpack.c.l.s4 269488144
        %v2427 = vunpack.c.0.s8 %v2426
        %v2428 = vlaneseq
        %v2429 = vshrl.u32 %v2428, 7
        %v2430 = vsub.s32 %v2427, %v2429
        %v2431 = vrot.slane %v1224, %v2430
        %v2433 = vunpack.c.l.s4 842150450
        %v2434 = vunpack.c.0.s8 %v2433
        %v2435 = vlaneseq
        %v2436 = vshrl.u32 %v2435, 7
        %v2437 = vsub.s32 %v2434, %v2436
        %v2438 = vrot.slane %v1224, %v2437
        %v2440 = vunpack.c.l.s4 1414812756
        %v2441 = vunpack.c.0.s8 %v2440
        %v2442 = vlaneseq
        %v2443 = vshrl.u32 %v2442, 7
        %v2444 = vsub.s32 %v2441, %v2443
        %v2445 = vrot.slane %v1224, %v2444
        %v2447 = vunpack.c.l.s4 1987475062
        %v2448 = vunpack.c.0.s8 %v2447
        %v2449 = vlaneseq
        %v2450 = vshrl.u32 %v2449, 7
        %v2451 = vsub.s32 %v2448, %v2450
        %v2452 = vrot.slane %v1224, %v2451
        %v2454 = vunpack.c.l.s4 269488144
        %v2455 = vunpack.c.0.s8 %v2454
        %v2456 = vlaneseq
        %v2457 = vshrl.u32 %v2456, 7
        %v2458 = vsub.s32 %v2455, %v2457
        %v2459 = vrot.slane %v1225, %v2458
        %v2461 = vunpack.c.l.s4 842150450
        %v2462 = vunpack.c.0.s8 %v2461
        %v2463 = vlaneseq
        %v2464 = vshrl.u32 %v2463, 7
        %v2465 = vsub.s32 %v2462, %v2464
        %v2466 = vrot.slane %v1225, %v2465
        %v2468 = vunpack.c.l.s4 1414812756
        %v2469 = vunpack.c.0.s8 %v2468
        %v2470 = vlaneseq
        %v2471 = vshrl.u32 %v2470, 7
        %v2472 = vsub.s32 %v2469, %v2471
        %v2473 = vrot.slane %v1225, %v2472
        %v2475 = vunpack.c.l.s4 1987475062
        %v2476 = vunpack.c.0.s8 %v2475
        %v2477 = vlaneseq
        %v2478 = vshrl.u32 %v2477, 7
        %v2479 = vsub.s32 %v2476, %v2478
        %v2480 = vrot.slane %v1225, %v2479
        %v2482 = vunpack.c.l.s4 269488144
        %v2483 = vunpack.c.0.s8 %v2482
        %v2484 = vlaneseq
        %v2485 = vshrl.u32 %v2484, 7
        %v2486 = vsub.s32 %v2483, %v2485
        %v2487 = vrot.slane %v1226, %v2486
        %v2489 = vunpack.c.l.s4 842150450
        %v2490 = vunpack.c.0.s8 %v2489
        %v2491 = vlaneseq
        %v2492 = vshrl.u32 %v2491, 7
        %v2493 = vsub.s32 %v2490, %v2492
        %v2494 = vrot.slane %v1226, %v2493
        %v2496 = vunpack.c.l.s4 1414812756
        %v2497 = vunpack.c.0.s8 %v2496
        %v2498 = vlaneseq
        %v2499 = vshrl.u32 %v2498, 7
        %v2500 = vsub.s32 %v2497, %v2499
        %v2501 = vrot.slane %v1226, %v2500
        %v2503 = vunpack.c.l.s4 1987475062
        %v2504 = vunpack.c.0.s8 %v2503
        %v2505 = vlaneseq
        %v2506 = vshrl.u32 %v2505, 7
        %v2507 = vsub.s32 %v2504, %v2506
        %v2508 = vrot.slane %v1226, %v2507
        %v2510 = vunpack.c.l.s4 269488144
        %v2511 = vunpack.c.0.s8 %v2510
        %v2512 = vlaneseq
        %v2513 = vshrl.u32 %v2512, 7
        %v2514 = vsub.s32 %v2511, %v2513
        %v2515 = vrot.slane %v1227, %v2514
        %v2517 = vunpack.c.l.s4 842150450
        %v2518 = vunpack.c.0.s8 %v2517
        %v2519 = vlaneseq
        %v2520 = vshrl.u32 %v2519, 7
        %v2521 = vsub.s32 %v2518, %v2520
        %v2522 = vrot.slane %v1227, %v2521
        %v2524 = vunpack.c.l.s4 1414812756
        %v2525 = vunpack.c.0.s8 %v2524
        %v2526 = vlaneseq
        %v2527 = vshrl.u32 %v2526, 7
        %v2528 = vsub.s32 %v2525, %v2527
        %v2529 = vrot.slane %v1227, %v2528
        %v2531 = vunpack.c.l.s4 1987475062
        %v2532 = vunpack.c.0.s8 %v2531
        %v2533 = vlaneseq
        %v2534 = vshrl.u32 %v2533, 7
        %v2535 = vsub.s32 %v2532, %v2534
        %v2536 = vrot.slane %v1227, %v2535
        %v2538 = vunpack.c.l.s4 269488144
        %v2539 = vunpack.c.0.s8 %v2538
        %v2540 = vlaneseq
        %v2541 = vshrl.u32 %v2540, 7
        %v2542 = vsub.s32 %v2539, %v2541
        %v2543 = vrot.slane %v1228, %v2542
        %v2545 = vunpack.c.l.s4 842150450
        %v2546 = vunpack.c.0.s8 %v2545
        %v2547 = vlaneseq
        %v2548 = vshrl.u32 %v2547, 7
        %v2549 = vsub.s32 %v2546, %v2548
        %v2550 = vrot.slane %v1228, %v2549
        %v2552 = vunpack.c.l.s4 1414812756
        %v2553 = vunpack.c.0.s8 %v2552
        %v2554 = vlaneseq
        %v2555 = vshrl.u32 %v2554, 7
        %v2556 = vsub.s32 %v2553, %v2555
        %v2557 = vrot.slane %v1228, %v2556
        %v2559 = vunpack.c.l.s4 1987475062
        %v2560 = vunpack.c.0.s8 %v2559
        %v2561 = vlaneseq
        %v2562 = vshrl.u32 %v2561, 7
        %v2563 = vsub.s32 %v2560, %v2562
        %v2564 = vrot.slane %v1228, %v2563
        %v2566 = vunpack.c.l.s4 269488144
        %v2567 = vunpack.c.0.s8 %v2566
        %v2568 = vlaneseq
        %v2569 = vshrl.u32 %v2568, 7
        %v2570 = vsub.s32 %v2567, %v2569
        %v2571 = vrot.slane %v1229, %v2570
        %v2573 = vunpack.c.l.s4 842150450
        %v2574 = vunpack.c.0.s8 %v2573
        %v2575 = vlaneseq
        %v2576 = vshrl.u32 %v2575, 7
        %v2577 = vsub.s32 %v2574, %v2576
        %v2578 = vrot.slane %v1229, %v2577
        %v2580 = vunpack.c.l.s4 1414812756
        %v2581 = vunpack.c.0.s8 %v2580
        %v2582 = vlaneseq
        %v2583 = vshrl.u32 %v2582, 7
        %v2584 = vsub.s32 %v2581, %v2583
        %v2585 = vrot.slane %v1229, %v2584
        %v2587 = vunpack.c.l.s4 1987475062
        %v2588 = vunpack.c.0.s8 %v2587
        %v2589 = vlaneseq
        %v2590 = vshrl.u32 %v2589, 7
        %v2591 = vsub.s32 %v2588, %v2590
        %v2592 = vrot.slane %v1229, %v2591
        %v2594 = vunpack.c.l.s4 269488144
        %v2595 = vunpack.c.0.s8 %v2594
        %v2596 = vlaneseq
        %v2597 = vshrl.u32 %v2596, 7
        %v2598 = vsub.s32 %v2595, %v2597
        %v2599 = vrot.slane %v1230, %v2598
        %v2601 = vunpack.c.l.s4 842150450
        %v2602 = vunpack.c.0.s8 %v2601
        %v2603 = vlaneseq
        %v2604 = vshrl.u32 %v2603, 7
        %v2605 = vsub.s32 %v2602, %v2604
        %v2606 = vrot.slane %v1230, %v2605
        %v2608 = vunpack.c.l.s4 1414812756
        %v2609 = vunpack.c.0.s8 %v2608
        %v2610 = vlaneseq
        %v2611 = vshrl.u32 %v2610, 7
        %v2612 = vsub.s32 %v2609, %v2611
        %v2613 = vrot.slane %v1230, %v2612
        %v2615 = vunpack.c.l.s4 1987475062
        %v2616 = vunpack.c.0.s8 %v2615
        %v2617 = vlaneseq
        %v2618 = vshrl.u32 %v2617, 7
        %v2619 = vsub.s32 %v2616, %v2618
        %v2620 = vrot.slane %v1230, %v2619
        %v2622 = vunpack.c.l.s4 269488144
        %v2623 = vunpack.c.0.s8 %v2622
        %v2624 = vlaneseq
        %v2625 = vshrl.u32 %v2624, 7
        %v2626 = vsub.s32 %v2623, %v2625
        %v2627 = vrot.slane %v1231, %v2626
        %v2629 = vunpack.c.l.s4 842150450
        %v2630 = vunpack.c.0.s8 %v2629
        %v2631 = vlaneseq
        %v2632 = vshrl.u32 %v2631, 7
        %v2633 = vsub.s32 %v2630, %v2632
        %v2634 = vrot.slane %v1231, %v2633
        %v2636 = vunpack.c.l.s4 1414812756
        %v2637 = vunpack.c.0.s8 %v2636
        %v2638 = vlaneseq
        %v2639 = vshrl.u32 %v2638, 7
        %v2640 = vsub.s32 %v2637, %v2639
        %v2641 = vrot.slane %v1231, %v2640
        %v2643 = vunpack.c.l.s4 1987475062
        %v2644 = vunpack.c.0.s8 %v2643
        %v2645 = vlaneseq
        %v2646 = vshrl.u32 %v2645, 7
        %v2647 = vsub.s32 %v2644, %v2646
        %v2648 = vrot.slane %v1231, %v2647
        %v2650 = vunpack.c.l.s4 269488144
        %v2651 = vunpack.c.0.s8 %v2650
        %v2652 = vlaneseq
        %v2653 = vshrl.u32 %v2652, 7
        %v2654 = vsub.s32 %v2651, %v2653
        %v2655 = vrot.slane %v1232, %v2654
        %v2657 = vunpack.c.l.s4 842150450
        %v2658 = vunpack.c.0.s8 %v2657
        %v2659 = vlaneseq
        %v2660 = vshrl.u32 %v2659, 7
        %v2661 = vsub.s32 %v2658, %v2660
        %v2662 = vrot.slane %v1232, %v2661
        %v2664 = vunpack.c.l.s4 1414812756
        %v2665 = vunpack.c.0.s8 %v2664
        %v2666 = vlaneseq
        %v2667 = vshrl.u32 %v2666, 7
        %v2668 = vsub.s32 %v2665, %v2667
        %v2669 = vrot.slane %v1232, %v2668
        %v2671 = vunpack.c.l.s4 1987475062
        %v2672 = vunpack.c.0.s8 %v2671
        %v2673 = vlaneseq
        %v2674 = vshrl.u32 %v2673, 7
        %v2675 = vsub.s32 %v2672, %v2674
        %v2676 = vrot.slane %v1232, %v2675
        %v2678 = vunpack.c.l.s4 269488144
        %v2679 = vunpack.c.0.s8 %v2678
        %v2680 = vlaneseq
        %v2681 = vshrl.u32 %v2680, 7
        %v2682 = vsub.s32 %v2679, %v2681
        %v2683 = vrot.slane %v1233, %v2682
        %v2685 = vunpack.c.l.s4 842150450
        %v2686 = vunpack.c.0.s8 %v2685
        %v2687 = vlaneseq
        %v2688 = vshrl.u32 %v2687, 7
        %v2689 = vsub.s32 %v2686, %v2688
        %v2690 = vrot.slane %v1233, %v2689
        %v2692 = vunpack.c.l.s4 1414812756
        %v2693 = vunpack.c.0.s8 %v2692
        %v2694 = vlaneseq
        %v2695 = vshrl.u32 %v2694, 7
        %v2696 = vsub.s32 %v2693, %v2695
        %v2697 = vrot.slane %v1233, %v2696
        %v2699 = vunpack.c.l.s4 1987475062
        %v2700 = vunpack.c.0.s8 %v2699
        %v2701 = vlaneseq
        %v2702 = vshrl.u32 %v2701, 7
        %v2703 = vsub.s32 %v2700, %v2702
        %v2704 = vrot.slane %v1233, %v2703
        %v2706 = vunpack.c.l.s4 269488144
        %v2707 = vunpack.c.0.s8 %v2706
        %v2708 = vlaneseq
        %v2709 = vshrl.u32 %v2708, 7
        %v2710 = vsub.s32 %v2707, %v2709
        %v2711 = vrot.slane %v1234, %v2710
        %v2713 = vunpack.c.l.s4 842150450
        %v2714 = vunpack.c.0.s8 %v2713
        %v2715 = vlaneseq
        %v2716 = vshrl.u32 %v2715, 7
        %v2717 = vsub.s32 %v2714, %v2716
        %v2718 = vrot.slane %v1234, %v2717
        %v2720 = vunpack.c.l.s4 1414812756
        %v2721 = vunpack.c.0.s8 %v2720
        %v2722 = vlaneseq
        %v2723 = vshrl.u32 %v2722, 7
        %v2724 = vsub.s32 %v2721, %v2723
        %v2725 = vrot.slane %v1234, %v2724
        %v2727 = vunpack.c.l.s4 1987475062
        %v2728 = vunpack.c.0.s8 %v2727
        %v2729 = vlaneseq
        %v2730 = vshrl.u32 %v2729, 7
        %v2731 = vsub.s32 %v2728, %v2730
        %v2732 = vrot.slane %v1234, %v2731
        %v2734 = vunpack.c.l.s4 269488144
        %v2735 = vunpack.c.0.s8 %v2734
        %v2736 = vlaneseq
        %v2737 = vshrl.u32 %v2736, 7
        %v2738 = vsub.s32 %v2735, %v2737
        %v2739 = vrot.slane %v1235, %v2738
        %v2741 = vunpack.c.l.s4 842150450
        %v2742 = vunpack.c.0.s8 %v2741
        %v2743 = vlaneseq
        %v2744 = vshrl.u32 %v2743, 7
        %v2745 = vsub.s32 %v2742, %v2744
        %v2746 = vrot.slane %v1235, %v2745
        %v2748 = vunpack.c.l.s4 1414812756
        %v2749 = vunpack.c.0.s8 %v2748
        %v2750 = vlaneseq
        %v2751 = vshrl.u32 %v2750, 7
        %v2752 = vsub.s32 %v2749, %v2751
        %v2753 = vrot.slane %v1235, %v2752
        %v2755 = vunpack.c.l.s4 1987475062
        %v2756 = vunpack.c.0.s8 %v2755
        %v2757 = vlaneseq
        %v2758 = vshrl.u32 %v2757, 7
        %v2759 = vsub.s32 %v2756, %v2758
        %v2760 = vrot.slane %v1235, %v2759
        %v2762 = vunpack.c.l.s4 269488144
        %v2763 = vunpack.c.0.s8 %v2762
        %v2764 = vlaneseq
        %v2765 = vshrl.u32 %v2764, 7
        %v2766 = vsub.s32 %v2763, %v2765
        %v2767 = vrot.slane %v1236, %v2766
        %v2769 = vunpack.c.l.s4 842150450
        %v2770 = vunpack.c.0.s8 %v2769
        %v2771 = vlaneseq
        %v2772 = vshrl.u32 %v2771, 7
        %v2773 = vsub.s32 %v2770, %v2772
        %v2774 = vrot.slane %v1236, %v2773
        %v2776 = vunpack.c.l.s4 1414812756
        %v2777 = vunpack.c.0.s8 %v2776
        %v2778 = vlaneseq
        %v2779 = vshrl.u32 %v2778, 7
        %v2780 = vsub.s32 %v2777, %v2779
        %v2781 = vrot.slane %v1236, %v2780
        %v2783 = vunpack.c.l.s4 1987475062
        %v2784 = vunpack.c.0.s8 %v2783
        %v2785 = vlaneseq
        %v2786 = vshrl.u32 %v2785, 7
        %v2787 = vsub.s32 %v2784, %v2786
        %v2788 = vrot.slane %v1236, %v2787
        %v2790 = vunpack.c.l.s4 269488144
        %v2791 = vunpack.c.0.s8 %v2790
        %v2792 = vlaneseq
        %v2793 = vshrl.u32 %v2792, 7
        %v2794 = vsub.s32 %v2791, %v2793
        %v2795 = vrot.slane %v1237, %v2794
        %v2797 = vunpack.c.l.s4 842150450
        %v2798 = vunpack.c.0.s8 %v2797
        %v2799 = vlaneseq
        %v2800 = vshrl.u32 %v2799, 7
        %v2801 = vsub.s32 %v2798, %v2800
        %v2802 = vrot.slane %v1237, %v2801
        %v2804 = vunpack.c.l.s4 1414812756
        %v2805 = vunpack.c.0.s8 %v2804
        %v2806 = vlaneseq
        %v2807 = vshrl.u32 %v2806, 7
        %v2808 = vsub.s32 %v2805, %v2807
        %v2809 = vrot.slane %v1237, %v2808
        %v2811 = vunpack.c.l.s4 1987475062
        %v2812 = vunpack.c.0.s8 %v2811
        %v2813 = vlaneseq
        %v2814 = vshrl.u32 %v2813, 7
        %v2815 = vsub.s32 %v2812, %v2814
        %v2816 = vrot.slane %v1237, %v2815
        %v2818 = vunpack.c.l.s4 269488144
        %v2819 = vunpack.c.0.s8 %v2818
        %v2820 = vlaneseq
        %v2821 = vshrl.u32 %v2820, 7
        %v2822 = vsub.s32 %v2819, %v2821
        %v2823 = vrot.slane %v1238, %v2822
        %v2825 = vunpack.c.l.s4 842150450
        %v2826 = vunpack.c.0.s8 %v2825
        %v2827 = vlaneseq
        %v2828 = vshrl.u32 %v2827, 7
        %v2829 = vsub.s32 %v2826, %v2828
        %v2830 = vrot.slane %v1238, %v2829
        %v2832 = vunpack.c.l.s4 1414812756
        %v2833 = vunpack.c.0.s8 %v2832
        %v2834 = vlaneseq
        %v2835 = vshrl.u32 %v2834, 7
        %v2836 = vsub.s32 %v2833, %v2835
        %v2837 = vrot.slane %v1238, %v2836
        %v2839 = vunpack.c.l.s4 1987475062
        %v2840 = vunpack.c.0.s8 %v2839
        %v2841 = vlaneseq
        %v2842 = vshrl.u32 %v2841, 7
        %v2843 = vsub.s32 %v2840, %v2842
        %v2844 = vrot.slane %v1238, %v2843
        %v2846 = vunpack.c.l.s4 269488144
        %v2847 = vunpack.c.0.s8 %v2846
        %v2848 = vlaneseq
        %v2849 = vshrl.u32 %v2848, 7
        %v2850 = vsub.s32 %v2847, %v2849
        %v2851 = vrot.slane %v1239, %v2850
        %v2853 = vunpack.c.l.s4 842150450
        %v2854 = vunpack.c.0.s8 %v2853
        %v2855 = vlaneseq
        %v2856 = vshrl.u32 %v2855, 7
        %v2857 = vsub.s32 %v2854, %v2856
        %v2858 = vrot.slane %v1239, %v2857
        %v2860 = vunpack.c.l.s4 1414812756
        %v2861 = vunpack.c.0.s8 %v2860
        %v2862 = vlaneseq
        %v2863 = vshrl.u32 %v2862, 7
        %v2864 = vsub.s32 %v2861, %v2863
        %v2865 = vrot.slane %v1239, %v2864
        %v2867 = vunpack.c.l.s4 1987475062
        %v2868 = vunpack.c.0.s8 %v2867
        %v2869 = vlaneseq
        %v2870 = vshrl.u32 %v2869, 7
        %v2871 = vsub.s32 %v2868, %v2870
        %v2872 = vrot.slane %v1239, %v2871
        %v2874 = vunpack.c.l.s4 269488144
        %v2875 = vunpack.c.0.s8 %v2874
        %v2876 = vlaneseq
        %v2877 = vshrl.u32 %v2876, 7
        %v2878 = vsub.s32 %v2875, %v2877
        %v2879 = vrot.slane %v1240, %v2878
        %v2881 = vunpack.c.l.s4 842150450
        %v2882 = vunpack.c.0.s8 %v2881
        %v2883 = vlaneseq
        %v2884 = vshrl.u32 %v2883, 7
        %v2885 = vsub.s32 %v2882, %v2884
        %v2886 = vrot.slane %v1240, %v2885
        %v2888 = vunpack.c.l.s4 1414812756
        %v2889 = vunpack.c.0.s8 %v2888
        %v2890 = vlaneseq
        %v2891 = vshrl.u32 %v2890, 7
        %v2892 = vsub.s32 %v2889, %v2891
        %v2893 = vrot.slane %v1240, %v2892
        %v2895 = vunpack.c.l.s4 1987475062
        %v2896 = vunpack.c.0.s8 %v2895
        %v2897 = vlaneseq
        %v2898 = vshrl.u32 %v2897, 7
        %v2899 = vsub.s32 %v2896, %v2898
        %v2900 = vrot.slane %v1240, %v2899
        %v2902 = vunpack.c.l.s4 269488144
        %v2903 = vunpack.c.0.s8 %v2902
        %v2904 = vlaneseq
        %v2905 = vshrl.u32 %v2904, 7
        %v2906 = vsub.s32 %v2903, %v2905
        %v2907 = vrot.slane %v1241, %v2906
        %v2909 = vunpack.c.l.s4 842150450
        %v2910 = vunpack.c.0.s8 %v2909
        %v2911 = vlaneseq
        %v2912 = vshrl.u32 %v2911, 7
        %v2913 = vsub.s32 %v2910, %v2912
        %v2914 = vrot.slane %v1241, %v2913
        %v2916 = vunpack.c.l.s4 1414812756
        %v2917 = vunpack.c.0.s8 %v2916
        %v2918 = vlaneseq
        %v2919 = vshrl.u32 %v2918, 7
        %v2920 = vsub.s32 %v2917, %v2919
        %v2921 = vrot.slane %v1241, %v2920
        %v2923 = vunpack.c.l.s4 1987475062
        %v2924 = vunpack.c.0.s8 %v2923
        %v2925 = vlaneseq
        %v2926 = vshrl.u32 %v2925, 7
        %v2927 = vsub.s32 %v2924, %v2926
        %v2928 = vrot.slane %v1241, %v2927
        %v2930 = vunpack.c.l.s4 269488144
        %v2931 = vunpack.c.0.s8 %v2930
        %v2932 = vlaneseq
        %v2933 = vshrl.u32 %v2932, 7
        %v2934 = vsub.s32 %v2931, %v2933
        %v2935 = vrot.slane %v1242, %v2934
        %v2937 = vunpack.c.l.s4 842150450
        %v2938 = vunpack.c.0.s8 %v2937
        %v2939 = vlaneseq
        %v2940 = vshrl.u32 %v2939, 7
        %v2941 = vsub.s32 %v2938, %v2940
        %v2942 = vrot.slane %v1242, %v2941
        %v2944 = vunpack.c.l.s4 1414812756
        %v2945 = vunpack.c.0.s8 %v2944
        %v2946 = vlaneseq
        %v2947 = vshrl.u32 %v2946, 7
        %v2948 = vsub.s32 %v2945, %v2947
        %v2949 = vrot.slane %v1242, %v2948
        %v2951 = vunpack.c.l.s4 1987475062
        %v2952 = vunpack.c.0.s8 %v2951
        %v2953 = vlaneseq
        %v2954 = vshrl.u32 %v2953, 7
        %v2955 = vsub.s32 %v2952, %v2954
        %v2956 = vrot.slane %v1242, %v2955
        %v2958 = vunpack.c.l.s4 269488144
        %v2959 = vunpack.c.0.s8 %v2958
        %v2960 = vlaneseq
        %v2961 = vshrl.u32 %v2960, 7
        %v2962 = vsub.s32 %v2959, %v2961
        %v2963 = vrot.slane %v1243, %v2962
        %v2965 = vunpack.c.l.s4 842150450
        %v2966 = vunpack.c.0.s8 %v2965
        %v2967 = vlaneseq
        %v2968 = vshrl.u32 %v2967, 7
        %v2969 = vsub.s32 %v2966, %v2968
        %v2970 = vrot.slane %v1243, %v2969
        %v2972 = vunpack.c.l.s4 1414812756
        %v2973 = vunpack.c.0.s8 %v2972
        %v2974 = vlaneseq
        %v2975 = vshrl.u32 %v2974, 7
        %v2976 = vsub.s32 %v2973, %v2975
        %v2977 = vrot.slane %v1243, %v2976
        %v2979 = vunpack.c.l.s4 1987475062
        %v2980 = vunpack.c.0.s8 %v2979
        %v2981 = vlaneseq
        %v2982 = vshrl.u32 %v2981, 7
        %v2983 = vsub.s32 %v2980, %v2982
        %v2984 = vrot.slane %v1243, %v2983
        %v2986 = vunpack.c.l.s4 269488144
        %v2987 = vunpack.c.0.s8 %v2986
        %v2988 = vlaneseq
        %v2989 = vshrl.u32 %v2988, 7
        %v2990 = vsub.s32 %v2987, %v2989
        %v2991 = vrot.slane %v1244, %v2990
        %v2993 = vunpack.c.l.s4 842150450
        %v2994 = vunpack.c.0.s8 %v2993
        %v2995 = vlaneseq
        %v2996 = vshrl.u32 %v2995, 7
        %v2997 = vsub.s32 %v2994, %v2996
        %v2998 = vrot.slane %v1244, %v2997
        %v3000 = vunpack.c.l.s4 1414812756
        %v3001 = vunpack.c.0.s8 %v3000
        %v3002 = vlaneseq
        %v3003 = vshrl.u32 %v3002, 7
        %v3004 = vsub.s32 %v3001, %v3003
        %v3005 = vrot.slane %v1244, %v3004
        %v3007 = vunpack.c.l.s4 1987475062
        %v3008 = vunpack.c.0.s8 %v3007
        %v3009 = vlaneseq
        %v3010 = vshrl.u32 %v3009, 7
        %v3011 = vsub.s32 %v3008, %v3010
        %v3012 = vrot.slane %v1244, %v3011
        %v3014 = vunpack.c.l.s4 269488144
        %v3015 = vunpack.c.0.s8 %v3014
        %v3016 = vlaneseq
        %v3017 = vshrl.u32 %v3016, 7
        %v3018 = vsub.s32 %v3015, %v3017
        %v3019 = vrot.slane %v1245, %v3018
        %v3021 = vunpack.c.l.s4 842150450
        %v3022 = vunpack.c.0.s8 %v3021
        %v3023 = vlaneseq
        %v3024 = vshrl.u32 %v3023, 7
        %v3025 = vsub.s32 %v3022, %v3024
        %v3026 = vrot.slane %v1245, %v3025
        %v3028 = vunpack.c.l.s4 1414812756
        %v3029 = vunpack.c.0.s8 %v3028
        %v3030 = vlaneseq
        %v3031 = vshrl.u32 %v3030, 7
        %v3032 = vsub.s32 %v3029, %v3031
        %v3033 = vrot.slane %v1245, %v3032
        %v3035 = vunpack.c.l.s4 1987475062
        %v3036 = vunpack.c.0.s8 %v3035
        %v3037 = vlaneseq
        %v3038 = vshrl.u32 %v3037, 7
        %v3039 = vsub.s32 %v3036, %v3038
        %v3040 = vrot.slane %v1245, %v3039
        %v3042 = vunpack.c.l.s4 269488144
        %v3043 = vunpack.c.0.s8 %v3042
        %v3044 = vlaneseq
        %v3045 = vshrl.u32 %v3044, 7
        %v3046 = vsub.s32 %v3043, %v3045
        %v3047 = vrot.slane %v1246, %v3046
        %v3049 = vunpack.c.l.s4 842150450
        %v3050 = vunpack.c.0.s8 %v3049
        %v3051 = vlaneseq
        %v3052 = vshrl.u32 %v3051, 7
        %v3053 = vsub.s32 %v3050, %v3052
        %v3054 = vrot.slane %v1246, %v3053
        %v3056 = vunpack.c.l.s4 1414812756
        %v3057 = vunpack.c.0.s8 %v3056
        %v3058 = vlaneseq
        %v3059 = vshrl.u32 %v3058, 7
        %v3060 = vsub.s32 %v3057, %v3059
        %v3061 = vrot.slane %v1246, %v3060
        %v3063 = vunpack.c.l.s4 1987475062
        %v3064 = vunpack.c.0.s8 %v3063
        %v3065 = vlaneseq
        %v3066 = vshrl.u32 %v3065, 7
        %v3067 = vsub.s32 %v3064, %v3066
        %v3068 = vrot.slane %v1246, %v3067
        %v3070 = vunpack.c.l.s4 269488144
        %v3071 = vunpack.c.0.s8 %v3070
        %v3072 = vlaneseq
        %v3073 = vshrl.u32 %v3072, 7
        %v3074 = vsub.s32 %v3071, %v3073
        %v3075 = vrot.slane %v1247, %v3074
        %v3077 = vunpack.c.l.s4 842150450
        %v3078 = vunpack.c.0.s8 %v3077
        %v3079 = vlaneseq
        %v3080 = vshrl.u32 %v3079, 7
        %v3081 = vsub.s32 %v3078, %v3080
        %v3082 = vrot.slane %v1247, %v3081
        %v3084 = vunpack.c.l.s4 1414812756
        %v3085 = vunpack.c.0.s8 %v3084
        %v3086 = vlaneseq
        %v3087 = vshrl.u32 %v3086, 7
        %v3088 = vsub.s32 %v3085, %v3087
        %v3089 = vrot.slane %v1247, %v3088
        %v3091 = vunpack.c.l.s4 1987475062
        %v3092 = vunpack.c.0.s8 %v3091
        %v3093 = vlaneseq
        %v3094 = vshrl.u32 %v3093, 7
        %v3095 = vsub.s32 %v3092, %v3094
        %v3096 = vrot.slane %v1247, %v3095
        %v3098 = vunpack.c.l.s4 269488144
        %v3099 = vunpack.c.0.s8 %v3098
        %v3100 = vlaneseq
        %v3101 = vshrl.u32 %v3100, 7
        %v3102 = vsub.s32 %v3099, %v3101
        %v3103 = vrot.slane %v1248, %v3102
        %v3105 = vunpack.c.l.s4 842150450
        %v3106 = vunpack.c.0.s8 %v3105
        %v3107 = vlaneseq
        %v3108 = vshrl.u32 %v3107, 7
        %v3109 = vsub.s32 %v3106, %v3108
        %v3110 = vrot.slane %v1248, %v3109
        %v3112 = vunpack.c.l.s4 1414812756
        %v3113 = vunpack.c.0.s8 %v3112
        %v3114 = vlaneseq
        %v3115 = vshrl.u32 %v3114, 7
        %v3116 = vsub.s32 %v3113, %v3115
        %v3117 = vrot.slane %v1248, %v3116
        %v3119 = vunpack.c.l.s4 1987475062
        %v3120 = vunpack.c.0.s8 %v3119
        %v3121 = vlaneseq
        %v3122 = vshrl.u32 %v3121, 7
        %v3123 = vsub.s32 %v3120, %v3122
        %v3124 = vrot.slane %v1248, %v3123
        %v3126 = vunpack.c.l.s4 269488144
        %v3127 = vunpack.c.0.s8 %v3126
        %v3128 = vlaneseq
        %v3129 = vshrl.u32 %v3128, 7
        %v3130 = vsub.s32 %v3127, %v3129
        %v3131 = vrot.slane %v1249, %v3130
        %v3133 = vunpack.c.l.s4 842150450
        %v3134 = vunpack.c.0.s8 %v3133
        %v3135 = vlaneseq
        %v3136 = vshrl.u32 %v3135, 7
        %v3137 = vsub.s32 %v3134, %v3136
        %v3138 = vrot.slane %v1249, %v3137
        %v3140 = vunpack.c.l.s4 1414812756
        %v3141 = vunpack.c.0.s8 %v3140
        %v3142 = vlaneseq
        %v3143 = vshrl.u32 %v3142, 7
        %v3144 = vsub.s32 %v3141, %v3143
        %v3145 = vrot.slane %v1249, %v3144
        %v3147 = vunpack.c.l.s4 1987475062
        %v3148 = vunpack.c.0.s8 %v3147
        %v3149 = vlaneseq
        %v3150 = vshrl.u32 %v3149, 7
        %v3151 = vsub.s32 %v3148, %v3150
        %v3152 = vrot.slane %v1249, %v3151
        %v3154 = vunpack.c.l.s4 269488144
        %v3155 = vunpack.c.0.s8 %v3154
        %v3156 = vlaneseq
        %v3157 = vshrl.u32 %v3156, 7
        %v3158 = vsub.s32 %v3155, %v3157
        %v3159 = vrot.slane %v1250, %v3158
        %v3161 = vunpack.c.l.s4 842150450
        %v3162 = vunpack.c.0.s8 %v3161
        %v3163 = vlaneseq
        %v3164 = vshrl.u32 %v3163, 7
        %v3165 = vsub.s32 %v3162, %v3164
        %v3166 = vrot.slane %v1250, %v3165
        %v3168 = vunpack.c.l.s4 1414812756
        %v3169 = vunpack.c.0.s8 %v3168
        %v3170 = vlaneseq
        %v3171 = vshrl.u32 %v3170, 7
        %v3172 = vsub.s32 %v3169, %v3171
        %v3173 = vrot.slane %v1250, %v3172
        %v3175 = vunpack.c.l.s4 1987475062
        %v3176 = vunpack.c.0.s8 %v3175
        %v3177 = vlaneseq
        %v3178 = vshrl.u32 %v3177, 7
        %v3179 = vsub.s32 %v3176, %v3178
        %v3180 = vrot.slane %v1250, %v3179
        %v3182 = vunpack.c.l.s4 269488144
        %v3183 = vunpack.c.0.s8 %v3182
        %v3184 = vlaneseq
        %v3185 = vshrl.u32 %v3184, 7
        %v3186 = vsub.s32 %v3183, %v3185
        %v3187 = vrot.slane %v1251, %v3186
        %v3189 = vunpack.c.l.s4 842150450
        %v3190 = vunpack.c.0.s8 %v3189
        %v3191 = vlaneseq
        %v3192 = vshrl.u32 %v3191, 7
        %v3193 = vsub.s32 %v3190, %v3192
        %v3194 = vrot.slane %v1251, %v3193
        %v3196 = vunpack.c.l.s4 1414812756
        %v3197 = vunpack.c.0.s8 %v3196
        %v3198 = vlaneseq
        %v3199 = vshrl.u32 %v3198, 7
        %v3200 = vsub.s32 %v3197, %v3199
        %v3201 = vrot.slane %v1251, %v3200
        %v3203 = vunpack.c.l.s4 1987475062
        %v3204 = vunpack.c.0.s8 %v3203
        %v3205 = vlaneseq
        %v3206 = vshrl.u32 %v3205, 7
        %v3207 = vsub.s32 %v3204, %v3206
        %v3208 = vrot.slane %v1251, %v3207
        %v3210 = vunpack.c.l.s4 269488144
        %v3211 = vunpack.c.0.s8 %v3210
        %v3212 = vlaneseq
        %v3213 = vshrl.u32 %v3212, 7
        %v3214 = vsub.s32 %v3211, %v3213
        %v3215 = vrot.slane %v1252, %v3214
        %v3217 = vunpack.c.l.s4 842150450
        %v3218 = vunpack.c.0.s8 %v3217
        %v3219 = vlaneseq
        %v3220 = vshrl.u32 %v3219, 7
        %v3221 = vsub.s32 %v3218, %v3220
        %v3222 = vrot.slane %v1252, %v3221
        %v3224 = vunpack.c.l.s4 1414812756
        %v3225 = vunpack.c.0.s8 %v3224
        %v3226 = vlaneseq
        %v3227 = vshrl.u32 %v3226, 7
        %v3228 = vsub.s32 %v3225, %v3227
        %v3229 = vrot.slane %v1252, %v3228
        %v3231 = vunpack.c.l.s4 1987475062
        %v3232 = vunpack.c.0.s8 %v3231
        %v3233 = vlaneseq
        %v3234 = vshrl.u32 %v3233, 7
        %v3235 = vsub.s32 %v3232, %v3234
        %v3236 = vrot.slane %v1252, %v3235
        %v3238 = vunpack.c.l.s4 269488144
        %v3239 = vunpack.c.0.s8 %v3238
        %v3240 = vlaneseq
        %v3241 = vshrl.u32 %v3240, 7
        %v3242 = vsub.s32 %v3239, %v3241
        %v3243 = vrot.slane %v1253, %v3242
        %v3245 = vunpack.c.l.s4 842150450
        %v3246 = vunpack.c.0.s8 %v3245
        %v3247 = vlaneseq
        %v3248 = vshrl.u32 %v3247, 7
        %v3249 = vsub.s32 %v3246, %v3248
        %v3250 = vrot.slane %v1253, %v3249
        %v3252 = vunpack.c.l.s4 1414812756
        %v3253 = vunpack.c.0.s8 %v3252
        %v3254 = vlaneseq
        %v3255 = vshrl.u32 %v3254, 7
        %v3256 = vsub.s32 %v3253, %v3255
        %v3257 = vrot.slane %v1253, %v3256
        %v3259 = vunpack.c.l.s4 1987475062
        %v3260 = vunpack.c.0.s8 %v3259
        %v3261 = vlaneseq
        %v3262 = vshrl.u32 %v3261, 7
        %v3263 = vsub.s32 %v3260, %v3262
        %v3264 = vrot.slane %v1253, %v3263
        %v3266 = vunpack.c.l.s4 269488144
        %v3267 = vunpack.c.0.s8 %v3266
        %v3268 = vlaneseq
        %v3269 = vshrl.u32 %v3268, 7
        %v3270 = vsub.s32 %v3267, %v3269
        %v3271 = vrot.slane %v1254, %v3270
        %v3273 = vunpack.c.l.s4 842150450
        %v3274 = vunpack.c.0.s8 %v3273
        %v3275 = vlaneseq
        %v3276 = vshrl.u32 %v3275, 7
        %v3277 = vsub.s32 %v3274, %v3276
        %v3278 = vrot.slane %v1254, %v3277
        %v3280 = vunpack.c.l.s4 1414812756
        %v3281 = vunpack.c.0.s8 %v3280
        %v3282 = vlaneseq
        %v3283 = vshrl.u32 %v3282, 7
        %v3284 = vsub.s32 %v3281, %v3283
        %v3285 = vrot.slane %v1254, %v3284
        %v3287 = vunpack.c.l.s4 1987475062
        %v3288 = vunpack.c.0.s8 %v3287
        %v3289 = vlaneseq
        %v3290 = vshrl.u32 %v3289, 7
        %v3291 = vsub.s32 %v3288, %v3290
        %v3292 = vrot.slane %v1254, %v3291
        %v3294 = vunpack.c.l.s4 269488144
        %v3295 = vunpack.c.0.s8 %v3294
        %v3296 = vlaneseq
        %v3297 = vshrl.u32 %v3296, 7
        %v3298 = vsub.s32 %v3295, %v3297
        %v3299 = vrot.slane %v1255, %v3298
        %v3301 = vunpack.c.l.s4 842150450
        %v3302 = vunpack.c.0.s8 %v3301
        %v3303 = vlaneseq
        %v3304 = vshrl.u32 %v3303, 7
        %v3305 = vsub.s32 %v3302, %v3304
        %v3306 = vrot.slane %v1255, %v3305
        %v3308 = vunpack.c.l.s4 1414812756
        %v3309 = vunpack.c.0.s8 %v3308
        %v3310 = vlaneseq
        %v3311 = vshrl.u32 %v3310, 7
        %v3312 = vsub.s32 %v3309, %v3311
        %v3313 = vrot.slane %v1255, %v3312
        %v3315 = vunpack.c.l.s4 1987475062
        %v3316 = vunpack.c.0.s8 %v3315
        %v3317 = vlaneseq
        %v3318 = vshrl.u32 %v3317, 7
        %v3319 = vsub.s32 %v3316, %v3318
        %v3320 = vrot.slane %v1255, %v3319
        %v3322 = vunpack.c.l.s4 269488144
        %v3323 = vunpack.c.0.s8 %v3322
        %v3324 = vlaneseq
        %v3325 = vshrl.u32 %v3324, 7
        %v3326 = vsub.s32 %v3323, %v3325
        %v3327 = vrot.slane %v1256, %v3326
        %v3329 = vunpack.c.l.s4 842150450
        %v3330 = vunpack.c.0.s8 %v3329
        %v3331 = vlaneseq
        %v3332 = vshrl.u32 %v3331, 7
        %v3333 = vsub.s32 %v3330, %v3332
        %v3334 = vrot.slane %v1256, %v3333
        %v3336 = vunpack.c.l.s4 1414812756
        %v3337 = vunpack.c.0.s8 %v3336
        %v3338 = vlaneseq
        %v3339 = vshrl.u32 %v3338, 7
        %v3340 = vsub.s32 %v3337, %v3339
        %v3341 = vrot.slane %v1256, %v3340
        %v3343 = vunpack.c.l.s4 1987475062
        %v3344 = vunpack.c.0.s8 %v3343
        %v3345 = vlaneseq
        %v3346 = vshrl.u32 %v3345, 7
        %v3347 = vsub.s32 %v3344, %v3346
        %v3348 = vrot.slane %v1256, %v3347
        %v3350 = vunpack.c.l.s4 269488144
        %v3351 = vunpack.c.0.s8 %v3350
        %v3352 = vlaneseq
        %v3353 = vshrl.u32 %v3352, 7
        %v3354 = vsub.s32 %v3351, %v3353
        %v3355 = vrot.slane %v1257, %v3354
        %v3357 = vunpack.c.l.s4 842150450
        %v3358 = vunpack.c.0.s8 %v3357
        %v3359 = vlaneseq
        %v3360 = vshrl.u32 %v3359, 7
        %v3361 = vsub.s32 %v3358, %v3360
        %v3362 = vrot.slane %v1257, %v3361
        %v3364 = vunpack.c.l.s4 1414812756
        %v3365 = vunpack.c.0.s8 %v3364
        %v3366 = vlaneseq
        %v3367 = vshrl.u32 %v3366, 7
        %v3368 = vsub.s32 %v3365, %v3367
        %v3369 = vrot.slane %v1257, %v3368
        %v3371 = vunpack.c.l.s4 1987475062
        %v3372 = vunpack.c.0.s8 %v3371
        %v3373 = vlaneseq
        %v3374 = vshrl.u32 %v3373, 7
        %v3375 = vsub.s32 %v3372, %v3374
        %v3376 = vrot.slane %v1257, %v3375
        %v3378 = vunpack.c.l.s4 269488144
        %v3379 = vunpack.c.0.s8 %v3378
        %v3380 = vlaneseq
        %v3381 = vshrl.u32 %v3380, 7
        %v3382 = vsub.s32 %v3379, %v3381
        %v3383 = vrot.slane %v1258, %v3382
        %v3385 = vunpack.c.l.s4 842150450
        %v3386 = vunpack.c.0.s8 %v3385
        %v3387 = vlaneseq
        %v3388 = vshrl.u32 %v3387, 7
        %v3389 = vsub.s32 %v3386, %v3388
        %v3390 = vrot.slane %v1258, %v3389
        %v3392 = vunpack.c.l.s4 1414812756
        %v3393 = vunpack.c.0.s8 %v3392
        %v3394 = vlaneseq
        %v3395 = vshrl.u32 %v3394, 7
        %v3396 = vsub.s32 %v3393, %v3395
        %v3397 = vrot.slane %v1258, %v3396
        %v3399 = vunpack.c.l.s4 1987475062
        %v3400 = vunpack.c.0.s8 %v3399
        %v3401 = vlaneseq
        %v3402 = vshrl.u32 %v3401, 7
        %v3403 = vsub.s32 %v3400, %v3402
        %v3404 = vrot.slane %v1258, %v3403
        %v3406 = vunpack.c.l.s4 269488144
        %v3407 = vunpack.c.0.s8 %v3406
        %v3408 = vlaneseq
        %v3409 = vshrl.u32 %v3408, 7
        %v3410 = vsub.s32 %v3407, %v3409
        %v3411 = vrot.slane %v1259, %v3410
        %v3413 = vunpack.c.l.s4 842150450
        %v3414 = vunpack.c.0.s8 %v3413
        %v3415 = vlaneseq
        %v3416 = vshrl.u32 %v3415, 7
        %v3417 = vsub.s32 %v3414, %v3416
        %v3418 = vrot.slane %v1259, %v3417
        %v3420 = vunpack.c.l.s4 1414812756
        %v3421 = vunpack.c.0.s8 %v3420
        %v3422 = vlaneseq
        %v3423 = vshrl.u32 %v3422, 7
        %v3424 = vsub.s32 %v3421, %v3423
        %v3425 = vrot.slane %v1259, %v3424
        %v3427 = vunpack.c.l.s4 1987475062
        %v3428 = vunpack.c.0.s8 %v3427
        %v3429 = vlaneseq
        %v3430 = vshrl.u32 %v3429, 7
        %v3431 = vsub.s32 %v3428, %v3430
        %v3432 = vrot.slane %v1259, %v3431
        %v3434 = vunpack.c.l.s4 269488144
        %v3435 = vunpack.c.0.s8 %v3434
        %v3436 = vlaneseq
        %v3437 = vshrl.u32 %v3436, 7
        %v3438 = vsub.s32 %v3435, %v3437
        %v3439 = vrot.slane %v1260, %v3438
        %v3441 = vunpack.c.l.s4 842150450
        %v3442 = vunpack.c.0.s8 %v3441
        %v3443 = vlaneseq
        %v3444 = vshrl.u32 %v3443, 7
        %v3445 = vsub.s32 %v3442, %v3444
        %v3446 = vrot.slane %v1260, %v3445
        %v3448 = vunpack.c.l.s4 1414812756
        %v3449 = vunpack.c.0.s8 %v3448
        %v3450 = vlaneseq
        %v3451 = vshrl.u32 %v3450, 7
        %v3452 = vsub.s32 %v3449, %v3451
        %v3453 = vrot.slane %v1260, %v3452
        %v3455 = vunpack.c.l.s4 1987475062
        %v3456 = vunpack.c.0.s8 %v3455
        %v3457 = vlaneseq
        %v3458 = vshrl.u32 %v3457, 7
        %v3459 = vsub.s32 %v3456, %v3458
        %v3460 = vrot.slane %v1260, %v3459
        %v3462 = vunpack.c.l.s4 269488144
        %v3463 = vunpack.c.0.s8 %v3462
        %v3464 = vlaneseq
        %v3465 = vshrl.u32 %v3464, 7
        %v3466 = vsub.s32 %v3463, %v3465
        %v3467 = vrot.slane %v1261, %v3466
        %v3469 = vunpack.c.l.s4 842150450
        %v3470 = vunpack.c.0.s8 %v3469
        %v3471 = vlaneseq
        %v3472 = vshrl.u32 %v3471, 7
        %v3473 = vsub.s32 %v3470, %v3472
        %v3474 = vrot.slane %v1261, %v3473
        %v3476 = vunpack.c.l.s4 1414812756
        %v3477 = vunpack.c.0.s8 %v3476
        %v3478 = vlaneseq
        %v3479 = vshrl.u32 %v3478, 7
        %v3480 = vsub.s32 %v3477, %v3479
        %v3481 = vrot.slane %v1261, %v3480
        %v3483 = vunpack.c.l.s4 1987475062
        %v3484 = vunpack.c.0.s8 %v3483
        %v3485 = vlaneseq
        %v3486 = vshrl.u32 %v3485, 7
        %v3487 = vsub.s32 %v3484, %v3486
        %v3488 = vrot.slane %v1261, %v3487
        %v3490 = vunpack.c.l.s4 269488144
        %v3491 = vunpack.c.0.s8 %v3490
        %v3492 = vlaneseq
        %v3493 = vshrl.u32 %v3492, 7
        %v3494 = vsub.s32 %v3491, %v3493
        %v3495 = vrot.slane %v1262, %v3494
        %v3497 = vunpack.c.l.s4 842150450
        %v3498 = vunpack.c.0.s8 %v3497
        %v3499 = vlaneseq
        %v3500 = vshrl.u32 %v3499, 7
        %v3501 = vsub.s32 %v3498, %v3500
        %v3502 = vrot.slane %v1262, %v3501
        %v3504 = vunpack.c.l.s4 1414812756
        %v3505 = vunpack.c.0.s8 %v3504
        %v3506 = vlaneseq
        %v3507 = vshrl.u32 %v3506, 7
        %v3508 = vsub.s32 %v3505, %v3507
        %v3509 = vrot.slane %v1262, %v3508
        %v3511 = vunpack.c.l.s4 1987475062
        %v3512 = vunpack.c.0.s8 %v3511
        %v3513 = vlaneseq
        %v3514 = vshrl.u32 %v3513, 7
        %v3515 = vsub.s32 %v3512, %v3514
        %v3516 = vrot.slane %v1262, %v3515
        %v3518 = vunpack.c.l.s4 269488144
        %v3519 = vunpack.c.0.s8 %v3518
        %v3520 = vlaneseq
        %v3521 = vshrl.u32 %v3520, 7
        %v3522 = vsub.s32 %v3519, %v3521
        %v3523 = vrot.slane %v1263, %v3522
        %v3525 = vunpack.c.l.s4 842150450
        %v3526 = vunpack.c.0.s8 %v3525
        %v3527 = vlaneseq
        %v3528 = vshrl.u32 %v3527, 7
        %v3529 = vsub.s32 %v3526, %v3528
        %v3530 = vrot.slane %v1263, %v3529
        %v3532 = vunpack.c.l.s4 1414812756
        %v3533 = vunpack.c.0.s8 %v3532
        %v3534 = vlaneseq
        %v3535 = vshrl.u32 %v3534, 7
        %v3536 = vsub.s32 %v3533, %v3535
        %v3537 = vrot.slane %v1263, %v3536
        %v3539 = vunpack.c.l.s4 1987475062
        %v3540 = vunpack.c.0.s8 %v3539
        %v3541 = vlaneseq
        %v3542 = vshrl.u32 %v3541, 7
        %v3543 = vsub.s32 %v3540, %v3542
        %v3544 = vrot.slane %v1263, %v3543
        %v3546 = vunpack.c.l.s4 269488144
        %v3547 = vunpack.c.0.s8 %v3546
        %v3548 = vlaneseq
        %v3549 = vshrl.u32 %v3548, 7
        %v3550 = vsub.s32 %v3547, %v3549
        %v3551 = vrot.slane %v1264, %v3550
        %v3553 = vunpack.c.l.s4 842150450
        %v3554 = vunpack.c.0.s8 %v3553
        %v3555 = vlaneseq
        %v3556 = vshrl.u32 %v3555, 7
        %v3557 = vsub.s32 %v3554, %v3556
        %v3558 = vrot.slane %v1264, %v3557
        %v3560 = vunpack.c.l.s4 1414812756
        %v3561 = vunpack.c.0.s8 %v3560
        %v3562 = vlaneseq
        %v3563 = vshrl.u32 %v3562, 7
        %v3564 = vsub.s32 %v3561, %v3563
        %v3565 = vrot.slane %v1264, %v3564
        %v3567 = vunpack.c.l.s4 1987475062
        %v3568 = vunpack.c.0.s8 %v3567
        %v3569 = vlaneseq
        %v3570 = vshrl.u32 %v3569, 7
        %v3571 = vsub.s32 %v3568, %v3570
        %v3572 = vrot.slane %v1264, %v3571
        %v3574 = vunpack.c.l.s4 269488144
        %v3575 = vunpack.c.0.s8 %v3574
        %v3576 = vlaneseq
        %v3577 = vshrl.u32 %v3576, 7
        %v3578 = vsub.s32 %v3575, %v3577
        %v3579 = vrot.slane %v1265, %v3578
        %v3581 = vunpack.c.l.s4 842150450
        %v3582 = vunpack.c.0.s8 %v3581
        %v3583 = vlaneseq
        %v3584 = vshrl.u32 %v3583, 7
        %v3585 = vsub.s32 %v3582, %v3584
        %v3586 = vrot.slane %v1265, %v3585
        %v3588 = vunpack.c.l.s4 1414812756
        %v3589 = vunpack.c.0.s8 %v3588
        %v3590 = vlaneseq
        %v3591 = vshrl.u32 %v3590, 7
        %v3592 = vsub.s32 %v3589, %v3591
        %v3593 = vrot.slane %v1265, %v3592
        %v3595 = vunpack.c.l.s4 1987475062
        %v3596 = vunpack.c.0.s8 %v3595
        %v3597 = vlaneseq
        %v3598 = vshrl.u32 %v3597, 7
        %v3599 = vsub.s32 %v3596, %v3598
        %v3600 = vrot.slane %v1265, %v3599
        %v3602 = vunpack.c.l.s4 269488144
        %v3603 = vunpack.c.0.s8 %v3602
        %v3604 = vlaneseq
        %v3605 = vshrl.u32 %v3604, 7
        %v3606 = vsub.s32 %v3603, %v3605
        %v3607 = vrot.slane %v1266, %v3606
        %v3609 = vunpack.c.l.s4 842150450
        %v3610 = vunpack.c.0.s8 %v3609
        %v3611 = vlaneseq
        %v3612 = vshrl.u32 %v3611, 7
        %v3613 = vsub.s32 %v3610, %v3612
        %v3614 = vrot.slane %v1266, %v3613
        %v3616 = vunpack.c.l.s4 1414812756
        %v3617 = vunpack.c.0.s8 %v3616
        %v3618 = vlaneseq
        %v3619 = vshrl.u32 %v3618, 7
        %v3620 = vsub.s32 %v3617, %v3619
        %v3621 = vrot.slane %v1266, %v3620
        %v3623 = vunpack.c.l.s4 1987475062
        %v3624 = vunpack.c.0.s8 %v3623
        %v3625 = vlaneseq
        %v3626 = vshrl.u32 %v3625, 7
        %v3627 = vsub.s32 %v3624, %v3626
        %v3628 = vrot.slane %v1266, %v3627
        %v3630 = vunpack.c.l.s4 269488144
        %v3631 = vunpack.c.0.s8 %v3630
        %v3632 = vlaneseq
        %v3633 = vshrl.u32 %v3632, 7
        %v3634 = vsub.s32 %v3631, %v3633
        %v3635 = vrot.slane %v1267, %v3634
        %v3637 = vunpack.c.l.s4 842150450
        %v3638 = vunpack.c.0.s8 %v3637
        %v3639 = vlaneseq
        %v3640 = vshrl.u32 %v3639, 7
        %v3641 = vsub.s32 %v3638, %v3640
        %v3642 = vrot.slane %v1267, %v3641
        %v3644 = vunpack.c.l.s4 1414812756
        %v3645 = vunpack.c.0.s8 %v3644
        %v3646 = vlaneseq
        %v3647 = vshrl.u32 %v3646, 7
        %v3648 = vsub.s32 %v3645, %v3647
        %v3649 = vrot.slane %v1267, %v3648
        %v3651 = vunpack.c.l.s4 1987475062
        %v3652 = vunpack.c.0.s8 %v3651
        %v3653 = vlaneseq
        %v3654 = vshrl.u32 %v3653, 7
        %v3655 = vsub.s32 %v3652, %v3654
        %v3656 = vrot.slane %v1267, %v3655
        %v3658 = vunpack.c.l.s4 269488144
        %v3659 = vunpack.c.0.s8 %v3658
        %v3660 = vlaneseq
        %v3661 = vshrl.u32 %v3660, 7
        %v3662 = vsub.s32 %v3659, %v3661
        %v3663 = vrot.slane %v1268, %v3662
        %v3665 = vunpack.c.l.s4 842150450
        %v3666 = vunpack.c.0.s8 %v3665
        %v3667 = vlaneseq
        %v3668 = vshrl.u32 %v3667, 7
        %v3669 = vsub.s32 %v3666, %v3668
        %v3670 = vrot.slane %v1268, %v3669
        %v3672 = vunpack.c.l.s4 1414812756
        %v3673 = vunpack.c.0.s8 %v3672
        %v3674 = vlaneseq
        %v3675 = vshrl.u32 %v3674, 7
        %v3676 = vsub.s32 %v3673, %v3675
        %v3677 = vrot.slane %v1268, %v3676
        %v3679 = vunpack.c.l.s4 1987475062
        %v3680 = vunpack.c.0.s8 %v3679
        %v3681 = vlaneseq
        %v3682 = vshrl.u32 %v3681, 7
        %v3683 = vsub.s32 %v3680, %v3682
        %v3684 = vrot.slane %v1268, %v3683
        %v3686 = vunpack.c.l.s4 269488144
        %v3687 = vunpack.c.0.s8 %v3686
        %v3688 = vlaneseq
        %v3689 = vshrl.u32 %v3688, 7
        %v3690 = vsub.s32 %v3687, %v3689
        %v3691 = vrot.slane %v1269, %v3690
        %v3693 = vunpack.c.l.s4 842150450
        %v3694 = vunpack.c.0.s8 %v3693
        %v3695 = vlaneseq
        %v3696 = vshrl.u32 %v3695, 7
        %v3697 = vsub.s32 %v3694, %v3696
        %v3698 = vrot.slane %v1269, %v3697
        %v3700 = vunpack.c.l.s4 1414812756
        %v3701 = vunpack.c.0.s8 %v3700
        %v3702 = vlaneseq
        %v3703 = vshrl.u32 %v3702, 7
        %v3704 = vsub.s32 %v3701, %v3703
        %v3705 = vrot.slane %v1269, %v3704
        %v3707 = vunpack.c.l.s4 1987475062
        %v3708 = vunpack.c.0.s8 %v3707
        %v3709 = vlaneseq
        %v3710 = vshrl.u32 %v3709, 7
        %v3711 = vsub.s32 %v3708, %v3710
        %v3712 = vrot.slane %v1269, %v3711
        %v3714 = vunpack.c.l.s4 269488144
        %v3715 = vunpack.c.0.s8 %v3714
        %v3716 = vlaneseq
        %v3717 = vshrl.u32 %v3716, 7
        %v3718 = vsub.s32 %v3715, %v3717
        %v3719 = vrot.slane %v1270, %v3718
        %v3721 = vunpack.c.l.s4 842150450
        %v3722 = vunpack.c.0.s8 %v3721
        %v3723 = vlaneseq
        %v3724 = vshrl.u32 %v3723, 7
        %v3725 = vsub.s32 %v3722, %v3724
        %v3726 = vrot.slane %v1270, %v3725
        %v3728 = vunpack.c.l.s4 1414812756
        %v3729 = vunpack.c.0.s8 %v3728
        %v3730 = vlaneseq
        %v3731 = vshrl.u32 %v3730, 7
        %v3732 = vsub.s32 %v3729, %v3731
        %v3733 = vrot.slane %v1270, %v3732
        %v3735 = vunpack.c.l.s4 1987475062
        %v3736 = vunpack.c.0.s8 %v3735
        %v3737 = vlaneseq
        %v3738 = vshrl.u32 %v3737, 7
        %v3739 = vsub.s32 %v3736, %v3738
        %v3740 = vrot.slane %v1270, %v3739
        %v3742 = vunpack.c.l.s4 269488144
        %v3743 = vunpack.c.0.s8 %v3742
        %v3744 = vlaneseq
        %v3745 = vshrl.u32 %v3744, 7
        %v3746 = vsub.s32 %v3743, %v3745
        %v3747 = vrot.slane %v1271, %v3746
        %v3749 = vunpack.c.l.s4 842150450
        %v3750 = vunpack.c.0.s8 %v3749
        %v3751 = vlaneseq
        %v3752 = vshrl.u32 %v3751, 7
        %v3753 = vsub.s32 %v3750, %v3752
        %v3754 = vrot.slane %v1271, %v3753
        %v3756 = vunpack.c.l.s4 1414812756
        %v3757 = vunpack.c.0.s8 %v3756
        %v3758 = vlaneseq
        %v3759 = vshrl.u32 %v3758, 7
        %v3760 = vsub.s32 %v3757, %v3759
        %v3761 = vrot.slane %v1271, %v3760
        %v3763 = vunpack.c.l.s4 1987475062
        %v3764 = vunpack.c.0.s8 %v3763
        %v3765 = vlaneseq
        %v3766 = vshrl.u32 %v3765, 7
        %v3767 = vsub.s32 %v3764, %v3766
        %v3768 = vrot.slane %v1271, %v3767
        %v3770 = vunpack.c.l.s4 269488144
        %v3771 = vunpack.c.0.s8 %v3770
        %v3772 = vlaneseq
        %v3773 = vshrl.u32 %v3772, 7
        %v3774 = vsub.s32 %v3771, %v3773
        %v3775 = vrot.slane %v1272, %v3774
        %v3777 = vunpack.c.l.s4 842150450
        %v3778 = vunpack.c.0.s8 %v3777
        %v3779 = vlaneseq
        %v3780 = vshrl.u32 %v3779, 7
        %v3781 = vsub.s32 %v3778, %v3780
        %v3782 = vrot.slane %v1272, %v3781
        %v3784 = vunpack.c.l.s4 1414812756
        %v3785 = vunpack.c.0.s8 %v3784
        %v3786 = vlaneseq
        %v3787 = vshrl.u32 %v3786, 7
        %v3788 = vsub.s32 %v3785, %v3787
        %v3789 = vrot.slane %v1272, %v3788
        %v3791 = vunpack.c.l.s4 1987475062
        %v3792 = vunpack.c.0.s8 %v3791
        %v3793 = vlaneseq
        %v3794 = vshrl.u32 %v3793, 7
        %v3795 = vsub.s32 %v3792, %v3794
        %v3796 = vrot.slane %v1272, %v3795
        %v3798 = vunpack.c.l.s4 269488144
        %v3799 = vunpack.c.0.s8 %v3798
        %v3800 = vlaneseq
        %v3801 = vshrl.u32 %v3800, 7
        %v3802 = vsub.s32 %v3799, %v3801
        %v3803 = vrot.slane %v1273, %v3802
        %v3805 = vunpack.c.l.s4 842150450
        %v3806 = vunpack.c.0.s8 %v3805
        %v3807 = vlaneseq
        %v3808 = vshrl.u32 %v3807, 7
        %v3809 = vsub.s32 %v3806, %v3808
        %v3810 = vrot.slane %v1273, %v3809
        %v3812 = vunpack.c.l.s4 1414812756
        %v3813 = vunpack.c.0.s8 %v3812
        %v3814 = vlaneseq
        %v3815 = vshrl.u32 %v3814, 7
        %v3816 = vsub.s32 %v3813, %v3815
        %v3817 = vrot.slane %v1273, %v3816
        %v3819 = vunpack.c.l.s4 1987475062
        %v3820 = vunpack.c.0.s8 %v3819
        %v3821 = vlaneseq
        %v3822 = vshrl.u32 %v3821, 7
        %v3823 = vsub.s32 %v3820, %v3822
        %v3824 = vrot.slane %v1273, %v3823
        %v3826 = vunpack.c.l.s4 269488144
        %v3827 = vunpack.c.0.s8 %v3826
        %v3828 = vlaneseq
        %v3829 = vshrl.u32 %v3828, 7
        %v3830 = vsub.s32 %v3827, %v3829
        %v3831 = vrot.slane %v1274, %v3830
        %v3833 = vunpack.c.l.s4 842150450
        %v3834 = vunpack.c.0.s8 %v3833
        %v3835 = vlaneseq
        %v3836 = vshrl.u32 %v3835, 7
        %v3837 = vsub.s32 %v3834, %v3836
        %v3838 = vrot.slane %v1274, %v3837
        %v3840 = vunpack.c.l.s4 1414812756
        %v3841 = vunpack.c.0.s8 %v3840
        %v3842 = vlaneseq
        %v3843 = vshrl.u32 %v3842, 7
        %v3844 = vsub.s32 %v3841, %v3843
        %v3845 = vrot.slane %v1274, %v3844
        %v3847 = vunpack.c.l.s4 1987475062
        %v3848 = vunpack.c.0.s8 %v3847
        %v3849 = vlaneseq
        %v3850 = vshrl.u32 %v3849, 7
        %v3851 = vsub.s32 %v3848, %v3850
        %v3852 = vrot.slane %v1274, %v3851
        %v3854 = vunpack.c.l.s4 269488144
        %v3855 = vunpack.c.0.s8 %v3854
        %v3856 = vlaneseq
        %v3857 = vshrl.u32 %v3856, 7
        %v3858 = vsub.s32 %v3855, %v3857
        %v3859 = vrot.slane %v1275, %v3858
        %v3861 = vunpack.c.l.s4 842150450
        %v3862 = vunpack.c.0.s8 %v3861
        %v3863 = vlaneseq
        %v3864 = vshrl.u32 %v3863, 7
        %v3865 = vsub.s32 %v3862, %v3864
        %v3866 = vrot.slane %v1275, %v3865
        %v3868 = vunpack.c.l.s4 1414812756
        %v3869 = vunpack.c.0.s8 %v3868
        %v3870 = vlaneseq
        %v3871 = vshrl.u32 %v3870, 7
        %v3872 = vsub.s32 %v3869, %v3871
        %v3873 = vrot.slane %v1275, %v3872
        %v3875 = vunpack.c.l.s4 1987475062
        %v3876 = vunpack.c.0.s8 %v3875
        %v3877 = vlaneseq
        %v3878 = vshrl.u32 %v3877, 7
        %v3879 = vsub.s32 %v3876, %v3878
        %v3880 = vrot.slane %v1275, %v3879
        %v3882 = vunpack.c.l.s4 269488144
        %v3883 = vunpack.c.0.s8 %v3882
        %v3884 = vlaneseq
        %v3885 = vshrl.u32 %v3884, 7
        %v3886 = vsub.s32 %v3883, %v3885
        %v3887 = vrot.slane %v1276, %v3886
        %v3889 = vunpack.c.l.s4 842150450
        %v3890 = vunpack.c.0.s8 %v3889
        %v3891 = vlaneseq
        %v3892 = vshrl.u32 %v3891, 7
        %v3893 = vsub.s32 %v3890, %v3892
        %v3894 = vrot.slane %v1276, %v3893
        %v3896 = vunpack.c.l.s4 1414812756
        %v3897 = vunpack.c.0.s8 %v3896
        %v3898 = vlaneseq
        %v3899 = vshrl.u32 %v3898, 7
        %v3900 = vsub.s32 %v3897, %v3899
        %v3901 = vrot.slane %v1276, %v3900
        %v3903 = vunpack.c.l.s4 1987475062
        %v3904 = vunpack.c.0.s8 %v3903
        %v3905 = vlaneseq
        %v3906 = vshrl.u32 %v3905, 7
        %v3907 = vsub.s32 %v3904, %v3906
        %v3908 = vrot.slane %v1276, %v3907
        %v3910 = vunpack.c.l.s4 269488144
        %v3911 = vunpack.c.0.s8 %v3910
        %v3912 = vlaneseq
        %v3913 = vshrl.u32 %v3912, 7
        %v3914 = vsub.s32 %v3911, %v3913
        %v3915 = vrot.slane %v1277, %v3914
        %v3917 = vunpack.c.l.s4 842150450
        %v3918 = vunpack.c.0.s8 %v3917
        %v3919 = vlaneseq
        %v3920 = vshrl.u32 %v3919, 7
        %v3921 = vsub.s32 %v3918, %v3920
        %v3922 = vrot.slane %v1277, %v3921
        %v3924 = vunpack.c.l.s4 1414812756
        %v3925 = vunpack.c.0.s8 %v3924
        %v3926 = vlaneseq
        %v3927 = vshrl.u32 %v3926, 7
        %v3928 = vsub.s32 %v3925, %v3927
        %v3929 = vrot.slane %v1277, %v3928
        %v3931 = vunpack.c.l.s4 1987475062
        %v3932 = vunpack.c.0.s8 %v3931
        %v3933 = vlaneseq
        %v3934 = vshrl.u32 %v3933, 7
        %v3935 = vsub.s32 %v3932, %v3934
        %v3936 = vrot.slane %v1277, %v3935
        %v3938 = vunpack.c.l.s4 269488144
        %v3939 = vunpack.c.0.s8 %v3938
        %v3940 = vlaneseq
        %v3941 = vshrl.u32 %v3940, 7
        %v3942 = vsub.s32 %v3939, %v3941
        %v3943 = vrot.slane %v1278, %v3942
        %v3945 = vunpack.c.l.s4 842150450
        %v3946 = vunpack.c.0.s8 %v3945
        %v3947 = vlaneseq
        %v3948 = vshrl.u32 %v3947, 7
        %v3949 = vsub.s32 %v3946, %v3948
        %v3950 = vrot.slane %v1278, %v3949
        %v3952 = vunpack.c.l.s4 1414812756
        %v3953 = vunpack.c.0.s8 %v3952
        %v3954 = vlaneseq
        %v3955 = vshrl.u32 %v3954, 7
        %v3956 = vsub.s32 %v3953, %v3955
        %v3957 = vrot.slane %v1278, %v3956
        %v3959 = vunpack.c.l.s4 1987475062
        %v3960 = vunpack.c.0.s8 %v3959
        %v3961 = vlaneseq
        %v3962 = vshrl.u32 %v3961, 7
        %v3963 = vsub.s32 %v3960, %v3962
        %v3964 = vrot.slane %v1278, %v3963
        %v3966 = vunpack.c.l.s4 269488144
        %v3967 = vunpack.c.0.s8 %v3966
        %v3968 = vlaneseq
        %v3969 = vshrl.u32 %v3968, 7
        %v3970 = vsub.s32 %v3967, %v3969
        %v3971 = vrot.slane %v1279, %v3970
        %v3973 = vunpack.c.l.s4 842150450
        %v3974 = vunpack.c.0.s8 %v3973
        %v3975 = vlaneseq
        %v3976 = vshrl.u32 %v3975, 7
        %v3977 = vsub.s32 %v3974, %v3976
        %v3978 = vrot.slane %v1279, %v3977
        %v3980 = vunpack.c.l.s4 1414812756
        %v3981 = vunpack.c.0.s8 %v3980
        %v3982 = vlaneseq
        %v3983 = vshrl.u32 %v3982, 7
        %v3984 = vsub.s32 %v3981, %v3983
        %v3985 = vrot.slane %v1279, %v3984
        %v3987 = vunpack.c.l.s4 1987475062
        %v3988 = vunpack.c.0.s8 %v3987
        %v3989 = vlaneseq
        %v3990 = vshrl.u32 %v3989, 7
        %v3991 = vsub.s32 %v3988, %v3990
        %v3992 = vrot.slane %v1279, %v3991
        %v3994 = vunpack.c.l.s4 269488144
        %v3995 = vunpack.c.0.s8 %v3994
        %v3996 = vlaneseq
        %v3997 = vshrl.u32 %v3996, 7
        %v3998 = vsub.s32 %v3995, %v3997
        %v3999 = vrot.slane %v1280, %v3998
        %v4001 = vunpack.c.l.s4 842150450
        %v4002 = vunpack.c.0.s8 %v4001
        %v4003 = vlaneseq
        %v4004 = vshrl.u32 %v4003, 7
        %v4005 = vsub.s32 %v4002, %v4004
        %v4006 = vrot.slane %v1280, %v4005
        %v4008 = vunpack.c.l.s4 1414812756
        %v4009 = vunpack.c.0.s8 %v4008
        %v4010 = vlaneseq
        %v4011 = vshrl.u32 %v4010, 7
        %v4012 = vsub.s32 %v4009, %v4011
        %v4013 = vrot.slane %v1280, %v4012
        %v4015 = vunpack.c.l.s4 1987475062
        %v4016 = vunpack.c.0.s8 %v4015
        %v4017 = vlaneseq
        %v4018 = vshrl.u32 %v4017, 7
        %v4019 = vsub.s32 %v4016, %v4018
        %v4020 = vrot.slane %v1280, %v4019
        %v4022 = vunpack.c.l.s4 269488144
        %v4023 = vunpack.c.0.s8 %v4022
        %v4024 = vlaneseq
        %v4025 = vshrl.u32 %v4024, 7
        %v4026 = vsub.s32 %v4023, %v4025
        %v4027 = vrot.slane %v1281, %v4026
        %v4029 = vunpack.c.l.s4 842150450
        %v4030 = vunpack.c.0.s8 %v4029
        %v4031 = vlaneseq
        %v4032 = vshrl.u32 %v4031, 7
        %v4033 = vsub.s32 %v4030, %v4032
        %v4034 = vrot.slane %v1281, %v4033
        %v4036 = vunpack.c.l.s4 1414812756
        %v4037 = vunpack.c.0.s8 %v4036
        %v4038 = vlaneseq
        %v4039 = vshrl.u32 %v4038, 7
        %v4040 = vsub.s32 %v4037, %v4039
        %v4041 = vrot.slane %v1281, %v4040
        %v4043 = vunpack.c.l.s4 1987475062
        %v4044 = vunpack.c.0.s8 %v4043
        %v4045 = vlaneseq
        %v4046 = vshrl.u32 %v4045, 7
        %v4047 = vsub.s32 %v4044, %v4046
        %v4048 = vrot.slane %v1281, %v4047
        %v4050 = vunpack.c.l.s4 269488144
        %v4051 = vunpack.c.0.s8 %v4050
        %v4052 = vlaneseq
        %v4053 = vshrl.u32 %v4052, 7
        %v4054 = vsub.s32 %v4051, %v4053
        %v4055 = vrot.slane %v1282, %v4054
        %v4057 = vunpack.c.l.s4 842150450
        %v4058 = vunpack.c.0.s8 %v4057
        %v4059 = vlaneseq
        %v4060 = vshrl.u32 %v4059, 7
        %v4061 = vsub.s32 %v4058, %v4060
        %v4062 = vrot.slane %v1282, %v4061
        %v4064 = vunpack.c.l.s4 1414812756
        %v4065 = vunpack.c.0.s8 %v4064
        %v4066 = vlaneseq
        %v4067 = vshrl.u32 %v4066, 7
        %v4068 = vsub.s32 %v4065, %v4067
        %v4069 = vrot.slane %v1282, %v4068
        %v4071 = vunpack.c.l.s4 1987475062
        %v4072 = vunpack.c.0.s8 %v4071
        %v4073 = vlaneseq
        %v4074 = vshrl.u32 %v4073, 7
        %v4075 = vsub.s32 %v4072, %v4074
        %v4076 = vrot.slane %v1282, %v4075
        %v4078 = vunpack.c.l.s4 269488144
        %v4079 = vunpack.c.0.s8 %v4078
        %v4080 = vlaneseq
        %v4081 = vshrl.u32 %v4080, 7
        %v4082 = vsub.s32 %v4079, %v4081
        %v4083 = vrot.slane %v1283, %v4082
        %v4085 = vunpack.c.l.s4 842150450
        %v4086 = vunpack.c.0.s8 %v4085
        %v4087 = vlaneseq
        %v4088 = vshrl.u32 %v4087, 7
        %v4089 = vsub.s32 %v4086, %v4088
        %v4090 = vrot.slane %v1283, %v4089
        %v4092 = vunpack.c.l.s4 1414812756
        %v4093 = vunpack.c.0.s8 %v4092
        %v4094 = vlaneseq
        %v4095 = vshrl.u32 %v4094, 7
        %v4096 = vsub.s32 %v4093, %v4095
        %v4097 = vrot.slane %v1283, %v4096
        %v4099 = vunpack.c.l.s4 1987475062
        %v4100 = vunpack.c.0.s8 %v4099
        %v4101 = vlaneseq
        %v4102 = vshrl.u32 %v4101, 7
        %v4103 = vsub.s32 %v4100, %v4102
        %v4104 = vrot.slane %v1283, %v4103
        %v4106 = vunpack.c.l.s4 269488144
        %v4107 = vunpack.c.0.s8 %v4106
        %v4108 = vlaneseq
        %v4109 = vshrl.u32 %v4108, 7
        %v4110 = vsub.s32 %v4107, %v4109
        %v4111 = vrot.slane %v1284, %v4110
        %v4113 = vunpack.c.l.s4 842150450
        %v4114 = vunpack.c.0.s8 %v4113
        %v4115 = vlaneseq
        %v4116 = vshrl.u32 %v4115, 7
        %v4117 = vsub.s32 %v4114, %v4116
        %v4118 = vrot.slane %v1284, %v4117
        %v4120 = vunpack.c.l.s4 1414812756
        %v4121 = vunpack.c.0.s8 %v4120
        %v4122 = vlaneseq
        %v4123 = vshrl.u32 %v4122, 7
        %v4124 = vsub.s32 %v4121, %v4123
        %v4125 = vrot.slane %v1284, %v4124
        %v4127 = vunpack.c.l.s4 1987475062
        %v4128 = vunpack.c.0.s8 %v4127
        %v4129 = vlaneseq
        %v4130 = vshrl.u32 %v4129, 7
        %v4131 = vsub.s32 %v4128, %v4130
        %v4132 = vrot.slane %v1284, %v4131
        %v4134 = vunpack.c.l.s4 269488144
        %v4135 = vunpack.c.0.s8 %v4134
        %v4136 = vlaneseq
        %v4137 = vshrl.u32 %v4136, 7
        %v4138 = vsub.s32 %v4135, %v4137
        %v4139 = vrot.slane %v1285, %v4138
        %v4141 = vunpack.c.l.s4 842150450
        %v4142 = vunpack.c.0.s8 %v4141
        %v4143 = vlaneseq
        %v4144 = vshrl.u32 %v4143, 7
        %v4145 = vsub.s32 %v4142, %v4144
        %v4146 = vrot.slane %v1285, %v4145
        %v4148 = vunpack.c.l.s4 1414812756
        %v4149 = vunpack.c.0.s8 %v4148
        %v4150 = vlaneseq
        %v4151 = vshrl.u32 %v4150, 7
        %v4152 = vsub.s32 %v4149, %v4151
        %v4153 = vrot.slane %v1285, %v4152
        %v4155 = vunpack.c.l.s4 1987475062
        %v4156 = vunpack.c.0.s8 %v4155
        %v4157 = vlaneseq
        %v4158 = vshrl.u32 %v4157, 7
        %v4159 = vsub.s32 %v4156, %v4158
        %v4160 = vrot.slane %v1285, %v4159
        %v4162 = vunpack.c.l.s4 269488144
        %v4163 = vunpack.c.0.s8 %v4162
        %v4164 = vlaneseq
        %v4165 = vshrl.u32 %v4164, 7
        %v4166 = vsub.s32 %v4163, %v4165
        %v4167 = vrot.slane %v1286, %v4166
        %v4169 = vunpack.c.l.s4 842150450
        %v4170 = vunpack.c.0.s8 %v4169
        %v4171 = vlaneseq
        %v4172 = vshrl.u32 %v4171, 7
        %v4173 = vsub.s32 %v4170, %v4172
        %v4174 = vrot.slane %v1286, %v4173
        %v4176 = vunpack.c.l.s4 1414812756
        %v4177 = vunpack.c.0.s8 %v4176
        %v4178 = vlaneseq
        %v4179 = vshrl.u32 %v4178, 7
        %v4180 = vsub.s32 %v4177, %v4179
        %v4181 = vrot.slane %v1286, %v4180
        %v4183 = vunpack.c.l.s4 1987475062
        %v4184 = vunpack.c.0.s8 %v4183
        %v4185 = vlaneseq
        %v4186 = vshrl.u32 %v4185, 7
        %v4187 = vsub.s32 %v4184, %v4186
        %v4188 = vrot.slane %v1286, %v4187
        %v4190 = vunpack.c.l.s4 269488144
        %v4191 = vunpack.c.0.s8 %v4190
        %v4192 = vlaneseq
        %v4193 = vshrl.u32 %v4192, 7
        %v4194 = vsub.s32 %v4191, %v4193
        %v4195 = vrot.slane %v1287, %v4194
        %v4197 = vunpack.c.l.s4 842150450
        %v4198 = vunpack.c.0.s8 %v4197
        %v4199 = vlaneseq
        %v4200 = vshrl.u32 %v4199, 7
        %v4201 = vsub.s32 %v4198, %v4200
        %v4202 = vrot.slane %v1287, %v4201
        %v4204 = vunpack.c.l.s4 1414812756
        %v4205 = vunpack.c.0.s8 %v4204
        %v4206 = vlaneseq
        %v4207 = vshrl.u32 %v4206, 7
        %v4208 = vsub.s32 %v4205, %v4207
        %v4209 = vrot.slane %v1287, %v4208
        %v4211 = vunpack.c.l.s4 1987475062
        %v4212 = vunpack.c.0.s8 %v4211
        %v4213 = vlaneseq
        %v4214 = vshrl.u32 %v4213, 7
        %v4215 = vsub.s32 %v4212, %v4214
        %v4216 = vrot.slane %v1287, %v4215
        %v4218 = vunpack.c.l.s4 269488144
        %v4219 = vunpack.c.0.s8 %v4218
        %v4220 = vlaneseq
        %v4221 = vshrl.u32 %v4220, 7
        %v4222 = vsub.s32 %v4219, %v4221
        %v4223 = vrot.slane %v1288, %v4222
        %v4225 = vunpack.c.l.s4 842150450
        %v4226 = vunpack.c.0.s8 %v4225
        %v4227 = vlaneseq
        %v4228 = vshrl.u32 %v4227, 7
        %v4229 = vsub.s32 %v4226, %v4228
        %v4230 = vrot.slane %v1288, %v4229
        %v4232 = vunpack.c.l.s4 1414812756
        %v4233 = vunpack.c.0.s8 %v4232
        %v4234 = vlaneseq
        %v4235 = vshrl.u32 %v4234, 7
        %v4236 = vsub.s32 %v4233, %v4235
        %v4237 = vrot.slane %v1288, %v4236
        %v4239 = vunpack.c.l.s4 1987475062
        %v4240 = vunpack.c.0.s8 %v4239
        %v4241 = vlaneseq
        %v4242 = vshrl.u32 %v4241, 7
        %v4243 = vsub.s32 %v4240, %v4242
        %v4244 = vrot.slane %v1288, %v4243
        %v4246 = vunpack.c.l.s4 269488144
        %v4247 = vunpack.c.0.s8 %v4246
        %v4248 = vlaneseq
        %v4249 = vshrl.u32 %v4248, 7
        %v4250 = vsub.s32 %v4247, %v4249
        %v4251 = vrot.slane %v1289, %v4250
        %v4253 = vunpack.c.l.s4 842150450
        %v4254 = vunpack.c.0.s8 %v4253
        %v4255 = vlaneseq
        %v4256 = vshrl.u32 %v4255, 7
        %v4257 = vsub.s32 %v4254, %v4256
        %v4258 = vrot.slane %v1289, %v4257
        %v4260 = vunpack.c.l.s4 1414812756
        %v4261 = vunpack.c.0.s8 %v4260
        %v4262 = vlaneseq
        %v4263 = vshrl.u32 %v4262, 7
        %v4264 = vsub.s32 %v4261, %v4263
        %v4265 = vrot.slane %v1289, %v4264
        %v4267 = vunpack.c.l.s4 1987475062
        %v4268 = vunpack.c.0.s8 %v4267
        %v4269 = vlaneseq
        %v4270 = vshrl.u32 %v4269, 7
        %v4271 = vsub.s32 %v4268, %v4270
        %v4272 = vrot.slane %v1289, %v4271
        %v4274 = vunpack.c.l.s4 269488144
        %v4275 = vunpack.c.0.s8 %v4274
        %v4276 = vlaneseq
        %v4277 = vshrl.u32 %v4276, 7
        %v4278 = vsub.s32 %v4275, %v4277
        %v4279 = vrot.slane %v1290, %v4278
        %v4281 = vunpack.c.l.s4 842150450
        %v4282 = vunpack.c.0.s8 %v4281
        %v4283 = vlaneseq
        %v4284 = vshrl.u32 %v4283, 7
        %v4285 = vsub.s32 %v4282, %v4284
        %v4286 = vrot.slane %v1290, %v4285
        %v4288 = vunpack.c.l.s4 1414812756
        %v4289 = vunpack.c.0.s8 %v4288
        %v4290 = vlaneseq
        %v4291 = vshrl.u32 %v4290, 7
        %v4292 = vsub.s32 %v4289, %v4291
        %v4293 = vrot.slane %v1290, %v4292
        %v4295 = vunpack.c.l.s4 1987475062
        %v4296 = vunpack.c.0.s8 %v4295
        %v4297 = vlaneseq
        %v4298 = vshrl.u32 %v4297, 7
        %v4299 = vsub.s32 %v4296, %v4298
        %v4300 = vrot.slane %v1290, %v4299
        %v4302 = vunpack.c.l.s4 269488144
        %v4303 = vunpack.c.0.s8 %v4302
        %v4304 = vlaneseq
        %v4305 = vshrl.u32 %v4304, 7
        %v4306 = vsub.s32 %v4303, %v4305
        %v4307 = vrot.slane %v1291, %v4306
        %v4309 = vunpack.c.l.s4 842150450
        %v4310 = vunpack.c.0.s8 %v4309
        %v4311 = vlaneseq
        %v4312 = vshrl.u32 %v4311, 7
        %v4313 = vsub.s32 %v4310, %v4312
        %v4314 = vrot.slane %v1291, %v4313
        %v4316 = vunpack.c.l.s4 1414812756
        %v4317 = vunpack.c.0.s8 %v4316
        %v4318 = vlaneseq
        %v4319 = vshrl.u32 %v4318, 7
        %v4320 = vsub.s32 %v4317, %v4319
        %v4321 = vrot.slane %v1291, %v4320
        %v4323 = vunpack.c.l.s4 1987475062
        %v4324 = vunpack.c.0.s8 %v4323
        %v4325 = vlaneseq
        %v4326 = vshrl.u32 %v4325, 7
        %v4327 = vsub.s32 %v4324, %v4326
        %v4328 = vrot.slane %v1291, %v4327
        %v4330 = vunpack.c.l.s4 269488144
        %v4331 = vunpack.c.0.s8 %v4330
        %v4332 = vlaneseq
        %v4333 = vshrl.u32 %v4332, 7
        %v4334 = vsub.s32 %v4331, %v4333
        %v4335 = vrot.slane %v1292, %v4334
        %v4337 = vunpack.c.l.s4 842150450
        %v4338 = vunpack.c.0.s8 %v4337
        %v4339 = vlaneseq
        %v4340 = vshrl.u32 %v4339, 7
        %v4341 = vsub.s32 %v4338, %v4340
        %v4342 = vrot.slane %v1292, %v4341
        %v4344 = vunpack.c.l.s4 1414812756
        %v4345 = vunpack.c.0.s8 %v4344
        %v4346 = vlaneseq
        %v4347 = vshrl.u32 %v4346, 7
        %v4348 = vsub.s32 %v4345, %v4347
        %v4349 = vrot.slane %v1292, %v4348
        %v4351 = vunpack.c.l.s4 1987475062
        %v4352 = vunpack.c.0.s8 %v4351
        %v4353 = vlaneseq
        %v4354 = vshrl.u32 %v4353, 7
        %v4355 = vsub.s32 %v4352, %v4354
        %v4356 = vrot.slane %v1292, %v4355
        %v4358 = vunpack.c.l.s4 269488144
        %v4359 = vunpack.c.0.s8 %v4358
        %v4360 = vlaneseq
        %v4361 = vshrl.u32 %v4360, 7
        %v4362 = vsub.s32 %v4359, %v4361
        %v4363 = vrot.slane %v1293, %v4362
        %v4365 = vunpack.c.l.s4 842150450
        %v4366 = vunpack.c.0.s8 %v4365
        %v4367 = vlaneseq
        %v4368 = vshrl.u32 %v4367, 7
        %v4369 = vsub.s32 %v4366, %v4368
        %v4370 = vrot.slane %v1293, %v4369
        %v4372 = vunpack.c.l.s4 1414812756
        %v4373 = vunpack.c.0.s8 %v4372
        %v4374 = vlaneseq
        %v4375 = vshrl.u32 %v4374, 7
        %v4376 = vsub.s32 %v4373, %v4375
        %v4377 = vrot.slane %v1293, %v4376
        %v4379 = vunpack.c.l.s4 1987475062
        %v4380 = vunpack.c.0.s8 %v4379
        %v4381 = vlaneseq
        %v4382 = vshrl.u32 %v4381, 7
        %v4383 = vsub.s32 %v4380, %v4382
        %v4384 = vrot.slane %v1293, %v4383
        %v4386 = vunpack.c.l.s4 269488144
        %v4387 = vunpack.c.0.s8 %v4386
        %v4388 = vlaneseq
        %v4389 = vshrl.u32 %v4388, 7
        %v4390 = vsub.s32 %v4387, %v4389
        %v4391 = vrot.slane %v1294, %v4390
        %v4393 = vunpack.c.l.s4 842150450
        %v4394 = vunpack.c.0.s8 %v4393
        %v4395 = vlaneseq
        %v4396 = vshrl.u32 %v4395, 7
        %v4397 = vsub.s32 %v4394, %v4396
        %v4398 = vrot.slane %v1294, %v4397
        %v4400 = vunpack.c.l.s4 1414812756
        %v4401 = vunpack.c.0.s8 %v4400
        %v4402 = vlaneseq
        %v4403 = vshrl.u32 %v4402, 7
        %v4404 = vsub.s32 %v4401, %v4403
        %v4405 = vrot.slane %v1294, %v4404
        %v4407 = vunpack.c.l.s4 1987475062
        %v4408 = vunpack.c.0.s8 %v4407
        %v4409 = vlaneseq
        %v4410 = vshrl.u32 %v4409, 7
        %v4411 = vsub.s32 %v4408, %v4410
        %v4412 = vrot.slane %v1294, %v4411
        %v4414 = vunpack.c.l.s4 269488144
        %v4415 = vunpack.c.0.s8 %v4414
        %v4416 = vlaneseq
        %v4417 = vshrl.u32 %v4416, 7
        %v4418 = vsub.s32 %v4415, %v4417
        %v4419 = vrot.slane %v1295, %v4418
        %v4421 = vunpack.c.l.s4 842150450
        %v4422 = vunpack.c.0.s8 %v4421
        %v4423 = vlaneseq
        %v4424 = vshrl.u32 %v4423, 7
        %v4425 = vsub.s32 %v4422, %v4424
        %v4426 = vrot.slane %v1295, %v4425
        %v4428 = vunpack.c.l.s4 1414812756
        %v4429 = vunpack.c.0.s8 %v4428
        %v4430 = vlaneseq
        %v4431 = vshrl.u32 %v4430, 7
        %v4432 = vsub.s32 %v4429, %v4431
        %v4433 = vrot.slane %v1295, %v4432
        %v4435 = vunpack.c.l.s4 1987475062
        %v4436 = vunpack.c.0.s8 %v4435
        %v4437 = vlaneseq
        %v4438 = vshrl.u32 %v4437, 7
        %v4439 = vsub.s32 %v4436, %v4438
        %v4440 = vrot.slane %v1295, %v4439
        %v4442 = vunpack.c.l.s4 269488144
        %v4443 = vunpack.c.0.s8 %v4442
        %v4444 = vlaneseq
        %v4445 = vshrl.u32 %v4444, 7
        %v4446 = vsub.s32 %v4443, %v4445
        %v4447 = vrot.slane %v1296, %v4446
        %v4449 = vunpack.c.l.s4 842150450
        %v4450 = vunpack.c.0.s8 %v4449
        %v4451 = vlaneseq
        %v4452 = vshrl.u32 %v4451, 7
        %v4453 = vsub.s32 %v4450, %v4452
        %v4454 = vrot.slane %v1296, %v4453
        %v4456 = vunpack.c.l.s4 1414812756
        %v4457 = vunpack.c.0.s8 %v4456
        %v4458 = vlaneseq
        %v4459 = vshrl.u32 %v4458, 7
        %v4460 = vsub.s32 %v4457, %v4459
        %v4461 = vrot.slane %v1296, %v4460
        %v4463 = vunpack.c.l.s4 1987475062
        %v4464 = vunpack.c.0.s8 %v4463
        %v4465 = vlaneseq
        %v4466 = vshrl.u32 %v4465, 7
        %v4467 = vsub.s32 %v4464, %v4466
        %v4468 = vrot.slane %v1296, %v4467
        %v4470 = vunpack.c.l.s4 269488144
        %v4471 = vunpack.c.0.s8 %v4470
        %v4472 = vlaneseq
        %v4473 = vshrl.u32 %v4472, 7
        %v4474 = vsub.s32 %v4471, %v4473
        %v4475 = vrot.slane %v1297, %v4474
        %v4477 = vunpack.c.l.s4 842150450
        %v4478 = vunpack.c.0.s8 %v4477
        %v4479 = vlaneseq
        %v4480 = vshrl.u32 %v4479, 7
        %v4481 = vsub.s32 %v4478, %v4480
        %v4482 = vrot.slane %v1297, %v4481
        %v4484 = vunpack.c.l.s4 1414812756
        %v4485 = vunpack.c.0.s8 %v4484
        %v4486 = vlaneseq
        %v4487 = vshrl.u32 %v4486, 7
        %v4488 = vsub.s32 %v4485, %v4487
        %v4489 = vrot.slane %v1297, %v4488
        %v4491 = vunpack.c.l.s4 1987475062
        %v4492 = vunpack.c.0.s8 %v4491
        %v4493 = vlaneseq
        %v4494 = vshrl.u32 %v4493, 7
        %v4495 = vsub.s32 %v4492, %v4494
        %v4496 = vrot.slane %v1297, %v4495
        %v4498 = vunpack.c.l.s4 269488144
        %v4499 = vunpack.c.0.s8 %v4498
        %v4500 = vlaneseq
        %v4501 = vshrl.u32 %v4500, 7
        %v4502 = vsub.s32 %v4499, %v4501
        %v4503 = vrot.slane %v1298, %v4502
        %v4505 = vunpack.c.l.s4 842150450
        %v4506 = vunpack.c.0.s8 %v4505
        %v4507 = vlaneseq
        %v4508 = vshrl.u32 %v4507, 7
        %v4509 = vsub.s32 %v4506, %v4508
        %v4510 = vrot.slane %v1298, %v4509
        %v4512 = vunpack.c.l.s4 1414812756
        %v4513 = vunpack.c.0.s8 %v4512
        %v4514 = vlaneseq
        %v4515 = vshrl.u32 %v4514, 7
        %v4516 = vsub.s32 %v4513, %v4515
        %v4517 = vrot.slane %v1298, %v4516
        %v4519 = vunpack.c.l.s4 1987475062
        %v4520 = vunpack.c.0.s8 %v4519
        %v4521 = vlaneseq
        %v4522 = vshrl.u32 %v4521, 7
        %v4523 = vsub.s32 %v4520, %v4522
        %v4524 = vrot.slane %v1298, %v4523
        %v4526 = vunpack.c.l.s4 269488144
        %v4527 = vunpack.c.0.s8 %v4526
        %v4528 = vlaneseq
        %v4529 = vshrl.u32 %v4528, 7
        %v4530 = vsub.s32 %v4527, %v4529
        %v4531 = vrot.slane %v1299, %v4530
        %v4533 = vunpack.c.l.s4 842150450
        %v4534 = vunpack.c.0.s8 %v4533
        %v4535 = vlaneseq
        %v4536 = vshrl.u32 %v4535, 7
        %v4537 = vsub.s32 %v4534, %v4536
        %v4538 = vrot.slane %v1299, %v4537
        %v4540 = vunpack.c.l.s4 1414812756
        %v4541 = vunpack.c.0.s8 %v4540
        %v4542 = vlaneseq
        %v4543 = vshrl.u32 %v4542, 7
        %v4544 = vsub.s32 %v4541, %v4543
        %v4545 = vrot.slane %v1299, %v4544
        %v4547 = vunpack.c.l.s4 1987475062
        %v4548 = vunpack.c.0.s8 %v4547
        %v4549 = vlaneseq
        %v4550 = vshrl.u32 %v4549, 7
        %v4551 = vsub.s32 %v4548, %v4550
        %v4552 = vrot.slane %v1299, %v4551
        %v4554 = vunpack.c.l.s4 269488144
        %v4555 = vunpack.c.0.s8 %v4554
        %v4556 = vlaneseq
        %v4557 = vshrl.u32 %v4556, 7
        %v4558 = vsub.s32 %v4555, %v4557
        %v4559 = vrot.slane %v1300, %v4558
        %v4561 = vunpack.c.l.s4 842150450
        %v4562 = vunpack.c.0.s8 %v4561
        %v4563 = vlaneseq
        %v4564 = vshrl.u32 %v4563, 7
        %v4565 = vsub.s32 %v4562, %v4564
        %v4566 = vrot.slane %v1300, %v4565
        %v4568 = vunpack.c.l.s4 1414812756
        %v4569 = vunpack.c.0.s8 %v4568
        %v4570 = vlaneseq
        %v4571 = vshrl.u32 %v4570, 7
        %v4572 = vsub.s32 %v4569, %v4571
        %v4573 = vrot.slane %v1300, %v4572
        %v4575 = vunpack.c.l.s4 1987475062
        %v4576 = vunpack.c.0.s8 %v4575
        %v4577 = vlaneseq
        %v4578 = vshrl.u32 %v4577, 7
        %v4579 = vsub.s32 %v4576, %v4578
        %v4580 = vrot.slane %v1300, %v4579
        %v4582 = vunpack.c.l.s4 269488144
        %v4583 = vunpack.c.0.s8 %v4582
        %v4584 = vlaneseq
        %v4585 = vshrl.u32 %v4584, 7
        %v4586 = vsub.s32 %v4583, %v4585
        %v4587 = vrot.slane %v1301, %v4586
        %v4589 = vunpack.c.l.s4 842150450
        %v4590 = vunpack.c.0.s8 %v4589
        %v4591 = vlaneseq
        %v4592 = vshrl.u32 %v4591, 7
        %v4593 = vsub.s32 %v4590, %v4592
        %v4594 = vrot.slane %v1301, %v4593
        %v4596 = vunpack.c.l.s4 1414812756
        %v4597 = vunpack.c.0.s8 %v4596
        %v4598 = vlaneseq
        %v4599 = vshrl.u32 %v4598, 7
        %v4600 = vsub.s32 %v4597, %v4599
        %v4601 = vrot.slane %v1301, %v4600
        %v4603 = vunpack.c.l.s4 1987475062
        %v4604 = vunpack.c.0.s8 %v4603
        %v4605 = vlaneseq
        %v4606 = vshrl.u32 %v4605, 7
        %v4607 = vsub.s32 %v4604, %v4606
        %v4608 = vrot.slane %v1301, %v4607
        %v4610 = vunpack.c.l.s4 269488144
        %v4611 = vunpack.c.0.s8 %v4610
        %v4612 = vlaneseq
        %v4613 = vshrl.u32 %v4612, 7
        %v4614 = vsub.s32 %v4611, %v4613
        %v4615 = vrot.slane %v1302, %v4614
        %v4617 = vunpack.c.l.s4 842150450
        %v4618 = vunpack.c.0.s8 %v4617
        %v4619 = vlaneseq
        %v4620 = vshrl.u32 %v4619, 7
        %v4621 = vsub.s32 %v4618, %v4620
        %v4622 = vrot.slane %v1302, %v4621
        %v4624 = vunpack.c.l.s4 1414812756
        %v4625 = vunpack.c.0.s8 %v4624
        %v4626 = vlaneseq
        %v4627 = vshrl.u32 %v4626, 7
        %v4628 = vsub.s32 %v4625, %v4627
        %v4629 = vrot.slane %v1302, %v4628
        %v4631 = vunpack.c.l.s4 1987475062
        %v4632 = vunpack.c.0.s8 %v4631
        %v4633 = vlaneseq
        %v4634 = vshrl.u32 %v4633, 7
        %v4635 = vsub.s32 %v4632, %v4634
        %v4636 = vrot.slane %v1302, %v4635
        %v4638 = vunpack.c.l.s4 269488144
        %v4639 = vunpack.c.0.s8 %v4638
        %v4640 = vlaneseq
        %v4641 = vshrl.u32 %v4640, 7
        %v4642 = vsub.s32 %v4639, %v4641
        %v4643 = vrot.slane %v1303, %v4642
        %v4645 = vunpack.c.l.s4 842150450
        %v4646 = vunpack.c.0.s8 %v4645
        %v4647 = vlaneseq
        %v4648 = vshrl.u32 %v4647, 7
        %v4649 = vsub.s32 %v4646, %v4648
        %v4650 = vrot.slane %v1303, %v4649
        %v4652 = vunpack.c.l.s4 1414812756
        %v4653 = vunpack.c.0.s8 %v4652
        %v4654 = vlaneseq
        %v4655 = vshrl.u32 %v4654, 7
        %v4656 = vsub.s32 %v4653, %v4655
        %v4657 = vrot.slane %v1303, %v4656
        %v4659 = vunpack.c.l.s4 1987475062
        %v4660 = vunpack.c.0.s8 %v4659
        %v4661 = vlaneseq
        %v4662 = vshrl.u32 %v4661, 7
        %v4663 = vsub.s32 %v4660, %v4662
        %v4664 = vrot.slane %v1303, %v4663
        %v4666 = vunpack.c.l.s4 269488144
        %v4667 = vunpack.c.0.s8 %v4666
        %v4668 = vlaneseq
        %v4669 = vshrl.u32 %v4668, 7
        %v4670 = vsub.s32 %v4667, %v4669
        %v4671 = vrot.slane %v1304, %v4670
        %v4673 = vunpack.c.l.s4 842150450
        %v4674 = vunpack.c.0.s8 %v4673
        %v4675 = vlaneseq
        %v4676 = vshrl.u32 %v4675, 7
        %v4677 = vsub.s32 %v4674, %v4676
        %v4678 = vrot.slane %v1304, %v4677
        %v4680 = vunpack.c.l.s4 1414812756
        %v4681 = vunpack.c.0.s8 %v4680
        %v4682 = vlaneseq
        %v4683 = vshrl.u32 %v4682, 7
        %v4684 = vsub.s32 %v4681, %v4683
        %v4685 = vrot.slane %v1304, %v4684
        %v4687 = vunpack.c.l.s4 1987475062
        %v4688 = vunpack.c.0.s8 %v4687
        %v4689 = vlaneseq
        %v4690 = vshrl.u32 %v4689, 7
        %v4691 = vsub.s32 %v4688, %v4690
        %v4692 = vrot.slane %v1304, %v4691
        %v4694 = vunpack.c.l.s4 269488144
        %v4695 = vunpack.c.0.s8 %v4694
        %v4696 = vlaneseq
        %v4697 = vshrl.u32 %v4696, 7
        %v4698 = vsub.s32 %v4695, %v4697
        %v4699 = vrot.slane %v1305, %v4698
        %v4701 = vunpack.c.l.s4 842150450
        %v4702 = vunpack.c.0.s8 %v4701
        %v4703 = vlaneseq
        %v4704 = vshrl.u32 %v4703, 7
        %v4705 = vsub.s32 %v4702, %v4704
        %v4706 = vrot.slane %v1305, %v4705
        %v4708 = vunpack.c.l.s4 1414812756
        %v4709 = vunpack.c.0.s8 %v4708
        %v4710 = vlaneseq
        %v4711 = vshrl.u32 %v4710, 7
        %v4712 = vsub.s32 %v4709, %v4711
        %v4713 = vrot.slane %v1305, %v4712
        %v4715 = vunpack.c.l.s4 1987475062
        %v4716 = vunpack.c.0.s8 %v4715
        %v4717 = vlaneseq
        %v4718 = vshrl.u32 %v4717, 7
        %v4719 = vsub.s32 %v4716, %v4718
        %v4720 = vrot.slane %v1305, %v4719
        %v4722 = vunpack.c.l.s4 269488144
        %v4723 = vunpack.c.0.s8 %v4722
        %v4724 = vlaneseq
        %v4725 = vshrl.u32 %v4724, 7
        %v4726 = vsub.s32 %v4723, %v4725
        %v4727 = vrot.slane %v1306, %v4726
        %v4729 = vunpack.c.l.s4 842150450
        %v4730 = vunpack.c.0.s8 %v4729
        %v4731 = vlaneseq
        %v4732 = vshrl.u32 %v4731, 7
        %v4733 = vsub.s32 %v4730, %v4732
        %v4734 = vrot.slane %v1306, %v4733
        %v4736 = vunpack.c.l.s4 1414812756
        %v4737 = vunpack.c.0.s8 %v4736
        %v4738 = vlaneseq
        %v4739 = vshrl.u32 %v4738, 7
        %v4740 = vsub.s32 %v4737, %v4739
        %v4741 = vrot.slane %v1306, %v4740
        %v4743 = vunpack.c.l.s4 1987475062
        %v4744 = vunpack.c.0.s8 %v4743
        %v4745 = vlaneseq
        %v4746 = vshrl.u32 %v4745, 7
        %v4747 = vsub.s32 %v4744, %v4746
        %v4748 = vrot.slane %v1306, %v4747
        %v4750 = vunpack.c.l.s4 269488144
        %v4751 = vunpack.c.0.s8 %v4750
        %v4752 = vlaneseq
        %v4753 = vshrl.u32 %v4752, 7
        %v4754 = vsub.s32 %v4751, %v4753
        %v4755 = vrot.slane %v1307, %v4754
        %v4757 = vunpack.c.l.s4 842150450
        %v4758 = vunpack.c.0.s8 %v4757
        %v4759 = vlaneseq
        %v4760 = vshrl.u32 %v4759, 7
        %v4761 = vsub.s32 %v4758, %v4760
        %v4762 = vrot.slane %v1307, %v4761
        %v4764 = vunpack.c.l.s4 1414812756
        %v4765 = vunpack.c.0.s8 %v4764
        %v4766 = vlaneseq
        %v4767 = vshrl.u32 %v4766, 7
        %v4768 = vsub.s32 %v4765, %v4767
        %v4769 = vrot.slane %v1307, %v4768
        %v4771 = vunpack.c.l.s4 1987475062
        %v4772 = vunpack.c.0.s8 %v4771
        %v4773 = vlaneseq
        %v4774 = vshrl.u32 %v4773, 7
        %v4775 = vsub.s32 %v4772, %v4774
        %v4776 = vrot.slane %v1307, %v4775
        %v4778 = vunpack.c.l.s4 269488144
        %v4779 = vunpack.c.0.s8 %v4778
        %v4780 = vlaneseq
        %v4781 = vshrl.u32 %v4780, 7
        %v4782 = vsub.s32 %v4779, %v4781
        %v4783 = vrot.slane %v1308, %v4782
        %v4785 = vunpack.c.l.s4 842150450
        %v4786 = vunpack.c.0.s8 %v4785
        %v4787 = vlaneseq
        %v4788 = vshrl.u32 %v4787, 7
        %v4789 = vsub.s32 %v4786, %v4788
        %v4790 = vrot.slane %v1308, %v4789
        %v4792 = vunpack.c.l.s4 1414812756
        %v4793 = vunpack.c.0.s8 %v4792
        %v4794 = vlaneseq
        %v4795 = vshrl.u32 %v4794, 7
        %v4796 = vsub.s32 %v4793, %v4795
        %v4797 = vrot.slane %v1308, %v4796
        %v4799 = vunpack.c.l.s4 1987475062
        %v4800 = vunpack.c.0.s8 %v4799
        %v4801 = vlaneseq
        %v4802 = vshrl.u32 %v4801, 7
        %v4803 = vsub.s32 %v4800, %v4802
        %v4804 = vrot.slane %v1308, %v4803
        %v4806 = vunpack.c.l.s4 269488144
        %v4807 = vunpack.c.0.s8 %v4806
        %v4808 = vlaneseq
        %v4809 = vshrl.u32 %v4808, 7
        %v4810 = vsub.s32 %v4807, %v4809
        %v4811 = vrot.slane %v1309, %v4810
        %v4813 = vunpack.c.l.s4 842150450
        %v4814 = vunpack.c.0.s8 %v4813
        %v4815 = vlaneseq
        %v4816 = vshrl.u32 %v4815, 7
        %v4817 = vsub.s32 %v4814, %v4816
        %v4818 = vrot.slane %v1309, %v4817
        %v4820 = vunpack.c.l.s4 1414812756
        %v4821 = vunpack.c.0.s8 %v4820
        %v4822 = vlaneseq
        %v4823 = vshrl.u32 %v4822, 7
        %v4824 = vsub.s32 %v4821, %v4823
        %v4825 = vrot.slane %v1309, %v4824
        %v4827 = vunpack.c.l.s4 1987475062
        %v4828 = vunpack.c.0.s8 %v4827
        %v4829 = vlaneseq
        %v4830 = vshrl.u32 %v4829, 7
        %v4831 = vsub.s32 %v4828, %v4830
        %v4832 = vrot.slane %v1309, %v4831
        %v4834 = vunpack.c.l.s4 269488144
        %v4835 = vunpack.c.0.s8 %v4834
        %v4836 = vlaneseq
        %v4837 = vshrl.u32 %v4836, 7
        %v4838 = vsub.s32 %v4835, %v4837
        %v4839 = vrot.slane %v1310, %v4838
        %v4841 = vunpack.c.l.s4 842150450
        %v4842 = vunpack.c.0.s8 %v4841
        %v4843 = vlaneseq
        %v4844 = vshrl.u32 %v4843, 7
        %v4845 = vsub.s32 %v4842, %v4844
        %v4846 = vrot.slane %v1310, %v4845
        %v4848 = vunpack.c.l.s4 1414812756
        %v4849 = vunpack.c.0.s8 %v4848
        %v4850 = vlaneseq
        %v4851 = vshrl.u32 %v4850, 7
        %v4852 = vsub.s32 %v4849, %v4851
        %v4853 = vrot.slane %v1310, %v4852
        %v4855 = vunpack.c.l.s4 1987475062
        %v4856 = vunpack.c.0.s8 %v4855
        %v4857 = vlaneseq
        %v4858 = vshrl.u32 %v4857, 7
        %v4859 = vsub.s32 %v4856, %v4858
        %v4860 = vrot.slane %v1310, %v4859
        %v4862 = vunpack.c.l.s4 269488144
        %v4863 = vunpack.c.0.s8 %v4862
        %v4864 = vlaneseq
        %v4865 = vshrl.u32 %v4864, 7
        %v4866 = vsub.s32 %v4863, %v4865
        %v4867 = vrot.slane %v1311, %v4866
        %v4869 = vunpack.c.l.s4 842150450
        %v4870 = vunpack.c.0.s8 %v4869
        %v4871 = vlaneseq
        %v4872 = vshrl.u32 %v4871, 7
        %v4873 = vsub.s32 %v4870, %v4872
        %v4874 = vrot.slane %v1311, %v4873
        %v4876 = vunpack.c.l.s4 1414812756
        %v4877 = vunpack.c.0.s8 %v4876
        %v4878 = vlaneseq
        %v4879 = vshrl.u32 %v4878, 7
        %v4880 = vsub.s32 %v4877, %v4879
        %v4881 = vrot.slane %v1311, %v4880
        %v4883 = vunpack.c.l.s4 1987475062
        %v4884 = vunpack.c.0.s8 %v4883
        %v4885 = vlaneseq
        %v4886 = vshrl.u32 %v4885, 7
        %v4887 = vsub.s32 %v4884, %v4886
        %v4888 = vrot.slane %v1311, %v4887
        %v4890 = vunpack.c.l.s4 269488144
        %v4891 = vunpack.c.0.s8 %v4890
        %v4892 = vlaneseq
        %v4893 = vshrl.u32 %v4892, 7
        %v4894 = vsub.s32 %v4891, %v4893
        %v4895 = vrot.slane %v1312, %v4894
        %v4897 = vunpack.c.l.s4 842150450
        %v4898 = vunpack.c.0.s8 %v4897
        %v4899 = vlaneseq
        %v4900 = vshrl.u32 %v4899, 7
        %v4901 = vsub.s32 %v4898, %v4900
        %v4902 = vrot.slane %v1312, %v4901
        %v4904 = vunpack.c.l.s4 1414812756
        %v4905 = vunpack.c.0.s8 %v4904
        %v4906 = vlaneseq
        %v4907 = vshrl.u32 %v4906, 7
        %v4908 = vsub.s32 %v4905, %v4907
        %v4909 = vrot.slane %v1312, %v4908
        %v4911 = vunpack.c.l.s4 1987475062
        %v4912 = vunpack.c.0.s8 %v4911
        %v4913 = vlaneseq
        %v4914 = vshrl.u32 %v4913, 7
        %v4915 = vsub.s32 %v4912, %v4914
        %v4916 = vrot.slane %v1312, %v4915
        %v4918 = vunpack.c.l.s4 269488144
        %v4919 = vunpack.c.0.s8 %v4918
        %v4920 = vlaneseq
        %v4921 = vshrl.u32 %v4920, 7
        %v4922 = vsub.s32 %v4919, %v4921
        %v4923 = vrot.slane %v1313, %v4922
        %v4925 = vunpack.c.l.s4 842150450
        %v4926 = vunpack.c.0.s8 %v4925
        %v4927 = vlaneseq
        %v4928 = vshrl.u32 %v4927, 7
        %v4929 = vsub.s32 %v4926, %v4928
        %v4930 = vrot.slane %v1313, %v4929
        %v4932 = vunpack.c.l.s4 1414812756
        %v4933 = vunpack.c.0.s8 %v4932
        %v4934 = vlaneseq
        %v4935 = vshrl.u32 %v4934, 7
        %v4936 = vsub.s32 %v4933, %v4935
        %v4937 = vrot.slane %v1313, %v4936
        %v4939 = vunpack.c.l.s4 1987475062
        %v4940 = vunpack.c.0.s8 %v4939
        %v4941 = vlaneseq
        %v4942 = vshrl.u32 %v4941, 7
        %v4943 = vsub.s32 %v4940, %v4942
        %v4944 = vrot.slane %v1313, %v4943
        %v4946 = vunpack.c.l.s4 269488144
        %v4947 = vunpack.c.0.s8 %v4946
        %v4948 = vlaneseq
        %v4949 = vshrl.u32 %v4948, 7
        %v4950 = vsub.s32 %v4947, %v4949
        %v4951 = vrot.slane %v1314, %v4950
        %v4953 = vunpack.c.l.s4 842150450
        %v4954 = vunpack.c.0.s8 %v4953
        %v4955 = vlaneseq
        %v4956 = vshrl.u32 %v4955, 7
        %v4957 = vsub.s32 %v4954, %v4956
        %v4958 = vrot.slane %v1314, %v4957
        %v4960 = vunpack.c.l.s4 1414812756
        %v4961 = vunpack.c.0.s8 %v4960
        %v4962 = vlaneseq
        %v4963 = vshrl.u32 %v4962, 7
        %v4964 = vsub.s32 %v4961, %v4963
        %v4965 = vrot.slane %v1314, %v4964
        %v4967 = vunpack.c.l.s4 1987475062
        %v4968 = vunpack.c.0.s8 %v4967
        %v4969 = vlaneseq
        %v4970 = vshrl.u32 %v4969, 7
        %v4971 = vsub.s32 %v4968, %v4970
        %v4972 = vrot.slane %v1314, %v4971
        %v4974 = vunpack.c.l.s4 269488144
        %v4975 = vunpack.c.0.s8 %v4974
        %v4976 = vlaneseq
        %v4977 = vshrl.u32 %v4976, 7
        %v4978 = vsub.s32 %v4975, %v4977
        %v4979 = vrot.slane %v1315, %v4978
        %v4981 = vunpack.c.l.s4 842150450
        %v4982 = vunpack.c.0.s8 %v4981
        %v4983 = vlaneseq
        %v4984 = vshrl.u32 %v4983, 7
        %v4985 = vsub.s32 %v4982, %v4984
        %v4986 = vrot.slane %v1315, %v4985
        %v4988 = vunpack.c.l.s4 1414812756
        %v4989 = vunpack.c.0.s8 %v4988
        %v4990 = vlaneseq
        %v4991 = vshrl.u32 %v4990, 7
        %v4992 = vsub.s32 %v4989, %v4991
        %v4993 = vrot.slane %v1315, %v4992
        %v4995 = vunpack.c.l.s4 1987475062
        %v4996 = vunpack.c.0.s8 %v4995
        %v4997 = vlaneseq
        %v4998 = vshrl.u32 %v4997, 7
        %v4999 = vsub.s32 %v4996, %v4998
        %v5000 = vrot.slane %v1315, %v4999
        %v5002 = vunpack.c.l.s4 269488144
        %v5003 = vunpack.c.0.s8 %v5002
        %v5004 = vlaneseq
        %v5005 = vshrl.u32 %v5004, 7
        %v5006 = vsub.s32 %v5003, %v5005
        %v5007 = vrot.slane %v1316, %v5006
        %v5009 = vunpack.c.l.s4 842150450
        %v5010 = vunpack.c.0.s8 %v5009
        %v5011 = vlaneseq
        %v5012 = vshrl.u32 %v5011, 7
        %v5013 = vsub.s32 %v5010, %v5012
        %v5014 = vrot.slane %v1316, %v5013
        %v5016 = vunpack.c.l.s4 1414812756
        %v5017 = vunpack.c.0.s8 %v5016
        %v5018 = vlaneseq
        %v5019 = vshrl.u32 %v5018, 7
        %v5020 = vsub.s32 %v5017, %v5019
        %v5021 = vrot.slane %v1316, %v5020
        %v5023 = vunpack.c.l.s4 1987475062
        %v5024 = vunpack.c.0.s8 %v5023
        %v5025 = vlaneseq
        %v5026 = vshrl.u32 %v5025, 7
        %v5027 = vsub.s32 %v5024, %v5026
        %v5028 = vrot.slane %v1316, %v5027
        %v5029 = vcombine.low %v1451, %v1458
        %v5030 = vcombine.low %v1465, %v1472
        %v5032 = vunpack.c.l.s4 1983009808
        %v5033 = vunpack.c.0.s8 %v5032
        %v5034 = vlaneseq
        %v5035 = vshrl.u32 %v5034, 7
        %v5036 = vsub.s32 %v5033, %v5035
        %v5037 = vrot.slane %v5029, %v5036
        %v5039 = vunpack.c.l.s4 1983009808
        %v5040 = vunpack.c.0.s8 %v5039
        %v5041 = vlaneseq
        %v5042 = vshrl.u32 %v5041, 7
        %v5043 = vsub.s32 %v5040, %v5042
        %v5044 = vrot.slane %v5030, %v5043
        %v5045 = vcombine.low %v5037, %v5044
        %v5046 = vcombine.low %v1479, %v1486
        %v5047 = vcombine.low %v1493, %v1500
        %v5049 = vunpack.c.l.s4 1983009808
        %v5050 = vunpack.c.0.s8 %v5049
        %v5051 = vlaneseq
        %v5052 = vshrl.u32 %v5051, 7
        %v5053 = vsub.s32 %v5050, %v5052
        %v5054 = vrot.slane %v5046, %v5053
        %v5056 = vunpack.c.l.s4 1983009808
        %v5057 = vunpack.c.0.s8 %v5056
        %v5058 = vlaneseq
        %v5059 = vshrl.u32 %v5058, 7
        %v5060 = vsub.s32 %v5057, %v5059
        %v5061 = vrot.slane %v5047, %v5060
        %v5062 = vcombine.low %v5054, %v5061
        %v5063 = vcombine.low %v1507, %v1514
        %v5064 = vcombine.low %v1521, %v1528
        %v5066 = vunpack.c.l.s4 1983009808
        %v5067 = vunpack.c.0.s8 %v5066
        %v5068 = vlaneseq
        %v5069 = vshrl.u32 %v5068, 7
        %v5070 = vsub.s32 %v5067, %v5069
        %v5071 = vrot.slane %v5063, %v5070
        %v5073 = vunpack.c.l.s4 1983009808
        %v5074 = vunpack.c.0.s8 %v5073
        %v5075 = vlaneseq
        %v5076 = vshrl.u32 %v5075, 7
        %v5077 = vsub.s32 %v5074, %v5076
        %v5078 = vrot.slane %v5064, %v5077
        %v5079 = vcombine.low %v5071, %v5078
        %v5080 = vcombine.low %v1535, %v1542
        %v5081 = vcombine.low %v1549, %v1556
        %v5083 = vunpack.c.l.s4 1983009808
        %v5084 = vunpack.c.0.s8 %v5083
        %v5085 = vlaneseq
        %v5086 = vshrl.u32 %v5085, 7
        %v5087 = vsub.s32 %v5084, %v5086
        %v5088 = vrot.slane %v5080, %v5087
        %v5090 = vunpack.c.l.s4 1983009808
        %v5091 = vunpack.c.0.s8 %v5090
        %v5092 = vlaneseq
        %v5093 = vshrl.u32 %v5092, 7
        %v5094 = vsub.s32 %v5091, %v5093
        %v5095 = vrot.slane %v5081, %v5094
        %v5096 = vcombine.low %v5088, %v5095
        %v5097 = vcombine.low %v1563, %v1570
        %v5098 = vcombine.low %v1577, %v1584
        %v5100 = vunpack.c.l.s4 1983009808
        %v5101 = vunpack.c.0.s8 %v5100
        %v5102 = vlaneseq
        %v5103 = vshrl.u32 %v5102, 7
        %v5104 = vsub.s32 %v5101, %v5103
        %v5105 = vrot.slane %v5097, %v5104
        %v5107 = vunpack.c.l.s4 1983009808
        %v5108 = vunpack.c.0.s8 %v5107
        %v5109 = vlaneseq
        %v5110 = vshrl.u32 %v5109, 7
        %v5111 = vsub.s32 %v5108, %v5110
        %v5112 = vrot.slane %v5098, %v5111
        %v5113 = vcombine.low %v5105, %v5112
        %v5114 = vcombine.low %v1591, %v1598
        %v5115 = vcombine.low %v1605, %v1612
        %v5117 = vunpack.c.l.s4 1983009808
        %v5118 = vunpack.c.0.s8 %v5117
        %v5119 = vlaneseq
        %v5120 = vshrl.u32 %v5119, 7
        %v5121 = vsub.s32 %v5118, %v5120
        %v5122 = vrot.slane %v5114, %v5121
        %v5124 = vunpack.c.l.s4 1983009808
        %v5125 = vunpack.c.0.s8 %v5124
        %v5126 = vlaneseq
        %v5127 = vshrl.u32 %v5126, 7
        %v5128 = vsub.s32 %v5125, %v5127
        %v5129 = vrot.slane %v5115, %v5128
        %v5130 = vcombine.low %v5122, %v5129
        %v5131 = vcombine.low %v1619, %v1626
        %v5132 = vcombine.low %v1633, %v1640
        %v5134 = vunpack.c.l.s4 1983009808
        %v5135 = vunpack.c.0.s8 %v5134
        %v5136 = vlaneseq
        %v5137 = vshrl.u32 %v5136, 7
        %v5138 = vsub.s32 %v5135, %v5137
        %v5139 = vrot.slane %v5131, %v5138
        %v5141 = vunpack.c.l.s4 1983009808
        %v5142 = vunpack.c.0.s8 %v5141
        %v5143 = vlaneseq
        %v5144 = vshrl.u32 %v5143, 7
        %v5145 = vsub.s32 %v5142, %v5144
        %v5146 = vrot.slane %v5132, %v5145
        %v5147 = vcombine.low %v5139, %v5146
        %v5148 = vcombine.low %v1647, %v1654
        %v5149 = vcombine.low %v1661, %v1668
        %v5151 = vunpack.c.l.s4 1983009808
        %v5152 = vunpack.c.0.s8 %v5151
        %v5153 = vlaneseq
        %v5154 = vshrl.u32 %v5153, 7
        %v5155 = vsub.s32 %v5152, %v5154
        %v5156 = vrot.slane %v5148, %v5155
        %v5158 = vunpack.c.l.s4 1983009808
        %v5159 = vunpack.c.0.s8 %v5158
        %v5160 = vlaneseq
        %v5161 = vshrl.u32 %v5160, 7
        %v5162 = vsub.s32 %v5159, %v5161
        %v5163 = vrot.slane %v5149, %v5162
        %v5164 = vcombine.low %v5156, %v5163
        %v5165 = vcombine.low %v1675, %v1682
        %v5166 = vcombine.low %v1689, %v1696
        %v5168 = vunpack.c.l.s4 1983009808
        %v5169 = vunpack.c.0.s8 %v5168
        %v5170 = vlaneseq
        %v5171 = vshrl.u32 %v5170, 7
        %v5172 = vsub.s32 %v5169, %v5171
        %v5173 = vrot.slane %v5165, %v5172
        %v5175 = vunpack.c.l.s4 1983009808
        %v5176 = vunpack.c.0.s8 %v5175
        %v5177 = vlaneseq
        %v5178 = vshrl.u32 %v5177, 7
        %v5179 = vsub.s32 %v5176, %v5178
        %v5180 = vrot.slane %v5166, %v5179
        %v5181 = vcombine.low %v5173, %v5180
        %v5182 = vcombine.low %v1703, %v1710
        %v5183 = vcombine.low %v1717, %v1724
        %v5185 = vunpack.c.l.s4 1983009808
        %v5186 = vunpack.c.0.s8 %v5185
        %v5187 = vlaneseq
        %v5188 = vshrl.u32 %v5187, 7
        %v5189 = vsub.s32 %v5186, %v5188
        %v5190 = vrot.slane %v5182, %v5189
        %v5192 = vunpack.c.l.s4 1983009808
        %v5193 = vunpack.c.0.s8 %v5192
        %v5194 = vlaneseq
        %v5195 = vshrl.u32 %v5194, 7
        %v5196 = vsub.s32 %v5193, %v5195
        %v5197 = vrot.slane %v5183, %v5196
        %v5198 = vcombine.low %v5190, %v5197
        %v5199 = vcombine.low %v1731, %v1738
        %v5200 = vcombine.low %v1745, %v1752
        %v5202 = vunpack.c.l.s4 1983009808
        %v5203 = vunpack.c.0.s8 %v5202
        %v5204 = vlaneseq
        %v5205 = vshrl.u32 %v5204, 7
        %v5206 = vsub.s32 %v5203, %v5205
        %v5207 = vrot.slane %v5199, %v5206
        %v5209 = vunpack.c.l.s4 1983009808
        %v5210 = vunpack.c.0.s8 %v5209
        %v5211 = vlaneseq
        %v5212 = vshrl.u32 %v5211, 7
        %v5213 = vsub.s32 %v5210, %v5212
        %v5214 = vrot.slane %v5200, %v5213
        %v5215 = vcombine.low %v5207, %v5214
        %v5216 = vcombine.low %v1759, %v1766
        %v5217 = vcombine.low %v1773, %v1780
        %v5219 = vunpack.c.l.s4 1983009808
        %v5220 = vunpack.c.0.s8 %v5219
        %v5221 = vlaneseq
        %v5222 = vshrl.u32 %v5221, 7
        %v5223 = vsub.s32 %v5220, %v5222
        %v5224 = vrot.slane %v5216, %v5223
        %v5226 = vunpack.c.l.s4 1983009808
        %v5227 = vunpack.c.0.s8 %v5226
        %v5228 = vlaneseq
        %v5229 = vshrl.u32 %v5228, 7
        %v5230 = vsub.s32 %v5227, %v5229
        %v5231 = vrot.slane %v5217, %v5230
        %v5232 = vcombine.low %v5224, %v5231
        %v5233 = vcombine.low %v1787, %v1794
        %v5234 = vcombine.low %v1801, %v1808
        %v5236 = vunpack.c.l.s4 1983009808
        %v5237 = vunpack.c.0.s8 %v5236
        %v5238 = vlaneseq
        %v5239 = vshrl.u32 %v5238, 7
        %v5240 = vsub.s32 %v5237, %v5239
        %v5241 = vrot.slane %v5233, %v5240
        %v5243 = vunpack.c.l.s4 1983009808
        %v5244 = vunpack.c.0.s8 %v5243
        %v5245 = vlaneseq
        %v5246 = vshrl.u32 %v5245, 7
        %v5247 = vsub.s32 %v5244, %v5246
        %v5248 = vrot.slane %v5234, %v5247
        %v5249 = vcombine.low %v5241, %v5248
        %v5250 = vcombine.low %v1815, %v1822
        %v5251 = vcombine.low %v1829, %v1836
        %v5253 = vunpack.c.l.s4 1983009808
        %v5254 = vunpack.c.0.s8 %v5253
        %v5255 = vlaneseq
        %v5256 = vshrl.u32 %v5255, 7
        %v5257 = vsub.s32 %v5254, %v5256
        %v5258 = vrot.slane %v5250, %v5257
        %v5260 = vunpack.c.l.s4 1983009808
        %v5261 = vunpack.c.0.s8 %v5260
        %v5262 = vlaneseq
        %v5263 = vshrl.u32 %v5262, 7
        %v5264 = vsub.s32 %v5261, %v5263
        %v5265 = vrot.slane %v5251, %v5264
        %v5266 = vcombine.low %v5258, %v5265
        %v5267 = vcombine.low %v1843, %v1850
        %v5268 = vcombine.low %v1857, %v1864
        %v5270 = vunpack.c.l.s4 1983009808
        %v5271 = vunpack.c.0.s8 %v5270
        %v5272 = vlaneseq
        %v5273 = vshrl.u32 %v5272, 7
        %v5274 = vsub.s32 %v5271, %v5273
        %v5275 = vrot.slane %v5267, %v5274
        %v5277 = vunpack.c.l.s4 1983009808
        %v5278 = vunpack.c.0.s8 %v5277
        %v5279 = vlaneseq
        %v5280 = vshrl.u32 %v5279, 7
        %v5281 = vsub.s32 %v5278, %v5280
        %v5282 = vrot.slane %v5268, %v5281
        %v5283 = vcombine.low %v5275, %v5282
        %v5284 = vcombine.low %v1871, %v1878
        %v5285 = vcombine.low %v1885, %v1892
        %v5287 = vunpack.c.l.s4 1983009808
        %v5288 = vunpack.c.0.s8 %v5287
        %v5289 = vlaneseq
        %v5290 = vshrl.u32 %v5289, 7
        %v5291 = vsub.s32 %v5288, %v5290
        %v5292 = vrot.slane %v5284, %v5291
        %v5294 = vunpack.c.l.s4 1983009808
        %v5295 = vunpack.c.0.s8 %v5294
        %v5296 = vlaneseq
        %v5297 = vshrl.u32 %v5296, 7
        %v5298 = vsub.s32 %v5295, %v5297
        %v5299 = vrot.slane %v5285, %v5298
        %v5300 = vcombine.low %v5292, %v5299
        %v5301 = vcombine.low %v1899, %v1906
        %v5302 = vcombine.low %v1913, %v1920
        %v5304 = vunpack.c.l.s4 1983009808
        %v5305 = vunpack.c.0.s8 %v5304
        %v5306 = vlaneseq
        %v5307 = vshrl.u32 %v5306, 7
        %v5308 = vsub.s32 %v5305, %v5307
        %v5309 = vrot.slane %v5301, %v5308
        %v5311 = vunpack.c.l.s4 1983009808
        %v5312 = vunpack.c.0.s8 %v5311
        %v5313 = vlaneseq
        %v5314 = vshrl.u32 %v5313, 7
        %v5315 = vsub.s32 %v5312, %v5314
        %v5316 = vrot.slane %v5302, %v5315
        %v5317 = vcombine.low %v5309, %v5316
        %v5318 = vcombine.low %v1927, %v1934
        %v5319 = vcombine.low %v1941, %v1948
        %v5321 = vunpack.c.l.s4 1983009808
        %v5322 = vunpack.c.0.s8 %v5321
        %v5323 = vlaneseq
        %v5324 = vshrl.u32 %v5323, 7
        %v5325 = vsub.s32 %v5322, %v5324
        %v5326 = vrot.slane %v5318, %v5325
        %v5328 = vunpack.c.l.s4 1983009808
        %v5329 = vunpack.c.0.s8 %v5328
        %v5330 = vlaneseq
        %v5331 = vshrl.u32 %v5330, 7
        %v5332 = vsub.s32 %v5329, %v5331
        %v5333 = vrot.slane %v5319, %v5332
        %v5334 = vcombine.low %v5326, %v5333
        %v5335 = vcombine.low %v1955, %v1962
        %v5336 = vcombine.low %v1969, %v1976
        %v5338 = vunpack.c.l.s4 1983009808
        %v5339 = vunpack.c.0.s8 %v5338
        %v5340 = vlaneseq
        %v5341 = vshrl.u32 %v5340, 7
        %v5342 = vsub.s32 %v5339, %v5341
        %v5343 = vrot.slane %v5335, %v5342
        %v5345 = vunpack.c.l.s4 1983009808
        %v5346 = vunpack.c.0.s8 %v5345
        %v5347 = vlaneseq
        %v5348 = vshrl.u32 %v5347, 7
        %v5349 = vsub.s32 %v5346, %v5348
        %v5350 = vrot.slane %v5336, %v5349
        %v5351 = vcombine.low %v5343, %v5350
        %v5352 = vcombine.low %v1983, %v1990
        %v5353 = vcombine.low %v1997, %v2004
        %v5355 = vunpack.c.l.s4 1983009808
        %v5356 = vunpack.c.0.s8 %v5355
        %v5357 = vlaneseq
        %v5358 = vshrl.u32 %v5357, 7
        %v5359 = vsub.s32 %v5356, %v5358
        %v5360 = vrot.slane %v5352, %v5359
        %v5362 = vunpack.c.l.s4 1983009808
        %v5363 = vunpack.c.0.s8 %v5362
        %v5364 = vlaneseq
        %v5365 = vshrl.u32 %v5364, 7
        %v5366 = vsub.s32 %v5363, %v5365
        %v5367 = vrot.slane %v5353, %v5366
        %v5368 = vcombine.low %v5360, %v5367
        %v5369 = vcombine.low %v2011, %v2018
        %v5370 = vcombine.low %v2025, %v2032
        %v5372 = vunpack.c.l.s4 1983009808
        %v5373 = vunpack.c.0.s8 %v5372
        %v5374 = vlaneseq
        %v5375 = vshrl.u32 %v5374, 7
        %v5376 = vsub.s32 %v5373, %v5375
        %v5377 = vrot.slane %v5369, %v5376
        %v5379 = vunpack.c.l.s4 1983009808
        %v5380 = vunpack.c.0.s8 %v5379
        %v5381 = vlaneseq
        %v5382 = vshrl.u32 %v5381, 7
        %v5383 = vsub.s32 %v5380, %v5382
        %v5384 = vrot.slane %v5370, %v5383
        %v5385 = vcombine.low %v5377, %v5384
        %v5386 = vcombine.low %v2039, %v2046
        %v5387 = vcombine.low %v2053, %v2060
        %v5389 = vunpack.c.l.s4 1983009808
        %v5390 = vunpack.c.0.s8 %v5389
        %v5391 = vlaneseq
        %v5392 = vshrl.u32 %v5391, 7
        %v5393 = vsub.s32 %v5390, %v5392
        %v5394 = vrot.slane %v5386, %v5393
        %v5396 = vunpack.c.l.s4 1983009808
        %v5397 = vunpack.c.0.s8 %v5396
        %v5398 = vlaneseq
        %v5399 = vshrl.u32 %v5398, 7
        %v5400 = vsub.s32 %v5397, %v5399
        %v5401 = vrot.slane %v5387, %v5400
        %v5402 = vcombine.low %v5394, %v5401
        %v5403 = vcombine.low %v2067, %v2074
        %v5404 = vcombine.low %v2081, %v2088
        %v5406 = vunpack.c.l.s4 1983009808
        %v5407 = vunpack.c.0.s8 %v5406
        %v5408 = vlaneseq
        %v5409 = vshrl.u32 %v5408, 7
        %v5410 = vsub.s32 %v5407, %v5409
        %v5411 = vrot.slane %v5403, %v5410
        %v5413 = vunpack.c.l.s4 1983009808
        %v5414 = vunpack.c.0.s8 %v5413
        %v5415 = vlaneseq
        %v5416 = vshrl.u32 %v5415, 7
        %v5417 = vsub.s32 %v5414, %v5416
        %v5418 = vrot.slane %v5404, %v5417
        %v5419 = vcombine.low %v5411, %v5418
        %v5420 = vcombine.low %v2095, %v2102
        %v5421 = vcombine.low %v2109, %v2116
        %v5423 = vunpack.c.l.s4 1983009808
        %v5424 = vunpack.c.0.s8 %v5423
        %v5425 = vlaneseq
        %v5426 = vshrl.u32 %v5425, 7
        %v5427 = vsub.s32 %v5424, %v5426
        %v5428 = vrot.slane %v5420, %v5427
        %v5430 = vunpack.c.l.s4 1983009808
        %v5431 = vunpack.c.0.s8 %v5430
        %v5432 = vlaneseq
        %v5433 = vshrl.u32 %v5432, 7
        %v5434 = vsub.s32 %v5431, %v5433
        %v5435 = vrot.slane %v5421, %v5434
        %v5436 = vcombine.low %v5428, %v5435
        %v5437 = vcombine.low %v2123, %v2130
        %v5438 = vcombine.low %v2137, %v2144
        %v5440 = vunpack.c.l.s4 1983009808
        %v5441 = vunpack.c.0.s8 %v5440
        %v5442 = vlaneseq
        %v5443 = vshrl.u32 %v5442, 7
        %v5444 = vsub.s32 %v5441, %v5443
        %v5445 = vrot.slane %v5437, %v5444
        %v5447 = vunpack.c.l.s4 1983009808
        %v5448 = vunpack.c.0.s8 %v5447
        %v5449 = vlaneseq
        %v5450 = vshrl.u32 %v5449, 7
        %v5451 = vsub.s32 %v5448, %v5450
        %v5452 = vrot.slane %v5438, %v5451
        %v5453 = vcombine.low %v5445, %v5452
        %v5454 = vcombine.low %v2151, %v2158
        %v5455 = vcombine.low %v2165, %v2172
        %v5457 = vunpack.c.l.s4 1983009808
        %v5458 = vunpack.c.0.s8 %v5457
        %v5459 = vlaneseq
        %v5460 = vshrl.u32 %v5459, 7
        %v5461 = vsub.s32 %v5458, %v5460
        %v5462 = vrot.slane %v5454, %v5461
        %v5464 = vunpack.c.l.s4 1983009808
        %v5465 = vunpack.c.0.s8 %v5464
        %v5466 = vlaneseq
        %v5467 = vshrl.u32 %v5466, 7
        %v5468 = vsub.s32 %v5465, %v5467
        %v5469 = vrot.slane %v5455, %v5468
        %v5470 = vcombine.low %v5462, %v5469
        %v5471 = vcombine.low %v2179, %v2186
        %v5472 = vcombine.low %v2193, %v2200
        %v5474 = vunpack.c.l.s4 1983009808
        %v5475 = vunpack.c.0.s8 %v5474
        %v5476 = vlaneseq
        %v5477 = vshrl.u32 %v5476, 7
        %v5478 = vsub.s32 %v5475, %v5477
        %v5479 = vrot.slane %v5471, %v5478
        %v5481 = vunpack.c.l.s4 1983009808
        %v5482 = vunpack.c.0.s8 %v5481
        %v5483 = vlaneseq
        %v5484 = vshrl.u32 %v5483, 7
        %v5485 = vsub.s32 %v5482, %v5484
        %v5486 = vrot.slane %v5472, %v5485
        %v5487 = vcombine.low %v5479, %v5486
        %v5488 = vcombine.low %v2207, %v2214
        %v5489 = vcombine.low %v2221, %v2228
        %v5491 = vunpack.c.l.s4 1983009808
        %v5492 = vunpack.c.0.s8 %v5491
        %v5493 = vlaneseq
        %v5494 = vshrl.u32 %v5493, 7
        %v5495 = vsub.s32 %v5492, %v5494
        %v5496 = vrot.slane %v5488, %v5495
        %v5498 = vunpack.c.l.s4 1983009808
        %v5499 = vunpack.c.0.s8 %v5498
        %v5500 = vlaneseq
        %v5501 = vshrl.u32 %v5500, 7
        %v5502 = vsub.s32 %v5499, %v5501
        %v5503 = vrot.slane %v5489, %v5502
        %v5504 = vcombine.low %v5496, %v5503
        %v5505 = vcombine.low %v2235, %v2242
        %v5506 = vcombine.low %v2249, %v2256
        %v5508 = vunpack.c.l.s4 1983009808
        %v5509 = vunpack.c.0.s8 %v5508
        %v5510 = vlaneseq
        %v5511 = vshrl.u32 %v5510, 7
        %v5512 = vsub.s32 %v5509, %v5511
        %v5513 = vrot.slane %v5505, %v5512
        %v5515 = vunpack.c.l.s4 1983009808
        %v5516 = vunpack.c.0.s8 %v5515
        %v5517 = vlaneseq
        %v5518 = vshrl.u32 %v5517, 7
        %v5519 = vsub.s32 %v5516, %v5518
        %v5520 = vrot.slane %v5506, %v5519
        %v5521 = vcombine.low %v5513, %v5520
        %v5522 = vcombine.low %v2263, %v2270
        %v5523 = vcombine.low %v2277, %v2284
        %v5525 = vunpack.c.l.s4 1983009808
        %v5526 = vunpack.c.0.s8 %v5525
        %v5527 = vlaneseq
        %v5528 = vshrl.u32 %v5527, 7
        %v5529 = vsub.s32 %v5526, %v5528
        %v5530 = vrot.slane %v5522, %v5529
        %v5532 = vunpack.c.l.s4 1983009808
        %v5533 = vunpack.c.0.s8 %v5532
        %v5534 = vlaneseq
        %v5535 = vshrl.u32 %v5534, 7
        %v5536 = vsub.s32 %v5533, %v5535
        %v5537 = vrot.slane %v5523, %v5536
        %v5538 = vcombine.low %v5530, %v5537
        %v5539 = vcombine.low %v2291, %v2298
        %v5540 = vcombine.low %v2305, %v2312
        %v5542 = vunpack.c.l.s4 1983009808
        %v5543 = vunpack.c.0.s8 %v5542
        %v5544 = vlaneseq
        %v5545 = vshrl.u32 %v5544, 7
        %v5546 = vsub.s32 %v5543, %v5545
        %v5547 = vrot.slane %v5539, %v5546
        %v5549 = vunpack.c.l.s4 1983009808
        %v5550 = vunpack.c.0.s8 %v5549
        %v5551 = vlaneseq
        %v5552 = vshrl.u32 %v5551, 7
        %v5553 = vsub.s32 %v5550, %v5552
        %v5554 = vrot.slane %v5540, %v5553
        %v5555 = vcombine.low %v5547, %v5554
        %v5556 = vcombine.low %v2319, %v2326
        %v5557 = vcombine.low %v2333, %v2340
        %v5559 = vunpack.c.l.s4 1983009808
        %v5560 = vunpack.c.0.s8 %v5559
        %v5561 = vlaneseq
        %v5562 = vshrl.u32 %v5561, 7
        %v5563 = vsub.s32 %v5560, %v5562
        %v5564 = vrot.slane %v5556, %v5563
        %v5566 = vunpack.c.l.s4 1983009808
        %v5567 = vunpack.c.0.s8 %v5566
        %v5568 = vlaneseq
        %v5569 = vshrl.u32 %v5568, 7
        %v5570 = vsub.s32 %v5567, %v5569
        %v5571 = vrot.slane %v5557, %v5570
        %v5572 = vcombine.low %v5564, %v5571
        %v5573 = vcombine.low %v2347, %v2354
        %v5574 = vcombine.low %v2361, %v2368
        %v5576 = vunpack.c.l.s4 1983009808
        %v5577 = vunpack.c.0.s8 %v5576
        %v5578 = vlaneseq
        %v5579 = vshrl.u32 %v5578, 7
        %v5580 = vsub.s32 %v5577, %v5579
        %v5581 = vrot.slane %v5573, %v5580
        %v5583 = vunpack.c.l.s4 1983009808
        %v5584 = vunpack.c.0.s8 %v5583
        %v5585 = vlaneseq
        %v5586 = vshrl.u32 %v5585, 7
        %v5587 = vsub.s32 %v5584, %v5586
        %v5588 = vrot.slane %v5574, %v5587
        %v5589 = vcombine.low %v5581, %v5588
        %v5590 = vcombine.low %v2375, %v2382
        %v5591 = vcombine.low %v2389, %v2396
        %v5593 = vunpack.c.l.s4 1983009808
        %v5594 = vunpack.c.0.s8 %v5593
        %v5595 = vlaneseq
        %v5596 = vshrl.u32 %v5595, 7
        %v5597 = vsub.s32 %v5594, %v5596
        %v5598 = vrot.slane %v5590, %v5597
        %v5600 = vunpack.c.l.s4 1983009808
        %v5601 = vunpack.c.0.s8 %v5600
        %v5602 = vlaneseq
        %v5603 = vshrl.u32 %v5602, 7
        %v5604 = vsub.s32 %v5601, %v5603
        %v5605 = vrot.slane %v5591, %v5604
        %v5606 = vcombine.low %v5598, %v5605
        %v5607 = vcombine.low %v2403, %v2410
        %v5608 = vcombine.low %v2417, %v2424
        %v5610 = vunpack.c.l.s4 1983009808
        %v5611 = vunpack.c.0.s8 %v5610
        %v5612 = vlaneseq
        %v5613 = vshrl.u32 %v5612, 7
        %v5614 = vsub.s32 %v5611, %v5613
        %v5615 = vrot.slane %v5607, %v5614
        %v5617 = vunpack.c.l.s4 1983009808
        %v5618 = vunpack.c.0.s8 %v5617
        %v5619 = vlaneseq
        %v5620 = vshrl.u32 %v5619, 7
        %v5621 = vsub.s32 %v5618, %v5620
        %v5622 = vrot.slane %v5608, %v5621
        %v5623 = vcombine.low %v5615, %v5622
        %v5624 = vcombine.low %v2431, %v2438
        %v5625 = vcombine.low %v2445, %v2452
        %v5627 = vunpack.c.l.s4 1983009808
        %v5628 = vunpack.c.0.s8 %v5627
        %v5629 = vlaneseq
        %v5630 = vshrl.u32 %v5629, 7
        %v5631 = vsub.s32 %v5628, %v5630
        %v5632 = vrot.slane %v5624, %v5631
        %v5634 = vunpack.c.l.s4 1983009808
        %v5635 = vunpack.c.0.s8 %v5634
        %v5636 = vlaneseq
        %v5637 = vshrl.u32 %v5636, 7
        %v5638 = vsub.s32 %v5635, %v5637
        %v5639 = vrot.slane %v5625, %v5638
        %v5640 = vcombine.low %v5632, %v5639
        %v5641 = vcombine.low %v2459, %v2466
        %v5642 = vcombine.low %v2473, %v2480
        %v5644 = vunpack.c.l.s4 1983009808
        %v5645 = vunpack.c.0.s8 %v5644
        %v5646 = vlaneseq
        %v5647 = vshrl.u32 %v5646, 7
        %v5648 = vsub.s32 %v5645, %v5647
        %v5649 = vrot.slane %v5641, %v5648
        %v5651 = vunpack.c.l.s4 1983009808
        %v5652 = vunpack.c.0.s8 %v5651
        %v5653 = vlaneseq
        %v5654 = vshrl.u32 %v5653, 7
        %v5655 = vsub.s32 %v5652, %v5654
        %v5656 = vrot.slane %v5642, %v5655
        %v5657 = vcombine.low %v5649, %v5656
        %v5658 = vcombine.low %v2487, %v2494
        %v5659 = vcombine.low %v2501, %v2508
        %v5661 = vunpack.c.l.s4 1983009808
        %v5662 = vunpack.c.0.s8 %v5661
        %v5663 = vlaneseq
        %v5664 = vshrl.u32 %v5663, 7
        %v5665 = vsub.s32 %v5662, %v5664
        %v5666 = vrot.slane %v5658, %v5665
        %v5668 = vunpack.c.l.s4 1983009808
        %v5669 = vunpack.c.0.s8 %v5668
        %v5670 = vlaneseq
        %v5671 = vshrl.u32 %v5670, 7
        %v5672 = vsub.s32 %v5669, %v5671
        %v5673 = vrot.slane %v5659, %v5672
        %v5674 = vcombine.low %v5666, %v5673
        %v5675 = vcombine.low %v2515, %v2522
        %v5676 = vcombine.low %v2529, %v2536
        %v5678 = vunpack.c.l.s4 1983009808
        %v5679 = vunpack.c.0.s8 %v5678
        %v5680 = vlaneseq
        %v5681 = vshrl.u32 %v5680, 7
        %v5682 = vsub.s32 %v5679, %v5681
        %v5683 = vrot.slane %v5675, %v5682
        %v5685 = vunpack.c.l.s4 1983009808
        %v5686 = vunpack.c.0.s8 %v5685
        %v5687 = vlaneseq
        %v5688 = vshrl.u32 %v5687, 7
        %v5689 = vsub.s32 %v5686, %v5688
        %v5690 = vrot.slane %v5676, %v5689
        %v5691 = vcombine.low %v5683, %v5690
        %v5692 = vcombine.low %v2543, %v2550
        %v5693 = vcombine.low %v2557, %v2564
        %v5695 = vunpack.c.l.s4 1983009808
        %v5696 = vunpack.c.0.s8 %v5695
        %v5697 = vlaneseq
        %v5698 = vshrl.u32 %v5697, 7
        %v5699 = vsub.s32 %v5696, %v5698
        %v5700 = vrot.slane %v5692, %v5699
        %v5702 = vunpack.c.l.s4 1983009808
        %v5703 = vunpack.c.0.s8 %v5702
        %v5704 = vlaneseq
        %v5705 = vshrl.u32 %v5704, 7
        %v5706 = vsub.s32 %v5703, %v5705
        %v5707 = vrot.slane %v5693, %v5706
        %v5708 = vcombine.low %v5700, %v5707
        %v5709 = vcombine.low %v2571, %v2578
        %v5710 = vcombine.low %v2585, %v2592
        %v5712 = vunpack.c.l.s4 1983009808
        %v5713 = vunpack.c.0.s8 %v5712
        %v5714 = vlaneseq
        %v5715 = vshrl.u32 %v5714, 7
        %v5716 = vsub.s32 %v5713, %v5715
        %v5717 = vrot.slane %v5709, %v5716
        %v5719 = vunpack.c.l.s4 1983009808
        %v5720 = vunpack.c.0.s8 %v5719
        %v5721 = vlaneseq
        %v5722 = vshrl.u32 %v5721, 7
        %v5723 = vsub.s32 %v5720, %v5722
        %v5724 = vrot.slane %v5710, %v5723
        %v5725 = vcombine.low %v5717, %v5724
        %v5726 = vcombine.low %v2599, %v2606
        %v5727 = vcombine.low %v2613, %v2620
        %v5729 = vunpack.c.l.s4 1983009808
        %v5730 = vunpack.c.0.s8 %v5729
        %v5731 = vlaneseq
        %v5732 = vshrl.u32 %v5731, 7
        %v5733 = vsub.s32 %v5730, %v5732
        %v5734 = vrot.slane %v5726, %v5733
        %v5736 = vunpack.c.l.s4 1983009808
        %v5737 = vunpack.c.0.s8 %v5736
        %v5738 = vlaneseq
        %v5739 = vshrl.u32 %v5738, 7
        %v5740 = vsub.s32 %v5737, %v5739
        %v5741 = vrot.slane %v5727, %v5740
        %v5742 = vcombine.low %v5734, %v5741
        %v5743 = vcombine.low %v2627, %v2634
        %v5744 = vcombine.low %v2641, %v2648
        %v5746 = vunpack.c.l.s4 1983009808
        %v5747 = vunpack.c.0.s8 %v5746
        %v5748 = vlaneseq
        %v5749 = vshrl.u32 %v5748, 7
        %v5750 = vsub.s32 %v5747, %v5749
        %v5751 = vrot.slane %v5743, %v5750
        %v5753 = vunpack.c.l.s4 1983009808
        %v5754 = vunpack.c.0.s8 %v5753
        %v5755 = vlaneseq
        %v5756 = vshrl.u32 %v5755, 7
        %v5757 = vsub.s32 %v5754, %v5756
        %v5758 = vrot.slane %v5744, %v5757
        %v5759 = vcombine.low %v5751, %v5758
        %v5760 = vcombine.low %v2655, %v2662
        %v5761 = vcombine.low %v2669, %v2676
        %v5763 = vunpack.c.l.s4 1983009808
        %v5764 = vunpack.c.0.s8 %v5763
        %v5765 = vlaneseq
        %v5766 = vshrl.u32 %v5765, 7
        %v5767 = vsub.s32 %v5764, %v5766
        %v5768 = vrot.slane %v5760, %v5767
        %v5770 = vunpack.c.l.s4 1983009808
        %v5771 = vunpack.c.0.s8 %v5770
        %v5772 = vlaneseq
        %v5773 = vshrl.u32 %v5772, 7
        %v5774 = vsub.s32 %v5771, %v5773
        %v5775 = vrot.slane %v5761, %v5774
        %v5776 = vcombine.low %v5768, %v5775
        %v5777 = vcombine.low %v2683, %v2690
        %v5778 = vcombine.low %v2697, %v2704
        %v5780 = vunpack.c.l.s4 1983009808
        %v5781 = vunpack.c.0.s8 %v5780
        %v5782 = vlaneseq
        %v5783 = vshrl.u32 %v5782, 7
        %v5784 = vsub.s32 %v5781, %v5783
        %v5785 = vrot.slane %v5777, %v5784
        %v5787 = vunpack.c.l.s4 1983009808
        %v5788 = vunpack.c.0.s8 %v5787
        %v5789 = vlaneseq
        %v5790 = vshrl.u32 %v5789, 7
        %v5791 = vsub.s32 %v5788, %v5790
        %v5792 = vrot.slane %v5778, %v5791
        %v5793 = vcombine.low %v5785, %v5792
        %v5794 = vcombine.low %v2711, %v2718
        %v5795 = vcombine.low %v2725, %v2732
        %v5797 = vunpack.c.l.s4 1983009808
        %v5798 = vunpack.c.0.s8 %v5797
        %v5799 = vlaneseq
        %v5800 = vshrl.u32 %v5799, 7
        %v5801 = vsub.s32 %v5798, %v5800
        %v5802 = vrot.slane %v5794, %v5801
        %v5804 = vunpack.c.l.s4 1983009808
        %v5805 = vunpack.c.0.s8 %v5804
        %v5806 = vlaneseq
        %v5807 = vshrl.u32 %v5806, 7
        %v5808 = vsub.s32 %v5805, %v5807
        %v5809 = vrot.slane %v5795, %v5808
        %v5810 = vcombine.low %v5802, %v5809
        %v5811 = vcombine.low %v2739, %v2746
        %v5812 = vcombine.low %v2753, %v2760
        %v5814 = vunpack.c.l.s4 1983009808
        %v5815 = vunpack.c.0.s8 %v5814
        %v5816 = vlaneseq
        %v5817 = vshrl.u32 %v5816, 7
        %v5818 = vsub.s32 %v5815, %v5817
        %v5819 = vrot.slane %v5811, %v5818
        %v5821 = vunpack.c.l.s4 1983009808
        %v5822 = vunpack.c.0.s8 %v5821
        %v5823 = vlaneseq
        %v5824 = vshrl.u32 %v5823, 7
        %v5825 = vsub.s32 %v5822, %v5824
        %v5826 = vrot.slane %v5812, %v5825
        %v5827 = vcombine.low %v5819, %v5826
        %v5828 = vcombine.low %v2767, %v2774
        %v5829 = vcombine.low %v2781, %v2788
        %v5831 = vunpack.c.l.s4 1983009808
        %v5832 = vunpack.c.0.s8 %v5831
        %v5833 = vlaneseq
        %v5834 = vshrl.u32 %v5833, 7
        %v5835 = vsub.s32 %v5832, %v5834
        %v5836 = vrot.slane %v5828, %v5835
        %v5838 = vunpack.c.l.s4 1983009808
        %v5839 = vunpack.c.0.s8 %v5838
        %v5840 = vlaneseq
        %v5841 = vshrl.u32 %v5840, 7
        %v5842 = vsub.s32 %v5839, %v5841
        %v5843 = vrot.slane %v5829, %v5842
        %v5844 = vcombine.low %v5836, %v5843
        %v5845 = vcombine.low %v2795, %v2802
        %v5846 = vcombine.low %v2809, %v2816
        %v5848 = vunpack.c.l.s4 1983009808
        %v5849 = vunpack.c.0.s8 %v5848
        %v5850 = vlaneseq
        %v5851 = vshrl.u32 %v5850, 7
        %v5852 = vsub.s32 %v5849, %v5851
        %v5853 = vrot.slane %v5845, %v5852
        %v5855 = vunpack.c.l.s4 1983009808
        %v5856 = vunpack.c.0.s8 %v5855
        %v5857 = vlaneseq
        %v5858 = vshrl.u32 %v5857, 7
        %v5859 = vsub.s32 %v5856, %v5858
        %v5860 = vrot.slane %v5846, %v5859
        %v5861 = vcombine.low %v5853, %v5860
        %v5862 = vcombine.low %v2823, %v2830
        %v5863 = vcombine.low %v2837, %v2844
        %v5865 = vunpack.c.l.s4 1983009808
        %v5866 = vunpack.c.0.s8 %v5865
        %v5867 = vlaneseq
        %v5868 = vshrl.u32 %v5867, 7
        %v5869 = vsub.s32 %v5866, %v5868
        %v5870 = vrot.slane %v5862, %v5869
        %v5872 = vunpack.c.l.s4 1983009808
        %v5873 = vunpack.c.0.s8 %v5872
        %v5874 = vlaneseq
        %v5875 = vshrl.u32 %v5874, 7
        %v5876 = vsub.s32 %v5873, %v5875
        %v5877 = vrot.slane %v5863, %v5876
        %v5878 = vcombine.low %v5870, %v5877
        %v5879 = vcombine.low %v2851, %v2858
        %v5880 = vcombine.low %v2865, %v2872
        %v5882 = vunpack.c.l.s4 1983009808
        %v5883 = vunpack.c.0.s8 %v5882
        %v5884 = vlaneseq
        %v5885 = vshrl.u32 %v5884, 7
        %v5886 = vsub.s32 %v5883, %v5885
        %v5887 = vrot.slane %v5879, %v5886
        %v5889 = vunpack.c.l.s4 1983009808
        %v5890 = vunpack.c.0.s8 %v5889
        %v5891 = vlaneseq
        %v5892 = vshrl.u32 %v5891, 7
        %v5893 = vsub.s32 %v5890, %v5892
        %v5894 = vrot.slane %v5880, %v5893
        %v5895 = vcombine.low %v5887, %v5894
        %v5896 = vcombine.low %v2879, %v2886
        %v5897 = vcombine.low %v2893, %v2900
        %v5899 = vunpack.c.l.s4 1983009808
        %v5900 = vunpack.c.0.s8 %v5899
        %v5901 = vlaneseq
        %v5902 = vshrl.u32 %v5901, 7
        %v5903 = vsub.s32 %v5900, %v5902
        %v5904 = vrot.slane %v5896, %v5903
        %v5906 = vunpack.c.l.s4 1983009808
        %v5907 = vunpack.c.0.s8 %v5906
        %v5908 = vlaneseq
        %v5909 = vshrl.u32 %v5908, 7
        %v5910 = vsub.s32 %v5907, %v5909
        %v5911 = vrot.slane %v5897, %v5910
        %v5912 = vcombine.low %v5904, %v5911
        %v5913 = vcombine.low %v2907, %v2914
        %v5914 = vcombine.low %v2921, %v2928
        %v5916 = vunpack.c.l.s4 1983009808
        %v5917 = vunpack.c.0.s8 %v5916
        %v5918 = vlaneseq
        %v5919 = vshrl.u32 %v5918, 7
        %v5920 = vsub.s32 %v5917, %v5919
        %v5921 = vrot.slane %v5913, %v5920
        %v5923 = vunpack.c.l.s4 1983009808
        %v5924 = vunpack.c.0.s8 %v5923
        %v5925 = vlaneseq
        %v5926 = vshrl.u32 %v5925, 7
        %v5927 = vsub.s32 %v5924, %v5926
        %v5928 = vrot.slane %v5914, %v5927
        %v5929 = vcombine.low %v5921, %v5928
        %v5930 = vcombine.low %v2935, %v2942
        %v5931 = vcombine.low %v2949, %v2956
        %v5933 = vunpack.c.l.s4 1983009808
        %v5934 = vunpack.c.0.s8 %v5933
        %v5935 = vlaneseq
        %v5936 = vshrl.u32 %v5935, 7
        %v5937 = vsub.s32 %v5934, %v5936
        %v5938 = vrot.slane %v5930, %v5937
        %v5940 = vunpack.c.l.s4 1983009808
        %v5941 = vunpack.c.0.s8 %v5940
        %v5942 = vlaneseq
        %v5943 = vshrl.u32 %v5942, 7
        %v5944 = vsub.s32 %v5941, %v5943
        %v5945 = vrot.slane %v5931, %v5944
        %v5946 = vcombine.low %v5938, %v5945
        %v5947 = vcombine.low %v2963, %v2970
        %v5948 = vcombine.low %v2977, %v2984
        %v5950 = vunpack.c.l.s4 1983009808
        %v5951 = vunpack.c.0.s8 %v5950
        %v5952 = vlaneseq
        %v5953 = vshrl.u32 %v5952, 7
        %v5954 = vsub.s32 %v5951, %v5953
        %v5955 = vrot.slane %v5947, %v5954
        %v5957 = vunpack.c.l.s4 1983009808
        %v5958 = vunpack.c.0.s8 %v5957
        %v5959 = vlaneseq
        %v5960 = vshrl.u32 %v5959, 7
        %v5961 = vsub.s32 %v5958, %v5960
        %v5962 = vrot.slane %v5948, %v5961
        %v5963 = vcombine.low %v5955, %v5962
        %v5964 = vcombine.low %v2991, %v2998
        %v5965 = vcombine.low %v3005, %v3012
        %v5967 = vunpack.c.l.s4 1983009808
        %v5968 = vunpack.c.0.s8 %v5967
        %v5969 = vlaneseq
        %v5970 = vshrl.u32 %v5969, 7
        %v5971 = vsub.s32 %v5968, %v5970
        %v5972 = vrot.slane %v5964, %v5971
        %v5974 = vunpack.c.l.s4 1983009808
        %v5975 = vunpack.c.0.s8 %v5974
        %v5976 = vlaneseq
        %v5977 = vshrl.u32 %v5976, 7
        %v5978 = vsub.s32 %v5975, %v5977
        %v5979 = vrot.slane %v5965, %v5978
        %v5980 = vcombine.low %v5972, %v5979
        %v5981 = vcombine.low %v3019, %v3026
        %v5982 = vcombine.low %v3033, %v3040
        %v5984 = vunpack.c.l.s4 1983009808
        %v5985 = vunpack.c.0.s8 %v5984
        %v5986 = vlaneseq
        %v5987 = vshrl.u32 %v5986, 7
        %v5988 = vsub.s32 %v5985, %v5987
        %v5989 = vrot.slane %v5981, %v5988
        %v5991 = vunpack.c.l.s4 1983009808
        %v5992 = vunpack.c.0.s8 %v5991
        %v5993 = vlaneseq
        %v5994 = vshrl.u32 %v5993, 7
        %v5995 = vsub.s32 %v5992, %v5994
        %v5996 = vrot.slane %v5982, %v5995
        %v5997 = vcombine.low %v5989, %v5996
        %v5998 = vcombine.low %v3047, %v3054
        %v5999 = vcombine.low %v3061, %v3068
        %v6001 = vunpack.c.l.s4 1983009808
        %v6002 = vunpack.c.0.s8 %v6001
        %v6003 = vlaneseq
        %v6004 = vshrl.u32 %v6003, 7
        %v6005 = vsub.s32 %v6002, %v6004
        %v6006 = vrot.slane %v5998, %v6005
        %v6008 = vunpack.c.l.s4 1983009808
        %v6009 = vunpack.c.0.s8 %v6008
        %v6010 = vlaneseq
        %v6011 = vshrl.u32 %v6010, 7
        %v6012 = vsub.s32 %v6009, %v6011
        %v6013 = vrot.slane %v5999, %v6012
        %v6014 = vcombine.low %v6006, %v6013
        %v6015 = vcombine.low %v3075, %v3082
        %v6016 = vcombine.low %v3089, %v3096
        %v6018 = vunpack.c.l.s4 1983009808
        %v6019 = vunpack.c.0.s8 %v6018
        %v6020 = vlaneseq
        %v6021 = vshrl.u32 %v6020, 7
        %v6022 = vsub.s32 %v6019, %v6021
        %v6023 = vrot.slane %v6015, %v6022
        %v6025 = vunpack.c.l.s4 1983009808
        %v6026 = vunpack.c.0.s8 %v6025
        %v6027 = vlaneseq
        %v6028 = vshrl.u32 %v6027, 7
        %v6029 = vsub.s32 %v6026, %v6028
        %v6030 = vrot.slane %v6016, %v6029
        %v6031 = vcombine.low %v6023, %v6030
        %v6032 = vcombine.low %v3103, %v3110
        %v6033 = vcombine.low %v3117, %v3124
        %v6035 = vunpack.c.l.s4 1983009808
        %v6036 = vunpack.c.0.s8 %v6035
        %v6037 = vlaneseq
        %v6038 = vshrl.u32 %v6037, 7
        %v6039 = vsub.s32 %v6036, %v6038
        %v6040 = vrot.slane %v6032, %v6039
        %v6042 = vunpack.c.l.s4 1983009808
        %v6043 = vunpack.c.0.s8 %v6042
        %v6044 = vlaneseq
        %v6045 = vshrl.u32 %v6044, 7
        %v6046 = vsub.s32 %v6043, %v6045
        %v6047 = vrot.slane %v6033, %v6046
        %v6048 = vcombine.low %v6040, %v6047
        %v6049 = vcombine.low %v3131, %v3138
        %v6050 = vcombine.low %v3145, %v3152
        %v6052 = vunpack.c.l.s4 1983009808
        %v6053 = vunpack.c.0.s8 %v6052
        %v6054 = vlaneseq
        %v6055 = vshrl.u32 %v6054, 7
        %v6056 = vsub.s32 %v6053, %v6055
        %v6057 = vrot.slane %v6049, %v6056
        %v6059 = vunpack.c.l.s4 1983009808
        %v6060 = vunpack.c.0.s8 %v6059
        %v6061 = vlaneseq
        %v6062 = vshrl.u32 %v6061, 7
        %v6063 = vsub.s32 %v6060, %v6062
        %v6064 = vrot.slane %v6050, %v6063
        %v6065 = vcombine.low %v6057, %v6064
        %v6066 = vcombine.low %v3159, %v3166
        %v6067 = vcombine.low %v3173, %v3180
        %v6069 = vunpack.c.l.s4 1983009808
        %v6070 = vunpack.c.0.s8 %v6069
        %v6071 = vlaneseq
        %v6072 = vshrl.u32 %v6071, 7
        %v6073 = vsub.s32 %v6070, %v6072
        %v6074 = vrot.slane %v6066, %v6073
        %v6076 = vunpack.c.l.s4 1983009808
        %v6077 = vunpack.c.0.s8 %v6076
        %v6078 = vlaneseq
        %v6079 = vshrl.u32 %v6078, 7
        %v6080 = vsub.s32 %v6077, %v6079
        %v6081 = vrot.slane %v6067, %v6080
        %v6082 = vcombine.low %v6074, %v6081
        %v6083 = vcombine.low %v3187, %v3194
        %v6084 = vcombine.low %v3201, %v3208
        %v6086 = vunpack.c.l.s4 1983009808
        %v6087 = vunpack.c.0.s8 %v6086
        %v6088 = vlaneseq
        %v6089 = vshrl.u32 %v6088, 7
        %v6090 = vsub.s32 %v6087, %v6089
        %v6091 = vrot.slane %v6083, %v6090
        %v6093 = vunpack.c.l.s4 1983009808
        %v6094 = vunpack.c.0.s8 %v6093
        %v6095 = vlaneseq
        %v6096 = vshrl.u32 %v6095, 7
        %v6097 = vsub.s32 %v6094, %v6096
        %v6098 = vrot.slane %v6084, %v6097
        %v6099 = vcombine.low %v6091, %v6098
        %v6100 = vcombine.low %v3215, %v3222
        %v6101 = vcombine.low %v3229, %v3236
        %v6103 = vunpack.c.l.s4 1983009808
        %v6104 = vunpack.c.0.s8 %v6103
        %v6105 = vlaneseq
        %v6106 = vshrl.u32 %v6105, 7
        %v6107 = vsub.s32 %v6104, %v6106
        %v6108 = vrot.slane %v6100, %v6107
        %v6110 = vunpack.c.l.s4 1983009808
        %v6111 = vunpack.c.0.s8 %v6110
        %v6112 = vlaneseq
        %v6113 = vshrl.u32 %v6112, 7
        %v6114 = vsub.s32 %v6111, %v6113
        %v6115 = vrot.slane %v6101, %v6114
        %v6116 = vcombine.low %v6108, %v6115
        %v6117 = vcombine.low %v3243, %v3250
        %v6118 = vcombine.low %v3257, %v3264
        %v6120 = vunpack.c.l.s4 1983009808
        %v6121 = vunpack.c.0.s8 %v6120
        %v6122 = vlaneseq
        %v6123 = vshrl.u32 %v6122, 7
        %v6124 = vsub.s32 %v6121, %v6123
        %v6125 = vrot.slane %v6117, %v6124
        %v6127 = vunpack.c.l.s4 1983009808
        %v6128 = vunpack.c.0.s8 %v6127
        %v6129 = vlaneseq
        %v6130 = vshrl.u32 %v6129, 7
        %v6131 = vsub.s32 %v6128, %v6130
        %v6132 = vrot.slane %v6118, %v6131
        %v6133 = vcombine.low %v6125, %v6132
        %v6134 = vcombine.low %v3271, %v3278
        %v6135 = vcombine.low %v3285, %v3292
        %v6137 = vunpack.c.l.s4 1983009808
        %v6138 = vunpack.c.0.s8 %v6137
        %v6139 = vlaneseq
        %v6140 = vshrl.u32 %v6139, 7
        %v6141 = vsub.s32 %v6138, %v6140
        %v6142 = vrot.slane %v6134, %v6141
        %v6144 = vunpack.c.l.s4 1983009808
        %v6145 = vunpack.c.0.s8 %v6144
        %v6146 = vlaneseq
        %v6147 = vshrl.u32 %v6146, 7
        %v6148 = vsub.s32 %v6145, %v6147
        %v6149 = vrot.slane %v6135, %v6148
        %v6150 = vcombine.low %v6142, %v6149
        %v6151 = vcombine.low %v3299, %v3306
        %v6152 = vcombine.low %v3313, %v3320
        %v6154 = vunpack.c.l.s4 1983009808
        %v6155 = vunpack.c.0.s8 %v6154
        %v6156 = vlaneseq
        %v6157 = vshrl.u32 %v6156, 7
        %v6158 = vsub.s32 %v6155, %v6157
        %v6159 = vrot.slane %v6151, %v6158
        %v6161 = vunpack.c.l.s4 1983009808
        %v6162 = vunpack.c.0.s8 %v6161
        %v6163 = vlaneseq
        %v6164 = vshrl.u32 %v6163, 7
        %v6165 = vsub.s32 %v6162, %v6164
        %v6166 = vrot.slane %v6152, %v6165
        %v6167 = vcombine.low %v6159, %v6166
        %v6168 = vcombine.low %v3327, %v3334
        %v6169 = vcombine.low %v3341, %v3348
        %v6171 = vunpack.c.l.s4 1983009808
        %v6172 = vunpack.c.0.s8 %v6171
        %v6173 = vlaneseq
        %v6174 = vshrl.u32 %v6173, 7
        %v6175 = vsub.s32 %v6172, %v6174
        %v6176 = vrot.slane %v6168, %v6175
        %v6178 = vunpack.c.l.s4 1983009808
        %v6179 = vunpack.c.0.s8 %v6178
        %v6180 = vlaneseq
        %v6181 = vshrl.u32 %v6180, 7
        %v6182 = vsub.s32 %v6179, %v6181
        %v6183 = vrot.slane %v6169, %v6182
        %v6184 = vcombine.low %v6176, %v6183
        %v6185 = vcombine.low %v3355, %v3362
        %v6186 = vcombine.low %v3369, %v3376
        %v6188 = vunpack.c.l.s4 1983009808
        %v6189 = vunpack.c.0.s8 %v6188
        %v6190 = vlaneseq
        %v6191 = vshrl.u32 %v6190, 7
        %v6192 = vsub.s32 %v6189, %v6191
        %v6193 = vrot.slane %v6185, %v6192
        %v6195 = vunpack.c.l.s4 1983009808
        %v6196 = vunpack.c.0.s8 %v6195
        %v6197 = vlaneseq
        %v6198 = vshrl.u32 %v6197, 7
        %v6199 = vsub.s32 %v6196, %v6198
        %v6200 = vrot.slane %v6186, %v6199
        %v6201 = vcombine.low %v6193, %v6200
        %v6202 = vcombine.low %v3383, %v3390
        %v6203 = vcombine.low %v3397, %v3404
        %v6205 = vunpack.c.l.s4 1983009808
        %v6206 = vunpack.c.0.s8 %v6205
        %v6207 = vlaneseq
        %v6208 = vshrl.u32 %v6207, 7
        %v6209 = vsub.s32 %v6206, %v6208
        %v6210 = vrot.slane %v6202, %v6209
        %v6212 = vunpack.c.l.s4 1983009808
        %v6213 = vunpack.c.0.s8 %v6212
        %v6214 = vlaneseq
        %v6215 = vshrl.u32 %v6214, 7
        %v6216 = vsub.s32 %v6213, %v6215
        %v6217 = vrot.slane %v6203, %v6216
        %v6218 = vcombine.low %v6210, %v6217
        %v6219 = vcombine.low %v3411, %v3418
        %v6220 = vcombine.low %v3425, %v3432
        %v6222 = vunpack.c.l.s4 1983009808
        %v6223 = vunpack.c.0.s8 %v6222
        %v6224 = vlaneseq
        %v6225 = vshrl.u32 %v6224, 7
        %v6226 = vsub.s32 %v6223, %v6225
        %v6227 = vrot.slane %v6219, %v6226
        %v6229 = vunpack.c.l.s4 1983009808
        %v6230 = vunpack.c.0.s8 %v6229
        %v6231 = vlaneseq
        %v6232 = vshrl.u32 %v6231, 7
        %v6233 = vsub.s32 %v6230, %v6232
        %v6234 = vrot.slane %v6220, %v6233
        %v6235 = vcombine.low %v6227, %v6234
        %v6236 = vcombine.low %v3439, %v3446
        %v6237 = vcombine.low %v3453, %v3460
        %v6239 = vunpack.c.l.s4 1983009808
        %v6240 = vunpack.c.0.s8 %v6239
        %v6241 = vlaneseq
        %v6242 = vshrl.u32 %v6241, 7
        %v6243 = vsub.s32 %v6240, %v6242
        %v6244 = vrot.slane %v6236, %v6243
        %v6246 = vunpack.c.l.s4 1983009808
        %v6247 = vunpack.c.0.s8 %v6246
        %v6248 = vlaneseq
        %v6249 = vshrl.u32 %v6248, 7
        %v6250 = vsub.s32 %v6247, %v6249
        %v6251 = vrot.slane %v6237, %v6250
        %v6252 = vcombine.low %v6244, %v6251
        %v6253 = vcombine.low %v3467, %v3474
        %v6254 = vcombine.low %v3481, %v3488
        %v6256 = vunpack.c.l.s4 1983009808
        %v6257 = vunpack.c.0.s8 %v6256
        %v6258 = vlaneseq
        %v6259 = vshrl.u32 %v6258, 7
        %v6260 = vsub.s32 %v6257, %v6259
        %v6261 = vrot.slane %v6253, %v6260
        %v6263 = vunpack.c.l.s4 1983009808
        %v6264 = vunpack.c.0.s8 %v6263
        %v6265 = vlaneseq
        %v6266 = vshrl.u32 %v6265, 7
        %v6267 = vsub.s32 %v6264, %v6266
        %v6268 = vrot.slane %v6254, %v6267
        %v6269 = vcombine.low %v6261, %v6268
        %v6270 = vcombine.low %v3495, %v3502
        %v6271 = vcombine.low %v3509, %v3516
        %v6273 = vunpack.c.l.s4 1983009808
        %v6274 = vunpack.c.0.s8 %v6273
        %v6275 = vlaneseq
        %v6276 = vshrl.u32 %v6275, 7
        %v6277 = vsub.s32 %v6274, %v6276
        %v6278 = vrot.slane %v6270, %v6277
        %v6280 = vunpack.c.l.s4 1983009808
        %v6281 = vunpack.c.0.s8 %v6280
        %v6282 = vlaneseq
        %v6283 = vshrl.u32 %v6282, 7
        %v6284 = vsub.s32 %v6281, %v6283
        %v6285 = vrot.slane %v6271, %v6284
        %v6286 = vcombine.low %v6278, %v6285
        %v6287 = vcombine.low %v3523, %v3530
        %v6288 = vcombine.low %v3537, %v3544
        %v6290 = vunpack.c.l.s4 1983009808
        %v6291 = vunpack.c.0.s8 %v6290
        %v6292 = vlaneseq
        %v6293 = vshrl.u32 %v6292, 7
        %v6294 = vsub.s32 %v6291, %v6293
        %v6295 = vrot.slane %v6287, %v6294
        %v6297 = vunpack.c.l.s4 1983009808
        %v6298 = vunpack.c.0.s8 %v6297
        %v6299 = vlaneseq
        %v6300 = vshrl.u32 %v6299, 7
        %v6301 = vsub.s32 %v6298, %v6300
        %v6302 = vrot.slane %v6288, %v6301
        %v6303 = vcombine.low %v6295, %v6302
        %v6304 = vcombine.low %v3551, %v3558
        %v6305 = vcombine.low %v3565, %v3572
        %v6307 = vunpack.c.l.s4 1983009808
        %v6308 = vunpack.c.0.s8 %v6307
        %v6309 = vlaneseq
        %v6310 = vshrl.u32 %v6309, 7
        %v6311 = vsub.s32 %v6308, %v6310
        %v6312 = vrot.slane %v6304, %v6311
        %v6314 = vunpack.c.l.s4 1983009808
        %v6315 = vunpack.c.0.s8 %v6314
        %v6316 = vlaneseq
        %v6317 = vshrl.u32 %v6316, 7
        %v6318 = vsub.s32 %v6315, %v6317
        %v6319 = vrot.slane %v6305, %v6318
        %v6320 = vcombine.low %v6312, %v6319
        %v6321 = vcombine.low %v3579, %v3586
        %v6322 = vcombine.low %v3593, %v3600
        %v6324 = vunpack.c.l.s4 1983009808
        %v6325 = vunpack.c.0.s8 %v6324
        %v6326 = vlaneseq
        %v6327 = vshrl.u32 %v6326, 7
        %v6328 = vsub.s32 %v6325, %v6327
        %v6329 = vrot.slane %v6321, %v6328
        %v6331 = vunpack.c.l.s4 1983009808
        %v6332 = vunpack.c.0.s8 %v6331
        %v6333 = vlaneseq
        %v6334 = vshrl.u32 %v6333, 7
        %v6335 = vsub.s32 %v6332, %v6334
        %v6336 = vrot.slane %v6322, %v6335
        %v6337 = vcombine.low %v6329, %v6336
        %v6338 = vcombine.low %v3607, %v3614
        %v6339 = vcombine.low %v3621, %v3628
        %v6341 = vunpack.c.l.s4 1983009808
        %v6342 = vunpack.c.0.s8 %v6341
        %v6343 = vlaneseq
        %v6344 = vshrl.u32 %v6343, 7
        %v6345 = vsub.s32 %v6342, %v6344
        %v6346 = vrot.slane %v6338, %v6345
        %v6348 = vunpack.c.l.s4 1983009808
        %v6349 = vunpack.c.0.s8 %v6348
        %v6350 = vlaneseq
        %v6351 = vshrl.u32 %v6350, 7
        %v6352 = vsub.s32 %v6349, %v6351
        %v6353 = vrot.slane %v6339, %v6352
        %v6354 = vcombine.low %v6346, %v6353
        %v6355 = vcombine.low %v3635, %v3642
        %v6356 = vcombine.low %v3649, %v3656
        %v6358 = vunpack.c.l.s4 1983009808
        %v6359 = vunpack.c.0.s8 %v6358
        %v6360 = vlaneseq
        %v6361 = vshrl.u32 %v6360, 7
        %v6362 = vsub.s32 %v6359, %v6361
        %v6363 = vrot.slane %v6355, %v6362
        %v6365 = vunpack.c.l.s4 1983009808
        %v6366 = vunpack.c.0.s8 %v6365
        %v6367 = vlaneseq
        %v6368 = vshrl.u32 %v6367, 7
        %v6369 = vsub.s32 %v6366, %v6368
        %v6370 = vrot.slane %v6356, %v6369
        %v6371 = vcombine.low %v6363, %v6370
        %v6372 = vcombine.low %v3663, %v3670
        %v6373 = vcombine.low %v3677, %v3684
        %v6375 = vunpack.c.l.s4 1983009808
        %v6376 = vunpack.c.0.s8 %v6375
        %v6377 = vlaneseq
        %v6378 = vshrl.u32 %v6377, 7
        %v6379 = vsub.s32 %v6376, %v6378
        %v6380 = vrot.slane %v6372, %v6379
        %v6382 = vunpack.c.l.s4 1983009808
        %v6383 = vunpack.c.0.s8 %v6382
        %v6384 = vlaneseq
        %v6385 = vshrl.u32 %v6384, 7
        %v6386 = vsub.s32 %v6383, %v6385
        %v6387 = vrot.slane %v6373, %v6386
        %v6388 = vcombine.low %v6380, %v6387
        %v6389 = vcombine.low %v3691, %v3698
        %v6390 = vcombine.low %v3705, %v3712
        %v6392 = vunpack.c.l.s4 1983009808
        %v6393 = vunpack.c.0.s8 %v6392
        %v6394 = vlaneseq
        %v6395 = vshrl.u32 %v6394, 7
        %v6396 = vsub.s32 %v6393, %v6395
        %v6397 = vrot.slane %v6389, %v6396
        %v6399 = vunpack.c.l.s4 1983009808
        %v6400 = vunpack.c.0.s8 %v6399
        %v6401 = vlaneseq
        %v6402 = vshrl.u32 %v6401, 7
        %v6403 = vsub.s32 %v6400, %v6402
        %v6404 = vrot.slane %v6390, %v6403
        %v6405 = vcombine.low %v6397, %v6404
        %v6406 = vcombine.low %v3719, %v3726
        %v6407 = vcombine.low %v3733, %v3740
        %v6409 = vunpack.c.l.s4 1983009808
        %v6410 = vunpack.c.0.s8 %v6409
        %v6411 = vlaneseq
        %v6412 = vshrl.u32 %v6411, 7
        %v6413 = vsub.s32 %v6410, %v6412
        %v6414 = vrot.slane %v6406, %v6413
        %v6416 = vunpack.c.l.s4 1983009808
        %v6417 = vunpack.c.0.s8 %v6416
        %v6418 = vlaneseq
        %v6419 = vshrl.u32 %v6418, 7
        %v6420 = vsub.s32 %v6417, %v6419
        %v6421 = vrot.slane %v6407, %v6420
        %v6422 = vcombine.low %v6414, %v6421
        %v6423 = vcombine.low %v3747, %v3754
        %v6424 = vcombine.low %v3761, %v3768
        %v6426 = vunpack.c.l.s4 1983009808
        %v6427 = vunpack.c.0.s8 %v6426
        %v6428 = vlaneseq
        %v6429 = vshrl.u32 %v6428, 7
        %v6430 = vsub.s32 %v6427, %v6429
        %v6431 = vrot.slane %v6423, %v6430
        %v6433 = vunpack.c.l.s4 1983009808
        %v6434 = vunpack.c.0.s8 %v6433
        %v6435 = vlaneseq
        %v6436 = vshrl.u32 %v6435, 7
        %v6437 = vsub.s32 %v6434, %v6436
        %v6438 = vrot.slane %v6424, %v6437
        %v6439 = vcombine.low %v6431, %v6438
        %v6440 = vcombine.low %v3775, %v3782
        %v6441 = vcombine.low %v3789, %v3796
        %v6443 = vunpack.c.l.s4 1983009808
        %v6444 = vunpack.c.0.s8 %v6443
        %v6445 = vlaneseq
        %v6446 = vshrl.u32 %v6445, 7
        %v6447 = vsub.s32 %v6444, %v6446
        %v6448 = vrot.slane %v6440, %v6447
        %v6450 = vunpack.c.l.s4 1983009808
        %v6451 = vunpack.c.0.s8 %v6450
        %v6452 = vlaneseq
        %v6453 = vshrl.u32 %v6452, 7
        %v6454 = vsub.s32 %v6451, %v6453
        %v6455 = vrot.slane %v6441, %v6454
        %v6456 = vcombine.low %v6448, %v6455
        %v6457 = vcombine.low %v3803, %v3810
        %v6458 = vcombine.low %v3817, %v3824
        %v6460 = vunpack.c.l.s4 1983009808
        %v6461 = vunpack.c.0.s8 %v6460
        %v6462 = vlaneseq
        %v6463 = vshrl.u32 %v6462, 7
        %v6464 = vsub.s32 %v6461, %v6463
        %v6465 = vrot.slane %v6457, %v6464
        %v6467 = vunpack.c.l.s4 1983009808
        %v6468 = vunpack.c.0.s8 %v6467
        %v6469 = vlaneseq
        %v6470 = vshrl.u32 %v6469, 7
        %v6471 = vsub.s32 %v6468, %v6470
        %v6472 = vrot.slane %v6458, %v6471
        %v6473 = vcombine.low %v6465, %v6472
        %v6474 = vcombine.low %v3831, %v3838
        %v6475 = vcombine.low %v3845, %v3852
        %v6477 = vunpack.c.l.s4 1983009808
        %v6478 = vunpack.c.0.s8 %v6477
        %v6479 = vlaneseq
        %v6480 = vshrl.u32 %v6479, 7
        %v6481 = vsub.s32 %v6478, %v6480
        %v6482 = vrot.slane %v6474, %v6481
        %v6484 = vunpack.c.l.s4 1983009808
        %v6485 = vunpack.c.0.s8 %v6484
        %v6486 = vlaneseq
        %v6487 = vshrl.u32 %v6486, 7
        %v6488 = vsub.s32 %v6485, %v6487
        %v6489 = vrot.slane %v6475, %v6488
        %v6490 = vcombine.low %v6482, %v6489
        %v6491 = vcombine.low %v3859, %v3866
        %v6492 = vcombine.low %v3873, %v3880
        %v6494 = vunpack.c.l.s4 1983009808
        %v6495 = vunpack.c.0.s8 %v6494
        %v6496 = vlaneseq
        %v6497 = vshrl.u32 %v6496, 7
        %v6498 = vsub.s32 %v6495, %v6497
        %v6499 = vrot.slane %v6491, %v6498
        %v6501 = vunpack.c.l.s4 1983009808
        %v6502 = vunpack.c.0.s8 %v6501
        %v6503 = vlaneseq
        %v6504 = vshrl.u32 %v6503, 7
        %v6505 = vsub.s32 %v6502, %v6504
        %v6506 = vrot.slane %v6492, %v6505
        %v6507 = vcombine.low %v6499, %v6506
        %v6508 = vcombine.low %v3887, %v3894
        %v6509 = vcombine.low %v3901, %v3908
        %v6511 = vunpack.c.l.s4 1983009808
        %v6512 = vunpack.c.0.s8 %v6511
        %v6513 = vlaneseq
        %v6514 = vshrl.u32 %v6513, 7
        %v6515 = vsub.s32 %v6512, %v6514
        %v6516 = vrot.slane %v6508, %v6515
        %v6518 = vunpack.c.l.s4 1983009808
        %v6519 = vunpack.c.0.s8 %v6518
        %v6520 = vlaneseq
        %v6521 = vshrl.u32 %v6520, 7
        %v6522 = vsub.s32 %v6519, %v6521
        %v6523 = vrot.slane %v6509, %v6522
        %v6524 = vcombine.low %v6516, %v6523
        %v6525 = vcombine.low %v3915, %v3922
        %v6526 = vcombine.low %v3929, %v3936
        %v6528 = vunpack.c.l.s4 1983009808
        %v6529 = vunpack.c.0.s8 %v6528
        %v6530 = vlaneseq
        %v6531 = vshrl.u32 %v6530, 7
        %v6532 = vsub.s32 %v6529, %v6531
        %v6533 = vrot.slane %v6525, %v6532
        %v6535 = vunpack.c.l.s4 1983009808
        %v6536 = vunpack.c.0.s8 %v6535
        %v6537 = vlaneseq
        %v6538 = vshrl.u32 %v6537, 7
        %v6539 = vsub.s32 %v6536, %v6538
        %v6540 = vrot.slane %v6526, %v6539
        %v6541 = vcombine.low %v6533, %v6540
        %v6542 = vcombine.low %v3943, %v3950
        %v6543 = vcombine.low %v3957, %v3964
        %v6545 = vunpack.c.l.s4 1983009808
        %v6546 = vunpack.c.0.s8 %v6545
        %v6547 = vlaneseq
        %v6548 = vshrl.u32 %v6547, 7
        %v6549 = vsub.s32 %v6546, %v6548
        %v6550 = vrot.slane %v6542, %v6549
        %v6552 = vunpack.c.l.s4 1983009808
        %v6553 = vunpack.c.0.s8 %v6552
        %v6554 = vlaneseq
        %v6555 = vshrl.u32 %v6554, 7
        %v6556 = vsub.s32 %v6553, %v6555
        %v6557 = vrot.slane %v6543, %v6556
        %v6558 = vcombine.low %v6550, %v6557
        %v6559 = vcombine.low %v3971, %v3978
        %v6560 = vcombine.low %v3985, %v3992
        %v6562 = vunpack.c.l.s4 1983009808
        %v6563 = vunpack.c.0.s8 %v6562
        %v6564 = vlaneseq
        %v6565 = vshrl.u32 %v6564, 7
        %v6566 = vsub.s32 %v6563, %v6565
        %v6567 = vrot.slane %v6559, %v6566
        %v6569 = vunpack.c.l.s4 1983009808
        %v6570 = vunpack.c.0.s8 %v6569
        %v6571 = vlaneseq
        %v6572 = vshrl.u32 %v6571, 7
        %v6573 = vsub.s32 %v6570, %v6572
        %v6574 = vrot.slane %v6560, %v6573
        %v6575 = vcombine.low %v6567, %v6574
        %v6576 = vcombine.low %v3999, %v4006
        %v6577 = vcombine.low %v4013, %v4020
        %v6579 = vunpack.c.l.s4 1983009808
        %v6580 = vunpack.c.0.s8 %v6579
        %v6581 = vlaneseq
        %v6582 = vshrl.u32 %v6581, 7
        %v6583 = vsub.s32 %v6580, %v6582
        %v6584 = vrot.slane %v6576, %v6583
        %v6586 = vunpack.c.l.s4 1983009808
        %v6587 = vunpack.c.0.s8 %v6586
        %v6588 = vlaneseq
        %v6589 = vshrl.u32 %v6588, 7
        %v6590 = vsub.s32 %v6587, %v6589
        %v6591 = vrot.slane %v6577, %v6590
        %v6592 = vcombine.low %v6584, %v6591
        %v6593 = vcombine.low %v4027, %v4034
        %v6594 = vcombine.low %v4041, %v4048
        %v6596 = vunpack.c.l.s4 1983009808
        %v6597 = vunpack.c.0.s8 %v6596
        %v6598 = vlaneseq
        %v6599 = vshrl.u32 %v6598, 7
        %v6600 = vsub.s32 %v6597, %v6599
        %v6601 = vrot.slane %v6593, %v6600
        %v6603 = vunpack.c.l.s4 1983009808
        %v6604 = vunpack.c.0.s8 %v6603
        %v6605 = vlaneseq
        %v6606 = vshrl.u32 %v6605, 7
        %v6607 = vsub.s32 %v6604, %v6606
        %v6608 = vrot.slane %v6594, %v6607
        %v6609 = vcombine.low %v6601, %v6608
        %v6610 = vcombine.low %v4055, %v4062
        %v6611 = vcombine.low %v4069, %v4076
        %v6613 = vunpack.c.l.s4 1983009808
        %v6614 = vunpack.c.0.s8 %v6613
        %v6615 = vlaneseq
        %v6616 = vshrl.u32 %v6615, 7
        %v6617 = vsub.s32 %v6614, %v6616
        %v6618 = vrot.slane %v6610, %v6617
        %v6620 = vunpack.c.l.s4 1983009808
        %v6621 = vunpack.c.0.s8 %v6620
        %v6622 = vlaneseq
        %v6623 = vshrl.u32 %v6622, 7
        %v6624 = vsub.s32 %v6621, %v6623
        %v6625 = vrot.slane %v6611, %v6624
        %v6626 = vcombine.low %v6618, %v6625
        %v6627 = vcombine.low %v4083, %v4090
        %v6628 = vcombine.low %v4097, %v4104
        %v6630 = vunpack.c.l.s4 1983009808
        %v6631 = vunpack.c.0.s8 %v6630
        %v6632 = vlaneseq
        %v6633 = vshrl.u32 %v6632, 7
        %v6634 = vsub.s32 %v6631, %v6633
        %v6635 = vrot.slane %v6627, %v6634
        %v6637 = vunpack.c.l.s4 1983009808
        %v6638 = vunpack.c.0.s8 %v6637
        %v6639 = vlaneseq
        %v6640 = vshrl.u32 %v6639, 7
        %v6641 = vsub.s32 %v6638, %v6640
        %v6642 = vrot.slane %v6628, %v6641
        %v6643 = vcombine.low %v6635, %v6642
        %v6644 = vcombine.low %v4111, %v4118
        %v6645 = vcombine.low %v4125, %v4132
        %v6647 = vunpack.c.l.s4 1983009808
        %v6648 = vunpack.c.0.s8 %v6647
        %v6649 = vlaneseq
        %v6650 = vshrl.u32 %v6649, 7
        %v6651 = vsub.s32 %v6648, %v6650
        %v6652 = vrot.slane %v6644, %v6651
        %v6654 = vunpack.c.l.s4 1983009808
        %v6655 = vunpack.c.0.s8 %v6654
        %v6656 = vlaneseq
        %v6657 = vshrl.u32 %v6656, 7
        %v6658 = vsub.s32 %v6655, %v6657
        %v6659 = vrot.slane %v6645, %v6658
        %v6660 = vcombine.low %v6652, %v6659
        %v6661 = vcombine.low %v4139, %v4146
        %v6662 = vcombine.low %v4153, %v4160
        %v6664 = vunpack.c.l.s4 1983009808
        %v6665 = vunpack.c.0.s8 %v6664
        %v6666 = vlaneseq
        %v6667 = vshrl.u32 %v6666, 7
        %v6668 = vsub.s32 %v6665, %v6667
        %v6669 = vrot.slane %v6661, %v6668
        %v6671 = vunpack.c.l.s4 1983009808
        %v6672 = vunpack.c.0.s8 %v6671
        %v6673 = vlaneseq
        %v6674 = vshrl.u32 %v6673, 7
        %v6675 = vsub.s32 %v6672, %v6674
        %v6676 = vrot.slane %v6662, %v6675
        %v6677 = vcombine.low %v6669, %v6676
        %v6678 = vcombine.low %v4167, %v4174
        %v6679 = vcombine.low %v4181, %v4188
        %v6681 = vunpack.c.l.s4 1983009808
        %v6682 = vunpack.c.0.s8 %v6681
        %v6683 = vlaneseq
        %v6684 = vshrl.u32 %v6683, 7
        %v6685 = vsub.s32 %v6682, %v6684
        %v6686 = vrot.slane %v6678, %v6685
        %v6688 = vunpack.c.l.s4 1983009808
        %v6689 = vunpack.c.0.s8 %v6688
        %v6690 = vlaneseq
        %v6691 = vshrl.u32 %v6690, 7
        %v6692 = vsub.s32 %v6689, %v6691
        %v6693 = vrot.slane %v6679, %v6692
        %v6694 = vcombine.low %v6686, %v6693
        %v6695 = vcombine.low %v4195, %v4202
        %v6696 = vcombine.low %v4209, %v4216
        %v6698 = vunpack.c.l.s4 1983009808
        %v6699 = vunpack.c.0.s8 %v6698
        %v6700 = vlaneseq
        %v6701 = vshrl.u32 %v6700, 7
        %v6702 = vsub.s32 %v6699, %v6701
        %v6703 = vrot.slane %v6695, %v6702
        %v6705 = vunpack.c.l.s4 1983009808
        %v6706 = vunpack.c.0.s8 %v6705
        %v6707 = vlaneseq
        %v6708 = vshrl.u32 %v6707, 7
        %v6709 = vsub.s32 %v6706, %v6708
        %v6710 = vrot.slane %v6696, %v6709
        %v6711 = vcombine.low %v6703, %v6710
        %v6712 = vcombine.low %v4223, %v4230
        %v6713 = vcombine.low %v4237, %v4244
        %v6715 = vunpack.c.l.s4 1983009808
        %v6716 = vunpack.c.0.s8 %v6715
        %v6717 = vlaneseq
        %v6718 = vshrl.u32 %v6717, 7
        %v6719 = vsub.s32 %v6716, %v6718
        %v6720 = vrot.slane %v6712, %v6719
        %v6722 = vunpack.c.l.s4 1983009808
        %v6723 = vunpack.c.0.s8 %v6722
        %v6724 = vlaneseq
        %v6725 = vshrl.u32 %v6724, 7
        %v6726 = vsub.s32 %v6723, %v6725
        %v6727 = vrot.slane %v6713, %v6726
        %v6728 = vcombine.low %v6720, %v6727
        %v6729 = vcombine.low %v4251, %v4258
        %v6730 = vcombine.low %v4265, %v4272
        %v6732 = vunpack.c.l.s4 1983009808
        %v6733 = vunpack.c.0.s8 %v6732
        %v6734 = vlaneseq
        %v6735 = vshrl.u32 %v6734, 7
        %v6736 = vsub.s32 %v6733, %v6735
        %v6737 = vrot.slane %v6729, %v6736
        %v6739 = vunpack.c.l.s4 1983009808
        %v6740 = vunpack.c.0.s8 %v6739
        %v6741 = vlaneseq
        %v6742 = vshrl.u32 %v6741, 7
        %v6743 = vsub.s32 %v6740, %v6742
        %v6744 = vrot.slane %v6730, %v6743
        %v6745 = vcombine.low %v6737, %v6744
        %v6746 = vcombine.low %v4279, %v4286
        %v6747 = vcombine.low %v4293, %v4300
        %v6749 = vunpack.c.l.s4 1983009808
        %v6750 = vunpack.c.0.s8 %v6749
        %v6751 = vlaneseq
        %v6752 = vshrl.u32 %v6751, 7
        %v6753 = vsub.s32 %v6750, %v6752
        %v6754 = vrot.slane %v6746, %v6753
        %v6756 = vunpack.c.l.s4 1983009808
        %v6757 = vunpack.c.0.s8 %v6756
        %v6758 = vlaneseq
        %v6759 = vshrl.u32 %v6758, 7
        %v6760 = vsub.s32 %v6757, %v6759
        %v6761 = vrot.slane %v6747, %v6760
        %v6762 = vcombine.low %v6754, %v6761
        %v6763 = vcombine.low %v4307, %v4314
        %v6764 = vcombine.low %v4321, %v4328
        %v6766 = vunpack.c.l.s4 1983009808
        %v6767 = vunpack.c.0.s8 %v6766
        %v6768 = vlaneseq
        %v6769 = vshrl.u32 %v6768, 7
        %v6770 = vsub.s32 %v6767, %v6769
        %v6771 = vrot.slane %v6763, %v6770
        %v6773 = vunpack.c.l.s4 1983009808
        %v6774 = vunpack.c.0.s8 %v6773
        %v6775 = vlaneseq
        %v6776 = vshrl.u32 %v6775, 7
        %v6777 = vsub.s32 %v6774, %v6776
        %v6778 = vrot.slane %v6764, %v6777
        %v6779 = vcombine.low %v6771, %v6778
        %v6780 = vcombine.low %v4335, %v4342
        %v6781 = vcombine.low %v4349, %v4356
        %v6783 = vunpack.c.l.s4 1983009808
        %v6784 = vunpack.c.0.s8 %v6783
        %v6785 = vlaneseq
        %v6786 = vshrl.u32 %v6785, 7
        %v6787 = vsub.s32 %v6784, %v6786
        %v6788 = vrot.slane %v6780, %v6787
        %v6790 = vunpack.c.l.s4 1983009808
        %v6791 = vunpack.c.0.s8 %v6790
        %v6792 = vlaneseq
        %v6793 = vshrl.u32 %v6792, 7
        %v6794 = vsub.s32 %v6791, %v6793
        %v6795 = vrot.slane %v6781, %v6794
        %v6796 = vcombine.low %v6788, %v6795
        %v6797 = vcombine.low %v4363, %v4370
        %v6798 = vcombine.low %v4377, %v4384
        %v6800 = vunpack.c.l.s4 1983009808
        %v6801 = vunpack.c.0.s8 %v6800
        %v6802 = vlaneseq
        %v6803 = vshrl.u32 %v6802, 7
        %v6804 = vsub.s32 %v6801, %v6803
        %v6805 = vrot.slane %v6797, %v6804
        %v6807 = vunpack.c.l.s4 1983009808
        %v6808 = vunpack.c.0.s8 %v6807
        %v6809 = vlaneseq
        %v6810 = vshrl.u32 %v6809, 7
        %v6811 = vsub.s32 %v6808, %v6810
        %v6812 = vrot.slane %v6798, %v6811
        %v6813 = vcombine.low %v6805, %v6812
        %v6814 = vcombine.low %v4391, %v4398
        %v6815 = vcombine.low %v4405, %v4412
        %v6817 = vunpack.c.l.s4 1983009808
        %v6818 = vunpack.c.0.s8 %v6817
        %v6819 = vlaneseq
        %v6820 = vshrl.u32 %v6819, 7
        %v6821 = vsub.s32 %v6818, %v6820
        %v6822 = vrot.slane %v6814, %v6821
        %v6824 = vunpack.c.l.s4 1983009808
        %v6825 = vunpack.c.0.s8 %v6824
        %v6826 = vlaneseq
        %v6827 = vshrl.u32 %v6826, 7
        %v6828 = vsub.s32 %v6825, %v6827
        %v6829 = vrot.slane %v6815, %v6828
        %v6830 = vcombine.low %v6822, %v6829
        %v6831 = vcombine.low %v4419, %v4426
        %v6832 = vcombine.low %v4433, %v4440
        %v6834 = vunpack.c.l.s4 1983009808
        %v6835 = vunpack.c.0.s8 %v6834
        %v6836 = vlaneseq
        %v6837 = vshrl.u32 %v6836, 7
        %v6838 = vsub.s32 %v6835, %v6837
        %v6839 = vrot.slane %v6831, %v6838
        %v6841 = vunpack.c.l.s4 1983009808
        %v6842 = vunpack.c.0.s8 %v6841
        %v6843 = vlaneseq
        %v6844 = vshrl.u32 %v6843, 7
        %v6845 = vsub.s32 %v6842, %v6844
        %v6846 = vrot.slane %v6832, %v6845
        %v6847 = vcombine.low %v6839, %v6846
        %v6848 = vcombine.low %v4447, %v4454
        %v6849 = vcombine.low %v4461, %v4468
        %v6851 = vunpack.c.l.s4 1983009808
        %v6852 = vunpack.c.0.s8 %v6851
        %v6853 = vlaneseq
        %v6854 = vshrl.u32 %v6853, 7
        %v6855 = vsub.s32 %v6852, %v6854
        %v6856 = vrot.slane %v6848, %v6855
        %v6858 = vunpack.c.l.s4 1983009808
        %v6859 = vunpack.c.0.s8 %v6858
        %v6860 = vlaneseq
        %v6861 = vshrl.u32 %v6860, 7
        %v6862 = vsub.s32 %v6859, %v6861
        %v6863 = vrot.slane %v6849, %v6862
        %v6864 = vcombine.low %v6856, %v6863
        %v6865 = vcombine.low %v4475, %v4482
        %v6866 = vcombine.low %v4489, %v4496
        %v6868 = vunpack.c.l.s4 1983009808
        %v6869 = vunpack.c.0.s8 %v6868
        %v6870 = vlaneseq
        %v6871 = vshrl.u32 %v6870, 7
        %v6872 = vsub.s32 %v6869, %v6871
        %v6873 = vrot.slane %v6865, %v6872
        %v6875 = vunpack.c.l.s4 1983009808
        %v6876 = vunpack.c.0.s8 %v6875
        %v6877 = vlaneseq
        %v6878 = vshrl.u32 %v6877, 7
        %v6879 = vsub.s32 %v6876, %v6878
        %v6880 = vrot.slane %v6866, %v6879
        %v6881 = vcombine.low %v6873, %v6880
        %v6882 = vcombine.low %v4503, %v4510
        %v6883 = vcombine.low %v4517, %v4524
        %v6885 = vunpack.c.l.s4 1983009808
        %v6886 = vunpack.c.0.s8 %v6885
        %v6887 = vlaneseq
        %v6888 = vshrl.u32 %v6887, 7
        %v6889 = vsub.s32 %v6886, %v6888
        %v6890 = vrot.slane %v6882, %v6889
        %v6892 = vunpack.c.l.s4 1983009808
        %v6893 = vunpack.c.0.s8 %v6892
        %v6894 = vlaneseq
        %v6895 = vshrl.u32 %v6894, 7
        %v6896 = vsub.s32 %v6893, %v6895
        %v6897 = vrot.slane %v6883, %v6896
        %v6898 = vcombine.low %v6890, %v6897
        %v6899 = vcombine.low %v4531, %v4538
        %v6900 = vcombine.low %v4545, %v4552
        %v6902 = vunpack.c.l.s4 1983009808
        %v6903 = vunpack.c.0.s8 %v6902
        %v6904 = vlaneseq
        %v6905 = vshrl.u32 %v6904, 7
        %v6906 = vsub.s32 %v6903, %v6905
        %v6907 = vrot.slane %v6899, %v6906
        %v6909 = vunpack.c.l.s4 1983009808
        %v6910 = vunpack.c.0.s8 %v6909
        %v6911 = vlaneseq
        %v6912 = vshrl.u32 %v6911, 7
        %v6913 = vsub.s32 %v6910, %v6912
        %v6914 = vrot.slane %v6900, %v6913
        %v6915 = vcombine.low %v6907, %v6914
        %v6916 = vcombine.low %v4559, %v4566
        %v6917 = vcombine.low %v4573, %v4580
        %v6919 = vunpack.c.l.s4 1983009808
        %v6920 = vunpack.c.0.s8 %v6919
        %v6921 = vlaneseq
        %v6922 = vshrl.u32 %v6921, 7
        %v6923 = vsub.s32 %v6920, %v6922
        %v6924 = vrot.slane %v6916, %v6923
        %v6926 = vunpack.c.l.s4 1983009808
        %v6927 = vunpack.c.0.s8 %v6926
        %v6928 = vlaneseq
        %v6929 = vshrl.u32 %v6928, 7
        %v6930 = vsub.s32 %v6927, %v6929
        %v6931 = vrot.slane %v6917, %v6930
        %v6932 = vcombine.low %v6924, %v6931
        %v6933 = vcombine.low %v4587, %v4594
        %v6934 = vcombine.low %v4601, %v4608
        %v6936 = vunpack.c.l.s4 1983009808
        %v6937 = vunpack.c.0.s8 %v6936
        %v6938 = vlaneseq
        %v6939 = vshrl.u32 %v6938, 7
        %v6940 = vsub.s32 %v6937, %v6939
        %v6941 = vrot.slane %v6933, %v6940
        %v6943 = vunpack.c.l.s4 1983009808
        %v6944 = vunpack.c.0.s8 %v6943
        %v6945 = vlaneseq
        %v6946 = vshrl.u32 %v6945, 7
        %v6947 = vsub.s32 %v6944, %v6946
        %v6948 = vrot.slane %v6934, %v6947
        %v6949 = vcombine.low %v6941, %v6948
        %v6950 = vcombine.low %v4615, %v4622
        %v6951 = vcombine.low %v4629, %v4636
        %v6953 = vunpack.c.l.s4 1983009808
        %v6954 = vunpack.c.0.s8 %v6953
        %v6955 = vlaneseq
        %v6956 = vshrl.u32 %v6955, 7
        %v6957 = vsub.s32 %v6954, %v6956
        %v6958 = vrot.slane %v6950, %v6957
        %v6960 = vunpack.c.l.s4 1983009808
        %v6961 = vunpack.c.0.s8 %v6960
        %v6962 = vlaneseq
        %v6963 = vshrl.u32 %v6962, 7
        %v6964 = vsub.s32 %v6961, %v6963
        %v6965 = vrot.slane %v6951, %v6964
        %v6966 = vcombine.low %v6958, %v6965
        %v6967 = vcombine.low %v4643, %v4650
        %v6968 = vcombine.low %v4657, %v4664
        %v6970 = vunpack.c.l.s4 1983009808
        %v6971 = vunpack.c.0.s8 %v6970
        %v6972 = vlaneseq
        %v6973 = vshrl.u32 %v6972, 7
        %v6974 = vsub.s32 %v6971, %v6973
        %v6975 = vrot.slane %v6967, %v6974
        %v6977 = vunpack.c.l.s4 1983009808
        %v6978 = vunpack.c.0.s8 %v6977
        %v6979 = vlaneseq
        %v6980 = vshrl.u32 %v6979, 7
        %v6981 = vsub.s32 %v6978, %v6980
        %v6982 = vrot.slane %v6968, %v6981
        %v6983 = vcombine.low %v6975, %v6982
        %v6984 = vcombine.low %v4671, %v4678
        %v6985 = vcombine.low %v4685, %v4692
        %v6987 = vunpack.c.l.s4 1983009808
        %v6988 = vunpack.c.0.s8 %v6987
        %v6989 = vlaneseq
        %v6990 = vshrl.u32 %v6989, 7
        %v6991 = vsub.s32 %v6988, %v6990
        %v6992 = vrot.slane %v6984, %v6991
        %v6994 = vunpack.c.l.s4 1983009808
        %v6995 = vunpack.c.0.s8 %v6994
        %v6996 = vlaneseq
        %v6997 = vshrl.u32 %v6996, 7
        %v6998 = vsub.s32 %v6995, %v6997
        %v6999 = vrot.slane %v6985, %v6998
        %v7000 = vcombine.low %v6992, %v6999
        %v7001 = vcombine.low %v4699, %v4706
        %v7002 = vcombine.low %v4713, %v4720
        %v7004 = vunpack.c.l.s4 1983009808
        %v7005 = vunpack.c.0.s8 %v7004
        %v7006 = vlaneseq
        %v7007 = vshrl.u32 %v7006, 7
        %v7008 = vsub.s32 %v7005, %v7007
        %v7009 = vrot.slane %v7001, %v7008
        %v7011 = vunpack.c.l.s4 1983009808
        %v7012 = vunpack.c.0.s8 %v7011
        %v7013 = vlaneseq
        %v7014 = vshrl.u32 %v7013, 7
        %v7015 = vsub.s32 %v7012, %v7014
        %v7016 = vrot.slane %v7002, %v7015
        %v7017 = vcombine.low %v7009, %v7016
        %v7018 = vcombine.low %v4727, %v4734
        %v7019 = vcombine.low %v4741, %v4748
        %v7021 = vunpack.c.l.s4 1983009808
        %v7022 = vunpack.c.0.s8 %v7021
        %v7023 = vlaneseq
        %v7024 = vshrl.u32 %v7023, 7
        %v7025 = vsub.s32 %v7022, %v7024
        %v7026 = vrot.slane %v7018, %v7025
        %v7028 = vunpack.c.l.s4 1983009808
        %v7029 = vunpack.c.0.s8 %v7028
        %v7030 = vlaneseq
        %v7031 = vshrl.u32 %v7030, 7
        %v7032 = vsub.s32 %v7029, %v7031
        %v7033 = vrot.slane %v7019, %v7032
        %v7034 = vcombine.low %v7026, %v7033
        %v7035 = vcombine.low %v4755, %v4762
        %v7036 = vcombine.low %v4769, %v4776
        %v7038 = vunpack.c.l.s4 1983009808
        %v7039 = vunpack.c.0.s8 %v7038
        %v7040 = vlaneseq
        %v7041 = vshrl.u32 %v7040, 7
        %v7042 = vsub.s32 %v7039, %v7041
        %v7043 = vrot.slane %v7035, %v7042
        %v7045 = vunpack.c.l.s4 1983009808
        %v7046 = vunpack.c.0.s8 %v7045
        %v7047 = vlaneseq
        %v7048 = vshrl.u32 %v7047, 7
        %v7049 = vsub.s32 %v7046, %v7048
        %v7050 = vrot.slane %v7036, %v7049
        %v7051 = vcombine.low %v7043, %v7050
        %v7052 = vcombine.low %v4783, %v4790
        %v7053 = vcombine.low %v4797, %v4804
        %v7055 = vunpack.c.l.s4 1983009808
        %v7056 = vunpack.c.0.s8 %v7055
        %v7057 = vlaneseq
        %v7058 = vshrl.u32 %v7057, 7
        %v7059 = vsub.s32 %v7056, %v7058
        %v7060 = vrot.slane %v7052, %v7059
        %v7062 = vunpack.c.l.s4 1983009808
        %v7063 = vunpack.c.0.s8 %v7062
        %v7064 = vlaneseq
        %v7065 = vshrl.u32 %v7064, 7
        %v7066 = vsub.s32 %v7063, %v7065
        %v7067 = vrot.slane %v7053, %v7066
        %v7068 = vcombine.low %v7060, %v7067
        %v7069 = vcombine.low %v4811, %v4818
        %v7070 = vcombine.low %v4825, %v4832
        %v7072 = vunpack.c.l.s4 1983009808
        %v7073 = vunpack.c.0.s8 %v7072
        %v7074 = vlaneseq
        %v7075 = vshrl.u32 %v7074, 7
        %v7076 = vsub.s32 %v7073, %v7075
        %v7077 = vrot.slane %v7069, %v7076
        %v7079 = vunpack.c.l.s4 1983009808
        %v7080 = vunpack.c.0.s8 %v7079
        %v7081 = vlaneseq
        %v7082 = vshrl.u32 %v7081, 7
        %v7083 = vsub.s32 %v7080, %v7082
        %v7084 = vrot.slane %v7070, %v7083
        %v7085 = vcombine.low %v7077, %v7084
        %v7086 = vcombine.low %v4839, %v4846
        %v7087 = vcombine.low %v4853, %v4860
        %v7089 = vunpack.c.l.s4 1983009808
        %v7090 = vunpack.c.0.s8 %v7089
        %v7091 = vlaneseq
        %v7092 = vshrl.u32 %v7091, 7
        %v7093 = vsub.s32 %v7090, %v7092
        %v7094 = vrot.slane %v7086, %v7093
        %v7096 = vunpack.c.l.s4 1983009808
        %v7097 = vunpack.c.0.s8 %v7096
        %v7098 = vlaneseq
        %v7099 = vshrl.u32 %v7098, 7
        %v7100 = vsub.s32 %v7097, %v7099
        %v7101 = vrot.slane %v7087, %v7100
        %v7102 = vcombine.low %v7094, %v7101
        %v7103 = vcombine.low %v4867, %v4874
        %v7104 = vcombine.low %v4881, %v4888
        %v7106 = vunpack.c.l.s4 1983009808
        %v7107 = vunpack.c.0.s8 %v7106
        %v7108 = vlaneseq
        %v7109 = vshrl.u32 %v7108, 7
        %v7110 = vsub.s32 %v7107, %v7109
        %v7111 = vrot.slane %v7103, %v7110
        %v7113 = vunpack.c.l.s4 1983009808
        %v7114 = vunpack.c.0.s8 %v7113
        %v7115 = vlaneseq
        %v7116 = vshrl.u32 %v7115, 7
        %v7117 = vsub.s32 %v7114, %v7116
        %v7118 = vrot.slane %v7104, %v7117
        %v7119 = vcombine.low %v7111, %v7118
        %v7120 = vcombine.low %v4895, %v4902
        %v7121 = vcombine.low %v4909, %v4916
        %v7123 = vunpack.c.l.s4 1983009808
        %v7124 = vunpack.c.0.s8 %v7123
        %v7125 = vlaneseq
        %v7126 = vshrl.u32 %v7125, 7
        %v7127 = vsub.s32 %v7124, %v7126
        %v7128 = vrot.slane %v7120, %v7127
        %v7130 = vunpack.c.l.s4 1983009808
        %v7131 = vunpack.c.0.s8 %v7130
        %v7132 = vlaneseq
        %v7133 = vshrl.u32 %v7132, 7
        %v7134 = vsub.s32 %v7131, %v7133
        %v7135 = vrot.slane %v7121, %v7134
        %v7136 = vcombine.low %v7128, %v7135
        %v7137 = vcombine.low %v4923, %v4930
        %v7138 = vcombine.low %v4937, %v4944
        %v7140 = vunpack.c.l.s4 1983009808
        %v7141 = vunpack.c.0.s8 %v7140
        %v7142 = vlaneseq
        %v7143 = vshrl.u32 %v7142, 7
        %v7144 = vsub.s32 %v7141, %v7143
        %v7145 = vrot.slane %v7137, %v7144
        %v7147 = vunpack.c.l.s4 1983009808
        %v7148 = vunpack.c.0.s8 %v7147
        %v7149 = vlaneseq
        %v7150 = vshrl.u32 %v7149, 7
        %v7151 = vsub.s32 %v7148, %v7150
        %v7152 = vrot.slane %v7138, %v7151
        %v7153 = vcombine.low %v7145, %v7152
        %v7154 = vcombine.low %v4951, %v4958
        %v7155 = vcombine.low %v4965, %v4972
        %v7157 = vunpack.c.l.s4 1983009808
        %v7158 = vunpack.c.0.s8 %v7157
        %v7159 = vlaneseq
        %v7160 = vshrl.u32 %v7159, 7
        %v7161 = vsub.s32 %v7158, %v7160
        %v7162 = vrot.slane %v7154, %v7161
        %v7164 = vunpack.c.l.s4 1983009808
        %v7165 = vunpack.c.0.s8 %v7164
        %v7166 = vlaneseq
        %v7167 = vshrl.u32 %v7166, 7
        %v7168 = vsub.s32 %v7165, %v7167
        %v7169 = vrot.slane %v7155, %v7168
        %v7170 = vcombine.low %v7162, %v7169
        %v7171 = vcombine.low %v4979, %v4986
        %v7172 = vcombine.low %v4993, %v5000
        %v7174 = vunpack.c.l.s4 1983009808
        %v7175 = vunpack.c.0.s8 %v7174
        %v7176 = vlaneseq
        %v7177 = vshrl.u32 %v7176, 7
        %v7178 = vsub.s32 %v7175, %v7177
        %v7179 = vrot.slane %v7171, %v7178
        %v7181 = vunpack.c.l.s4 1983009808
        %v7182 = vunpack.c.0.s8 %v7181
        %v7183 = vlaneseq
        %v7184 = vshrl.u32 %v7183, 7
        %v7185 = vsub.s32 %v7182, %v7184
        %v7186 = vrot.slane %v7172, %v7185
        %v7187 = vcombine.low %v7179, %v7186
        %v7188 = vcombine.low %v5007, %v5014
        %v7189 = vcombine.low %v5021, %v5028
        %v7191 = vunpack.c.l.s4 1983009808
        %v7192 = vunpack.c.0.s8 %v7191
        %v7193 = vlaneseq
        %v7194 = vshrl.u32 %v7193, 7
        %v7195 = vsub.s32 %v7192, %v7194
        %v7196 = vrot.slane %v7188, %v7195
        %v7198 = vunpack.c.l.s4 1983009808
        %v7199 = vunpack.c.0.s8 %v7198
        %v7200 = vlaneseq
        %v7201 = vshrl.u32 %v7200, 7
        %v7202 = vsub.s32 %v7199, %v7201
        %v7203 = vrot.slane %v7189, %v7202
        %v7204 = vcombine.low %v7196, %v7203
        %7205 = vset.pattern.permute.xlu0 0
        %7206 = vperm.xlu0 %7205, %v5045
        %v7207 = vpop.permute.xlu0 %7206
        %7208 = vset.pattern.permute.xlu0 0
        %7209 = vperm.xlu0 %7208, %v5062
        %v7210 = vpop.permute.xlu0 %7209
        %7211 = vset.pattern.permute.xlu0 0
        %7212 = vperm.xlu0 %7211, %v5079
        %v7213 = vpop.permute.xlu0 %7212
        %7214 = vset.pattern.permute.xlu0 0
        %7215 = vperm.xlu0 %7214, %v5096
        %v7216 = vpop.permute.xlu0 %7215
        %7217 = vset.pattern.permute.xlu0 0
        %7218 = vperm.xlu0 %7217, %v5113
        %v7219 = vpop.permute.xlu0 %7218
        %7220 = vset.pattern.permute.xlu0 0
        %7221 = vperm.xlu0 %7220, %v5130
        %v7222 = vpop.permute.xlu0 %7221
        %7223 = vset.pattern.permute.xlu0 0
        %7224 = vperm.xlu0 %7223, %v5147
        %v7225 = vpop.permute.xlu0 %7224
        %7226 = vset.pattern.permute.xlu0 0
        %7227 = vperm.xlu0 %7226, %v5164
        %v7228 = vpop.permute.xlu0 %7227
        %7229 = vset.pattern.permute.xlu0 0
        %7230 = vperm.xlu0 %7229, %v5181
        %v7231 = vpop.permute.xlu0 %7230
        %7232 = vset.pattern.permute.xlu0 0
        %7233 = vperm.xlu0 %7232, %v5198
        %v7234 = vpop.permute.xlu0 %7233
        %7235 = vset.pattern.permute.xlu0 0
        %7236 = vperm.xlu0 %7235, %v5215
        %v7237 = vpop.permute.xlu0 %7236
        %7238 = vset.pattern.permute.xlu0 0
        %7239 = vperm.xlu0 %7238, %v5232
        %v7240 = vpop.permute.xlu0 %7239
        %7241 = vset.pattern.permute.xlu0 0
        %7242 = vperm.xlu0 %7241, %v5249
        %v7243 = vpop.permute.xlu0 %7242
        %7244 = vset.pattern.permute.xlu0 0
        %7245 = vperm.xlu0 %7244, %v5266
        %v7246 = vpop.permute.xlu0 %7245
        %7247 = vset.pattern.permute.xlu0 0
        %7248 = vperm.xlu0 %7247, %v5283
        %v7249 = vpop.permute.xlu0 %7248
        %7250 = vset.pattern.permute.xlu0 0
        %7251 = vperm.xlu0 %7250, %v5300
        %v7252 = vpop.permute.xlu0 %7251
        %7253 = vset.pattern.permute.xlu0 0
        %7254 = vperm.xlu0 %7253, %v5317
        %v7255 = vpop.permute.xlu0 %7254
        %7256 = vset.pattern.permute.xlu0 0
        %7257 = vperm.xlu0 %7256, %v5334
        %v7258 = vpop.permute.xlu0 %7257
        %7259 = vset.pattern.permute.xlu0 0
        %7260 = vperm.xlu0 %7259, %v5351
        %v7261 = vpop.permute.xlu0 %7260
        %7262 = vset.pattern.permute.xlu0 0
        %7263 = vperm.xlu0 %7262, %v5368
        %v7264 = vpop.permute.xlu0 %7263
        %7265 = vset.pattern.permute.xlu0 0
        %7266 = vperm.xlu0 %7265, %v5385
        %v7267 = vpop.permute.xlu0 %7266
        %7268 = vset.pattern.permute.xlu0 0
        %7269 = vperm.xlu0 %7268, %v5402
        %v7270 = vpop.permute.xlu0 %7269
        %7271 = vset.pattern.permute.xlu0 0
        %7272 = vperm.xlu0 %7271, %v5419
        %v7273 = vpop.permute.xlu0 %7272
        %7274 = vset.pattern.permute.xlu0 0
        %7275 = vperm.xlu0 %7274, %v5436
        %v7276 = vpop.permute.xlu0 %7275
        %7277 = vset.pattern.permute.xlu0 0
        %7278 = vperm.xlu0 %7277, %v5453
        %v7279 = vpop.permute.xlu0 %7278
        %7280 = vset.pattern.permute.xlu0 0
        %7281 = vperm.xlu0 %7280, %v5470
        %v7282 = vpop.permute.xlu0 %7281
        %7283 = vset.pattern.permute.xlu0 0
        %7284 = vperm.xlu0 %7283, %v5487
        %v7285 = vpop.permute.xlu0 %7284
        %7286 = vset.pattern.permute.xlu0 0
        %7287 = vperm.xlu0 %7286, %v5504
        %v7288 = vpop.permute.xlu0 %7287
        %7289 = vset.pattern.permute.xlu0 0
        %7290 = vperm.xlu0 %7289, %v5521
        %v7291 = vpop.permute.xlu0 %7290
        %7292 = vset.pattern.permute.xlu0 0
        %7293 = vperm.xlu0 %7292, %v5538
        %v7294 = vpop.permute.xlu0 %7293
        %7295 = vset.pattern.permute.xlu0 0
        %7296 = vperm.xlu0 %7295, %v5555
        %v7297 = vpop.permute.xlu0 %7296
        %7298 = vset.pattern.permute.xlu0 0
        %7299 = vperm.xlu0 %7298, %v5572
        %v7300 = vpop.permute.xlu0 %7299
        %7301 = vset.pattern.permute.xlu0 0
        %7302 = vperm.xlu0 %7301, %v5589
        %v7303 = vpop.permute.xlu0 %7302
        %7304 = vset.pattern.permute.xlu0 0
        %7305 = vperm.xlu0 %7304, %v5606
        %v7306 = vpop.permute.xlu0 %7305
        %7307 = vset.pattern.permute.xlu0 0
        %7308 = vperm.xlu0 %7307, %v5623
        %v7309 = vpop.permute.xlu0 %7308
        %7310 = vset.pattern.permute.xlu0 0
        %7311 = vperm.xlu0 %7310, %v5640
        %v7312 = vpop.permute.xlu0 %7311
        %7313 = vset.pattern.permute.xlu0 0
        %7314 = vperm.xlu0 %7313, %v5657
        %v7315 = vpop.permute.xlu0 %7314
        %7316 = vset.pattern.permute.xlu0 0
        %7317 = vperm.xlu0 %7316, %v5674
        %v7318 = vpop.permute.xlu0 %7317
        %7319 = vset.pattern.permute.xlu0 0
        %7320 = vperm.xlu0 %7319, %v5691
        %v7321 = vpop.permute.xlu0 %7320
        %7322 = vset.pattern.permute.xlu0 0
        %7323 = vperm.xlu0 %7322, %v5708
        %v7324 = vpop.permute.xlu0 %7323
        %7325 = vset.pattern.permute.xlu0 0
        %7326 = vperm.xlu0 %7325, %v5725
        %v7327 = vpop.permute.xlu0 %7326
        %7328 = vset.pattern.permute.xlu0 0
        %7329 = vperm.xlu0 %7328, %v5742
        %v7330 = vpop.permute.xlu0 %7329
        %7331 = vset.pattern.permute.xlu0 0
        %7332 = vperm.xlu0 %7331, %v5759
        %v7333 = vpop.permute.xlu0 %7332
        %7334 = vset.pattern.permute.xlu0 0
        %7335 = vperm.xlu0 %7334, %v5776
        %v7336 = vpop.permute.xlu0 %7335
        %7337 = vset.pattern.permute.xlu0 0
        %7338 = vperm.xlu0 %7337, %v5793
        %v7339 = vpop.permute.xlu0 %7338
        %7340 = vset.pattern.permute.xlu0 0
        %7341 = vperm.xlu0 %7340, %v5810
        %v7342 = vpop.permute.xlu0 %7341
        %7343 = vset.pattern.permute.xlu0 0
        %7344 = vperm.xlu0 %7343, %v5827
        %v7345 = vpop.permute.xlu0 %7344
        %7346 = vset.pattern.permute.xlu0 0
        %7347 = vperm.xlu0 %7346, %v5844
        %v7348 = vpop.permute.xlu0 %7347
        %7349 = vset.pattern.permute.xlu0 0
        %7350 = vperm.xlu0 %7349, %v5861
        %v7351 = vpop.permute.xlu0 %7350
        %7352 = vset.pattern.permute.xlu0 0
        %7353 = vperm.xlu0 %7352, %v5878
        %v7354 = vpop.permute.xlu0 %7353
        %7355 = vset.pattern.permute.xlu0 0
        %7356 = vperm.xlu0 %7355, %v5895
        %v7357 = vpop.permute.xlu0 %7356
        %7358 = vset.pattern.permute.xlu0 0
        %7359 = vperm.xlu0 %7358, %v5912
        %v7360 = vpop.permute.xlu0 %7359
        %7361 = vset.pattern.permute.xlu0 0
        %7362 = vperm.xlu0 %7361, %v5929
        %v7363 = vpop.permute.xlu0 %7362
        %7364 = vset.pattern.permute.xlu0 0
        %7365 = vperm.xlu0 %7364, %v5946
        %v7366 = vpop.permute.xlu0 %7365
        %7367 = vset.pattern.permute.xlu0 0
        %7368 = vperm.xlu0 %7367, %v5963
        %v7369 = vpop.permute.xlu0 %7368
        %7370 = vset.pattern.permute.xlu0 0
        %7371 = vperm.xlu0 %7370, %v5980
        %v7372 = vpop.permute.xlu0 %7371
        %7373 = vset.pattern.permute.xlu0 0
        %7374 = vperm.xlu0 %7373, %v5997
        %v7375 = vpop.permute.xlu0 %7374
        %7376 = vset.pattern.permute.xlu0 0
        %7377 = vperm.xlu0 %7376, %v6014
        %v7378 = vpop.permute.xlu0 %7377
        %7379 = vset.pattern.permute.xlu0 0
        %7380 = vperm.xlu0 %7379, %v6031
        %v7381 = vpop.permute.xlu0 %7380
        %7382 = vset.pattern.permute.xlu0 0
        %7383 = vperm.xlu0 %7382, %v6048
        %v7384 = vpop.permute.xlu0 %7383
        %7385 = vset.pattern.permute.xlu0 0
        %7386 = vperm.xlu0 %7385, %v6065
        %v7387 = vpop.permute.xlu0 %7386
        %7388 = vset.pattern.permute.xlu0 0
        %7389 = vperm.xlu0 %7388, %v6082
        %v7390 = vpop.permute.xlu0 %7389
        %7391 = vset.pattern.permute.xlu0 0
        %7392 = vperm.xlu0 %7391, %v6099
        %v7393 = vpop.permute.xlu0 %7392
        %7394 = vset.pattern.permute.xlu0 0
        %7395 = vperm.xlu0 %7394, %v6116
        %v7396 = vpop.permute.xlu0 %7395
        %7397 = vset.pattern.permute.xlu0 0
        %7398 = vperm.xlu0 %7397, %v6133
        %v7399 = vpop.permute.xlu0 %7398
        %7400 = vset.pattern.permute.xlu0 0
        %7401 = vperm.xlu0 %7400, %v6150
        %v7402 = vpop.permute.xlu0 %7401
        %7403 = vset.pattern.permute.xlu0 0
        %7404 = vperm.xlu0 %7403, %v6167
        %v7405 = vpop.permute.xlu0 %7404
        %7406 = vset.pattern.permute.xlu0 0
        %7407 = vperm.xlu0 %7406, %v6184
        %v7408 = vpop.permute.xlu0 %7407
        %7409 = vset.pattern.permute.xlu0 0
        %7410 = vperm.xlu0 %7409, %v6201
        %v7411 = vpop.permute.xlu0 %7410
        %7412 = vset.pattern.permute.xlu0 0
        %7413 = vperm.xlu0 %7412, %v6218
        %v7414 = vpop.permute.xlu0 %7413
        %7415 = vset.pattern.permute.xlu0 0
        %7416 = vperm.xlu0 %7415, %v6235
        %v7417 = vpop.permute.xlu0 %7416
        %7418 = vset.pattern.permute.xlu0 0
        %7419 = vperm.xlu0 %7418, %v6252
        %v7420 = vpop.permute.xlu0 %7419
        %7421 = vset.pattern.permute.xlu0 0
        %7422 = vperm.xlu0 %7421, %v6269
        %v7423 = vpop.permute.xlu0 %7422
        %7424 = vset.pattern.permute.xlu0 0
        %7425 = vperm.xlu0 %7424, %v6286
        %v7426 = vpop.permute.xlu0 %7425
        %7427 = vset.pattern.permute.xlu0 0
        %7428 = vperm.xlu0 %7427, %v6303
        %v7429 = vpop.permute.xlu0 %7428
        %7430 = vset.pattern.permute.xlu0 0
        %7431 = vperm.xlu0 %7430, %v6320
        %v7432 = vpop.permute.xlu0 %7431
        %7433 = vset.pattern.permute.xlu0 0
        %7434 = vperm.xlu0 %7433, %v6337
        %v7435 = vpop.permute.xlu0 %7434
        %7436 = vset.pattern.permute.xlu0 0
        %7437 = vperm.xlu0 %7436, %v6354
        %v7438 = vpop.permute.xlu0 %7437
        %7439 = vset.pattern.permute.xlu0 0
        %7440 = vperm.xlu0 %7439, %v6371
        %v7441 = vpop.permute.xlu0 %7440
        %7442 = vset.pattern.permute.xlu0 0
        %7443 = vperm.xlu0 %7442, %v6388
        %v7444 = vpop.permute.xlu0 %7443
        %7445 = vset.pattern.permute.xlu0 0
        %7446 = vperm.xlu0 %7445, %v6405
        %v7447 = vpop.permute.xlu0 %7446
        %7448 = vset.pattern.permute.xlu0 0
        %7449 = vperm.xlu0 %7448, %v6422
        %v7450 = vpop.permute.xlu0 %7449
        %7451 = vset.pattern.permute.xlu0 0
        %7452 = vperm.xlu0 %7451, %v6439
        %v7453 = vpop.permute.xlu0 %7452
        %7454 = vset.pattern.permute.xlu0 0
        %7455 = vperm.xlu0 %7454, %v6456
        %v7456 = vpop.permute.xlu0 %7455
        %7457 = vset.pattern.permute.xlu0 0
        %7458 = vperm.xlu0 %7457, %v6473
        %v7459 = vpop.permute.xlu0 %7458
        %7460 = vset.pattern.permute.xlu0 0
        %7461 = vperm.xlu0 %7460, %v6490
        %v7462 = vpop.permute.xlu0 %7461
        %7463 = vset.pattern.permute.xlu0 0
        %7464 = vperm.xlu0 %7463, %v6507
        %v7465 = vpop.permute.xlu0 %7464
        %7466 = vset.pattern.permute.xlu0 0
        %7467 = vperm.xlu0 %7466, %v6524
        %v7468 = vpop.permute.xlu0 %7467
        %7469 = vset.pattern.permute.xlu0 0
        %7470 = vperm.xlu0 %7469, %v6541
        %v7471 = vpop.permute.xlu0 %7470
        %7472 = vset.pattern.permute.xlu0 0
        %7473 = vperm.xlu0 %7472, %v6558
        %v7474 = vpop.permute.xlu0 %7473
        %7475 = vset.pattern.permute.xlu0 0
        %7476 = vperm.xlu0 %7475, %v6575
        %v7477 = vpop.permute.xlu0 %7476
        %7478 = vset.pattern.permute.xlu0 0
        %7479 = vperm.xlu0 %7478, %v6592
        %v7480 = vpop.permute.xlu0 %7479
        %7481 = vset.pattern.permute.xlu0 0
        %7482 = vperm.xlu0 %7481, %v6609
        %v7483 = vpop.permute.xlu0 %7482
        %7484 = vset.pattern.permute.xlu0 0
        %7485 = vperm.xlu0 %7484, %v6626
        %v7486 = vpop.permute.xlu0 %7485
        %7487 = vset.pattern.permute.xlu0 0
        %7488 = vperm.xlu0 %7487, %v6643
        %v7489 = vpop.permute.xlu0 %7488
        %7490 = vset.pattern.permute.xlu0 0
        %7491 = vperm.xlu0 %7490, %v6660
        %v7492 = vpop.permute.xlu0 %7491
        %7493 = vset.pattern.permute.xlu0 0
        %7494 = vperm.xlu0 %7493, %v6677
        %v7495 = vpop.permute.xlu0 %7494
        %7496 = vset.pattern.permute.xlu0 0
        %7497 = vperm.xlu0 %7496, %v6694
        %v7498 = vpop.permute.xlu0 %7497
        %7499 = vset.pattern.permute.xlu0 0
        %7500 = vperm.xlu0 %7499, %v6711
        %v7501 = vpop.permute.xlu0 %7500
        %7502 = vset.pattern.permute.xlu0 0
        %7503 = vperm.xlu0 %7502, %v6728
        %v7504 = vpop.permute.xlu0 %7503
        %7505 = vset.pattern.permute.xlu0 0
        %7506 = vperm.xlu0 %7505, %v6745
        %v7507 = vpop.permute.xlu0 %7506
        %7508 = vset.pattern.permute.xlu0 0
        %7509 = vperm.xlu0 %7508, %v6762
        %v7510 = vpop.permute.xlu0 %7509
        %7511 = vset.pattern.permute.xlu0 0
        %7512 = vperm.xlu0 %7511, %v6779
        %v7513 = vpop.permute.xlu0 %7512
        %7514 = vset.pattern.permute.xlu0 0
        %7515 = vperm.xlu0 %7514, %v6796
        %v7516 = vpop.permute.xlu0 %7515
        %7517 = vset.pattern.permute.xlu0 0
        %7518 = vperm.xlu0 %7517, %v6813
        %v7519 = vpop.permute.xlu0 %7518
        %7520 = vset.pattern.permute.xlu0 0
        %7521 = vperm.xlu0 %7520, %v6830
        %v7522 = vpop.permute.xlu0 %7521
        %7523 = vset.pattern.permute.xlu0 0
        %7524 = vperm.xlu0 %7523, %v6847
        %v7525 = vpop.permute.xlu0 %7524
        %7526 = vset.pattern.permute.xlu0 0
        %7527 = vperm.xlu0 %7526, %v6864
        %v7528 = vpop.permute.xlu0 %7527
        %7529 = vset.pattern.permute.xlu0 0
        %7530 = vperm.xlu0 %7529, %v6881
        %v7531 = vpop.permute.xlu0 %7530
        %7532 = vset.pattern.permute.xlu0 0
        %7533 = vperm.xlu0 %7532, %v6898
        %v7534 = vpop.permute.xlu0 %7533
        %7535 = vset.pattern.permute.xlu0 0
        %7536 = vperm.xlu0 %7535, %v6915
        %v7537 = vpop.permute.xlu0 %7536
        %7538 = vset.pattern.permute.xlu0 0
        %7539 = vperm.xlu0 %7538, %v6932
        %v7540 = vpop.permute.xlu0 %7539
        %7541 = vset.pattern.permute.xlu0 0
        %7542 = vperm.xlu0 %7541, %v6949
        %v7543 = vpop.permute.xlu0 %7542
        %7544 = vset.pattern.permute.xlu0 0
        %7545 = vperm.xlu0 %7544, %v6966
        %v7546 = vpop.permute.xlu0 %7545
        %7547 = vset.pattern.permute.xlu0 0
        %7548 = vperm.xlu0 %7547, %v6983
        %v7549 = vpop.permute.xlu0 %7548
        %7550 = vset.pattern.permute.xlu0 0
        %7551 = vperm.xlu0 %7550, %v7000
        %v7552 = vpop.permute.xlu0 %7551
        %7553 = vset.pattern.permute.xlu0 0
        %7554 = vperm.xlu0 %7553, %v7017
        %v7555 = vpop.permute.xlu0 %7554
        %7556 = vset.pattern.permute.xlu0 0
        %7557 = vperm.xlu0 %7556, %v7034
        %v7558 = vpop.permute.xlu0 %7557
        %7559 = vset.pattern.permute.xlu0 0
        %7560 = vperm.xlu0 %7559, %v7051
        %v7561 = vpop.permute.xlu0 %7560
        %7562 = vset.pattern.permute.xlu0 0
        %7563 = vperm.xlu0 %7562, %v7068
        %v7564 = vpop.permute.xlu0 %7563
        %7565 = vset.pattern.permute.xlu0 0
        %7566 = vperm.xlu0 %7565, %v7085
        %v7567 = vpop.permute.xlu0 %7566
        %7568 = vset.pattern.permute.xlu0 0
        %7569 = vperm.xlu0 %7568, %v7102
        %v7570 = vpop.permute.xlu0 %7569
        %7571 = vset.pattern.permute.xlu0 0
        %7572 = vperm.xlu0 %7571, %v7119
        %v7573 = vpop.permute.xlu0 %7572
        %7574 = vset.pattern.permute.xlu0 0
        %7575 = vperm.xlu0 %7574, %v7136
        %v7576 = vpop.permute.xlu0 %7575
        %7577 = vset.pattern.permute.xlu0 0
        %7578 = vperm.xlu0 %7577, %v7153
        %v7579 = vpop.permute.xlu0 %7578
        %7580 = vset.pattern.permute.xlu0 0
        %7581 = vperm.xlu0 %7580, %v7170
        %v7582 = vpop.permute.xlu0 %7581
        %7583 = vset.pattern.permute.xlu0 0
        %7584 = vperm.xlu0 %7583, %v7187
        %v7585 = vpop.permute.xlu0 %7584
        %7586 = vset.pattern.permute.xlu0 0
        %7587 = vperm.xlu0 %7586, %v7204
        %v7588 = vpop.permute.xlu0 %7587
        %v7589 = vlaneseq
        %v7590 = vand.u32 %v7589, 127
        %v7591 = vlaneseq
        %v7592 = vshrl.u32 %v7591, 7
        %v7593 = vsub.s32 %v7590, %v7592
        %v7594 = vrot.slane %v7207, %v7593
        %v7595 = vadd.s32 %v7590, 4294967288
        %v7596 = vlaneseq
        %v7597 = vshrl.u32 %v7596, 7
        %v7598 = vsub.s32 %v7595, %v7597
        %v7599 = vrot.slane %v7210, %v7598
        %vm7600 = vcmask 130112
        %v7601 = vsel %vm7600, %v7599, %v7594
        %v7602 = vadd.s32 %v7590, 4294967280
        %v7603 = vlaneseq
        %v7604 = vshrl.u32 %v7603, 7
        %v7605 = vsub.s32 %v7602, %v7604
        %v7606 = vrot.slane %v7213, %v7605
        %vm7607 = vcmask 195712
        %v7608 = vsel %vm7607, %v7606, %v7601
        %v7609 = vadd.s32 %v7590, 4294967272
        %v7610 = vlaneseq
        %v7611 = vshrl.u32 %v7610, 7
        %v7612 = vsub.s32 %v7609, %v7611
        %v7613 = vrot.slane %v7216, %v7612
        %vm7614 = vcmask 261312
        %v7615 = vsel %vm7614, %v7613, %v7608
        %v7616 = vadd.s32 %v7590, 4294967264
        %v7617 = vlaneseq
        %v7618 = vshrl.u32 %v7617, 7
        %v7619 = vsub.s32 %v7616, %v7618
        %v7620 = vrot.slane %v7219, %v7619
        %vm7621 = vcmask 326912
        %v7622 = vsel %vm7621, %v7620, %v7615
        %v7623 = vadd.s32 %v7590, 4294967256
        %v7624 = vlaneseq
        %v7625 = vshrl.u32 %v7624, 7
        %v7626 = vsub.s32 %v7623, %v7625
        %v7627 = vrot.slane %v7222, %v7626
        %vm7628 = vcmask 392512
        %v7629 = vsel %vm7628, %v7627, %v7622
        %v7630 = vadd.s32 %v7590, 4294967248
        %v7631 = vlaneseq
        %v7632 = vshrl.u32 %v7631, 7
        %v7633 = vsub.s32 %v7630, %v7632
        %v7634 = vrot.slane %v7225, %v7633
        %vm7635 = vcmask 458112
        %v7636 = vsel %vm7635, %v7634, %v7629
        %v7637 = vadd.s32 %v7590, 4294967240
        %v7638 = vlaneseq
        %v7639 = vshrl.u32 %v7638, 7
        %v7640 = vsub.s32 %v7637, %v7639
        %v7641 = vrot.slane %v7228, %v7640
        %vm7642 = vcmask 523712
        %v7643 = vsel %vm7642, %v7641, %v7636
        %v7644 = vadd.s32 %v7590, 4294967232
        %v7645 = vlaneseq
        %v7646 = vshrl.u32 %v7645, 7
        %v7647 = vsub.s32 %v7644, %v7646
        %v7648 = vrot.slane %v7231, %v7647
        %vm7649 = vcmask 589312
        %v7650 = vsel %vm7649, %v7648, %v7643
        %v7651 = vadd.s32 %v7590, 4294967224
        %v7652 = vlaneseq
        %v7653 = vshrl.u32 %v7652, 7
        %v7654 = vsub.s32 %v7651, %v7653
        %v7655 = vrot.slane %v7234, %v7654
        %vm7656 = vcmask 654912
        %v7657 = vsel %vm7656, %v7655, %v7650
        %v7658 = vadd.s32 %v7590, 4294967216
        %v7659 = vlaneseq
        %v7660 = vshrl.u32 %v7659, 7
        %v7661 = vsub.s32 %v7658, %v7660
        %v7662 = vrot.slane %v7237, %v7661
        %vm7663 = vcmask 720512
        %v7664 = vsel %vm7663, %v7662, %v7657
        %v7665 = vadd.s32 %v7590, 4294967208
        %v7666 = vlaneseq
        %v7667 = vshrl.u32 %v7666, 7
        %v7668 = vsub.s32 %v7665, %v7667
        %v7669 = vrot.slane %v7240, %v7668
        %vm7670 = vcmask 786112
        %v7671 = vsel %vm7670, %v7669, %v7664
        %v7672 = vadd.s32 %v7590, 4294967200
        %v7673 = vlaneseq
        %v7674 = vshrl.u32 %v7673, 7
        %v7675 = vsub.s32 %v7672, %v7674
        %v7676 = vrot.slane %v7243, %v7675
        %vm7677 = vcmask 851712
        %v7678 = vsel %vm7677, %v7676, %v7671
        %v7679 = vadd.s32 %v7590, 4294967192
        %v7680 = vlaneseq
        %v7681 = vshrl.u32 %v7680, 7
        %v7682 = vsub.s32 %v7679, %v7681
        %v7683 = vrot.slane %v7246, %v7682
        %vm7684 = vcmask 917312
        %v7685 = vsel %vm7684, %v7683, %v7678
        %v7686 = vadd.s32 %v7590, 4294967184
        %v7687 = vlaneseq
        %v7688 = vshrl.u32 %v7687, 7
        %v7689 = vsub.s32 %v7686, %v7688
        %v7690 = vrot.slane %v7249, %v7689
        %vm7691 = vcmask 982912
        %v7692 = vsel %vm7691, %v7690, %v7685
        %v7693 = vadd.s32 %v7590, 4294967176
        %v7694 = vlaneseq
        %v7695 = vshrl.u32 %v7694, 7
        %v7696 = vsub.s32 %v7693, %v7695
        %v7697 = vrot.slane %v7252, %v7696
        %vm7698 = vcmask 1048512
        %v7699 = vsel %vm7698, %v7697, %v7692
        %v7700 = vlaneseq
        %v7701 = vshrl.u32 %v7700, 7
        %v7702 = vsub.s32 %v7590, %v7701
        %v7703 = vrot.slane %v7255, %v7702
        %v7704 = vlaneseq
        %v7705 = vshrl.u32 %v7704, 7
        %v7706 = vsub.s32 %v7595, %v7705
        %v7707 = vrot.slane %v7258, %v7706
        %v7708 = vsel %vm7600, %v7707, %v7703
        %v7709 = vlaneseq
        %v7710 = vshrl.u32 %v7709, 7
        %v7711 = vsub.s32 %v7602, %v7710
        %v7712 = vrot.slane %v7261, %v7711
        %v7713 = vsel %vm7607, %v7712, %v7708
        %v7714 = vlaneseq
        %v7715 = vshrl.u32 %v7714, 7
        %v7716 = vsub.s32 %v7609, %v7715
        %v7717 = vrot.slane %v7264, %v7716
        %v7718 = vsel %vm7614, %v7717, %v7713
        %v7719 = vlaneseq
        %v7720 = vshrl.u32 %v7719, 7
        %v7721 = vsub.s32 %v7616, %v7720
        %v7722 = vrot.slane %v7267, %v7721
        %v7723 = vsel %vm7621, %v7722, %v7718
        %v7724 = vlaneseq
        %v7725 = vshrl.u32 %v7724, 7
        %v7726 = vsub.s32 %v7623, %v7725
        %v7727 = vrot.slane %v7270, %v7726
        %v7728 = vsel %vm7628, %v7727, %v7723
        %v7729 = vlaneseq
        %v7730 = vshrl.u32 %v7729, 7
        %v7731 = vsub.s32 %v7630, %v7730
        %v7732 = vrot.slane %v7273, %v7731
        %v7733 = vsel %vm7635, %v7732, %v7728
        %v7734 = vlaneseq
        %v7735 = vshrl.u32 %v7734, 7
        %v7736 = vsub.s32 %v7637, %v7735
        %v7737 = vrot.slane %v7276, %v7736
        %v7738 = vsel %vm7642, %v7737, %v7733
        %v7739 = vlaneseq
        %v7740 = vshrl.u32 %v7739, 7
        %v7741 = vsub.s32 %v7644, %v7740
        %v7742 = vrot.slane %v7279, %v7741
        %v7743 = vsel %vm7649, %v7742, %v7738
        %v7744 = vlaneseq
        %v7745 = vshrl.u32 %v7744, 7
        %v7746 = vsub.s32 %v7651, %v7745
        %v7747 = vrot.slane %v7282, %v7746
        %v7748 = vsel %vm7656, %v7747, %v7743
        %v7749 = vlaneseq
        %v7750 = vshrl.u32 %v7749, 7
        %v7751 = vsub.s32 %v7658, %v7750
        %v7752 = vrot.slane %v7285, %v7751
        %v7753 = vsel %vm7663, %v7752, %v7748
        %v7754 = vlaneseq
        %v7755 = vshrl.u32 %v7754, 7
        %v7756 = vsub.s32 %v7665, %v7755
        %v7757 = vrot.slane %v7288, %v7756
        %v7758 = vsel %vm7670, %v7757, %v7753
        %v7759 = vlaneseq
        %v7760 = vshrl.u32 %v7759, 7
        %v7761 = vsub.s32 %v7672, %v7760
        %v7762 = vrot.slane %v7291, %v7761
        %v7763 = vsel %vm7677, %v7762, %v7758
        %v7764 = vlaneseq
        %v7765 = vshrl.u32 %v7764, 7
        %v7766 = vsub.s32 %v7679, %v7765
        %v7767 = vrot.slane %v7294, %v7766
        %v7768 = vsel %vm7684, %v7767, %v7763
        %v7769 = vlaneseq
        %v7770 = vshrl.u32 %v7769, 7
        %v7771 = vsub.s32 %v7686, %v7770
        %v7772 = vrot.slane %v7297, %v7771
        %v7773 = vsel %vm7691, %v7772, %v7768
        %v7774 = vlaneseq
        %v7775 = vshrl.u32 %v7774, 7
        %v7776 = vsub.s32 %v7693, %v7775
        %v7777 = vrot.slane %v7300, %v7776
        %v7778 = vsel %vm7698, %v7777, %v7773
        %v7779 = vlaneseq
        %v7780 = vshrl.u32 %v7779, 7
        %v7781 = vsub.s32 %v7590, %v7780
        %v7782 = vrot.slane %v7303, %v7781
        %v7783 = vlaneseq
        %v7784 = vshrl.u32 %v7783, 7
        %v7785 = vsub.s32 %v7595, %v7784
        %v7786 = vrot.slane %v7306, %v7785
        %v7787 = vsel %vm7600, %v7786, %v7782
        %v7788 = vlaneseq
        %v7789 = vshrl.u32 %v7788, 7
        %v7790 = vsub.s32 %v7602, %v7789
        %v7791 = vrot.slane %v7309, %v7790
        %v7792 = vsel %vm7607, %v7791, %v7787
        %v7793 = vlaneseq
        %v7794 = vshrl.u32 %v7793, 7
        %v7795 = vsub.s32 %v7609, %v7794
        %v7796 = vrot.slane %v7312, %v7795
        %v7797 = vsel %vm7614, %v7796, %v7792
        %v7798 = vlaneseq
        %v7799 = vshrl.u32 %v7798, 7
        %v7800 = vsub.s32 %v7616, %v7799
        %v7801 = vrot.slane %v7315, %v7800
        %v7802 = vsel %vm7621, %v7801, %v7797
        %v7803 = vlaneseq
        %v7804 = vshrl.u32 %v7803, 7
        %v7805 = vsub.s32 %v7623, %v7804
        %v7806 = vrot.slane %v7318, %v7805
        %v7807 = vsel %vm7628, %v7806, %v7802
        %v7808 = vlaneseq
        %v7809 = vshrl.u32 %v7808, 7
        %v7810 = vsub.s32 %v7630, %v7809
        %v7811 = vrot.slane %v7321, %v7810
        %v7812 = vsel %vm7635, %v7811, %v7807
        %v7813 = vlaneseq
        %v7814 = vshrl.u32 %v7813, 7
        %v7815 = vsub.s32 %v7637, %v7814
        %v7816 = vrot.slane %v7324, %v7815
        %v7817 = vsel %vm7642, %v7816, %v7812
        %v7818 = vlaneseq
        %v7819 = vshrl.u32 %v7818, 7
        %v7820 = vsub.s32 %v7644, %v7819
        %v7821 = vrot.slane %v7327, %v7820
        %v7822 = vsel %vm7649, %v7821, %v7817
        %v7823 = vlaneseq
        %v7824 = vshrl.u32 %v7823, 7
        %v7825 = vsub.s32 %v7651, %v7824
        %v7826 = vrot.slane %v7330, %v7825
        %v7827 = vsel %vm7656, %v7826, %v7822
        %v7828 = vlaneseq
        %v7829 = vshrl.u32 %v7828, 7
        %v7830 = vsub.s32 %v7658, %v7829
        %v7831 = vrot.slane %v7333, %v7830
        %v7832 = vsel %vm7663, %v7831, %v7827
        %v7833 = vlaneseq
        %v7834 = vshrl.u32 %v7833, 7
        %v7835 = vsub.s32 %v7665, %v7834
        %v7836 = vrot.slane %v7336, %v7835
        %v7837 = vsel %vm7670, %v7836, %v7832
        %v7838 = vlaneseq
        %v7839 = vshrl.u32 %v7838, 7
        %v7840 = vsub.s32 %v7672, %v7839
        %v7841 = vrot.slane %v7339, %v7840
        %v7842 = vsel %vm7677, %v7841, %v7837
        %v7843 = vlaneseq
        %v7844 = vshrl.u32 %v7843, 7
        %v7845 = vsub.s32 %v7679, %v7844
        %v7846 = vrot.slane %v7342, %v7845
        %v7847 = vsel %vm7684, %v7846, %v7842
        %v7848 = vlaneseq
        %v7849 = vshrl.u32 %v7848, 7
        %v7850 = vsub.s32 %v7686, %v7849
        %v7851 = vrot.slane %v7345, %v7850
        %v7852 = vsel %vm7691, %v7851, %v7847
        %v7853 = vlaneseq
        %v7854 = vshrl.u32 %v7853, 7
        %v7855 = vsub.s32 %v7693, %v7854
        %v7856 = vrot.slane %v7348, %v7855
        %v7857 = vsel %vm7698, %v7856, %v7852
        %v7858 = vlaneseq
        %v7859 = vshrl.u32 %v7858, 7
        %v7860 = vsub.s32 %v7590, %v7859
        %v7861 = vrot.slane %v7351, %v7860
        %v7862 = vlaneseq
        %v7863 = vshrl.u32 %v7862, 7
        %v7864 = vsub.s32 %v7595, %v7863
        %v7865 = vrot.slane %v7354, %v7864
        %v7866 = vsel %vm7600, %v7865, %v7861
        %v7867 = vlaneseq
        %v7868 = vshrl.u32 %v7867, 7
        %v7869 = vsub.s32 %v7602, %v7868
        %v7870 = vrot.slane %v7357, %v7869
        %v7871 = vsel %vm7607, %v7870, %v7866
        %v7872 = vlaneseq
        %v7873 = vshrl.u32 %v7872, 7
        %v7874 = vsub.s32 %v7609, %v7873
        %v7875 = vrot.slane %v7360, %v7874
        %v7876 = vsel %vm7614, %v7875, %v7871
        %v7877 = vlaneseq
        %v7878 = vshrl.u32 %v7877, 7
        %v7879 = vsub.s32 %v7616, %v7878
        %v7880 = vrot.slane %v7363, %v7879
        %v7881 = vsel %vm7621, %v7880, %v7876
        %v7882 = vlaneseq
        %v7883 = vshrl.u32 %v7882, 7
        %v7884 = vsub.s32 %v7623, %v7883
        %v7885 = vrot.slane %v7366, %v7884
        %v7886 = vsel %vm7628, %v7885, %v7881
        %v7887 = vlaneseq
        %v7888 = vshrl.u32 %v7887, 7
        %v7889 = vsub.s32 %v7630, %v7888
        %v7890 = vrot.slane %v7369, %v7889
        %v7891 = vsel %vm7635, %v7890, %v7886
        %v7892 = vlaneseq
        %v7893 = vshrl.u32 %v7892, 7
        %v7894 = vsub.s32 %v7637, %v7893
        %v7895 = vrot.slane %v7372, %v7894
        %v7896 = vsel %vm7642, %v7895, %v7891
        %v7897 = vlaneseq
        %v7898 = vshrl.u32 %v7897, 7
        %v7899 = vsub.s32 %v7644, %v7898
        %v7900 = vrot.slane %v7375, %v7899
        %v7901 = vsel %vm7649, %v7900, %v7896
        %v7902 = vlaneseq
        %v7903 = vshrl.u32 %v7902, 7
        %v7904 = vsub.s32 %v7651, %v7903
        %v7905 = vrot.slane %v7378, %v7904
        %v7906 = vsel %vm7656, %v7905, %v7901
        %v7907 = vlaneseq
        %v7908 = vshrl.u32 %v7907, 7
        %v7909 = vsub.s32 %v7658, %v7908
        %v7910 = vrot.slane %v7381, %v7909
        %v7911 = vsel %vm7663, %v7910, %v7906
        %v7912 = vlaneseq
        %v7913 = vshrl.u32 %v7912, 7
        %v7914 = vsub.s32 %v7665, %v7913
        %v7915 = vrot.slane %v7384, %v7914
        %v7916 = vsel %vm7670, %v7915, %v7911
        %v7917 = vlaneseq
        %v7918 = vshrl.u32 %v7917, 7
        %v7919 = vsub.s32 %v7672, %v7918
        %v7920 = vrot.slane %v7387, %v7919
        %v7921 = vsel %vm7677, %v7920, %v7916
        %v7922 = vlaneseq
        %v7923 = vshrl.u32 %v7922, 7
        %v7924 = vsub.s32 %v7679, %v7923
        %v7925 = vrot.slane %v7390, %v7924
        %v7926 = vsel %vm7684, %v7925, %v7921
        %v7927 = vlaneseq
        %v7928 = vshrl.u32 %v7927, 7
        %v7929 = vsub.s32 %v7686, %v7928
        %v7930 = vrot.slane %v7393, %v7929
        %v7931 = vsel %vm7691, %v7930, %v7926
        %v7932 = vlaneseq
        %v7933 = vshrl.u32 %v7932, 7
        %v7934 = vsub.s32 %v7693, %v7933
        %v7935 = vrot.slane %v7396, %v7934
        %v7936 = vsel %vm7698, %v7935, %v7931
        %v7937 = vlaneseq
        %v7938 = vshrl.u32 %v7937, 7
        %v7939 = vsub.s32 %v7590, %v7938
        %v7940 = vrot.slane %v7399, %v7939
        %v7941 = vlaneseq
        %v7942 = vshrl.u32 %v7941, 7
        %v7943 = vsub.s32 %v7595, %v7942
        %v7944 = vrot.slane %v7402, %v7943
        %v7945 = vsel %vm7600, %v7944, %v7940
        %v7946 = vlaneseq
        %v7947 = vshrl.u32 %v7946, 7
        %v7948 = vsub.s32 %v7602, %v7947
        %v7949 = vrot.slane %v7405, %v7948
        %v7950 = vsel %vm7607, %v7949, %v7945
        %v7951 = vlaneseq
        %v7952 = vshrl.u32 %v7951, 7
        %v7953 = vsub.s32 %v7609, %v7952
        %v7954 = vrot.slane %v7408, %v7953
        %v7955 = vsel %vm7614, %v7954, %v7950
        %v7956 = vlaneseq
        %v7957 = vshrl.u32 %v7956, 7
        %v7958 = vsub.s32 %v7616, %v7957
        %v7959 = vrot.slane %v7411, %v7958
        %v7960 = vsel %vm7621, %v7959, %v7955
        %v7961 = vlaneseq
        %v7962 = vshrl.u32 %v7961, 7
        %v7963 = vsub.s32 %v7623, %v7962
        %v7964 = vrot.slane %v7414, %v7963
        %v7965 = vsel %vm7628, %v7964, %v7960
        %v7966 = vlaneseq
        %v7967 = vshrl.u32 %v7966, 7
        %v7968 = vsub.s32 %v7630, %v7967
        %v7969 = vrot.slane %v7417, %v7968
        %v7970 = vsel %vm7635, %v7969, %v7965
        %v7971 = vlaneseq
        %v7972 = vshrl.u32 %v7971, 7
        %v7973 = vsub.s32 %v7637, %v7972
        %v7974 = vrot.slane %v7420, %v7973
        %v7975 = vsel %vm7642, %v7974, %v7970
        %v7976 = vlaneseq
        %v7977 = vshrl.u32 %v7976, 7
        %v7978 = vsub.s32 %v7644, %v7977
        %v7979 = vrot.slane %v7423, %v7978
        %v7980 = vsel %vm7649, %v7979, %v7975
        %v7981 = vlaneseq
        %v7982 = vshrl.u32 %v7981, 7
        %v7983 = vsub.s32 %v7651, %v7982
        %v7984 = vrot.slane %v7426, %v7983
        %v7985 = vsel %vm7656, %v7984, %v7980
        %v7986 = vlaneseq
        %v7987 = vshrl.u32 %v7986, 7
        %v7988 = vsub.s32 %v7658, %v7987
        %v7989 = vrot.slane %v7429, %v7988
        %v7990 = vsel %vm7663, %v7989, %v7985
        %v7991 = vlaneseq
        %v7992 = vshrl.u32 %v7991, 7
        %v7993 = vsub.s32 %v7665, %v7992
        %v7994 = vrot.slane %v7432, %v7993
        %v7995 = vsel %vm7670, %v7994, %v7990
        %v7996 = vlaneseq
        %v7997 = vshrl.u32 %v7996, 7
        %v7998 = vsub.s32 %v7672, %v7997
        %v7999 = vrot.slane %v7435, %v7998
        %v8000 = vsel %vm7677, %v7999, %v7995
        %v8001 = vlaneseq
        %v8002 = vshrl.u32 %v8001, 7
        %v8003 = vsub.s32 %v7679, %v8002
        %v8004 = vrot.slane %v7438, %v8003
        %v8005 = vsel %vm7684, %v8004, %v8000
        %v8006 = vlaneseq
        %v8007 = vshrl.u32 %v8006, 7
        %v8008 = vsub.s32 %v7686, %v8007
        %v8009 = vrot.slane %v7441, %v8008
        %v8010 = vsel %vm7691, %v8009, %v8005
        %v8011 = vlaneseq
        %v8012 = vshrl.u32 %v8011, 7
        %v8013 = vsub.s32 %v7693, %v8012
        %v8014 = vrot.slane %v7444, %v8013
        %v8015 = vsel %vm7698, %v8014, %v8010
        %v8016 = vlaneseq
        %v8017 = vshrl.u32 %v8016, 7
        %v8018 = vsub.s32 %v7590, %v8017
        %v8019 = vrot.slane %v7447, %v8018
        %v8020 = vlaneseq
        %v8021 = vshrl.u32 %v8020, 7
        %v8022 = vsub.s32 %v7595, %v8021
        %v8023 = vrot.slane %v7450, %v8022
        %v8024 = vsel %vm7600, %v8023, %v8019
        %v8025 = vlaneseq
        %v8026 = vshrl.u32 %v8025, 7
        %v8027 = vsub.s32 %v7602, %v8026
        %v8028 = vrot.slane %v7453, %v8027
        %v8029 = vsel %vm7607, %v8028, %v8024
        %v8030 = vlaneseq
        %v8031 = vshrl.u32 %v8030, 7
        %v8032 = vsub.s32 %v7609, %v8031
        %v8033 = vrot.slane %v7456, %v8032
        %v8034 = vsel %vm7614, %v8033, %v8029
        %v8035 = vlaneseq
        %v8036 = vshrl.u32 %v8035, 7
        %v8037 = vsub.s32 %v7616, %v8036
        %v8038 = vrot.slane %v7459, %v8037
        %v8039 = vsel %vm7621, %v8038, %v8034
        %v8040 = vlaneseq
        %v8041 = vshrl.u32 %v8040, 7
        %v8042 = vsub.s32 %v7623, %v8041
        %v8043 = vrot.slane %v7462, %v8042
        %v8044 = vsel %vm7628, %v8043, %v8039
        %v8045 = vlaneseq
        %v8046 = vshrl.u32 %v8045, 7
        %v8047 = vsub.s32 %v7630, %v8046
        %v8048 = vrot.slane %v7465, %v8047
        %v8049 = vsel %vm7635, %v8048, %v8044
        %v8050 = vlaneseq
        %v8051 = vshrl.u32 %v8050, 7
        %v8052 = vsub.s32 %v7637, %v8051
        %v8053 = vrot.slane %v7468, %v8052
        %v8054 = vsel %vm7642, %v8053, %v8049
        %v8055 = vlaneseq
        %v8056 = vshrl.u32 %v8055, 7
        %v8057 = vsub.s32 %v7644, %v8056
        %v8058 = vrot.slane %v7471, %v8057
        %v8059 = vsel %vm7649, %v8058, %v8054
        %v8060 = vlaneseq
        %v8061 = vshrl.u32 %v8060, 7
        %v8062 = vsub.s32 %v7651, %v8061
        %v8063 = vrot.slane %v7474, %v8062
        %v8064 = vsel %vm7656, %v8063, %v8059
        %v8065 = vlaneseq
        %v8066 = vshrl.u32 %v8065, 7
        %v8067 = vsub.s32 %v7658, %v8066
        %v8068 = vrot.slane %v7477, %v8067
        %v8069 = vsel %vm7663, %v8068, %v8064
        %v8070 = vlaneseq
        %v8071 = vshrl.u32 %v8070, 7
        %v8072 = vsub.s32 %v7665, %v8071
        %v8073 = vrot.slane %v7480, %v8072
        %v8074 = vsel %vm7670, %v8073, %v8069
        %v8075 = vlaneseq
        %v8076 = vshrl.u32 %v8075, 7
        %v8077 = vsub.s32 %v7672, %v8076
        %v8078 = vrot.slane %v7483, %v8077
        %v8079 = vsel %vm7677, %v8078, %v8074
        %v8080 = vlaneseq
        %v8081 = vshrl.u32 %v8080, 7
        %v8082 = vsub.s32 %v7679, %v8081
        %v8083 = vrot.slane %v7486, %v8082
        %v8084 = vsel %vm7684, %v8083, %v8079
        %v8085 = vlaneseq
        %v8086 = vshrl.u32 %v8085, 7
        %v8087 = vsub.s32 %v7686, %v8086
        %v8088 = vrot.slane %v7489, %v8087
        %v8089 = vsel %vm7691, %v8088, %v8084
        %v8090 = vlaneseq
        %v8091 = vshrl.u32 %v8090, 7
        %v8092 = vsub.s32 %v7693, %v8091
        %v8093 = vrot.slane %v7492, %v8092
        %v8094 = vsel %vm7698, %v8093, %v8089
        %v8095 = vlaneseq
        %v8096 = vshrl.u32 %v8095, 7
        %v8097 = vsub.s32 %v7590, %v8096
        %v8098 = vrot.slane %v7495, %v8097
        %v8099 = vlaneseq
        %v8100 = vshrl.u32 %v8099, 7
        %v8101 = vsub.s32 %v7595, %v8100
        %v8102 = vrot.slane %v7498, %v8101
        %v8103 = vsel %vm7600, %v8102, %v8098
        %v8104 = vlaneseq
        %v8105 = vshrl.u32 %v8104, 7
        %v8106 = vsub.s32 %v7602, %v8105
        %v8107 = vrot.slane %v7501, %v8106
        %v8108 = vsel %vm7607, %v8107, %v8103
        %v8109 = vlaneseq
        %v8110 = vshrl.u32 %v8109, 7
        %v8111 = vsub.s32 %v7609, %v8110
        %v8112 = vrot.slane %v7504, %v8111
        %v8113 = vsel %vm7614, %v8112, %v8108
        %v8114 = vlaneseq
        %v8115 = vshrl.u32 %v8114, 7
        %v8116 = vsub.s32 %v7616, %v8115
        %v8117 = vrot.slane %v7507, %v8116
        %v8118 = vsel %vm7621, %v8117, %v8113
        %v8119 = vlaneseq
        %v8120 = vshrl.u32 %v8119, 7
        %v8121 = vsub.s32 %v7623, %v8120
        %v8122 = vrot.slane %v7510, %v8121
        %v8123 = vsel %vm7628, %v8122, %v8118
        %v8124 = vlaneseq
        %v8125 = vshrl.u32 %v8124, 7
        %v8126 = vsub.s32 %v7630, %v8125
        %v8127 = vrot.slane %v7513, %v8126
        %v8128 = vsel %vm7635, %v8127, %v8123
        %v8129 = vlaneseq
        %v8130 = vshrl.u32 %v8129, 7
        %v8131 = vsub.s32 %v7637, %v8130
        %v8132 = vrot.slane %v7516, %v8131
        %v8133 = vsel %vm7642, %v8132, %v8128
        %v8134 = vlaneseq
        %v8135 = vshrl.u32 %v8134, 7
        %v8136 = vsub.s32 %v7644, %v8135
        %v8137 = vrot.slane %v7519, %v8136
        %v8138 = vsel %vm7649, %v8137, %v8133
        %v8139 = vlaneseq
        %v8140 = vshrl.u32 %v8139, 7
        %v8141 = vsub.s32 %v7651, %v8140
        %v8142 = vrot.slane %v7522, %v8141
        %v8143 = vsel %vm7656, %v8142, %v8138
        %v8144 = vlaneseq
        %v8145 = vshrl.u32 %v8144, 7
        %v8146 = vsub.s32 %v7658, %v8145
        %v8147 = vrot.slane %v7525, %v8146
        %v8148 = vsel %vm7663, %v8147, %v8143
        %v8149 = vlaneseq
        %v8150 = vshrl.u32 %v8149, 7
        %v8151 = vsub.s32 %v7665, %v8150
        %v8152 = vrot.slane %v7528, %v8151
        %v8153 = vsel %vm7670, %v8152, %v8148
        %v8154 = vlaneseq
        %v8155 = vshrl.u32 %v8154, 7
        %v8156 = vsub.s32 %v7672, %v8155
        %v8157 = vrot.slane %v7531, %v8156
        %v8158 = vsel %vm7677, %v8157, %v8153
        %v8159 = vlaneseq
        %v8160 = vshrl.u32 %v8159, 7
        %v8161 = vsub.s32 %v7679, %v8160
        %v8162 = vrot.slane %v7534, %v8161
        %v8163 = vsel %vm7684, %v8162, %v8158
        %v8164 = vlaneseq
        %v8165 = vshrl.u32 %v8164, 7
        %v8166 = vsub.s32 %v7686, %v8165
        %v8167 = vrot.slane %v7537, %v8166
        %v8168 = vsel %vm7691, %v8167, %v8163
        %v8169 = vlaneseq
        %v8170 = vshrl.u32 %v8169, 7
        %v8171 = vsub.s32 %v7693, %v8170
        %v8172 = vrot.slane %v7540, %v8171
        %v8173 = vsel %vm7698, %v8172, %v8168
        %v8174 = vlaneseq
        %v8175 = vshrl.u32 %v8174, 7
        %v8176 = vsub.s32 %v7590, %v8175
        %v8177 = vrot.slane %v7543, %v8176
        %v8178 = vlaneseq
        %v8179 = vshrl.u32 %v8178, 7
        %v8180 = vsub.s32 %v7595, %v8179
        %v8181 = vrot.slane %v7546, %v8180
        %v8182 = vsel %vm7600, %v8181, %v8177
        %v8183 = vlaneseq
        %v8184 = vshrl.u32 %v8183, 7
        %v8185 = vsub.s32 %v7602, %v8184
        %v8186 = vrot.slane %v7549, %v8185
        %v8187 = vsel %vm7607, %v8186, %v8182
        %v8188 = vlaneseq
        %v8189 = vshrl.u32 %v8188, 7
        %v8190 = vsub.s32 %v7609, %v8189
        %v8191 = vrot.slane %v7552, %v8190
        %v8192 = vsel %vm7614, %v8191, %v8187
        %v8193 = vlaneseq
        %v8194 = vshrl.u32 %v8193, 7
        %v8195 = vsub.s32 %v7616, %v8194
        %v8196 = vrot.slane %v7555, %v8195
        %v8197 = vsel %vm7621, %v8196, %v8192
        %v8198 = vlaneseq
        %v8199 = vshrl.u32 %v8198, 7
        %v8200 = vsub.s32 %v7623, %v8199
        %v8201 = vrot.slane %v7558, %v8200
        %v8202 = vsel %vm7628, %v8201, %v8197
        %v8203 = vlaneseq
        %v8204 = vshrl.u32 %v8203, 7
        %v8205 = vsub.s32 %v7630, %v8204
        %v8206 = vrot.slane %v7561, %v8205
        %v8207 = vsel %vm7635, %v8206, %v8202
        %v8208 = vlaneseq
        %v8209 = vshrl.u32 %v8208, 7
        %v8210 = vsub.s32 %v7637, %v8209
        %v8211 = vrot.slane %v7564, %v8210
        %v8212 = vsel %vm7642, %v8211, %v8207
        %v8213 = vlaneseq
        %v8214 = vshrl.u32 %v8213, 7
        %v8215 = vsub.s32 %v7644, %v8214
        %v8216 = vrot.slane %v7567, %v8215
        %v8217 = vsel %vm7649, %v8216, %v8212
        %v8218 = vlaneseq
        %v8219 = vshrl.u32 %v8218, 7
        %v8220 = vsub.s32 %v7651, %v8219
        %v8221 = vrot.slane %v7570, %v8220
        %v8222 = vsel %vm7656, %v8221, %v8217
        %v8223 = vlaneseq
        %v8224 = vshrl.u32 %v8223, 7
        %v8225 = vsub.s32 %v7658, %v8224
        %v8226 = vrot.slane %v7573, %v8225
        %v8227 = vsel %vm7663, %v8226, %v8222
        %v8228 = vlaneseq
        %v8229 = vshrl.u32 %v8228, 7
        %v8230 = vsub.s32 %v7665, %v8229
        %v8231 = vrot.slane %v7576, %v8230
        %v8232 = vsel %vm7670, %v8231, %v8227
        %v8233 = vlaneseq
        %v8234 = vshrl.u32 %v8233, 7
        %v8235 = vsub.s32 %v7672, %v8234
        %v8236 = vrot.slane %v7579, %v8235
        %v8237 = vsel %vm7677, %v8236, %v8232
        %v8238 = vlaneseq
        %v8239 = vshrl.u32 %v8238, 7
        %v8240 = vsub.s32 %v7679, %v8239
        %v8241 = vrot.slane %v7582, %v8240
        %v8242 = vsel %vm7684, %v8241, %v8237
        %v8243 = vlaneseq
        %v8244 = vshrl.u32 %v8243, 7
        %v8245 = vsub.s32 %v7686, %v8244
        %v8246 = vrot.slane %v7585, %v8245
        %v8247 = vsel %vm7691, %v8246, %v8242
        %v8248 = vlaneseq
        %v8249 = vshrl.u32 %v8248, 7
        %v8250 = vsub.s32 %v7693, %v8249
        %v8251 = vrot.slane %v7588, %v8250
        %v8252 = vsel %vm7698, %v8251, %v8247
        %vm8253 = vcmask 1041409
        %v8254 = vsel %vm8253, %v8015, %v7699
        %v8255 = vsel %vm8253, %v8094, %v7778
        %v8256 = vsel %vm8253, %v8173, %v7857
        %v8257 = vsel %vm8253, %v8252, %v7936
        %v8258 = vcombine.low %v8254, %v8255
        %v8259 = vcombine.low %v8256, %v8257
        %v8261 = vunpack.c.l.s4 1983009808
        %v8262 = vunpack.c.0.s8 %v8261
        %v8263 = vlaneseq
        %v8264 = vshrl.u32 %v8263, 7
        %v8265 = vsub.s32 %v8262, %v8264
        %v8266 = vrot.slane %v8258, %v8265
        %v8268 = vunpack.c.l.s4 1983009808
        %v8269 = vunpack.c.0.s8 %v8268
        %v8270 = vlaneseq
        %v8271 = vshrl.u32 %v8270, 7
        %v8272 = vsub.s32 %v8269, %v8271
        %v8273 = vrot.slane %v8259, %v8272
        %v8274 = vcombine.low %v8266, %v8273
        %8276 = vst [vmem:[%s673] sm:$0xff] %v8274
        %s8277 = sand.u32 %s63, 1
        %s8278 = scalar_lea.sflag [#allocation4], %s8277
        %s8279 = sand.u32 %s63, 1
        %s8280 = smul.addr %s8279, 8
        %s8281 = scalar_lea.vmem [#allocation3], %s8280
        // Predicated region
        $region63: #{tpu_custom_call.1} parent=57 // pred_check
          %p8282 = pneg %p73
        $region64: #{tpu_custom_call.1} parent=57 // pred_check_branch
          %8284 = sbr.rel (%p8282) target = $region66
        $region65: #{tpu_custom_call.1} parent=57 // pred_region
          %s8285 = smul.u32 4, %s19
          %s8287 = ssub.s32 128, 128
          %8288 = vsyncadd %s8278, %s8287
          %s8289 = smul.addr %s8285, 32
          %s8290 = scalar_lea.hbm %s1, %s8289
          %s8292 = sshll.u32 %s8281, 4
          %s8293 = int_to_ptr.vmem [resolvable:$true] %s8292
          %8295 = dma.vmem_to_hbm [thread:$0]  %s8293, 128, %s8290, %s8278
        $region66: #{tpu_custom_call.1} parent=57 // pred_fallthru
          _
      $region58: #{tpu_custom_call.1} parent=5 // pred_fallthru
        _
      %p8296 = scmp.le.s32.totalorder 2, %s10
      // Predicated region
      $region67: #{tpu_custom_call.1} parent=5 // pred_check
        %p8297 = pneg %p8296
      $region68: #{tpu_custom_call.1} parent=5 // pred_check_branch
        %8299 = sbr.rel (%p8297) target = $region70
      $region69: #{tpu_custom_call.1} parent=5 // pred_region
        %s8300 = ssub.s32 %s10, 2
        // Predicated region
        $region71: #{tpu_custom_call.1} parent=69 // pred_check
          %p8301 = pneg %p79
        $region72: #{tpu_custom_call.1} parent=69 // pred_check_branch
          %8303 = sbr.rel (%p8301) target = $region74
        $region73: #{tpu_custom_call.1} parent=69 // pred_region
          %s8304 = sand.u32 %s64, 1
          %s8305 = scalar_lea.sflag [#allocation4], %s8304
          %s8306 = sand.u32 %s64, 1
          %s8307 = smul.addr %s8306, 8
          %s8308 = scalar_lea.vmem [#allocation3], %s8307
          %8309 = dma.done %s8305, 128
        $region74: #{tpu_custom_call.1} parent=69 // pred_fallthru
          _
      $region70: #{tpu_custom_call.1} parent=5 // pred_fallthru
        _
    $region6: #{tpu_custom_call.1} parent=1 // loop_footer
      %s14 = sadd.s32 1, %s10
    $region7: #{tpu_custom_call.1} parent=1 // loop_footer_branch
      %9 = sbr.rel target = $region3
    $region8: #{tpu_custom_call.1} parent=1 // loop_exit
      _
    %8310 = vsyncpa [#allocation4], 1
    %s8311 = scalar_lea.sflag [#allocation4], 1
    %8312 = vsyncpa %s8311, 1

</llo_original>
